<compile_context>
chip_gen: v6e
topology: v6e:2x2x1
jax: 0.10.0
libtpu: 0.0.40
codegen_flags: <defaults>
</compile_context>

<pallas_src>
import functools

import jax
import jax.numpy as jnp
from jax.experimental import pallas as pl
from jax.experimental.pallas import tpu as pltpu


# ----------------------------------- kernel ---------------------------------------

def newirnet8_kernel(
    x_ref,        # (8, M)   channel-major input, rows 3..7 zero, f32
    wdense_ref,   # (32, 200) dense 5x5 3->32, im2col layout col = 8*(kh*5+kw)+ci, f32
    wdw_ref,      # (80, 81) depthwise weights: [0:32]=5x5, [32:48]=3x3, [48:80]=9x9
    wpw_ref,      # (184, 64) pointwise weights (BN scales folded in)
    bias_ref,     # (64, 8)  fused per-channel biases, f32
    o_ref,        # (3, M)   output
    patches_ref,  # (200, M) im2col scratch (VMEM), f32
    *, H, W, cdt,
):
    f32 = jnp.float32
    M = x_ref.shape[1]

    # --- per-lane (h, w) coordinates of column m = ((n*H) + h)*W + w --------------
    lane = jax.lax.broadcasted_iota(jnp.int32, (1, M), 1)
    if (H & (H - 1)) == 0 and (W & (W - 1)) == 0:
        w_pos = lane & (W - 1)
        h_pos = (lane >> (W.bit_length() - 1)) & (H - 1)
    else:
        w_pos = lane % W
        h_pos = (lane // W) % H

    # --- zero-'same'-padding masks, built once and shared by every conv -----------
    PMAX = 4                                  # largest kernel is 9x9 -> offsets +-4
    hmask, wmask = {}, {}
    for d in range(-PMAX, PMAX + 1):
        if d == 0:
            continue
        hmask[d] = ((h_pos + d >= 0) & (h_pos + d < H)).astype(cdt)
        wmask[d] = ((w_pos + d >= 0) & (w_pos + d < W)).astype(cdt)

    def shifted_taps(a, k):
        """Yield (tap, copy of `a` shifted by the tap offset, zero-'same'-padded).

        pltpu.roll follows jnp.roll convention (result[i] = src[i - shift]); masks
        zero out taps that fall outside the image (stride 1, padding = k//2).
        """
        p = k // 2
        for kh in range(k):
            dh = kh - p
            ah = a if dh == 0 else pltpu.roll(a, (-dh * W) % M, axis=1) * hmask[dh]
            for kw in range(k):
                dw = kw - p
                ahw = ah if dw == 0 else pltpu.roll(ah, (-dw) % M, axis=1) * wmask[dw]
                yield kh * k + kw, ahw

    def conv_dw(a, wgt, k, bias_col=None):
        """Depthwise kxk conv in (C, M) layout; wgt is (C, k*k); bias seeds the acc."""
        if bias_col is None:
            acc = jnp.zeros(a.shape, a.dtype)
        else:
            acc = jnp.broadcast_to(bias_col, a.shape).astype(a.dtype)
        # TODO(synk): on v5e, bound live ranges with lax.fori_loop over kh for k=9.
        for t, ahw in shifted_taps(a, k):
            acc = acc + ahw * wgt[:, t:t + 1]
        return acc

    # ---- BlockDW2: relu(dense5x5 3->32); relu(dw5x5); relu(bn3(pw 32->64)) -------
    x8 = x_ref[...]                                        # (8, M) f32, rows 3..7 zero
    for t, piece in shifted_taps(x8, 5):                   # aligned 8-row im2col pieces
        patches_ref[8 * t:8 * t + 8, :] = piece.astype(patches_ref.dtype)
    a = jnp.dot(wdense_ref[...], patches_ref[...],
                preferred_element_type=f32)                # (32, M)
    a = jnp.maximum(a, 0.0).astype(cdt)
    a = jnp.maximum(conv_dw(a, wdw_ref[0:32, 0:25], 5), 0.0)            # (32, M) cdt
    d = jnp.dot(wpw_ref[0:64, 0:32], a, preferred_element_type=f32)
    dw = jnp.maximum(d + bias_ref[0:64, 0:1], 0.0).astype(cdt)          # (64, M) cdt

    # ---- BlockBottleNet: relu(pw 64->16); relu(dw3x3); bn2(pw 16->64); +res; relu -
    b = jnp.dot(wpw_ref[64:80, 0:64], dw, preferred_element_type=f32)
    b = jnp.maximum(b + bias_ref[0:16, 1:2], 0.0).astype(cdt)           # (16, M)
    b = jnp.maximum(conv_dw(b, wdw_ref[32:48, 0:9], 3,
                            bias_col=bias_ref[0:16, 2:3]), 0.0)         # (16, M)
    b = jnp.dot(wpw_ref[80:144, 0:16], b, preferred_element_type=f32)
    bo = jnp.maximum(b + bias_ref[0:64, 3:4] + dw, 0.0).astype(cdt)     # (64, M)

    # ---- BlockOut: relu(bn1(pw 64->32)); leaky0.2(dw9x9); tanh(pw 32->3) ---------
    c = jnp.dot(wpw_ref[144:176, 0:64], bo, preferred_element_type=f32)
    c = jnp.maximum(c + bias_ref[0:32, 4:5], 0.0).astype(cdt)           # (32, M)
    c = conv_dw(c, wdw_ref[48:80, 0:81], 9, bias_col=bias_ref[0:32, 5:6])
    # LeakyReLU(0.2): max(c, 0.2*c) is exact only because the slope is in (0, 1).
    c = jnp.maximum(c, jnp.asarray(0.2, c.dtype) * c)                   # (32, M)
    c = jnp.dot(wpw_ref[176:179, 0:32], c, preferred_element_type=f32)
    c = jnp.tanh(c + bias_ref[0:3, 6:7])                                # (3, M) f32

    # ---- global residual ----------------------------------------------------------
    o_ref[...] = (c + x_ref[0:3, :]).astype(o_ref.dtype)


# ---------------------------------- wrapper ----------------------------------------

def _default_compute_dtype():
    """bf16 elementwise/matmul on bf16-native chips (v6e/v7x); f32 otherwise (v5e)."""
    try:
        kind = jax.devices()[0].device_kind.lower()
    except Exception:
        return jnp.float32
    if any(tag in kind for tag in ("v6", "v7", "7x")):
        return jnp.bfloat16
    return jnp.float32


def newirnet8_forward(x_nchw, params, images_per_step=None, compute_dtype=None):
    """x_nchw: (N, 3, H, W) float32 (PyTorch NCHW); params: dict from init_params."""
    N, C, H, W = x_nchw.shape
    assert C == 3
    if compute_dtype is None:
        compute_dtype = _default_compute_dtype()

    if images_per_step is None:
        # >= 2 grid steps so both v7x TensorCores get work; cap the per-step block at
        # ~8K lanes so im2col scratch (+activations) stays well inside the default
        # scoped VMEM on every TPU generation.  Extra steps on 1-TC chips only cost
        # ~0.35us each, which is noise at these sizes.
        nb = max(1, N // 2)
        nb = min(nb, max(1, 8192 // (H * W)))
    else:
        nb = images_per_step
    assert N % nb == 0
    m_total = N * H * W
    m_blk = nb * H * W
    assert m_blk % 128 == 0, "H*W*images_per_step must be a multiple of 128"

    packed = pack_params(params, compute_dtype)

    # Channel-major, sublane-padded presentation: (8, N*H*W), rows 3..7 zero.
    # TODO(synk): this transpose/pad and the inverse below are extra XLA copies;
    # drop them if the surrounding model can produce/consume channel-major directly.
    x_t = jnp.transpose(x_nchw, (1, 0, 2, 3)).reshape(C, m_total)
    x_t = jnp.pad(x_t, ((0, 8 - C), (0, 0)))

    kernel = functools.partial(newirnet8_kernel, H=H, W=W, cdt=compute_dtype)

    in_specs = [pl.BlockSpec((8, m_blk), lambda i: (0, i))]
    in_specs += [pl.BlockSpec(w.shape, lambda i: (0, 0)) for w in packed]
    out_spec = pl.BlockSpec((C, m_blk), lambda i: (0, i))

    out_t = pl.pallas_call(
        kernel,
        out_shape=jax.ShapeDtypeStruct((C, m_total), x_nchw.dtype),
        grid=(N // nb,),
        in_specs=in_specs,
        out_specs=out_spec,
        scratch_shapes=[pltpu.VMEM((200, m_blk), jnp.float32)],   # aligned im2col buffer
        compiler_params=pltpu.CompilerParams(
            dimension_semantics=("parallel",),   # shards grid steps across TCs on v7x
        ),
    )(x_t, *packed)

    return jnp.transpose(out_t.reshape(C, N, H, W), (1, 0, 2, 3))


# ------------------------------ deterministic params -------------------------------

def _fold_bn(c, base):
    """Deterministic BatchNorm2d params folded to inference affine (scale, bias)."""
    i = jnp.arange(c, dtype=jnp.float32)
    gamma = 1.0 + 0.02 * jnp.cos(i + base)
    beta = 0.02 * jnp.sin(i + base)
    mean = 0.01 * jnp.sin(2.0 * i + base)
    var = 1.0 + 0.05 * jnp.abs(jnp.cos(3.0 * i + base))
    scale = gamma / jnp.sqrt(var + 1e-5)
    bias = beta - mean * scale
    return scale, bias


def init_params(key):
    """Raw parameters in PyTorch-equivalent layouts (deterministic)."""
    ks = jax.random.split(key, 16)
    n = lambda k, shape, s=0.1: s * jax.random.normal(k, shape, jnp.float32)
    return {
        # BlockDW2 (convDW9x9)
        "w_dense": n(ks[0], (32, 3, 5, 5)),   # convDW1 dense 5x5 3->32, no bias
        "w_dw5":   n(ks[1], (32, 5, 5)),      # convDW2 depthwise 5x5, no bias
        "w_pw2":   n(ks[2], (64, 32)),        # convPW2
        "b_pw2":   n(ks[3], (64,), 0.01),
        "bn3":     _fold_bn(64, 0.3),
        # BlockBottleNet (boN2)
        "w_bpw1":  n(ks[4], (16, 64)),
        "b_bpw1":  n(ks[5], (16,), 0.01),
        "w_bdw":   n(ks[6], (16, 3, 3)),      # depthwise 3x3
        "b_bdw":   n(ks[7], (16,), 0.01),
        "w_bpw2":  n(ks[8], (64, 16)),
        "b_bpw2":  n(ks[9], (64,), 0.01),
        "bn2":     _fold_bn(64, 0.7),
        # BlockOut (blockOut4)
        "w_opw1":  n(ks[10], (32, 64)),
        "b_opw1":  n(ks[11], (32,), 0.01),
        "bn1":     _fold_bn(32, 1.1),
        "w_odw":   n(ks[12], (32, 9, 9)),     # depthwise 9x9
        "b_odw":   n(ks[13], (32,), 0.01),
        "w_opw2":  n(ks[14], (3, 32)),
        "b_opw2":  n(ks[15], (3,), 0.01),
    }


def pack_params(p, compute_dtype):
    """Fold BN into pointwise weights and pack everything into 4 kernel slabs."""
    f32 = jnp.float32

    def fold(w, b, bn):
        s, bb = bn
        return w * s[:, None], s * b + bb

    w_pw2, b_pw2 = fold(p["w_pw2"], p["b_pw2"], p["bn3"])      # BlockDW2.convPW2 + bn3
    w_bpw2, b_bpw2 = fold(p["w_bpw2"], p["b_bpw2"], p["bn2"])  # boN2.convPW2 + bn2
    w_opw1, b_opw1 = fold(p["w_opw1"], p["b_opw1"], p["bn1"])  # blockOut4.convPW1 + bn1

    # Dense 5x5 im2col weights, sublane-aligned: column = 8*(kh*5+kw) + ci (ci<3).
    wdense = jnp.pad(jnp.transpose(p["w_dense"], (0, 2, 3, 1)),
                     ((0, 0), (0, 0), (0, 0), (0, 5))).reshape(32, 200)

    # Depthwise slab (80, 81): rows [0:32]=5x5, [32:48]=3x3, [48:80]=9x9.
    wdw = jnp.zeros((80, 81), f32)
    wdw = wdw.at[0:32, 0:25].set(p["w_dw5"].reshape(32, 25))
    wdw = wdw.at[32:48, 0:9].set(p["w_bdw"].reshape(16, 9))
    wdw = wdw.at[48:80, 0:81].set(p["w_odw"].reshape(32, 81))

    # Pointwise slab (184, 64); row ranges must match the kernel's static slices.
    wpw = jnp.zeros((184, 64), f32)
    wpw = wpw.at[0:64, 0:32].set(w_pw2)
    wpw = wpw.at[64:80, 0:64].set(p["w_bpw1"])
    wpw = wpw.at[80:144, 0:16].set(w_bpw2)
    wpw = wpw.at[144:176, 0:64].set(w_opw1)
    wpw = wpw.at[176:179, 0:32].set(p["w_opw2"])

    # Fused per-channel biases (64, 8); column order matches kernel slices.
    cols = [b_pw2, p["b_bpw1"], p["b_bdw"], b_bpw2, b_opw1, p["b_odw"], p["b_opw2"]]
    bias = jnp.zeros((64, 8), f32)
    for j, v in enumerate(cols):
        bias = bias.at[:v.shape[0], j].set(v)

    cdt = compute_dtype
    return (wdense.astype(f32), wdw.astype(cdt), wpw.astype(cdt), bias)


# ------------------------------------- main -----------------------------------------

if __name__ == "__main__":
    key = jax.random.PRNGKey(0)
    kx, kp = jax.random.split(key)

    N, C, H, W = 2, 3, 16, 16                      # PyTorch NCHW input (2, 3, 16, 16)
    x = jax.random.normal(kx, (N, C, H, W), jnp.float32)
    params = init_params(kp)

    out = newirnet8_forward(x, params)
    out = jax.block_until_ready(out)
    assert out.shape == (N, C, H, W) and out.dtype == jnp.float32
    assert bool(jnp.all(jnp.isfinite(out)))
    print("KERNEL_OK")
</pallas_src>

<mosaic_0001>
module attributes {stable_mosaic.version = 11 : i64} {
  func.func @newirnet8_kernel(%arg0: i32, %arg1: memref<8x256xf32, #tpu.memory_space<vmem>>, %arg2: memref<32x200xf32, #tpu.memory_space<vmem>>, %arg3: memref<80x81xf32, #tpu.memory_space<vmem>>, %arg4: memref<184x64xf32, #tpu.memory_space<vmem>>, %arg5: memref<64x8xf32, #tpu.memory_space<vmem>>, %arg6: memref<3x256xf32, #tpu.memory_space<vmem>>, %arg7: memref<200x256xf32, #tpu.memory_space<vmem>>) attributes {dimension_semantics = [#tpu.dimension_semantics<parallel>], iteration_bounds = array<i64: 2>, scalar_prefetch = 0 : i64, scratch_operands = 1 : i64, tpu.core_type = #tpu.core_type<tc>, window_params = [{transform_indices = @transform_0, window_bounds = array<i64: 8, 256>}, {pipeline_mode = #tpu.pipeline_mode<synchronous>, transform_indices = @transform_1, window_bounds = array<i64: 32, 200>}, {pipeline_mode = #tpu.pipeline_mode<synchronous>, transform_indices = @transform_2, window_bounds = array<i64: 80, 81>}, {pipeline_mode = #tpu.pipeline_mode<synchronous>, transform_indices = @transform_3, window_bounds = array<i64: 184, 64>}, {pipeline_mode = #tpu.pipeline_mode<synchronous>, transform_indices = @transform_4, window_bounds = array<i64: 64, 8>}, {transform_indices = @transform_5, window_bounds = array<i64: 3, 256>}]} {
    %0 = tpu.iota {dimensions = array<i32: 1>} : vector<1x256xi32>
    %c15_i32 = arith.constant 15 : i32
    %1 = vector.broadcast %c15_i32 : i32 to vector<1x256xi32>
    %2 = arith.andi %0, %1 : vector<1x256xi32>
    %c4_i32 = arith.constant 4 : i32
    %3 = vector.broadcast %c4_i32 : i32 to vector<1x256xi32>
    %4 = arith.shrsi %0, %3 : vector<1x256xi32>
    %c15_i32_0 = arith.constant 15 : i32
    %5 = vector.broadcast %c15_i32_0 : i32 to vector<1x256xi32>
    %6 = arith.andi %4, %5 : vector<1x256xi32>
    %c-4_i32 = arith.constant -4 : i32
    %7 = vector.broadcast %c-4_i32 : i32 to vector<1x256xi32>
    %8 = arith.addi %6, %7 : vector<1x256xi32>
    %c0_i32 = arith.constant 0 : i32
    %9 = vector.broadcast %c0_i32 : i32 to vector<1x256xi32>
    %10 = arith.cmpi sge, %8, %9 : vector<1x256xi32>
    %c-4_i32_1 = arith.constant -4 : i32
    %11 = vector.broadcast %c-4_i32_1 : i32 to vector<1x256xi32>
    %12 = arith.addi %6, %11 : vector<1x256xi32>
    %c16_i32 = arith.constant 16 : i32
    %13 = vector.broadcast %c16_i32 : i32 to vector<1x256xi32>
    %14 = arith.cmpi slt, %12, %13 : vector<1x256xi32>
    %15 = arith.andi %10, %14 : vector<1x256xi1>
    %16 = arith.extui %15 : vector<1x256xi1> to vector<1x256xi32>
    %17 = arith.sitofp %16 : vector<1x256xi32> to vector<1x256xf32>
    %c-4_i32_2 = arith.constant -4 : i32
    %18 = vector.broadcast %c-4_i32_2 : i32 to vector<1x256xi32>
    %19 = arith.addi %2, %18 : vector<1x256xi32>
    %c0_i32_3 = arith.constant 0 : i32
    %20 = vector.broadcast %c0_i32_3 : i32 to vector<1x256xi32>
    %21 = arith.cmpi sge, %19, %20 : vector<1x256xi32>
    %c-4_i32_4 = arith.constant -4 : i32
    %22 = vector.broadcast %c-4_i32_4 : i32 to vector<1x256xi32>
    %23 = arith.addi %2, %22 : vector<1x256xi32>
    %c16_i32_5 = arith.constant 16 : i32
    %24 = vector.broadcast %c16_i32_5 : i32 to vector<1x256xi32>
    %25 = arith.cmpi slt, %23, %24 : vector<1x256xi32>
    %26 = arith.andi %21, %25 : vector<1x256xi1>
    %27 = arith.extui %26 : vector<1x256xi1> to vector<1x256xi32>
    %28 = arith.sitofp %27 : vector<1x256xi32> to vector<1x256xf32>
    %c-3_i32 = arith.constant -3 : i32
    %29 = vector.broadcast %c-3_i32 : i32 to vector<1x256xi32>
    %30 = arith.addi %6, %29 : vector<1x256xi32>
    %c0_i32_6 = arith.constant 0 : i32
    %31 = vector.broadcast %c0_i32_6 : i32 to vector<1x256xi32>
    %32 = arith.cmpi sge, %30, %31 : vector<1x256xi32>
    %c-3_i32_7 = arith.constant -3 : i32
    %33 = vector.broadcast %c-3_i32_7 : i32 to vector<1x256xi32>
    %34 = arith.addi %6, %33 : vector<1x256xi32>
    %c16_i32_8 = arith.constant 16 : i32
    %35 = vector.broadcast %c16_i32_8 : i32 to vector<1x256xi32>
    %36 = arith.cmpi slt, %34, %35 : vector<1x256xi32>
    %37 = arith.andi %32, %36 : vector<1x256xi1>
    %38 = arith.extui %37 : vector<1x256xi1> to vector<1x256xi32>
    %39 = arith.sitofp %38 : vector<1x256xi32> to vector<1x256xf32>
    %c-3_i32_9 = arith.constant -3 : i32
    %40 = vector.broadcast %c-3_i32_9 : i32 to vector<1x256xi32>
    %41 = arith.addi %2, %40 : vector<1x256xi32>
    %c0_i32_10 = arith.constant 0 : i32
    %42 = vector.broadcast %c0_i32_10 : i32 to vector<1x256xi32>
    %43 = arith.cmpi sge, %41, %42 : vector<1x256xi32>
    %c-3_i32_11 = arith.constant -3 : i32
    %44 = vector.broadcast %c-3_i32_11 : i32 to vector<1x256xi32>
    %45 = arith.addi %2, %44 : vector<1x256xi32>
    %c16_i32_12 = arith.constant 16 : i32
    %46 = vector.broadcast %c16_i32_12 : i32 to vector<1x256xi32>
    %47 = arith.cmpi slt, %45, %46 : vector<1x256xi32>
    %48 = arith.andi %43, %47 : vector<1x256xi1>
    %49 = arith.extui %48 : vector<1x256xi1> to vector<1x256xi32>
    %50 = arith.sitofp %49 : vector<1x256xi32> to vector<1x256xf32>
    %c-2_i32 = arith.constant -2 : i32
    %51 = vector.broadcast %c-2_i32 : i32 to vector<1x256xi32>
    %52 = arith.addi %6, %51 : vector<1x256xi32>
    %c0_i32_13 = arith.constant 0 : i32
    %53 = vector.broadcast %c0_i32_13 : i32 to vector<1x256xi32>
    %54 = arith.cmpi sge, %52, %53 : vector<1x256xi32>
    %c-2_i32_14 = arith.constant -2 : i32
    %55 = vector.broadcast %c-2_i32_14 : i32 to vector<1x256xi32>
    %56 = arith.addi %6, %55 : vector<1x256xi32>
    %c16_i32_15 = arith.constant 16 : i32
    %57 = vector.broadcast %c16_i32_15 : i32 to vector<1x256xi32>
    %58 = arith.cmpi slt, %56, %57 : vector<1x256xi32>
    %59 = arith.andi %54, %58 : vector<1x256xi1>
    %60 = arith.extui %59 : vector<1x256xi1> to vector<1x256xi32>
    %61 = arith.sitofp %60 : vector<1x256xi32> to vector<1x256xf32>
    %c-2_i32_16 = arith.constant -2 : i32
    %62 = vector.broadcast %c-2_i32_16 : i32 to vector<1x256xi32>
    %63 = arith.addi %2, %62 : vector<1x256xi32>
    %c0_i32_17 = arith.constant 0 : i32
    %64 = vector.broadcast %c0_i32_17 : i32 to vector<1x256xi32>
    %65 = arith.cmpi sge, %63, %64 : vector<1x256xi32>
    %c-2_i32_18 = arith.constant -2 : i32
    %66 = vector.broadcast %c-2_i32_18 : i32 to vector<1x256xi32>
    %67 = arith.addi %2, %66 : vector<1x256xi32>
    %c16_i32_19 = arith.constant 16 : i32
    %68 = vector.broadcast %c16_i32_19 : i32 to vector<1x256xi32>
    %69 = arith.cmpi slt, %67, %68 : vector<1x256xi32>
    %70 = arith.andi %65, %69 : vector<1x256xi1>
    %71 = arith.extui %70 : vector<1x256xi1> to vector<1x256xi32>
    %72 = arith.sitofp %71 : vector<1x256xi32> to vector<1x256xf32>
    %c-1_i32 = arith.constant -1 : i32
    %73 = vector.broadcast %c-1_i32 : i32 to vector<1x256xi32>
    %74 = arith.addi %6, %73 : vector<1x256xi32>
    %c0_i32_20 = arith.constant 0 : i32
    %75 = vector.broadcast %c0_i32_20 : i32 to vector<1x256xi32>
    %76 = arith.cmpi sge, %74, %75 : vector<1x256xi32>
    %c-1_i32_21 = arith.constant -1 : i32
    %77 = vector.broadcast %c-1_i32_21 : i32 to vector<1x256xi32>
    %78 = arith.addi %6, %77 : vector<1x256xi32>
    %c16_i32_22 = arith.constant 16 : i32
    %79 = vector.broadcast %c16_i32_22 : i32 to vector<1x256xi32>
    %80 = arith.cmpi slt, %78, %79 : vector<1x256xi32>
    %81 = arith.andi %76, %80 : vector<1x256xi1>
    %82 = arith.extui %81 : vector<1x256xi1> to vector<1x256xi32>
    %83 = arith.sitofp %82 : vector<1x256xi32> to vector<1x256xf32>
    %c-1_i32_23 = arith.constant -1 : i32
    %84 = vector.broadcast %c-1_i32_23 : i32 to vector<1x256xi32>
    %85 = arith.addi %2, %84 : vector<1x256xi32>
    %c0_i32_24 = arith.constant 0 : i32
    %86 = vector.broadcast %c0_i32_24 : i32 to vector<1x256xi32>
    %87 = arith.cmpi sge, %85, %86 : vector<1x256xi32>
    %c-1_i32_25 = arith.constant -1 : i32
    %88 = vector.broadcast %c-1_i32_25 : i32 to vector<1x256xi32>
    %89 = arith.addi %2, %88 : vector<1x256xi32>
    %c16_i32_26 = arith.constant 16 : i32
    %90 = vector.broadcast %c16_i32_26 : i32 to vector<1x256xi32>
    %91 = arith.cmpi slt, %89, %90 : vector<1x256xi32>
    %92 = arith.andi %87, %91 : vector<1x256xi1>
    %93 = arith.extui %92 : vector<1x256xi1> to vector<1x256xi32>
    %94 = arith.sitofp %93 : vector<1x256xi32> to vector<1x256xf32>
    %c1_i32 = arith.constant 1 : i32
    %95 = vector.broadcast %c1_i32 : i32 to vector<1x256xi32>
    %96 = arith.addi %6, %95 : vector<1x256xi32>
    %c0_i32_27 = arith.constant 0 : i32
    %97 = vector.broadcast %c0_i32_27 : i32 to vector<1x256xi32>
    %98 = arith.cmpi sge, %96, %97 : vector<1x256xi32>
    %c1_i32_28 = arith.constant 1 : i32
    %99 = vector.broadcast %c1_i32_28 : i32 to vector<1x256xi32>
    %100 = arith.addi %6, %99 : vector<1x256xi32>
    %c16_i32_29 = arith.constant 16 : i32
    %101 = vector.broadcast %c16_i32_29 : i32 to vector<1x256xi32>
    %102 = arith.cmpi slt, %100, %101 : vector<1x256xi32>
    %103 = arith.andi %98, %102 : vector<1x256xi1>
    %104 = arith.extui %103 : vector<1x256xi1> to vector<1x256xi32>
    %105 = arith.sitofp %104 : vector<1x256xi32> to vector<1x256xf32>
    %c1_i32_30 = arith.constant 1 : i32
    %106 = vector.broadcast %c1_i32_30 : i32 to vector<1x256xi32>
    %107 = arith.addi %2, %106 : vector<1x256xi32>
    %c0_i32_31 = arith.constant 0 : i32
    %108 = vector.broadcast %c0_i32_31 : i32 to vector<1x256xi32>
    %109 = arith.cmpi sge, %107, %108 : vector<1x256xi32>
    %c1_i32_32 = arith.constant 1 : i32
    %110 = vector.broadcast %c1_i32_32 : i32 to vector<1x256xi32>
    %111 = arith.addi %2, %110 : vector<1x256xi32>
    %c16_i32_33 = arith.constant 16 : i32
    %112 = vector.broadcast %c16_i32_33 : i32 to vector<1x256xi32>
    %113 = arith.cmpi slt, %111, %112 : vector<1x256xi32>
    %114 = arith.andi %109, %113 : vector<1x256xi1>
    %115 = arith.extui %114 : vector<1x256xi1> to vector<1x256xi32>
    %116 = arith.sitofp %115 : vector<1x256xi32> to vector<1x256xf32>
    %c2_i32 = arith.constant 2 : i32
    %117 = vector.broadcast %c2_i32 : i32 to vector<1x256xi32>
    %118 = arith.addi %6, %117 : vector<1x256xi32>
    %c0_i32_34 = arith.constant 0 : i32
    %119 = vector.broadcast %c0_i32_34 : i32 to vector<1x256xi32>
    %120 = arith.cmpi sge, %118, %119 : vector<1x256xi32>
    %c2_i32_35 = arith.constant 2 : i32
    %121 = vector.broadcast %c2_i32_35 : i32 to vector<1x256xi32>
    %122 = arith.addi %6, %121 : vector<1x256xi32>
    %c16_i32_36 = arith.constant 16 : i32
    %123 = vector.broadcast %c16_i32_36 : i32 to vector<1x256xi32>
    %124 = arith.cmpi slt, %122, %123 : vector<1x256xi32>
    %125 = arith.andi %120, %124 : vector<1x256xi1>
    %126 = arith.extui %125 : vector<1x256xi1> to vector<1x256xi32>
    %127 = arith.sitofp %126 : vector<1x256xi32> to vector<1x256xf32>
    %c2_i32_37 = arith.constant 2 : i32
    %128 = vector.broadcast %c2_i32_37 : i32 to vector<1x256xi32>
    %129 = arith.addi %2, %128 : vector<1x256xi32>
    %c0_i32_38 = arith.constant 0 : i32
    %130 = vector.broadcast %c0_i32_38 : i32 to vector<1x256xi32>
    %131 = arith.cmpi sge, %129, %130 : vector<1x256xi32>
    %c2_i32_39 = arith.constant 2 : i32
    %132 = vector.broadcast %c2_i32_39 : i32 to vector<1x256xi32>
    %133 = arith.addi %2, %132 : vector<1x256xi32>
    %c16_i32_40 = arith.constant 16 : i32
    %134 = vector.broadcast %c16_i32_40 : i32 to vector<1x256xi32>
    %135 = arith.cmpi slt, %133, %134 : vector<1x256xi32>
    %136 = arith.andi %131, %135 : vector<1x256xi1>
    %137 = arith.extui %136 : vector<1x256xi1> to vector<1x256xi32>
    %138 = arith.sitofp %137 : vector<1x256xi32> to vector<1x256xf32>
    %c3_i32 = arith.constant 3 : i32
    %139 = vector.broadcast %c3_i32 : i32 to vector<1x256xi32>
    %140 = arith.addi %6, %139 : vector<1x256xi32>
    %c0_i32_41 = arith.constant 0 : i32
    %141 = vector.broadcast %c0_i32_41 : i32 to vector<1x256xi32>
    %142 = arith.cmpi sge, %140, %141 : vector<1x256xi32>
    %c3_i32_42 = arith.constant 3 : i32
    %143 = vector.broadcast %c3_i32_42 : i32 to vector<1x256xi32>
    %144 = arith.addi %6, %143 : vector<1x256xi32>
    %c16_i32_43 = arith.constant 16 : i32
    %145 = vector.broadcast %c16_i32_43 : i32 to vector<1x256xi32>
    %146 = arith.cmpi slt, %144, %145 : vector<1x256xi32>
    %147 = arith.andi %142, %146 : vector<1x256xi1>
    %148 = arith.extui %147 : vector<1x256xi1> to vector<1x256xi32>
    %149 = arith.sitofp %148 : vector<1x256xi32> to vector<1x256xf32>
    %c3_i32_44 = arith.constant 3 : i32
    %150 = vector.broadcast %c3_i32_44 : i32 to vector<1x256xi32>
    %151 = arith.addi %2, %150 : vector<1x256xi32>
    %c0_i32_45 = arith.constant 0 : i32
    %152 = vector.broadcast %c0_i32_45 : i32 to vector<1x256xi32>
    %153 = arith.cmpi sge, %151, %152 : vector<1x256xi32>
    %c3_i32_46 = arith.constant 3 : i32
    %154 = vector.broadcast %c3_i32_46 : i32 to vector<1x256xi32>
    %155 = arith.addi %2, %154 : vector<1x256xi32>
    %c16_i32_47 = arith.constant 16 : i32
    %156 = vector.broadcast %c16_i32_47 : i32 to vector<1x256xi32>
    %157 = arith.cmpi slt, %155, %156 : vector<1x256xi32>
    %158 = arith.andi %153, %157 : vector<1x256xi1>
    %159 = arith.extui %158 : vector<1x256xi1> to vector<1x256xi32>
    %160 = arith.sitofp %159 : vector<1x256xi32> to vector<1x256xf32>
    %c4_i32_48 = arith.constant 4 : i32
    %161 = vector.broadcast %c4_i32_48 : i32 to vector<1x256xi32>
    %162 = arith.addi %6, %161 : vector<1x256xi32>
    %c0_i32_49 = arith.constant 0 : i32
    %163 = vector.broadcast %c0_i32_49 : i32 to vector<1x256xi32>
    %164 = arith.cmpi sge, %162, %163 : vector<1x256xi32>
    %c4_i32_50 = arith.constant 4 : i32
    %165 = vector.broadcast %c4_i32_50 : i32 to vector<1x256xi32>
    %166 = arith.addi %6, %165 : vector<1x256xi32>
    %c16_i32_51 = arith.constant 16 : i32
    %167 = vector.broadcast %c16_i32_51 : i32 to vector<1x256xi32>
    %168 = arith.cmpi slt, %166, %167 : vector<1x256xi32>
    %169 = arith.andi %164, %168 : vector<1x256xi1>
    %170 = arith.extui %169 : vector<1x256xi1> to vector<1x256xi32>
    %171 = arith.sitofp %170 : vector<1x256xi32> to vector<1x256xf32>
    %c4_i32_52 = arith.constant 4 : i32
    %172 = vector.broadcast %c4_i32_52 : i32 to vector<1x256xi32>
    %173 = arith.addi %2, %172 : vector<1x256xi32>
    %c0_i32_53 = arith.constant 0 : i32
    %174 = vector.broadcast %c0_i32_53 : i32 to vector<1x256xi32>
    %175 = arith.cmpi sge, %173, %174 : vector<1x256xi32>
    %c4_i32_54 = arith.constant 4 : i32
    %176 = vector.broadcast %c4_i32_54 : i32 to vector<1x256xi32>
    %177 = arith.addi %2, %176 : vector<1x256xi32>
    %c16_i32_55 = arith.constant 16 : i32
    %178 = vector.broadcast %c16_i32_55 : i32 to vector<1x256xi32>
    %179 = arith.cmpi slt, %177, %178 : vector<1x256xi32>
    %180 = arith.andi %175, %179 : vector<1x256xi1>
    %181 = arith.extui %180 : vector<1x256xi1> to vector<1x256xi32>
    %182 = arith.sitofp %181 : vector<1x256xi32> to vector<1x256xf32>
    %c0 = arith.constant 0 : index
    %c0_56 = arith.constant 0 : index
    %183 = vector.load %arg1[%c0, %c0_56] : memref<8x256xf32, #tpu.memory_space<vmem>>, vector<8x256xf32>
    %c32_i32 = arith.constant 32 : i32
    %184 = tpu.dynamic_rotate %183 by %c32_i32 dim 1 : vector<8x256xf32>, i32 -> vector<8x256xf32>
    %185 = vector.broadcast %61 : vector<1x256xf32> to vector<8x256xf32>
    %186 = arith.mulf %184, %185 : vector<8x256xf32>
    %c2_i32_57 = arith.constant 2 : i32
    %187 = tpu.dynamic_rotate %186 by %c2_i32_57 dim 1 : vector<8x256xf32>, i32 -> vector<8x256xf32>
    %188 = vector.broadcast %72 : vector<1x256xf32> to vector<8x256xf32>
    %189 = arith.mulf %187, %188 : vector<8x256xf32>
    %c0_58 = arith.constant 0 : index
    %c0_59 = arith.constant 0 : index
    %190 = vector.load %arg7[%c0_58, %c0_59] : memref<200x256xf32, #tpu.memory_space<vmem>>, vector<8x256xf32>
    tpu.vector_store %arg7[%c0_58, %c0_59], %189 {strides = array<i32>} : memref<200x256xf32, #tpu.memory_space<vmem>>, vector<8x256xf32>,
    %c1_i32_60 = arith.constant 1 : i32
    %191 = tpu.dynamic_rotate %186 by %c1_i32_60 dim 1 : vector<8x256xf32>, i32 -> vector<8x256xf32>
    %192 = vector.broadcast %94 : vector<1x256xf32> to vector<8x256xf32>
    %193 = arith.mulf %191, %192 : vector<8x256xf32>
    %c8 = arith.constant 8 : index
    %c0_61 = arith.constant 0 : index
    %194 = vector.load %arg7[%c8, %c0_61] : memref<200x256xf32, #tpu.memory_space<vmem>>, vector<8x256xf32>
    tpu.vector_store %arg7[%c8, %c0_61], %193 {strides = array<i32>} : memref<200x256xf32, #tpu.memory_space<vmem>>, vector<8x256xf32>,
    %c16 = arith.constant 16 : index
    %c0_62 = arith.constant 0 : index
    %195 = vector.load %arg7[%c16, %c0_62] : memref<200x256xf32, #tpu.memory_space<vmem>>, vector<8x256xf32>
    tpu.vector_store %arg7[%c16, %c0_62], %186 {strides = array<i32>} : memref<200x256xf32, #tpu.memory_space<vmem>>, vector<8x256xf32>,
    %c255_i32 = arith.constant 255 : i32
    %196 = tpu.dynamic_rotate %186 by %c255_i32 dim 1 : vector<8x256xf32>, i32 -> vector<8x256xf32>
    %197 = vector.broadcast %116 : vector<1x256xf32> to vector<8x256xf32>
    %198 = arith.mulf %196, %197 : vector<8x256xf32>
    %c24 = arith.constant 24 : index
    %c0_63 = arith.constant 0 : index
    %199 = vector.load %arg7[%c24, %c0_63] : memref<200x256xf32, #tpu.memory_space<vmem>>, vector<8x256xf32>
    tpu.vector_store %arg7[%c24, %c0_63], %198 {strides = array<i32>} : memref<200x256xf32, #tpu.memory_space<vmem>>, vector<8x256xf32>,
    %c254_i32 = arith.constant 254 : i32
    %200 = tpu.dynamic_rotate %186 by %c254_i32 dim 1 : vector<8x256xf32>, i32 -> vector<8x256xf32>
    %201 = vector.broadcast %138 : vector<1x256xf32> to vector<8x256xf32>
    %202 = arith.mulf %200, %201 : vector<8x256xf32>
    %c32 = arith.constant 32 : index
    %c0_64 = arith.constant 0 : index
    %203 = vector.load %arg7[%c32, %c0_64] : memref<200x256xf32, #tpu.memory_space<vmem>>, vector<8x256xf32>
    tpu.vector_store %arg7[%c32, %c0_64], %202 {strides = array<i32>} : memref<200x256xf32, #tpu.memory_space<vmem>>, vector<8x256xf32>,
    %c16_i32_65 = arith.constant 16 : i32
    %204 = tpu.dynamic_rotate %183 by %c16_i32_65 dim 1 : vector<8x256xf32>, i32 -> vector<8x256xf32>
    %205 = vector.broadcast %83 : vector<1x256xf32> to vector<8x256xf32>
    %206 = arith.mulf %204, %205 : vector<8x256xf32>
    %c2_i32_66 = arith.constant 2 : i32
    %207 = tpu.dynamic_rotate %206 by %c2_i32_66 dim 1 : vector<8x256xf32>, i32 -> vector<8x256xf32>
    %208 = vector.broadcast %72 : vector<1x256xf32> to vector<8x256xf32>
    %209 = arith.mulf %207, %208 : vector<8x256xf32>
    %c40 = arith.constant 40 : index
    %c0_67 = arith.constant 0 : index
    %210 = vector.load %arg7[%c40, %c0_67] : memref<200x256xf32, #tpu.memory_space<vmem>>, vector<8x256xf32>
    tpu.vector_store %arg7[%c40, %c0_67], %209 {strides = array<i32>} : memref<200x256xf32, #tpu.memory_space<vmem>>, vector<8x256xf32>,
    %c1_i32_68 = arith.constant 1 : i32
    %211 = tpu.dynamic_rotate %206 by %c1_i32_68 dim 1 : vector<8x256xf32>, i32 -> vector<8x256xf32>
    %212 = vector.broadcast %94 : vector<1x256xf32> to vector<8x256xf32>
    %213 = arith.mulf %211, %212 : vector<8x256xf32>
    %c48 = arith.constant 48 : index
    %c0_69 = arith.constant 0 : index
    %214 = vector.load %arg7[%c48, %c0_69] : memref<200x256xf32, #tpu.memory_space<vmem>>, vector<8x256xf32>
    tpu.vector_store %arg7[%c48, %c0_69], %213 {strides = array<i32>} : memref<200x256xf32, #tpu.memory_space<vmem>>, vector<8x256xf32>,
    %c56 = arith.constant 56 : index
    %c0_70 = arith.constant 0 : index
    %215 = vector.load %arg7[%c56, %c0_70] : memref<200x256xf32, #tpu.memory_space<vmem>>, vector<8x256xf32>
    tpu.vector_store %arg7[%c56, %c0_70], %206 {strides = array<i32>} : memref<200x256xf32, #tpu.memory_space<vmem>>, vector<8x256xf32>,
    %c255_i32_71 = arith.constant 255 : i32
    %216 = tpu.dynamic_rotate %206 by %c255_i32_71 dim 1 : vector<8x256xf32>, i32 -> vector<8x256xf32>
    %217 = vector.broadcast %116 : vector<1x256xf32> to vector<8x256xf32>
    %218 = arith.mulf %216, %217 : vector<8x256xf32>
    %c64 = arith.constant 64 : index
    %c0_72 = arith.constant 0 : index
    %219 = vector.load %arg7[%c64, %c0_72] : memref<200x256xf32, #tpu.memory_space<vmem>>, vector<8x256xf32>
    tpu.vector_store %arg7[%c64, %c0_72], %218 {strides = array<i32>} : memref<200x256xf32, #tpu.memory_space<vmem>>, vector<8x256xf32>,
    %c254_i32_73 = arith.constant 254 : i32
    %220 = tpu.dynamic_rotate %206 by %c254_i32_73 dim 1 : vector<8x256xf32>, i32 -> vector<8x256xf32>
    %221 = vector.broadcast %138 : vector<1x256xf32> to vector<8x256xf32>
    %222 = arith.mulf %220, %221 : vector<8x256xf32>
    %c72 = arith.constant 72 : index
    %c0_74 = arith.constant 0 : index
    %223 = vector.load %arg7[%c72, %c0_74] : memref<200x256xf32, #tpu.memory_space<vmem>>, vector<8x256xf32>
    tpu.vector_store %arg7[%c72, %c0_74], %222 {strides = array<i32>} : memref<200x256xf32, #tpu.memory_space<vmem>>, vector<8x256xf32>,
    %c2_i32_75 = arith.constant 2 : i32
    %224 = tpu.dynamic_rotate %183 by %c2_i32_75 dim 1 : vector<8x256xf32>, i32 -> vector<8x256xf32>
    %225 = vector.broadcast %72 : vector<1x256xf32> to vector<8x256xf32>
    %226 = arith.mulf %224, %225 : vector<8x256xf32>
    %c80 = arith.constant 80 : index
    %c0_76 = arith.constant 0 : index
    %227 = vector.load %arg7[%c80, %c0_76] : memref<200x256xf32, #tpu.memory_space<vmem>>, vector<8x256xf32>
    tpu.vector_store %arg7[%c80, %c0_76], %226 {strides = array<i32>} : memref<200x256xf32, #tpu.memory_space<vmem>>, vector<8x256xf32>,
    %c1_i32_77 = arith.constant 1 : i32
    %228 = tpu.dynamic_rotate %183 by %c1_i32_77 dim 1 : vector<8x256xf32>, i32 -> vector<8x256xf32>
    %229 = vector.broadcast %94 : vector<1x256xf32> to vector<8x256xf32>
    %230 = arith.mulf %228, %229 : vector<8x256xf32>
    %c88 = arith.constant 88 : index
    %c0_78 = arith.constant 0 : index
    %231 = vector.load %arg7[%c88, %c0_78] : memref<200x256xf32, #tpu.memory_space<vmem>>, vector<8x256xf32>
    tpu.vector_store %arg7[%c88, %c0_78], %230 {strides = array<i32>} : memref<200x256xf32, #tpu.memory_space<vmem>>, vector<8x256xf32>,
    %c96 = arith.constant 96 : index
    %c0_79 = arith.constant 0 : index
    %232 = vector.load %arg7[%c96, %c0_79] : memref<200x256xf32, #tpu.memory_space<vmem>>, vector<8x256xf32>
    tpu.vector_store %arg7[%c96, %c0_79], %183 {strides = array<i32>} : memref<200x256xf32, #tpu.memory_space<vmem>>, vector<8x256xf32>,
    %c255_i32_80 = arith.constant 255 : i32
    %233 = tpu.dynamic_rotate %183 by %c255_i32_80 dim 1 : vector<8x256xf32>, i32 -> vector<8x256xf32>
    %234 = vector.broadcast %116 : vector<1x256xf32> to vector<8x256xf32>
    %235 = arith.mulf %233, %234 : vector<8x256xf32>
    %c104 = arith.constant 104 : index
    %c0_81 = arith.constant 0 : index
    %236 = vector.load %arg7[%c104, %c0_81] : memref<200x256xf32, #tpu.memory_space<vmem>>, vector<8x256xf32>
    tpu.vector_store %arg7[%c104, %c0_81], %235 {strides = array<i32>} : memref<200x256xf32, #tpu.memory_space<vmem>>, vector<8x256xf32>,
    %c254_i32_82 = arith.constant 254 : i32
    %237 = tpu.dynamic_rotate %183 by %c254_i32_82 dim 1 : vector<8x256xf32>, i32 -> vector<8x256xf32>
    %238 = vector.broadcast %138 : vector<1x256xf32> to vector<8x256xf32>
    %239 = arith.mulf %237, %238 : vector<8x256xf32>
    %c112 = arith.constant 112 : index
    %c0_83 = arith.constant 0 : index
    %240 = vector.load %arg7[%c112, %c0_83] : memref<200x256xf32, #tpu.memory_space<vmem>>, vector<8x256xf32>
    tpu.vector_store %arg7[%c112, %c0_83], %239 {strides = array<i32>} : memref<200x256xf32, #tpu.memory_space<vmem>>, vector<8x256xf32>,
    %c240_i32 = arith.constant 240 : i32
    %241 = tpu.dynamic_rotate %183 by %c240_i32 dim 1 : vector<8x256xf32>, i32 -> vector<8x256xf32>
    %242 = vector.broadcast %105 : vector<1x256xf32> to vector<8x256xf32>
    %243 = arith.mulf %241, %242 : vector<8x256xf32>
    %c2_i32_84 = arith.constant 2 : i32
    %244 = tpu.dynamic_rotate %243 by %c2_i32_84 dim 1 : vector<8x256xf32>, i32 -> vector<8x256xf32>
    %245 = vector.broadcast %72 : vector<1x256xf32> to vector<8x256xf32>
    %246 = arith.mulf %244, %245 : vector<8x256xf32>
    %c120 = arith.constant 120 : index
    %c0_85 = arith.constant 0 : index
    %247 = vector.load %arg7[%c120, %c0_85] : memref<200x256xf32, #tpu.memory_space<vmem>>, vector<8x256xf32>
    tpu.vector_store %arg7[%c120, %c0_85], %246 {strides = array<i32>} : memref<200x256xf32, #tpu.memory_space<vmem>>, vector<8x256xf32>,
    %c1_i32_86 = arith.constant 1 : i32
    %248 = tpu.dynamic_rotate %243 by %c1_i32_86 dim 1 : vector<8x256xf32>, i32 -> vector<8x256xf32>
    %249 = vector.broadcast %94 : vector<1x256xf32> to vector<8x256xf32>
    %250 = arith.mulf %248, %249 : vector<8x256xf32>
    %c128 = arith.constant 128 : index
    %c0_87 = arith.constant 0 : index
    %251 = vector.load %arg7[%c128, %c0_87] : memref<200x256xf32, #tpu.memory_space<vmem>>, vector<8x256xf32>
    tpu.vector_store %arg7[%c128, %c0_87], %250 {strides = array<i32>} : memref<200x256xf32, #tpu.memory_space<vmem>>, vector<8x256xf32>,
    %c136 = arith.constant 136 : index
    %c0_88 = arith.constant 0 : index
    %252 = vector.load %arg7[%c136, %c0_88] : memref<200x256xf32, #tpu.memory_space<vmem>>, vector<8x256xf32>
    tpu.vector_store %arg7[%c136, %c0_88], %243 {strides = array<i32>} : memref<200x256xf32, #tpu.memory_space<vmem>>, vector<8x256xf32>,
    %c255_i32_89 = arith.constant 255 : i32
    %253 = tpu.dynamic_rotate %243 by %c255_i32_89 dim 1 : vector<8x256xf32>, i32 -> vector<8x256xf32>
    %254 = vector.broadcast %116 : vector<1x256xf32> to vector<8x256xf32>
    %255 = arith.mulf %253, %254 : vector<8x256xf32>
    %c144 = arith.constant 144 : index
    %c0_90 = arith.constant 0 : index
    %256 = vector.load %arg7[%c144, %c0_90] : memref<200x256xf32, #tpu.memory_space<vmem>>, vector<8x256xf32>
    tpu.vector_store %arg7[%c144, %c0_90], %255 {strides = array<i32>} : memref<200x256xf32, #tpu.memory_space<vmem>>, vector<8x256xf32>,
    %c254_i32_91 = arith.constant 254 : i32
    %257 = tpu.dynamic_rotate %243 by %c254_i32_91 dim 1 : vector<8x256xf32>, i32 -> vector<8x256xf32>
    %258 = vector.broadcast %138 : vector<1x256xf32> to vector<8x256xf32>
    %259 = arith.mulf %257, %258 : vector<8x256xf32>
    %c152 = arith.constant 152 : index
    %c0_92 = arith.constant 0 : index
    %260 = vector.load %arg7[%c152, %c0_92] : memref<200x256xf32, #tpu.memory_space<vmem>>, vector<8x256xf32>
    tpu.vector_store %arg7[%c152, %c0_92], %259 {strides = array<i32>} : memref<200x256xf32, #tpu.memory_space<vmem>>, vector<8x256xf32>,
    %c224_i32 = arith.constant 224 : i32
    %261 = tpu.dynamic_rotate %183 by %c224_i32 dim 1 : vector<8x256xf32>, i32 -> vector<8x256xf32>
    %262 = vector.broadcast %127 : vector<1x256xf32> to vector<8x256xf32>
    %263 = arith.mulf %261, %262 : vector<8x256xf32>
    %c2_i32_93 = arith.constant 2 : i32
    %264 = tpu.dynamic_rotate %263 by %c2_i32_93 dim 1 : vector<8x256xf32>, i32 -> vector<8x256xf32>
    %265 = vector.broadcast %72 : vector<1x256xf32> to vector<8x256xf32>
    %266 = arith.mulf %264, %265 : vector<8x256xf32>
    %c160 = arith.constant 160 : index
    %c0_94 = arith.constant 0 : index
    %267 = vector.load %arg7[%c160, %c0_94] : memref<200x256xf32, #tpu.memory_space<vmem>>, vector<8x256xf32>
    tpu.vector_store %arg7[%c160, %c0_94], %266 {strides = array<i32>} : memref<200x256xf32, #tpu.memory_space<vmem>>, vector<8x256xf32>,
    %c1_i32_95 = arith.constant 1 : i32
    %268 = tpu.dynamic_rotate %263 by %c1_i32_95 dim 1 : vector<8x256xf32>, i32 -> vector<8x256xf32>
    %269 = vector.broadcast %94 : vector<1x256xf32> to vector<8x256xf32>
    %270 = arith.mulf %268, %269 : vector<8x256xf32>
    %c168 = arith.constant 168 : index
    %c0_96 = arith.constant 0 : index
    %271 = vector.load %arg7[%c168, %c0_96] : memref<200x256xf32, #tpu.memory_space<vmem>>, vector<8x256xf32>
    tpu.vector_store %arg7[%c168, %c0_96], %270 {strides = array<i32>} : memref<200x256xf32, #tpu.memory_space<vmem>>, vector<8x256xf32>,
    %c176 = arith.constant 176 : index
    %c0_97 = arith.constant 0 : index
    %272 = vector.load %arg7[%c176, %c0_97] : memref<200x256xf32, #tpu.memory_space<vmem>>, vector<8x256xf32>
    tpu.vector_store %arg7[%c176, %c0_97], %263 {strides = array<i32>} : memref<200x256xf32, #tpu.memory_space<vmem>>, vector<8x256xf32>,
    %c255_i32_98 = arith.constant 255 : i32
    %273 = tpu.dynamic_rotate %263 by %c255_i32_98 dim 1 : vector<8x256xf32>, i32 -> vector<8x256xf32>
    %274 = vector.broadcast %116 : vector<1x256xf32> to vector<8x256xf32>
    %275 = arith.mulf %273, %274 : vector<8x256xf32>
    %c184 = arith.constant 184 : index
    %c0_99 = arith.constant 0 : index
    %276 = vector.load %arg7[%c184, %c0_99] : memref<200x256xf32, #tpu.memory_space<vmem>>, vector<8x256xf32>
    tpu.vector_store %arg7[%c184, %c0_99], %275 {strides = array<i32>} : memref<200x256xf32, #tpu.memory_space<vmem>>, vector<8x256xf32>,
    %c254_i32_100 = arith.constant 254 : i32
    %277 = tpu.dynamic_rotate %263 by %c254_i32_100 dim 1 : vector<8x256xf32>, i32 -> vector<8x256xf32>
    %278 = vector.broadcast %138 : vector<1x256xf32> to vector<8x256xf32>
    %279 = arith.mulf %277, %278 : vector<8x256xf32>
    %c192 = arith.constant 192 : index
    %c0_101 = arith.constant 0 : index
    %280 = vector.load %arg7[%c192, %c0_101] : memref<200x256xf32, #tpu.memory_space<vmem>>, vector<8x256xf32>
    tpu.vector_store %arg7[%c192, %c0_101], %279 {strides = array<i32>} : memref<200x256xf32, #tpu.memory_space<vmem>>, vector<8x256xf32>,
    %c0_102 = arith.constant 0 : index
    %c0_103 = arith.constant 0 : index
    %281 = vector.load %arg2[%c0_102, %c0_103] : memref<32x200xf32, #tpu.memory_space<vmem>>, vector<32x200xf32>
    %c0_104 = arith.constant 0 : index
    %c0_105 = arith.constant 0 : index
    %282 = vector.load %arg7[%c0_104, %c0_105] : memref<200x256xf32, #tpu.memory_space<vmem>>, vector<200x256xf32>
    %cst = arith.constant dense<0.000000e+00> : vector<32x256xf32>
    %283 = tpu.matmul %281, %282, %cst {dimension_numbers = #tpu.dot_dimension_numbers<[1], [0], [0], [1], [0, 0, 1, 1], [], []>} : vector<32x200xf32>, vector<200x256xf32>, vector<32x256xf32> -> vector<32x256xf32>
    %cst_106 = arith.constant 0.000000e+00 : f32
    %284 = vector.broadcast %cst_106 : f32 to vector<32x256xf32>
    %285 = arith.maximumf %283, %284 : vector<32x256xf32>
    %c0_107 = arith.constant 0 : index
    %c0_108 = arith.constant 0 : index
    %286 = vector.load %arg3[%c0_107, %c0_108] : memref<80x81xf32, #tpu.memory_space<vmem>>, vector<32x25xf32>
    %cst_109 = arith.constant 0.000000e+00 : f32
    %287 = vector.broadcast %cst_109 : f32 to vector<32x256xf32>
    %c32_i32_110 = arith.constant 32 : i32
    %288 = tpu.dynamic_rotate %285 by %c32_i32_110 dim 1 : vector<32x256xf32>, i32 -> vector<32x256xf32>
    %289 = vector.broadcast %61 : vector<1x256xf32> to vector<32x256xf32>
    %290 = arith.mulf %288, %289 : vector<32x256xf32>
    %c2_i32_111 = arith.constant 2 : i32
    %291 = tpu.dynamic_rotate %290 by %c2_i32_111 dim 1 : vector<32x256xf32>, i32 -> vector<32x256xf32>
    %292 = vector.broadcast %72 : vector<1x256xf32> to vector<32x256xf32>
    %293 = arith.mulf %291, %292 : vector<32x256xf32>
    %294 = vector.extract_strided_slice %286 {offsets = [0, 0], sizes = [32, 1], strides = [1, 1]} : vector<32x25xf32> to vector<32x1xf32>
    %295 = vector.broadcast %294 : vector<32x1xf32> to vector<32x256xf32>
    %296 = arith.mulf %293, %295 : vector<32x256xf32>
    %297 = arith.addf %287, %296 : vector<32x256xf32>
    %c1_i32_112 = arith.constant 1 : i32
    %298 = tpu.dynamic_rotate %290 by %c1_i32_112 dim 1 : vector<32x256xf32>, i32 -> vector<32x256xf32>
    %299 = vector.broadcast %94 : vector<1x256xf32> to vector<32x256xf32>
    %300 = arith.mulf %298, %299 : vector<32x256xf32>
    %301 = vector.extract_strided_slice %286 {offsets = [0, 1], sizes = [32, 1], strides = [1, 1]} : vector<32x25xf32> to vector<32x1xf32>
    %302 = vector.broadcast %301 : vector<32x1xf32> to vector<32x256xf32>
    %303 = arith.mulf %300, %302 : vector<32x256xf32>
    %304 = arith.addf %297, %303 : vector<32x256xf32>
    %305 = vector.extract_strided_slice %286 {offsets = [0, 2], sizes = [32, 1], strides = [1, 1]} : vector<32x25xf32> to vector<32x1xf32>
    %306 = vector.broadcast %305 : vector<32x1xf32> to vector<32x256xf32>
    %307 = arith.mulf %290, %306 : vector<32x256xf32>
    %308 = arith.addf %304, %307 : vector<32x256xf32>
    %c255_i32_113 = arith.constant 255 : i32
    %309 = tpu.dynamic_rotate %290 by %c255_i32_113 dim 1 : vector<32x256xf32>, i32 -> vector<32x256xf32>
    %310 = vector.broadcast %116 : vector<1x256xf32> to vector<32x256xf32>
    %311 = arith.mulf %309, %310 : vector<32x256xf32>
    %312 = vector.extract_strided_slice %286 {offsets = [0, 3], sizes = [32, 1], strides = [1, 1]} : vector<32x25xf32> to vector<32x1xf32>
    %313 = vector.broadcast %312 : vector<32x1xf32> to vector<32x256xf32>
    %314 = arith.mulf %311, %313 : vector<32x256xf32>
    %315 = arith.addf %308, %314 : vector<32x256xf32>
    %c254_i32_114 = arith.constant 254 : i32
    %316 = tpu.dynamic_rotate %290 by %c254_i32_114 dim 1 : vector<32x256xf32>, i32 -> vector<32x256xf32>
    %317 = vector.broadcast %138 : vector<1x256xf32> to vector<32x256xf32>
    %318 = arith.mulf %316, %317 : vector<32x256xf32>
    %319 = vector.extract_strided_slice %286 {offsets = [0, 4], sizes = [32, 1], strides = [1, 1]} : vector<32x25xf32> to vector<32x1xf32>
    %320 = vector.broadcast %319 : vector<32x1xf32> to vector<32x256xf32>
    %321 = arith.mulf %318, %320 : vector<32x256xf32>
    %322 = arith.addf %315, %321 : vector<32x256xf32>
    %c16_i32_115 = arith.constant 16 : i32
    %323 = tpu.dynamic_rotate %285 by %c16_i32_115 dim 1 : vector<32x256xf32>, i32 -> vector<32x256xf32>
    %324 = vector.broadcast %83 : vector<1x256xf32> to vector<32x256xf32>
    %325 = arith.mulf %323, %324 : vector<32x256xf32>
    %c2_i32_116 = arith.constant 2 : i32
    %326 = tpu.dynamic_rotate %325 by %c2_i32_116 dim 1 : vector<32x256xf32>, i32 -> vector<32x256xf32>
    %327 = vector.broadcast %72 : vector<1x256xf32> to vector<32x256xf32>
    %328 = arith.mulf %326, %327 : vector<32x256xf32>
    %329 = vector.extract_strided_slice %286 {offsets = [0, 5], sizes = [32, 1], strides = [1, 1]} : vector<32x25xf32> to vector<32x1xf32>
    %330 = vector.broadcast %329 : vector<32x1xf32> to vector<32x256xf32>
    %331 = arith.mulf %328, %330 : vector<32x256xf32>
    %332 = arith.addf %322, %331 : vector<32x256xf32>
    %c1_i32_117 = arith.constant 1 : i32
    %333 = tpu.dynamic_rotate %325 by %c1_i32_117 dim 1 : vector<32x256xf32>, i32 -> vector<32x256xf32>
    %334 = vector.broadcast %94 : vector<1x256xf32> to vector<32x256xf32>
    %335 = arith.mulf %333, %334 : vector<32x256xf32>
    %336 = vector.extract_strided_slice %286 {offsets = [0, 6], sizes = [32, 1], strides = [1, 1]} : vector<32x25xf32> to vector<32x1xf32>
    %337 = vector.broadcast %336 : vector<32x1xf32> to vector<32x256xf32>
    %338 = arith.mulf %335, %337 : vector<32x256xf32>
    %339 = arith.addf %332, %338 : vector<32x256xf32>
    %340 = vector.extract_strided_slice %286 {offsets = [0, 7], sizes = [32, 1], strides = [1, 1]} : vector<32x25xf32> to vector<32x1xf32>
    %341 = vector.broadcast %340 : vector<32x1xf32> to vector<32x256xf32>
    %342 = arith.mulf %325, %341 : vector<32x256xf32>
    %343 = arith.addf %339, %342 : vector<32x256xf32>
    %c255_i32_118 = arith.constant 255 : i32
    %344 = tpu.dynamic_rotate %325 by %c255_i32_118 dim 1 : vector<32x256xf32>, i32 -> vector<32x256xf32>
    %345 = vector.broadcast %116 : vector<1x256xf32> to vector<32x256xf32>
    %346 = arith.mulf %344, %345 : vector<32x256xf32>
    %347 = vector.extract_strided_slice %286 {offsets = [0, 8], sizes = [32, 1], strides = [1, 1]} : vector<32x25xf32> to vector<32x1xf32>
    %348 = vector.broadcast %347 : vector<32x1xf32> to vector<32x256xf32>
    %349 = arith.mulf %346, %348 : vector<32x256xf32>
    %350 = arith.addf %343, %349 : vector<32x256xf32>
    %c254_i32_119 = arith.constant 254 : i32
    %351 = tpu.dynamic_rotate %325 by %c254_i32_119 dim 1 : vector<32x256xf32>, i32 -> vector<32x256xf32>
    %352 = vector.broadcast %138 : vector<1x256xf32> to vector<32x256xf32>
    %353 = arith.mulf %351, %352 : vector<32x256xf32>
    %354 = vector.extract_strided_slice %286 {offsets = [0, 9], sizes = [32, 1], strides = [1, 1]} : vector<32x25xf32> to vector<32x1xf32>
    %355 = vector.broadcast %354 : vector<32x1xf32> to vector<32x256xf32>
    %356 = arith.mulf %353, %355 : vector<32x256xf32>
    %357 = arith.addf %350, %356 : vector<32x256xf32>
    %c2_i32_120 = arith.constant 2 : i32
    %358 = tpu.dynamic_rotate %285 by %c2_i32_120 dim 1 : vector<32x256xf32>, i32 -> vector<32x256xf32>
    %359 = vector.broadcast %72 : vector<1x256xf32> to vector<32x256xf32>
    %360 = arith.mulf %358, %359 : vector<32x256xf32>
    %361 = vector.extract_strided_slice %286 {offsets = [0, 10], sizes = [32, 1], strides = [1, 1]} : vector<32x25xf32> to vector<32x1xf32>
    %362 = vector.broadcast %361 : vector<32x1xf32> to vector<32x256xf32>
    %363 = arith.mulf %360, %362 : vector<32x256xf32>
    %364 = arith.addf %357, %363 : vector<32x256xf32>
    %c1_i32_121 = arith.constant 1 : i32
    %365 = tpu.dynamic_rotate %285 by %c1_i32_121 dim 1 : vector<32x256xf32>, i32 -> vector<32x256xf32>
    %366 = vector.broadcast %94 : vector<1x256xf32> to vector<32x256xf32>
    %367 = arith.mulf %365, %366 : vector<32x256xf32>
    %368 = vector.extract_strided_slice %286 {offsets = [0, 11], sizes = [32, 1], strides = [1, 1]} : vector<32x25xf32> to vector<32x1xf32>
    %369 = vector.broadcast %368 : vector<32x1xf32> to vector<32x256xf32>
    %370 = arith.mulf %367, %369 : vector<32x256xf32>
    %371 = arith.addf %364, %370 : vector<32x256xf32>
    %372 = vector.extract_strided_slice %286 {offsets = [0, 12], sizes = [32, 1], strides = [1, 1]} : vector<32x25xf32> to vector<32x1xf32>
    %373 = vector.broadcast %372 : vector<32x1xf32> to vector<32x256xf32>
    %374 = arith.mulf %285, %373 : vector<32x256xf32>
    %375 = arith.addf %371, %374 : vector<32x256xf32>
    %c255_i32_122 = arith.constant 255 : i32
    %376 = tpu.dynamic_rotate %285 by %c255_i32_122 dim 1 : vector<32x256xf32>, i32 -> vector<32x256xf32>
    %377 = vector.broadcast %116 : vector<1x256xf32> to vector<32x256xf32>
    %378 = arith.mulf %376, %377 : vector<32x256xf32>
    %379 = vector.extract_strided_slice %286 {offsets = [0, 13], sizes = [32, 1], strides = [1, 1]} : vector<32x25xf32> to vector<32x1xf32>
    %380 = vector.broadcast %379 : vector<32x1xf32> to vector<32x256xf32>
    %381 = arith.mulf %378, %380 : vector<32x256xf32>
    %382 = arith.addf %375, %381 : vector<32x256xf32>
    %c254_i32_123 = arith.constant 254 : i32
    %383 = tpu.dynamic_rotate %285 by %c254_i32_123 dim 1 : vector<32x256xf32>, i32 -> vector<32x256xf32>
    %384 = vector.broadcast %138 : vector<1x256xf32> to vector<32x256xf32>
    %385 = arith.mulf %383, %384 : vector<32x256xf32>
    %386 = vector.extract_strided_slice %286 {offsets = [0, 14], sizes = [32, 1], strides = [1, 1]} : vector<32x25xf32> to vector<32x1xf32>
    %387 = vector.broadcast %386 : vector<32x1xf32> to vector<32x256xf32>
    %388 = arith.mulf %385, %387 : vector<32x256xf32>
    %389 = arith.addf %382, %388 : vector<32x256xf32>
    %c240_i32_124 = arith.constant 240 : i32
    %390 = tpu.dynamic_rotate %285 by %c240_i32_124 dim 1 : vector<32x256xf32>, i32 -> vector<32x256xf32>
    %391 = vector.broadcast %105 : vector<1x256xf32> to vector<32x256xf32>
    %392 = arith.mulf %390, %391 : vector<32x256xf32>
    %c2_i32_125 = arith.constant 2 : i32
    %393 = tpu.dynamic_rotate %392 by %c2_i32_125 dim 1 : vector<32x256xf32>, i32 -> vector<32x256xf32>
    %394 = vector.broadcast %72 : vector<1x256xf32> to vector<32x256xf32>
    %395 = arith.mulf %393, %394 : vector<32x256xf32>
    %396 = vector.extract_strided_slice %286 {offsets = [0, 15], sizes = [32, 1], strides = [1, 1]} : vector<32x25xf32> to vector<32x1xf32>
    %397 = vector.broadcast %396 : vector<32x1xf32> to vector<32x256xf32>
    %398 = arith.mulf %395, %397 : vector<32x256xf32>
    %399 = arith.addf %389, %398 : vector<32x256xf32>
    %c1_i32_126 = arith.constant 1 : i32
    %400 = tpu.dynamic_rotate %392 by %c1_i32_126 dim 1 : vector<32x256xf32>, i32 -> vector<32x256xf32>
    %401 = vector.broadcast %94 : vector<1x256xf32> to vector<32x256xf32>
    %402 = arith.mulf %400, %401 : vector<32x256xf32>
    %403 = vector.extract_strided_slice %286 {offsets = [0, 16], sizes = [32, 1], strides = [1, 1]} : vector<32x25xf32> to vector<32x1xf32>
    %404 = vector.broadcast %403 : vector<32x1xf32> to vector<32x256xf32>
    %405 = arith.mulf %402, %404 : vector<32x256xf32>
    %406 = arith.addf %399, %405 : vector<32x256xf32>
    %407 = vector.extract_strided_slice %286 {offsets = [0, 17], sizes = [32, 1], strides = [1, 1]} : vector<32x25xf32> to vector<32x1xf32>
    %408 = vector.broadcast %407 : vector<32x1xf32> to vector<32x256xf32>
    %409 = arith.mulf %392, %408 : vector<32x256xf32>
    %410 = arith.addf %406, %409 : vector<32x256xf32>
    %c255_i32_127 = arith.constant 255 : i32
    %411 = tpu.dynamic_rotate %392 by %c255_i32_127 dim 1 : vector<32x256xf32>, i32 -> vector<32x256xf32>
    %412 = vector.broadcast %116 : vector<1x256xf32> to vector<32x256xf32>
    %413 = arith.mulf %411, %412 : vector<32x256xf32>
    %414 = vector.extract_strided_slice %286 {offsets = [0, 18], sizes = [32, 1], strides = [1, 1]} : vector<32x25xf32> to vector<32x1xf32>
    %415 = vector.broadcast %414 : vector<32x1xf32> to vector<32x256xf32>
    %416 = arith.mulf %413, %415 : vector<32x256xf32>
    %417 = arith.addf %410, %416 : vector<32x256xf32>
    %c254_i32_128 = arith.constant 254 : i32
    %418 = tpu.dynamic_rotate %392 by %c254_i32_128 dim 1 : vector<32x256xf32>, i32 -> vector<32x256xf32>
    %419 = vector.broadcast %138 : vector<1x256xf32> to vector<32x256xf32>
    %420 = arith.mulf %418, %419 : vector<32x256xf32>
    %421 = vector.extract_strided_slice %286 {offsets = [0, 19], sizes = [32, 1], strides = [1, 1]} : vector<32x25xf32> to vector<32x1xf32>
    %422 = vector.broadcast %421 : vector<32x1xf32> to vector<32x256xf32>
    %423 = arith.mulf %420, %422 : vector<32x256xf32>
    %424 = arith.addf %417, %423 : vector<32x256xf32>
    %c224_i32_129 = arith.constant 224 : i32
    %425 = tpu.dynamic_rotate %285 by %c224_i32_129 dim 1 : vector<32x256xf32>, i32 -> vector<32x256xf32>
    %426 = vector.broadcast %127 : vector<1x256xf32> to vector<32x256xf32>
    %427 = arith.mulf %425, %426 : vector<32x256xf32>
    %c2_i32_130 = arith.constant 2 : i32
    %428 = tpu.dynamic_rotate %427 by %c2_i32_130 dim 1 : vector<32x256xf32>, i32 -> vector<32x256xf32>
    %429 = vector.broadcast %72 : vector<1x256xf32> to vector<32x256xf32>
    %430 = arith.mulf %428, %429 : vector<32x256xf32>
    %431 = vector.extract_strided_slice %286 {offsets = [0, 20], sizes = [32, 1], strides = [1, 1]} : vector<32x25xf32> to vector<32x1xf32>
    %432 = vector.broadcast %431 : vector<32x1xf32> to vector<32x256xf32>
    %433 = arith.mulf %430, %432 : vector<32x256xf32>
    %434 = arith.addf %424, %433 : vector<32x256xf32>
    %c1_i32_131 = arith.constant 1 : i32
    %435 = tpu.dynamic_rotate %427 by %c1_i32_131 dim 1 : vector<32x256xf32>, i32 -> vector<32x256xf32>
    %436 = vector.broadcast %94 : vector<1x256xf32> to vector<32x256xf32>
    %437 = arith.mulf %435, %436 : vector<32x256xf32>
    %438 = vector.extract_strided_slice %286 {offsets = [0, 21], sizes = [32, 1], strides = [1, 1]} : vector<32x25xf32> to vector<32x1xf32>
    %439 = vector.broadcast %438 : vector<32x1xf32> to vector<32x256xf32>
    %440 = arith.mulf %437, %439 : vector<32x256xf32>
    %441 = arith.addf %434, %440 : vector<32x256xf32>
    %442 = vector.extract_strided_slice %286 {offsets = [0, 22], sizes = [32, 1], strides = [1, 1]} : vector<32x25xf32> to vector<32x1xf32>
    %443 = vector.broadcast %442 : vector<32x1xf32> to vector<32x256xf32>
    %444 = arith.mulf %427, %443 : vector<32x256xf32>
    %445 = arith.addf %441, %444 : vector<32x256xf32>
    %c255_i32_132 = arith.constant 255 : i32
    %446 = tpu.dynamic_rotate %427 by %c255_i32_132 dim 1 : vector<32x256xf32>, i32 -> vector<32x256xf32>
    %447 = vector.broadcast %116 : vector<1x256xf32> to vector<32x256xf32>
    %448 = arith.mulf %446, %447 : vector<32x256xf32>
    %449 = vector.extract_strided_slice %286 {offsets = [0, 23], sizes = [32, 1], strides = [1, 1]} : vector<32x25xf32> to vector<32x1xf32>
    %450 = vector.broadcast %449 : vector<32x1xf32> to vector<32x256xf32>
    %451 = arith.mulf %448, %450 : vector<32x256xf32>
    %452 = arith.addf %445, %451 : vector<32x256xf32>
    %c254_i32_133 = arith.constant 254 : i32
    %453 = tpu.dynamic_rotate %427 by %c254_i32_133 dim 1 : vector<32x256xf32>, i32 -> vector<32x256xf32>
    %454 = vector.broadcast %138 : vector<1x256xf32> to vector<32x256xf32>
    %455 = arith.mulf %453, %454 : vector<32x256xf32>
    %456 = vector.extract_strided_slice %286 {offsets = [0, 24], sizes = [32, 1], strides = [1, 1]} : vector<32x25xf32> to vector<32x1xf32>
    %457 = vector.broadcast %456 : vector<32x1xf32> to vector<32x256xf32>
    %458 = arith.mulf %455, %457 : vector<32x256xf32>
    %459 = arith.addf %452, %458 : vector<32x256xf32>
    %cst_134 = arith.constant 0.000000e+00 : f32
    %460 = vector.broadcast %cst_134 : f32 to vector<32x256xf32>
    %461 = arith.maximumf %459, %460 : vector<32x256xf32>
    %c0_135 = arith.constant 0 : index
    %c0_136 = arith.constant 0 : index
    %462 = vector.load %arg4[%c0_135, %c0_136] : memref<184x64xf32, #tpu.memory_space<vmem>>, vector<64x32xf32>
    %cst_137 = arith.constant dense<0.000000e+00> : vector<64x256xf32>
    %463 = tpu.matmul %462, %461, %cst_137 {dimension_numbers = #tpu.dot_dimension_numbers<[1], [0], [0], [1], [0, 0, 1, 1], [], []>} : vector<64x32xf32>, vector<32x256xf32>, vector<64x256xf32> -> vector<64x256xf32>
    %c0_138 = arith.constant 0 : index
    %c0_139 = arith.constant 0 : index
    %464 = vector.load %arg5[%c0_138, %c0_139] : memref<64x8xf32, #tpu.memory_space<vmem>>, vector<64x1xf32>
    %465 = vector.broadcast %464 : vector<64x1xf32> to vector<64x256xf32>
    %466 = arith.addf %463, %465 : vector<64x256xf32>
    %cst_140 = arith.constant 0.000000e+00 : f32
    %467 = vector.broadcast %cst_140 : f32 to vector<64x256xf32>
    %468 = arith.maximumf %466, %467 : vector<64x256xf32>
    %c64_141 = arith.constant 64 : index
    %c0_142 = arith.constant 0 : index
    %469 = vector.load %arg4[%c64_141, %c0_142] : memref<184x64xf32, #tpu.memory_space<vmem>>, vector<16x64xf32>
    %cst_143 = arith.constant dense<0.000000e+00> : vector<16x256xf32>
    %470 = tpu.matmul %469, %468, %cst_143 {dimension_numbers = #tpu.dot_dimension_numbers<[1], [0], [0], [1], [0, 0, 1, 1], [], []>} : vector<16x64xf32>, vector<64x256xf32>, vector<16x256xf32> -> vector<16x256xf32>
    %c0_144 = arith.constant 0 : index
    %c1 = arith.constant 1 : index
    %471 = vector.load %arg5[%c0_144, %c1] : memref<64x8xf32, #tpu.memory_space<vmem>>, vector<16x1xf32>
    %472 = vector.broadcast %471 : vector<16x1xf32> to vector<16x256xf32>
    %473 = arith.addf %470, %472 : vector<16x256xf32>
    %cst_145 = arith.constant 0.000000e+00 : f32
    %474 = vector.broadcast %cst_145 : f32 to vector<16x256xf32>
    %475 = arith.maximumf %473, %474 : vector<16x256xf32>
    %c32_146 = arith.constant 32 : index
    %c0_147 = arith.constant 0 : index
    %476 = vector.load %arg3[%c32_146, %c0_147] : memref<80x81xf32, #tpu.memory_space<vmem>>, vector<16x9xf32>
    %c0_148 = arith.constant 0 : index
    %c2 = arith.constant 2 : index
    %477 = vector.load %arg5[%c0_148, %c2] : memref<64x8xf32, #tpu.memory_space<vmem>>, vector<16x1xf32>
    %478 = vector.shape_cast %477 : vector<16x1xf32> to vector<16x1xf32>
    %479 = vector.broadcast %478 : vector<16x1xf32> to vector<16x256xf32>
    %c16_i32_149 = arith.constant 16 : i32
    %480 = tpu.dynamic_rotate %475 by %c16_i32_149 dim 1 : vector<16x256xf32>, i32 -> vector<16x256xf32>
    %481 = vector.broadcast %83 : vector<1x256xf32> to vector<16x256xf32>
    %482 = arith.mulf %480, %481 : vector<16x256xf32>
    %c1_i32_150 = arith.constant 1 : i32
    %483 = tpu.dynamic_rotate %482 by %c1_i32_150 dim 1 : vector<16x256xf32>, i32 -> vector<16x256xf32>
    %484 = vector.broadcast %94 : vector<1x256xf32> to vector<16x256xf32>
    %485 = arith.mulf %483, %484 : vector<16x256xf32>
    %486 = vector.extract_strided_slice %476 {offsets = [0, 0], sizes = [16, 1], strides = [1, 1]} : vector<16x9xf32> to vector<16x1xf32>
    %487 = vector.broadcast %486 : vector<16x1xf32> to vector<16x256xf32>
    %488 = arith.mulf %485, %487 : vector<16x256xf32>
    %489 = arith.addf %479, %488 : vector<16x256xf32>
    %490 = vector.extract_strided_slice %476 {offsets = [0, 1], sizes = [16, 1], strides = [1, 1]} : vector<16x9xf32> to vector<16x1xf32>
    %491 = vector.broadcast %490 : vector<16x1xf32> to vector<16x256xf32>
    %492 = arith.mulf %482, %491 : vector<16x256xf32>
    %493 = arith.addf %489, %492 : vector<16x256xf32>
    %c255_i32_151 = arith.constant 255 : i32
    %494 = tpu.dynamic_rotate %482 by %c255_i32_151 dim 1 : vector<16x256xf32>, i32 -> vector<16x256xf32>
    %495 = vector.broadcast %116 : vector<1x256xf32> to vector<16x256xf32>
    %496 = arith.mulf %494, %495 : vector<16x256xf32>
    %497 = vector.extract_strided_slice %476 {offsets = [0, 2], sizes = [16, 1], strides = [1, 1]} : vector<16x9xf32> to vector<16x1xf32>
    %498 = vector.broadcast %497 : vector<16x1xf32> to vector<16x256xf32>
    %499 = arith.mulf %496, %498 : vector<16x256xf32>
    %500 = arith.addf %493, %499 : vector<16x256xf32>
    %c1_i32_152 = arith.constant 1 : i32
    %501 = tpu.dynamic_rotate %475 by %c1_i32_152 dim 1 : vector<16x256xf32>, i32 -> vector<16x256xf32>
    %502 = vector.broadcast %94 : vector<1x256xf32> to vector<16x256xf32>
    %503 = arith.mulf %501, %502 : vector<16x256xf32>
    %504 = vector.extract_strided_slice %476 {offsets = [0, 3], sizes = [16, 1], strides = [1, 1]} : vector<16x9xf32> to vector<16x1xf32>
    %505 = vector.broadcast %504 : vector<16x1xf32> to vector<16x256xf32>
    %506 = arith.mulf %503, %505 : vector<16x256xf32>
    %507 = arith.addf %500, %506 : vector<16x256xf32>
    %508 = vector.extract_strided_slice %476 {offsets = [0, 4], sizes = [16, 1], strides = [1, 1]} : vector<16x9xf32> to vector<16x1xf32>
    %509 = vector.broadcast %508 : vector<16x1xf32> to vector<16x256xf32>
    %510 = arith.mulf %475, %509 : vector<16x256xf32>
    %511 = arith.addf %507, %510 : vector<16x256xf32>
    %c255_i32_153 = arith.constant 255 : i32
    %512 = tpu.dynamic_rotate %475 by %c255_i32_153 dim 1 : vector<16x256xf32>, i32 -> vector<16x256xf32>
    %513 = vector.broadcast %116 : vector<1x256xf32> to vector<16x256xf32>
    %514 = arith.mulf %512, %513 : vector<16x256xf32>
    %515 = vector.extract_strided_slice %476 {offsets = [0, 5], sizes = [16, 1], strides = [1, 1]} : vector<16x9xf32> to vector<16x1xf32>
    %516 = vector.broadcast %515 : vector<16x1xf32> to vector<16x256xf32>
    %517 = arith.mulf %514, %516 : vector<16x256xf32>
    %518 = arith.addf %511, %517 : vector<16x256xf32>
    %c240_i32_154 = arith.constant 240 : i32
    %519 = tpu.dynamic_rotate %475 by %c240_i32_154 dim 1 : vector<16x256xf32>, i32 -> vector<16x256xf32>
    %520 = vector.broadcast %105 : vector<1x256xf32> to vector<16x256xf32>
    %521 = arith.mulf %519, %520 : vector<16x256xf32>
    %c1_i32_155 = arith.constant 1 : i32
    %522 = tpu.dynamic_rotate %521 by %c1_i32_155 dim 1 : vector<16x256xf32>, i32 -> vector<16x256xf32>
    %523 = vector.broadcast %94 : vector<1x256xf32> to vector<16x256xf32>
    %524 = arith.mulf %522, %523 : vector<16x256xf32>
    %525 = vector.extract_strided_slice %476 {offsets = [0, 6], sizes = [16, 1], strides = [1, 1]} : vector<16x9xf32> to vector<16x1xf32>
    %526 = vector.broadcast %525 : vector<16x1xf32> to vector<16x256xf32>
    %527 = arith.mulf %524, %526 : vector<16x256xf32>
    %528 = arith.addf %518, %527 : vector<16x256xf32>
    %529 = vector.extract_strided_slice %476 {offsets = [0, 7], sizes = [16, 1], strides = [1, 1]} : vector<16x9xf32> to vector<16x1xf32>
    %530 = vector.broadcast %529 : vector<16x1xf32> to vector<16x256xf32>
    %531 = arith.mulf %521, %530 : vector<16x256xf32>
    %532 = arith.addf %528, %531 : vector<16x256xf32>
    %c255_i32_156 = arith.constant 255 : i32
    %533 = tpu.dynamic_rotate %521 by %c255_i32_156 dim 1 : vector<16x256xf32>, i32 -> vector<16x256xf32>
    %534 = vector.broadcast %116 : vector<1x256xf32> to vector<16x256xf32>
    %535 = arith.mulf %533, %534 : vector<16x256xf32>
    %536 = vector.extract_strided_slice %476 {offsets = [0, 8], sizes = [16, 1], strides = [1, 1]} : vector<16x9xf32> to vector<16x1xf32>
    %537 = vector.broadcast %536 : vector<16x1xf32> to vector<16x256xf32>
    %538 = arith.mulf %535, %537 : vector<16x256xf32>
    %539 = arith.addf %532, %538 : vector<16x256xf32>
    %cst_157 = arith.constant 0.000000e+00 : f32
    %540 = vector.broadcast %cst_157 : f32 to vector<16x256xf32>
    %541 = arith.maximumf %539, %540 : vector<16x256xf32>
    %c80_158 = arith.constant 80 : index
    %c0_159 = arith.constant 0 : index
    %542 = vector.load %arg4[%c80_158, %c0_159] : memref<184x64xf32, #tpu.memory_space<vmem>>, vector<64x16xf32>
    %cst_160 = arith.constant dense<0.000000e+00> : vector<64x256xf32>
    %543 = tpu.matmul %542, %541, %cst_160 {dimension_numbers = #tpu.dot_dimension_numbers<[1], [0], [0], [1], [0, 0, 1, 1], [], []>} : vector<64x16xf32>, vector<16x256xf32>, vector<64x256xf32> -> vector<64x256xf32>
    %c0_161 = arith.constant 0 : index
    %c3 = arith.constant 3 : index
    %544 = vector.load %arg5[%c0_161, %c3] : memref<64x8xf32, #tpu.memory_space<vmem>>, vector<64x1xf32>
    %545 = vector.broadcast %544 : vector<64x1xf32> to vector<64x256xf32>
    %546 = arith.addf %543, %545 : vector<64x256xf32>
    %547 = arith.addf %546, %468 : vector<64x256xf32>
    %cst_162 = arith.constant 0.000000e+00 : f32
    %548 = vector.broadcast %cst_162 : f32 to vector<64x256xf32>
    %549 = arith.maximumf %547, %548 : vector<64x256xf32>
    %c144_163 = arith.constant 144 : index
    %c0_164 = arith.constant 0 : index
    %550 = vector.load %arg4[%c144_163, %c0_164] : memref<184x64xf32, #tpu.memory_space<vmem>>, vector<32x64xf32>
    %cst_165 = arith.constant dense<0.000000e+00> : vector<32x256xf32>
    %551 = tpu.matmul %550, %549, %cst_165 {dimension_numbers = #tpu.dot_dimension_numbers<[1], [0], [0], [1], [0, 0, 1, 1], [], []>} : vector<32x64xf32>, vector<64x256xf32>, vector<32x256xf32> -> vector<32x256xf32>
    %c0_166 = arith.constant 0 : index
    %c4 = arith.constant 4 : index
    %552 = vector.load %arg5[%c0_166, %c4] : memref<64x8xf32, #tpu.memory_space<vmem>>, vector<32x1xf32>
    %553 = vector.broadcast %552 : vector<32x1xf32> to vector<32x256xf32>
    %554 = arith.addf %551, %553 : vector<32x256xf32>
    %cst_167 = arith.constant 0.000000e+00 : f32
    %555 = vector.broadcast %cst_167 : f32 to vector<32x256xf32>
    %556 = arith.maximumf %554, %555 : vector<32x256xf32>
    %c48_168 = arith.constant 48 : index
    %c0_169 = arith.constant 0 : index
    %557 = vector.load %arg3[%c48_168, %c0_169] : memref<80x81xf32, #tpu.memory_space<vmem>>, vector<32x81xf32>
    %c0_170 = arith.constant 0 : index
    %c5 = arith.constant 5 : index
    %558 = vector.load %arg5[%c0_170, %c5] : memref<64x8xf32, #tpu.memory_space<vmem>>, vector<32x1xf32>
    %559 = vector.shape_cast %558 : vector<32x1xf32> to vector<32x1xf32>
    %560 = vector.broadcast %559 : vector<32x1xf32> to vector<32x256xf32>
    %c64_i32 = arith.constant 64 : i32
    %561 = tpu.dynamic_rotate %556 by %c64_i32 dim 1 : vector<32x256xf32>, i32 -> vector<32x256xf32>
    %562 = vector.broadcast %17 : vector<1x256xf32> to vector<32x256xf32>
    %563 = arith.mulf %561, %562 : vector<32x256xf32>
    %c4_i32_171 = arith.constant 4 : i32
    %564 = tpu.dynamic_rotate %563 by %c4_i32_171 dim 1 : vector<32x256xf32>, i32 -> vector<32x256xf32>
    %565 = vector.broadcast %28 : vector<1x256xf32> to vector<32x256xf32>
    %566 = arith.mulf %564, %565 : vector<32x256xf32>
    %567 = vector.extract_strided_slice %557 {offsets = [0, 0], sizes = [32, 1], strides = [1, 1]} : vector<32x81xf32> to vector<32x1xf32>
    %568 = vector.broadcast %567 : vector<32x1xf32> to vector<32x256xf32>
    %569 = arith.mulf %566, %568 : vector<32x256xf32>
    %570 = arith.addf %560, %569 : vector<32x256xf32>
    %c3_i32_172 = arith.constant 3 : i32
    %571 = tpu.dynamic_rotate %563 by %c3_i32_172 dim 1 : vector<32x256xf32>, i32 -> vector<32x256xf32>
    %572 = vector.broadcast %50 : vector<1x256xf32> to vector<32x256xf32>
    %573 = arith.mulf %571, %572 : vector<32x256xf32>
    %574 = vector.extract_strided_slice %557 {offsets = [0, 1], sizes = [32, 1], strides = [1, 1]} : vector<32x81xf32> to vector<32x1xf32>
    %575 = vector.broadcast %574 : vector<32x1xf32> to vector<32x256xf32>
    %576 = arith.mulf %573, %575 : vector<32x256xf32>
    %577 = arith.addf %570, %576 : vector<32x256xf32>
    %c2_i32_173 = arith.constant 2 : i32
    %578 = tpu.dynamic_rotate %563 by %c2_i32_173 dim 1 : vector<32x256xf32>, i32 -> vector<32x256xf32>
    %579 = vector.broadcast %72 : vector<1x256xf32> to vector<32x256xf32>
    %580 = arith.mulf %578, %579 : vector<32x256xf32>
    %581 = vector.extract_strided_slice %557 {offsets = [0, 2], sizes = [32, 1], strides = [1, 1]} : vector<32x81xf32> to vector<32x1xf32>
    %582 = vector.broadcast %581 : vector<32x1xf32> to vector<32x256xf32>
    %583 = arith.mulf %580, %582 : vector<32x256xf32>
    %584 = arith.addf %577, %583 : vector<32x256xf32>
    %c1_i32_174 = arith.constant 1 : i32
    %585 = tpu.dynamic_rotate %563 by %c1_i32_174 dim 1 : vector<32x256xf32>, i32 -> vector<32x256xf32>
    %586 = vector.broadcast %94 : vector<1x256xf32> to vector<32x256xf32>
    %587 = arith.mulf %585, %586 : vector<32x256xf32>
    %588 = vector.extract_strided_slice %557 {offsets = [0, 3], sizes = [32, 1], strides = [1, 1]} : vector<32x81xf32> to vector<32x1xf32>
    %589 = vector.broadcast %588 : vector<32x1xf32> to vector<32x256xf32>
    %590 = arith.mulf %587, %589 : vector<32x256xf32>
    %591 = arith.addf %584, %590 : vector<32x256xf32>
    %592 = vector.extract_strided_slice %557 {offsets = [0, 4], sizes = [32, 1], strides = [1, 1]} : vector<32x81xf32> to vector<32x1xf32>
    %593 = vector.broadcast %592 : vector<32x1xf32> to vector<32x256xf32>
    %594 = arith.mulf %563, %593 : vector<32x256xf32>
    %595 = arith.addf %591, %594 : vector<32x256xf32>
    %c255_i32_175 = arith.constant 255 : i32
    %596 = tpu.dynamic_rotate %563 by %c255_i32_175 dim 1 : vector<32x256xf32>, i32 -> vector<32x256xf32>
    %597 = vector.broadcast %116 : vector<1x256xf32> to vector<32x256xf32>
    %598 = arith.mulf %596, %597 : vector<32x256xf32>
    %599 = vector.extract_strided_slice %557 {offsets = [0, 5], sizes = [32, 1], strides = [1, 1]} : vector<32x81xf32> to vector<32x1xf32>
    %600 = vector.broadcast %599 : vector<32x1xf32> to vector<32x256xf32>
    %601 = arith.mulf %598, %600 : vector<32x256xf32>
    %602 = arith.addf %595, %601 : vector<32x256xf32>
    %c254_i32_176 = arith.constant 254 : i32
    %603 = tpu.dynamic_rotate %563 by %c254_i32_176 dim 1 : vector<32x256xf32>, i32 -> vector<32x256xf32>
    %604 = vector.broadcast %138 : vector<1x256xf32> to vector<32x256xf32>
    %605 = arith.mulf %603, %604 : vector<32x256xf32>
    %606 = vector.extract_strided_slice %557 {offsets = [0, 6], sizes = [32, 1], strides = [1, 1]} : vector<32x81xf32> to vector<32x1xf32>
    %607 = vector.broadcast %606 : vector<32x1xf32> to vector<32x256xf32>
    %608 = arith.mulf %605, %607 : vector<32x256xf32>
    %609 = arith.addf %602, %608 : vector<32x256xf32>
    %c253_i32 = arith.constant 253 : i32
    %610 = tpu.dynamic_rotate %563 by %c253_i32 dim 1 : vector<32x256xf32>, i32 -> vector<32x256xf32>
    %611 = vector.broadcast %160 : vector<1x256xf32> to vector<32x256xf32>
    %612 = arith.mulf %610, %611 : vector<32x256xf32>
    %613 = vector.extract_strided_slice %557 {offsets = [0, 7], sizes = [32, 1], strides = [1, 1]} : vector<32x81xf32> to vector<32x1xf32>
    %614 = vector.broadcast %613 : vector<32x1xf32> to vector<32x256xf32>
    %615 = arith.mulf %612, %614 : vector<32x256xf32>
    %616 = arith.addf %609, %615 : vector<32x256xf32>
    %c252_i32 = arith.constant 252 : i32
    %617 = tpu.dynamic_rotate %563 by %c252_i32 dim 1 : vector<32x256xf32>, i32 -> vector<32x256xf32>
    %618 = vector.broadcast %182 : vector<1x256xf32> to vector<32x256xf32>
    %619 = arith.mulf %617, %618 : vector<32x256xf32>
    %620 = vector.extract_strided_slice %557 {offsets = [0, 8], sizes = [32, 1], strides = [1, 1]} : vector<32x81xf32> to vector<32x1xf32>
    %621 = vector.broadcast %620 : vector<32x1xf32> to vector<32x256xf32>
    %622 = arith.mulf %619, %621 : vector<32x256xf32>
    %623 = arith.addf %616, %622 : vector<32x256xf32>
    %c48_i32 = arith.constant 48 : i32
    %624 = tpu.dynamic_rotate %556 by %c48_i32 dim 1 : vector<32x256xf32>, i32 -> vector<32x256xf32>
    %625 = vector.broadcast %39 : vector<1x256xf32> to vector<32x256xf32>
    %626 = arith.mulf %624, %625 : vector<32x256xf32>
    %c4_i32_177 = arith.constant 4 : i32
    %627 = tpu.dynamic_rotate %626 by %c4_i32_177 dim 1 : vector<32x256xf32>, i32 -> vector<32x256xf32>
    %628 = vector.broadcast %28 : vector<1x256xf32> to vector<32x256xf32>
    %629 = arith.mulf %627, %628 : vector<32x256xf32>
    %630 = vector.extract_strided_slice %557 {offsets = [0, 9], sizes = [32, 1], strides = [1, 1]} : vector<32x81xf32> to vector<32x1xf32>
    %631 = vector.broadcast %630 : vector<32x1xf32> to vector<32x256xf32>
    %632 = arith.mulf %629, %631 : vector<32x256xf32>
    %633 = arith.addf %623, %632 : vector<32x256xf32>
    %c3_i32_178 = arith.constant 3 : i32
    %634 = tpu.dynamic_rotate %626 by %c3_i32_178 dim 1 : vector<32x256xf32>, i32 -> vector<32x256xf32>
    %635 = vector.broadcast %50 : vector<1x256xf32> to vector<32x256xf32>
    %636 = arith.mulf %634, %635 : vector<32x256xf32>
    %637 = vector.extract_strided_slice %557 {offsets = [0, 10], sizes = [32, 1], strides = [1, 1]} : vector<32x81xf32> to vector<32x1xf32>
    %638 = vector.broadcast %637 : vector<32x1xf32> to vector<32x256xf32>
    %639 = arith.mulf %636, %638 : vector<32x256xf32>
    %640 = arith.addf %633, %639 : vector<32x256xf32>
    %c2_i32_179 = arith.constant 2 : i32
    %641 = tpu.dynamic_rotate %626 by %c2_i32_179 dim 1 : vector<32x256xf32>, i32 -> vector<32x256xf32>
    %642 = vector.broadcast %72 : vector<1x256xf32> to vector<32x256xf32>
    %643 = arith.mulf %641, %642 : vector<32x256xf32>
    %644 = vector.extract_strided_slice %557 {offsets = [0, 11], sizes = [32, 1], strides = [1, 1]} : vector<32x81xf32> to vector<32x1xf32>
    %645 = vector.broadcast %644 : vector<32x1xf32> to vector<32x256xf32>
    %646 = arith.mulf %643, %645 : vector<32x256xf32>
    %647 = arith.addf %640, %646 : vector<32x256xf32>
    %c1_i32_180 = arith.constant 1 : i32
    %648 = tpu.dynamic_rotate %626 by %c1_i32_180 dim 1 : vector<32x256xf32>, i32 -> vector<32x256xf32>
    %649 = vector.broadcast %94 : vector<1x256xf32> to vector<32x256xf32>
    %650 = arith.mulf %648, %649 : vector<32x256xf32>
    %651 = vector.extract_strided_slice %557 {offsets = [0, 12], sizes = [32, 1], strides = [1, 1]} : vector<32x81xf32> to vector<32x1xf32>
    %652 = vector.broadcast %651 : vector<32x1xf32> to vector<32x256xf32>
    %653 = arith.mulf %650, %652 : vector<32x256xf32>
    %654 = arith.addf %647, %653 : vector<32x256xf32>
    %655 = vector.extract_strided_slice %557 {offsets = [0, 13], sizes = [32, 1], strides = [1, 1]} : vector<32x81xf32> to vector<32x1xf32>
    %656 = vector.broadcast %655 : vector<32x1xf32> to vector<32x256xf32>
    %657 = arith.mulf %626, %656 : vector<32x256xf32>
    %658 = arith.addf %654, %657 : vector<32x256xf32>
    %c255_i32_181 = arith.constant 255 : i32
    %659 = tpu.dynamic_rotate %626 by %c255_i32_181 dim 1 : vector<32x256xf32>, i32 -> vector<32x256xf32>
    %660 = vector.broadcast %116 : vector<1x256xf32> to vector<32x256xf32>
    %661 = arith.mulf %659, %660 : vector<32x256xf32>
    %662 = vector.extract_strided_slice %557 {offsets = [0, 14], sizes = [32, 1], strides = [1, 1]} : vector<32x81xf32> to vector<32x1xf32>
    %663 = vector.broadcast %662 : vector<32x1xf32> to vector<32x256xf32>
    %664 = arith.mulf %661, %663 : vector<32x256xf32>
    %665 = arith.addf %658, %664 : vector<32x256xf32>
    %c254_i32_182 = arith.constant 254 : i32
    %666 = tpu.dynamic_rotate %626 by %c254_i32_182 dim 1 : vector<32x256xf32>, i32 -> vector<32x256xf32>
    %667 = vector.broadcast %138 : vector<1x256xf32> to vector<32x256xf32>
    %668 = arith.mulf %666, %667 : vector<32x256xf32>
    %669 = vector.extract_strided_slice %557 {offsets = [0, 15], sizes = [32, 1], strides = [1, 1]} : vector<32x81xf32> to vector<32x1xf32>
    %670 = vector.broadcast %669 : vector<32x1xf32> to vector<32x256xf32>
    %671 = arith.mulf %668, %670 : vector<32x256xf32>
    %672 = arith.addf %665, %671 : vector<32x256xf32>
    %c253_i32_183 = arith.constant 253 : i32
    %673 = tpu.dynamic_rotate %626 by %c253_i32_183 dim 1 : vector<32x256xf32>, i32 -> vector<32x256xf32>
    %674 = vector.broadcast %160 : vector<1x256xf32> to vector<32x256xf32>
    %675 = arith.mulf %673, %674 : vector<32x256xf32>
    %676 = vector.extract_strided_slice %557 {offsets = [0, 16], sizes = [32, 1], strides = [1, 1]} : vector<32x81xf32> to vector<32x1xf32>
    %677 = vector.broadcast %676 : vector<32x1xf32> to vector<32x256xf32>
    %678 = arith.mulf %675, %677 : vector<32x256xf32>
    %679 = arith.addf %672, %678 : vector<32x256xf32>
    %c252_i32_184 = arith.constant 252 : i32
    %680 = tpu.dynamic_rotate %626 by %c252_i32_184 dim 1 : vector<32x256xf32>, i32 -> vector<32x256xf32>
    %681 = vector.broadcast %182 : vector<1x256xf32> to vector<32x256xf32>
    %682 = arith.mulf %680, %681 : vector<32x256xf32>
    %683 = vector.extract_strided_slice %557 {offsets = [0, 17], sizes = [32, 1], strides = [1, 1]} : vector<32x81xf32> to vector<32x1xf32>
    %684 = vector.broadcast %683 : vector<32x1xf32> to vector<32x256xf32>
    %685 = arith.mulf %682, %684 : vector<32x256xf32>
    %686 = arith.addf %679, %685 : vector<32x256xf32>
    %c32_i32_185 = arith.constant 32 : i32
    %687 = tpu.dynamic_rotate %556 by %c32_i32_185 dim 1 : vector<32x256xf32>, i32 -> vector<32x256xf32>
    %688 = vector.broadcast %61 : vector<1x256xf32> to vector<32x256xf32>
    %689 = arith.mulf %687, %688 : vector<32x256xf32>
    %c4_i32_186 = arith.constant 4 : i32
    %690 = tpu.dynamic_rotate %689 by %c4_i32_186 dim 1 : vector<32x256xf32>, i32 -> vector<32x256xf32>
    %691 = vector.broadcast %28 : vector<1x256xf32> to vector<32x256xf32>
    %692 = arith.mulf %690, %691 : vector<32x256xf32>
    %693 = vector.extract_strided_slice %557 {offsets = [0, 18], sizes = [32, 1], strides = [1, 1]} : vector<32x81xf32> to vector<32x1xf32>
    %694 = vector.broadcast %693 : vector<32x1xf32> to vector<32x256xf32>
    %695 = arith.mulf %692, %694 : vector<32x256xf32>
    %696 = arith.addf %686, %695 : vector<32x256xf32>
    %c3_i32_187 = arith.constant 3 : i32
    %697 = tpu.dynamic_rotate %689 by %c3_i32_187 dim 1 : vector<32x256xf32>, i32 -> vector<32x256xf32>
    %698 = vector.broadcast %50 : vector<1x256xf32> to vector<32x256xf32>
    %699 = arith.mulf %697, %698 : vector<32x256xf32>
    %700 = vector.extract_strided_slice %557 {offsets = [0, 19], sizes = [32, 1], strides = [1, 1]} : vector<32x81xf32> to vector<32x1xf32>
    %701 = vector.broadcast %700 : vector<32x1xf32> to vector<32x256xf32>
    %702 = arith.mulf %699, %701 : vector<32x256xf32>
    %703 = arith.addf %696, %702 : vector<32x256xf32>
    %c2_i32_188 = arith.constant 2 : i32
    %704 = tpu.dynamic_rotate %689 by %c2_i32_188 dim 1 : vector<32x256xf32>, i32 -> vector<32x256xf32>
    %705 = vector.broadcast %72 : vector<1x256xf32> to vector<32x256xf32>
    %706 = arith.mulf %704, %705 : vector<32x256xf32>
    %707 = vector.extract_strided_slice %557 {offsets = [0, 20], sizes = [32, 1], strides = [1, 1]} : vector<32x81xf32> to vector<32x1xf32>
    %708 = vector.broadcast %707 : vector<32x1xf32> to vector<32x256xf32>
    %709 = arith.mulf %706, %708 : vector<32x256xf32>
    %710 = arith.addf %703, %709 : vector<32x256xf32>
    %c1_i32_189 = arith.constant 1 : i32
    %711 = tpu.dynamic_rotate %689 by %c1_i32_189 dim 1 : vector<32x256xf32>, i32 -> vector<32x256xf32>
    %712 = vector.broadcast %94 : vector<1x256xf32> to vector<32x256xf32>
    %713 = arith.mulf %711, %712 : vector<32x256xf32>
    %714 = vector.extract_strided_slice %557 {offsets = [0, 21], sizes = [32, 1], strides = [1, 1]} : vector<32x81xf32> to vector<32x1xf32>
    %715 = vector.broadcast %714 : vector<32x1xf32> to vector<32x256xf32>
    %716 = arith.mulf %713, %715 : vector<32x256xf32>
    %717 = arith.addf %710, %716 : vector<32x256xf32>
    %718 = vector.extract_strided_slice %557 {offsets = [0, 22], sizes = [32, 1], strides = [1, 1]} : vector<32x81xf32> to vector<32x1xf32>
    %719 = vector.broadcast %718 : vector<32x1xf32> to vector<32x256xf32>
    %720 = arith.mulf %689, %719 : vector<32x256xf32>
    %721 = arith.addf %717, %720 : vector<32x256xf32>
    %c255_i32_190 = arith.constant 255 : i32
    %722 = tpu.dynamic_rotate %689 by %c255_i32_190 dim 1 : vector<32x256xf32>, i32 -> vector<32x256xf32>
    %723 = vector.broadcast %116 : vector<1x256xf32> to vector<32x256xf32>
    %724 = arith.mulf %722, %723 : vector<32x256xf32>
    %725 = vector.extract_strided_slice %557 {offsets = [0, 23], sizes = [32, 1], strides = [1, 1]} : vector<32x81xf32> to vector<32x1xf32>
    %726 = vector.broadcast %725 : vector<32x1xf32> to vector<32x256xf32>
    %727 = arith.mulf %724, %726 : vector<32x256xf32>
    %728 = arith.addf %721, %727 : vector<32x256xf32>
    %c254_i32_191 = arith.constant 254 : i32
    %729 = tpu.dynamic_rotate %689 by %c254_i32_191 dim 1 : vector<32x256xf32>, i32 -> vector<32x256xf32>
    %730 = vector.broadcast %138 : vector<1x256xf32> to vector<32x256xf32>
    %731 = arith.mulf %729, %730 : vector<32x256xf32>
    %732 = vector.extract_strided_slice %557 {offsets = [0, 24], sizes = [32, 1], strides = [1, 1]} : vector<32x81xf32> to vector<32x1xf32>
    %733 = vector.broadcast %732 : vector<32x1xf32> to vector<32x256xf32>
    %734 = arith.mulf %731, %733 : vector<32x256xf32>
    %735 = arith.addf %728, %734 : vector<32x256xf32>
    %c253_i32_192 = arith.constant 253 : i32
    %736 = tpu.dynamic_rotate %689 by %c253_i32_192 dim 1 : vector<32x256xf32>, i32 -> vector<32x256xf32>
    %737 = vector.broadcast %160 : vector<1x256xf32> to vector<32x256xf32>
    %738 = arith.mulf %736, %737 : vector<32x256xf32>
    %739 = vector.extract_strided_slice %557 {offsets = [0, 25], sizes = [32, 1], strides = [1, 1]} : vector<32x81xf32> to vector<32x1xf32>
    %740 = vector.broadcast %739 : vector<32x1xf32> to vector<32x256xf32>
    %741 = arith.mulf %738, %740 : vector<32x256xf32>
    %742 = arith.addf %735, %741 : vector<32x256xf32>
    %c252_i32_193 = arith.constant 252 : i32
    %743 = tpu.dynamic_rotate %689 by %c252_i32_193 dim 1 : vector<32x256xf32>, i32 -> vector<32x256xf32>
    %744 = vector.broadcast %182 : vector<1x256xf32> to vector<32x256xf32>
    %745 = arith.mulf %743, %744 : vector<32x256xf32>
    %746 = vector.extract_strided_slice %557 {offsets = [0, 26], sizes = [32, 1], strides = [1, 1]} : vector<32x81xf32> to vector<32x1xf32>
    %747 = vector.broadcast %746 : vector<32x1xf32> to vector<32x256xf32>
    %748 = arith.mulf %745, %747 : vector<32x256xf32>
    %749 = arith.addf %742, %748 : vector<32x256xf32>
    %c16_i32_194 = arith.constant 16 : i32
    %750 = tpu.dynamic_rotate %556 by %c16_i32_194 dim 1 : vector<32x256xf32>, i32 -> vector<32x256xf32>
    %751 = vector.broadcast %83 : vector<1x256xf32> to vector<32x256xf32>
    %752 = arith.mulf %750, %751 : vector<32x256xf32>
    %c4_i32_195 = arith.constant 4 : i32
    %753 = tpu.dynamic_rotate %752 by %c4_i32_195 dim 1 : vector<32x256xf32>, i32 -> vector<32x256xf32>
    %754 = vector.broadcast %28 : vector<1x256xf32> to vector<32x256xf32>
    %755 = arith.mulf %753, %754 : vector<32x256xf32>
    %756 = vector.extract_strided_slice %557 {offsets = [0, 27], sizes = [32, 1], strides = [1, 1]} : vector<32x81xf32> to vector<32x1xf32>
    %757 = vector.broadcast %756 : vector<32x1xf32> to vector<32x256xf32>
    %758 = arith.mulf %755, %757 : vector<32x256xf32>
    %759 = arith.addf %749, %758 : vector<32x256xf32>
    %c3_i32_196 = arith.constant 3 : i32
    %760 = tpu.dynamic_rotate %752 by %c3_i32_196 dim 1 : vector<32x256xf32>, i32 -> vector<32x256xf32>
    %761 = vector.broadcast %50 : vector<1x256xf32> to vector<32x256xf32>
    %762 = arith.mulf %760, %761 : vector<32x256xf32>
    %763 = vector.extract_strided_slice %557 {offsets = [0, 28], sizes = [32, 1], strides = [1, 1]} : vector<32x81xf32> to vector<32x1xf32>
    %764 = vector.broadcast %763 : vector<32x1xf32> to vector<32x256xf32>
    %765 = arith.mulf %762, %764 : vector<32x256xf32>
    %766 = arith.addf %759, %765 : vector<32x256xf32>
    %c2_i32_197 = arith.constant 2 : i32
    %767 = tpu.dynamic_rotate %752 by %c2_i32_197 dim 1 : vector<32x256xf32>, i32 -> vector<32x256xf32>
    %768 = vector.broadcast %72 : vector<1x256xf32> to vector<32x256xf32>
    %769 = arith.mulf %767, %768 : vector<32x256xf32>
    %770 = vector.extract_strided_slice %557 {offsets = [0, 29], sizes = [32, 1], strides = [1, 1]} : vector<32x81xf32> to vector<32x1xf32>
    %771 = vector.broadcast %770 : vector<32x1xf32> to vector<32x256xf32>
    %772 = arith.mulf %769, %771 : vector<32x256xf32>
    %773 = arith.addf %766, %772 : vector<32x256xf32>
    %c1_i32_198 = arith.constant 1 : i32
    %774 = tpu.dynamic_rotate %752 by %c1_i32_198 dim 1 : vector<32x256xf32>, i32 -> vector<32x256xf32>
    %775 = vector.broadcast %94 : vector<1x256xf32> to vector<32x256xf32>
    %776 = arith.mulf %774, %775 : vector<32x256xf32>
    %777 = vector.extract_strided_slice %557 {offsets = [0, 30], sizes = [32, 1], strides = [1, 1]} : vector<32x81xf32> to vector<32x1xf32>
    %778 = vector.broadcast %777 : vector<32x1xf32> to vector<32x256xf32>
    %779 = arith.mulf %776, %778 : vector<32x256xf32>
    %780 = arith.addf %773, %779 : vector<32x256xf32>
    %781 = vector.extract_strided_slice %557 {offsets = [0, 31], sizes = [32, 1], strides = [1, 1]} : vector<32x81xf32> to vector<32x1xf32>
    %782 = vector.broadcast %781 : vector<32x1xf32> to vector<32x256xf32>
    %783 = arith.mulf %752, %782 : vector<32x256xf32>
    %784 = arith.addf %780, %783 : vector<32x256xf32>
    %c255_i32_199 = arith.constant 255 : i32
    %785 = tpu.dynamic_rotate %752 by %c255_i32_199 dim 1 : vector<32x256xf32>, i32 -> vector<32x256xf32>
    %786 = vector.broadcast %116 : vector<1x256xf32> to vector<32x256xf32>
    %787 = arith.mulf %785, %786 : vector<32x256xf32>
    %788 = vector.extract_strided_slice %557 {offsets = [0, 32], sizes = [32, 1], strides = [1, 1]} : vector<32x81xf32> to vector<32x1xf32>
    %789 = vector.broadcast %788 : vector<32x1xf32> to vector<32x256xf32>
    %790 = arith.mulf %787, %789 : vector<32x256xf32>
    %791 = arith.addf %784, %790 : vector<32x256xf32>
    %c254_i32_200 = arith.constant 254 : i32
    %792 = tpu.dynamic_rotate %752 by %c254_i32_200 dim 1 : vector<32x256xf32>, i32 -> vector<32x256xf32>
    %793 = vector.broadcast %138 : vector<1x256xf32> to vector<32x256xf32>
    %794 = arith.mulf %792, %793 : vector<32x256xf32>
    %795 = vector.extract_strided_slice %557 {offsets = [0, 33], sizes = [32, 1], strides = [1, 1]} : vector<32x81xf32> to vector<32x1xf32>
    %796 = vector.broadcast %795 : vector<32x1xf32> to vector<32x256xf32>
    %797 = arith.mulf %794, %796 : vector<32x256xf32>
    %798 = arith.addf %791, %797 : vector<32x256xf32>
    %c253_i32_201 = arith.constant 253 : i32
    %799 = tpu.dynamic_rotate %752 by %c253_i32_201 dim 1 : vector<32x256xf32>, i32 -> vector<32x256xf32>
    %800 = vector.broadcast %160 : vector<1x256xf32> to vector<32x256xf32>
    %801 = arith.mulf %799, %800 : vector<32x256xf32>
    %802 = vector.extract_strided_slice %557 {offsets = [0, 34], sizes = [32, 1], strides = [1, 1]} : vector<32x81xf32> to vector<32x1xf32>
    %803 = vector.broadcast %802 : vector<32x1xf32> to vector<32x256xf32>
    %804 = arith.mulf %801, %803 : vector<32x256xf32>
    %805 = arith.addf %798, %804 : vector<32x256xf32>
    %c252_i32_202 = arith.constant 252 : i32
    %806 = tpu.dynamic_rotate %752 by %c252_i32_202 dim 1 : vector<32x256xf32>, i32 -> vector<32x256xf32>
    %807 = vector.broadcast %182 : vector<1x256xf32> to vector<32x256xf32>
    %808 = arith.mulf %806, %807 : vector<32x256xf32>
    %809 = vector.extract_strided_slice %557 {offsets = [0, 35], sizes = [32, 1], strides = [1, 1]} : vector<32x81xf32> to vector<32x1xf32>
    %810 = vector.broadcast %809 : vector<32x1xf32> to vector<32x256xf32>
    %811 = arith.mulf %808, %810 : vector<32x256xf32>
    %812 = arith.addf %805, %811 : vector<32x256xf32>
    %c4_i32_203 = arith.constant 4 : i32
    %813 = tpu.dynamic_rotate %556 by %c4_i32_203 dim 1 : vector<32x256xf32>, i32 -> vector<32x256xf32>
    %814 = vector.broadcast %28 : vector<1x256xf32> to vector<32x256xf32>
    %815 = arith.mulf %813, %814 : vector<32x256xf32>
    %816 = vector.extract_strided_slice %557 {offsets = [0, 36], sizes = [32, 1], strides = [1, 1]} : vector<32x81xf32> to vector<32x1xf32>
    %817 = vector.broadcast %816 : vector<32x1xf32> to vector<32x256xf32>
    %818 = arith.mulf %815, %817 : vector<32x256xf32>
    %819 = arith.addf %812, %818 : vector<32x256xf32>
    %c3_i32_204 = arith.constant 3 : i32
    %820 = tpu.dynamic_rotate %556 by %c3_i32_204 dim 1 : vector<32x256xf32>, i32 -> vector<32x256xf32>
    %821 = vector.broadcast %50 : vector<1x256xf32> to vector<32x256xf32>
    %822 = arith.mulf %820, %821 : vector<32x256xf32>
    %823 = vector.extract_strided_slice %557 {offsets = [0, 37], sizes = [32, 1], strides = [1, 1]} : vector<32x81xf32> to vector<32x1xf32>
    %824 = vector.broadcast %823 : vector<32x1xf32> to vector<32x256xf32>
    %825 = arith.mulf %822, %824 : vector<32x256xf32>
    %826 = arith.addf %819, %825 : vector<32x256xf32>
    %c2_i32_205 = arith.constant 2 : i32
    %827 = tpu.dynamic_rotate %556 by %c2_i32_205 dim 1 : vector<32x256xf32>, i32 -> vector<32x256xf32>
    %828 = vector.broadcast %72 : vector<1x256xf32> to vector<32x256xf32>
    %829 = arith.mulf %827, %828 : vector<32x256xf32>
    %830 = vector.extract_strided_slice %557 {offsets = [0, 38], sizes = [32, 1], strides = [1, 1]} : vector<32x81xf32> to vector<32x1xf32>
    %831 = vector.broadcast %830 : vector<32x1xf32> to vector<32x256xf32>
    %832 = arith.mulf %829, %831 : vector<32x256xf32>
    %833 = arith.addf %826, %832 : vector<32x256xf32>
    %c1_i32_206 = arith.constant 1 : i32
    %834 = tpu.dynamic_rotate %556 by %c1_i32_206 dim 1 : vector<32x256xf32>, i32 -> vector<32x256xf32>
    %835 = vector.broadcast %94 : vector<1x256xf32> to vector<32x256xf32>
    %836 = arith.mulf %834, %835 : vector<32x256xf32>
    %837 = vector.extract_strided_slice %557 {offsets = [0, 39], sizes = [32, 1], strides = [1, 1]} : vector<32x81xf32> to vector<32x1xf32>
    %838 = vector.broadcast %837 : vector<32x1xf32> to vector<32x256xf32>
    %839 = arith.mulf %836, %838 : vector<32x256xf32>
    %840 = arith.addf %833, %839 : vector<32x256xf32>
    %841 = vector.extract_strided_slice %557 {offsets = [0, 40], sizes = [32, 1], strides = [1, 1]} : vector<32x81xf32> to vector<32x1xf32>
    %842 = vector.broadcast %841 : vector<32x1xf32> to vector<32x256xf32>
    %843 = arith.mulf %556, %842 : vector<32x256xf32>
    %844 = arith.addf %840, %843 : vector<32x256xf32>
    %c255_i32_207 = arith.constant 255 : i32
    %845 = tpu.dynamic_rotate %556 by %c255_i32_207 dim 1 : vector<32x256xf32>, i32 -> vector<32x256xf32>
    %846 = vector.broadcast %116 : vector<1x256xf32> to vector<32x256xf32>
    %847 = arith.mulf %845, %846 : vector<32x256xf32>
    %848 = vector.extract_strided_slice %557 {offsets = [0, 41], sizes = [32, 1], strides = [1, 1]} : vector<32x81xf32> to vector<32x1xf32>
    %849 = vector.broadcast %848 : vector<32x1xf32> to vector<32x256xf32>
    %850 = arith.mulf %847, %849 : vector<32x256xf32>
    %851 = arith.addf %844, %850 : vector<32x256xf32>
    %c254_i32_208 = arith.constant 254 : i32
    %852 = tpu.dynamic_rotate %556 by %c254_i32_208 dim 1 : vector<32x256xf32>, i32 -> vector<32x256xf32>
    %853 = vector.broadcast %138 : vector<1x256xf32> to vector<32x256xf32>
    %854 = arith.mulf %852, %853 : vector<32x256xf32>
    %855 = vector.extract_strided_slice %557 {offsets = [0, 42], sizes = [32, 1], strides = [1, 1]} : vector<32x81xf32> to vector<32x1xf32>
    %856 = vector.broadcast %855 : vector<32x1xf32> to vector<32x256xf32>
    %857 = arith.mulf %854, %856 : vector<32x256xf32>
    %858 = arith.addf %851, %857 : vector<32x256xf32>
    %c253_i32_209 = arith.constant 253 : i32
    %859 = tpu.dynamic_rotate %556 by %c253_i32_209 dim 1 : vector<32x256xf32>, i32 -> vector<32x256xf32>
    %860 = vector.broadcast %160 : vector<1x256xf32> to vector<32x256xf32>
    %861 = arith.mulf %859, %860 : vector<32x256xf32>
    %862 = vector.extract_strided_slice %557 {offsets = [0, 43], sizes = [32, 1], strides = [1, 1]} : vector<32x81xf32> to vector<32x1xf32>
    %863 = vector.broadcast %862 : vector<32x1xf32> to vector<32x256xf32>
    %864 = arith.mulf %861, %863 : vector<32x256xf32>
    %865 = arith.addf %858, %864 : vector<32x256xf32>
    %c252_i32_210 = arith.constant 252 : i32
    %866 = tpu.dynamic_rotate %556 by %c252_i32_210 dim 1 : vector<32x256xf32>, i32 -> vector<32x256xf32>
    %867 = vector.broadcast %182 : vector<1x256xf32> to vector<32x256xf32>
    %868 = arith.mulf %866, %867 : vector<32x256xf32>
    %869 = vector.extract_strided_slice %557 {offsets = [0, 44], sizes = [32, 1], strides = [1, 1]} : vector<32x81xf32> to vector<32x1xf32>
    %870 = vector.broadcast %869 : vector<32x1xf32> to vector<32x256xf32>
    %871 = arith.mulf %868, %870 : vector<32x256xf32>
    %872 = arith.addf %865, %871 : vector<32x256xf32>
    %c240_i32_211 = arith.constant 240 : i32
    %873 = tpu.dynamic_rotate %556 by %c240_i32_211 dim 1 : vector<32x256xf32>, i32 -> vector<32x256xf32>
    %874 = vector.broadcast %105 : vector<1x256xf32> to vector<32x256xf32>
    %875 = arith.mulf %873, %874 : vector<32x256xf32>
    %c4_i32_212 = arith.constant 4 : i32
    %876 = tpu.dynamic_rotate %875 by %c4_i32_212 dim 1 : vector<32x256xf32>, i32 -> vector<32x256xf32>
    %877 = vector.broadcast %28 : vector<1x256xf32> to vector<32x256xf32>
    %878 = arith.mulf %876, %877 : vector<32x256xf32>
    %879 = vector.extract_strided_slice %557 {offsets = [0, 45], sizes = [32, 1], strides = [1, 1]} : vector<32x81xf32> to vector<32x1xf32>
    %880 = vector.broadcast %879 : vector<32x1xf32> to vector<32x256xf32>
    %881 = arith.mulf %878, %880 : vector<32x256xf32>
    %882 = arith.addf %872, %881 : vector<32x256xf32>
    %c3_i32_213 = arith.constant 3 : i32
    %883 = tpu.dynamic_rotate %875 by %c3_i32_213 dim 1 : vector<32x256xf32>, i32 -> vector<32x256xf32>
    %884 = vector.broadcast %50 : vector<1x256xf32> to vector<32x256xf32>
    %885 = arith.mulf %883, %884 : vector<32x256xf32>
    %886 = vector.extract_strided_slice %557 {offsets = [0, 46], sizes = [32, 1], strides = [1, 1]} : vector<32x81xf32> to vector<32x1xf32>
    %887 = vector.broadcast %886 : vector<32x1xf32> to vector<32x256xf32>
    %888 = arith.mulf %885, %887 : vector<32x256xf32>
    %889 = arith.addf %882, %888 : vector<32x256xf32>
    %c2_i32_214 = arith.constant 2 : i32
    %890 = tpu.dynamic_rotate %875 by %c2_i32_214 dim 1 : vector<32x256xf32>, i32 -> vector<32x256xf32>
    %891 = vector.broadcast %72 : vector<1x256xf32> to vector<32x256xf32>
    %892 = arith.mulf %890, %891 : vector<32x256xf32>
    %893 = vector.extract_strided_slice %557 {offsets = [0, 47], sizes = [32, 1], strides = [1, 1]} : vector<32x81xf32> to vector<32x1xf32>
    %894 = vector.broadcast %893 : vector<32x1xf32> to vector<32x256xf32>
    %895 = arith.mulf %892, %894 : vector<32x256xf32>
    %896 = arith.addf %889, %895 : vector<32x256xf32>
    %c1_i32_215 = arith.constant 1 : i32
    %897 = tpu.dynamic_rotate %875 by %c1_i32_215 dim 1 : vector<32x256xf32>, i32 -> vector<32x256xf32>
    %898 = vector.broadcast %94 : vector<1x256xf32> to vector<32x256xf32>
    %899 = arith.mulf %897, %898 : vector<32x256xf32>
    %900 = vector.extract_strided_slice %557 {offsets = [0, 48], sizes = [32, 1], strides = [1, 1]} : vector<32x81xf32> to vector<32x1xf32>
    %901 = vector.broadcast %900 : vector<32x1xf32> to vector<32x256xf32>
    %902 = arith.mulf %899, %901 : vector<32x256xf32>
    %903 = arith.addf %896, %902 : vector<32x256xf32>
    %904 = vector.extract_strided_slice %557 {offsets = [0, 49], sizes = [32, 1], strides = [1, 1]} : vector<32x81xf32> to vector<32x1xf32>
    %905 = vector.broadcast %904 : vector<32x1xf32> to vector<32x256xf32>
    %906 = arith.mulf %875, %905 : vector<32x256xf32>
    %907 = arith.addf %903, %906 : vector<32x256xf32>
    %c255_i32_216 = arith.constant 255 : i32
    %908 = tpu.dynamic_rotate %875 by %c255_i32_216 dim 1 : vector<32x256xf32>, i32 -> vector<32x256xf32>
    %909 = vector.broadcast %116 : vector<1x256xf32> to vector<32x256xf32>
    %910 = arith.mulf %908, %909 : vector<32x256xf32>
    %911 = vector.extract_strided_slice %557 {offsets = [0, 50], sizes = [32, 1], strides = [1, 1]} : vector<32x81xf32> to vector<32x1xf32>
    %912 = vector.broadcast %911 : vector<32x1xf32> to vector<32x256xf32>
    %913 = arith.mulf %910, %912 : vector<32x256xf32>
    %914 = arith.addf %907, %913 : vector<32x256xf32>
    %c254_i32_217 = arith.constant 254 : i32
    %915 = tpu.dynamic_rotate %875 by %c254_i32_217 dim 1 : vector<32x256xf32>, i32 -> vector<32x256xf32>
    %916 = vector.broadcast %138 : vector<1x256xf32> to vector<32x256xf32>
    %917 = arith.mulf %915, %916 : vector<32x256xf32>
    %918 = vector.extract_strided_slice %557 {offsets = [0, 51], sizes = [32, 1], strides = [1, 1]} : vector<32x81xf32> to vector<32x1xf32>
    %919 = vector.broadcast %918 : vector<32x1xf32> to vector<32x256xf32>
    %920 = arith.mulf %917, %919 : vector<32x256xf32>
    %921 = arith.addf %914, %920 : vector<32x256xf32>
    %c253_i32_218 = arith.constant 253 : i32
    %922 = tpu.dynamic_rotate %875 by %c253_i32_218 dim 1 : vector<32x256xf32>, i32 -> vector<32x256xf32>
    %923 = vector.broadcast %160 : vector<1x256xf32> to vector<32x256xf32>
    %924 = arith.mulf %922, %923 : vector<32x256xf32>
    %925 = vector.extract_strided_slice %557 {offsets = [0, 52], sizes = [32, 1], strides = [1, 1]} : vector<32x81xf32> to vector<32x1xf32>
    %926 = vector.broadcast %925 : vector<32x1xf32> to vector<32x256xf32>
    %927 = arith.mulf %924, %926 : vector<32x256xf32>
    %928 = arith.addf %921, %927 : vector<32x256xf32>
    %c252_i32_219 = arith.constant 252 : i32
    %929 = tpu.dynamic_rotate %875 by %c252_i32_219 dim 1 : vector<32x256xf32>, i32 -> vector<32x256xf32>
    %930 = vector.broadcast %182 : vector<1x256xf32> to vector<32x256xf32>
    %931 = arith.mulf %929, %930 : vector<32x256xf32>
    %932 = vector.extract_strided_slice %557 {offsets = [0, 53], sizes = [32, 1], strides = [1, 1]} : vector<32x81xf32> to vector<32x1xf32>
    %933 = vector.broadcast %932 : vector<32x1xf32> to vector<32x256xf32>
    %934 = arith.mulf %931, %933 : vector<32x256xf32>
    %935 = arith.addf %928, %934 : vector<32x256xf32>
    %c224_i32_220 = arith.constant 224 : i32
    %936 = tpu.dynamic_rotate %556 by %c224_i32_220 dim 1 : vector<32x256xf32>, i32 -> vector<32x256xf32>
    %937 = vector.broadcast %127 : vector<1x256xf32> to vector<32x256xf32>
    %938 = arith.mulf %936, %937 : vector<32x256xf32>
    %c4_i32_221 = arith.constant 4 : i32
    %939 = tpu.dynamic_rotate %938 by %c4_i32_221 dim 1 : vector<32x256xf32>, i32 -> vector<32x256xf32>
    %940 = vector.broadcast %28 : vector<1x256xf32> to vector<32x256xf32>
    %941 = arith.mulf %939, %940 : vector<32x256xf32>
    %942 = vector.extract_strided_slice %557 {offsets = [0, 54], sizes = [32, 1], strides = [1, 1]} : vector<32x81xf32> to vector<32x1xf32>
    %943 = vector.broadcast %942 : vector<32x1xf32> to vector<32x256xf32>
    %944 = arith.mulf %941, %943 : vector<32x256xf32>
    %945 = arith.addf %935, %944 : vector<32x256xf32>
    %c3_i32_222 = arith.constant 3 : i32
    %946 = tpu.dynamic_rotate %938 by %c3_i32_222 dim 1 : vector<32x256xf32>, i32 -> vector<32x256xf32>
    %947 = vector.broadcast %50 : vector<1x256xf32> to vector<32x256xf32>
    %948 = arith.mulf %946, %947 : vector<32x256xf32>
    %949 = vector.extract_strided_slice %557 {offsets = [0, 55], sizes = [32, 1], strides = [1, 1]} : vector<32x81xf32> to vector<32x1xf32>
    %950 = vector.broadcast %949 : vector<32x1xf32> to vector<32x256xf32>
    %951 = arith.mulf %948, %950 : vector<32x256xf32>
    %952 = arith.addf %945, %951 : vector<32x256xf32>
    %c2_i32_223 = arith.constant 2 : i32
    %953 = tpu.dynamic_rotate %938 by %c2_i32_223 dim 1 : vector<32x256xf32>, i32 -> vector<32x256xf32>
    %954 = vector.broadcast %72 : vector<1x256xf32> to vector<32x256xf32>
    %955 = arith.mulf %953, %954 : vector<32x256xf32>
    %956 = vector.extract_strided_slice %557 {offsets = [0, 56], sizes = [32, 1], strides = [1, 1]} : vector<32x81xf32> to vector<32x1xf32>
    %957 = vector.broadcast %956 : vector<32x1xf32> to vector<32x256xf32>
    %958 = arith.mulf %955, %957 : vector<32x256xf32>
    %959 = arith.addf %952, %958 : vector<32x256xf32>
    %c1_i32_224 = arith.constant 1 : i32
    %960 = tpu.dynamic_rotate %938 by %c1_i32_224 dim 1 : vector<32x256xf32>, i32 -> vector<32x256xf32>
    %961 = vector.broadcast %94 : vector<1x256xf32> to vector<32x256xf32>
    %962 = arith.mulf %960, %961 : vector<32x256xf32>
    %963 = vector.extract_strided_slice %557 {offsets = [0, 57], sizes = [32, 1], strides = [1, 1]} : vector<32x81xf32> to vector<32x1xf32>
    %964 = vector.broadcast %963 : vector<32x1xf32> to vector<32x256xf32>
    %965 = arith.mulf %962, %964 : vector<32x256xf32>
    %966 = arith.addf %959, %965 : vector<32x256xf32>
    %967 = vector.extract_strided_slice %557 {offsets = [0, 58], sizes = [32, 1], strides = [1, 1]} : vector<32x81xf32> to vector<32x1xf32>
    %968 = vector.broadcast %967 : vector<32x1xf32> to vector<32x256xf32>
    %969 = arith.mulf %938, %968 : vector<32x256xf32>
    %970 = arith.addf %966, %969 : vector<32x256xf32>
    %c255_i32_225 = arith.constant 255 : i32
    %971 = tpu.dynamic_rotate %938 by %c255_i32_225 dim 1 : vector<32x256xf32>, i32 -> vector<32x256xf32>
    %972 = vector.broadcast %116 : vector<1x256xf32> to vector<32x256xf32>
    %973 = arith.mulf %971, %972 : vector<32x256xf32>
    %974 = vector.extract_strided_slice %557 {offsets = [0, 59], sizes = [32, 1], strides = [1, 1]} : vector<32x81xf32> to vector<32x1xf32>
    %975 = vector.broadcast %974 : vector<32x1xf32> to vector<32x256xf32>
    %976 = arith.mulf %973, %975 : vector<32x256xf32>
    %977 = arith.addf %970, %976 : vector<32x256xf32>
    %c254_i32_226 = arith.constant 254 : i32
    %978 = tpu.dynamic_rotate %938 by %c254_i32_226 dim 1 : vector<32x256xf32>, i32 -> vector<32x256xf32>
    %979 = vector.broadcast %138 : vector<1x256xf32> to vector<32x256xf32>
    %980 = arith.mulf %978, %979 : vector<32x256xf32>
    %981 = vector.extract_strided_slice %557 {offsets = [0, 60], sizes = [32, 1], strides = [1, 1]} : vector<32x81xf32> to vector<32x1xf32>
    %982 = vector.broadcast %981 : vector<32x1xf32> to vector<32x256xf32>
    %983 = arith.mulf %980, %982 : vector<32x256xf32>
    %984 = arith.addf %977, %983 : vector<32x256xf32>
    %c253_i32_227 = arith.constant 253 : i32
    %985 = tpu.dynamic_rotate %938 by %c253_i32_227 dim 1 : vector<32x256xf32>, i32 -> vector<32x256xf32>
    %986 = vector.broadcast %160 : vector<1x256xf32> to vector<32x256xf32>
    %987 = arith.mulf %985, %986 : vector<32x256xf32>
    %988 = vector.extract_strided_slice %557 {offsets = [0, 61], sizes = [32, 1], strides = [1, 1]} : vector<32x81xf32> to vector<32x1xf32>
    %989 = vector.broadcast %988 : vector<32x1xf32> to vector<32x256xf32>
    %990 = arith.mulf %987, %989 : vector<32x256xf32>
    %991 = arith.addf %984, %990 : vector<32x256xf32>
    %c252_i32_228 = arith.constant 252 : i32
    %992 = tpu.dynamic_rotate %938 by %c252_i32_228 dim 1 : vector<32x256xf32>, i32 -> vector<32x256xf32>
    %993 = vector.broadcast %182 : vector<1x256xf32> to vector<32x256xf32>
    %994 = arith.mulf %992, %993 : vector<32x256xf32>
    %995 = vector.extract_strided_slice %557 {offsets = [0, 62], sizes = [32, 1], strides = [1, 1]} : vector<32x81xf32> to vector<32x1xf32>
    %996 = vector.broadcast %995 : vector<32x1xf32> to vector<32x256xf32>
    %997 = arith.mulf %994, %996 : vector<32x256xf32>
    %998 = arith.addf %991, %997 : vector<32x256xf32>
    %c208_i32 = arith.constant 208 : i32
    %999 = tpu.dynamic_rotate %556 by %c208_i32 dim 1 : vector<32x256xf32>, i32 -> vector<32x256xf32>
    %1000 = vector.broadcast %149 : vector<1x256xf32> to vector<32x256xf32>
    %1001 = arith.mulf %999, %1000 : vector<32x256xf32>
    %c4_i32_229 = arith.constant 4 : i32
    %1002 = tpu.dynamic_rotate %1001 by %c4_i32_229 dim 1 : vector<32x256xf32>, i32 -> vector<32x256xf32>
    %1003 = vector.broadcast %28 : vector<1x256xf32> to vector<32x256xf32>
    %1004 = arith.mulf %1002, %1003 : vector<32x256xf32>
    %1005 = vector.extract_strided_slice %557 {offsets = [0, 63], sizes = [32, 1], strides = [1, 1]} : vector<32x81xf32> to vector<32x1xf32>
    %1006 = vector.broadcast %1005 : vector<32x1xf32> to vector<32x256xf32>
    %1007 = arith.mulf %1004, %1006 : vector<32x256xf32>
    %1008 = arith.addf %998, %1007 : vector<32x256xf32>
    %c3_i32_230 = arith.constant 3 : i32
    %1009 = tpu.dynamic_rotate %1001 by %c3_i32_230 dim 1 : vector<32x256xf32>, i32 -> vector<32x256xf32>
    %1010 = vector.broadcast %50 : vector<1x256xf32> to vector<32x256xf32>
    %1011 = arith.mulf %1009, %1010 : vector<32x256xf32>
    %1012 = vector.extract_strided_slice %557 {offsets = [0, 64], sizes = [32, 1], strides = [1, 1]} : vector<32x81xf32> to vector<32x1xf32>
    %1013 = vector.broadcast %1012 : vector<32x1xf32> to vector<32x256xf32>
    %1014 = arith.mulf %1011, %1013 : vector<32x256xf32>
    %1015 = arith.addf %1008, %1014 : vector<32x256xf32>
    %c2_i32_231 = arith.constant 2 : i32
    %1016 = tpu.dynamic_rotate %1001 by %c2_i32_231 dim 1 : vector<32x256xf32>, i32 -> vector<32x256xf32>
    %1017 = vector.broadcast %72 : vector<1x256xf32> to vector<32x256xf32>
    %1018 = arith.mulf %1016, %1017 : vector<32x256xf32>
    %1019 = vector.extract_strided_slice %557 {offsets = [0, 65], sizes = [32, 1], strides = [1, 1]} : vector<32x81xf32> to vector<32x1xf32>
    %1020 = vector.broadcast %1019 : vector<32x1xf32> to vector<32x256xf32>
    %1021 = arith.mulf %1018, %1020 : vector<32x256xf32>
    %1022 = arith.addf %1015, %1021 : vector<32x256xf32>
    %c1_i32_232 = arith.constant 1 : i32
    %1023 = tpu.dynamic_rotate %1001 by %c1_i32_232 dim 1 : vector<32x256xf32>, i32 -> vector<32x256xf32>
    %1024 = vector.broadcast %94 : vector<1x256xf32> to vector<32x256xf32>
    %1025 = arith.mulf %1023, %1024 : vector<32x256xf32>
    %1026 = vector.extract_strided_slice %557 {offsets = [0, 66], sizes = [32, 1], strides = [1, 1]} : vector<32x81xf32> to vector<32x1xf32>
    %1027 = vector.broadcast %1026 : vector<32x1xf32> to vector<32x256xf32>
    %1028 = arith.mulf %1025, %1027 : vector<32x256xf32>
    %1029 = arith.addf %1022, %1028 : vector<32x256xf32>
    %1030 = vector.extract_strided_slice %557 {offsets = [0, 67], sizes = [32, 1], strides = [1, 1]} : vector<32x81xf32> to vector<32x1xf32>
    %1031 = vector.broadcast %1030 : vector<32x1xf32> to vector<32x256xf32>
    %1032 = arith.mulf %1001, %1031 : vector<32x256xf32>
    %1033 = arith.addf %1029, %1032 : vector<32x256xf32>
    %c255_i32_233 = arith.constant 255 : i32
    %1034 = tpu.dynamic_rotate %1001 by %c255_i32_233 dim 1 : vector<32x256xf32>, i32 -> vector<32x256xf32>
    %1035 = vector.broadcast %116 : vector<1x256xf32> to vector<32x256xf32>
    %1036 = arith.mulf %1034, %1035 : vector<32x256xf32>
    %1037 = vector.extract_strided_slice %557 {offsets = [0, 68], sizes = [32, 1], strides = [1, 1]} : vector<32x81xf32> to vector<32x1xf32>
    %1038 = vector.broadcast %1037 : vector<32x1xf32> to vector<32x256xf32>
    %1039 = arith.mulf %1036, %1038 : vector<32x256xf32>
    %1040 = arith.addf %1033, %1039 : vector<32x256xf32>
    %c254_i32_234 = arith.constant 254 : i32
    %1041 = tpu.dynamic_rotate %1001 by %c254_i32_234 dim 1 : vector<32x256xf32>, i32 -> vector<32x256xf32>
    %1042 = vector.broadcast %138 : vector<1x256xf32> to vector<32x256xf32>
    %1043 = arith.mulf %1041, %1042 : vector<32x256xf32>
    %1044 = vector.extract_strided_slice %557 {offsets = [0, 69], sizes = [32, 1], strides = [1, 1]} : vector<32x81xf32> to vector<32x1xf32>
    %1045 = vector.broadcast %1044 : vector<32x1xf32> to vector<32x256xf32>
    %1046 = arith.mulf %1043, %1045 : vector<32x256xf32>
    %1047 = arith.addf %1040, %1046 : vector<32x256xf32>
    %c253_i32_235 = arith.constant 253 : i32
    %1048 = tpu.dynamic_rotate %1001 by %c253_i32_235 dim 1 : vector<32x256xf32>, i32 -> vector<32x256xf32>
    %1049 = vector.broadcast %160 : vector<1x256xf32> to vector<32x256xf32>
    %1050 = arith.mulf %1048, %1049 : vector<32x256xf32>
    %1051 = vector.extract_strided_slice %557 {offsets = [0, 70], sizes = [32, 1], strides = [1, 1]} : vector<32x81xf32> to vector<32x1xf32>
    %1052 = vector.broadcast %1051 : vector<32x1xf32> to vector<32x256xf32>
    %1053 = arith.mulf %1050, %1052 : vector<32x256xf32>
    %1054 = arith.addf %1047, %1053 : vector<32x256xf32>
    %c252_i32_236 = arith.constant 252 : i32
    %1055 = tpu.dynamic_rotate %1001 by %c252_i32_236 dim 1 : vector<32x256xf32>, i32 -> vector<32x256xf32>
    %1056 = vector.broadcast %182 : vector<1x256xf32> to vector<32x256xf32>
    %1057 = arith.mulf %1055, %1056 : vector<32x256xf32>
    %1058 = vector.extract_strided_slice %557 {offsets = [0, 71], sizes = [32, 1], strides = [1, 1]} : vector<32x81xf32> to vector<32x1xf32>
    %1059 = vector.broadcast %1058 : vector<32x1xf32> to vector<32x256xf32>
    %1060 = arith.mulf %1057, %1059 : vector<32x256xf32>
    %1061 = arith.addf %1054, %1060 : vector<32x256xf32>
    %c192_i32 = arith.constant 192 : i32
    %1062 = tpu.dynamic_rotate %556 by %c192_i32 dim 1 : vector<32x256xf32>, i32 -> vector<32x256xf32>
    %1063 = vector.broadcast %171 : vector<1x256xf32> to vector<32x256xf32>
    %1064 = arith.mulf %1062, %1063 : vector<32x256xf32>
    %c4_i32_237 = arith.constant 4 : i32
    %1065 = tpu.dynamic_rotate %1064 by %c4_i32_237 dim 1 : vector<32x256xf32>, i32 -> vector<32x256xf32>
    %1066 = vector.broadcast %28 : vector<1x256xf32> to vector<32x256xf32>
    %1067 = arith.mulf %1065, %1066 : vector<32x256xf32>
    %1068 = vector.extract_strided_slice %557 {offsets = [0, 72], sizes = [32, 1], strides = [1, 1]} : vector<32x81xf32> to vector<32x1xf32>
    %1069 = vector.broadcast %1068 : vector<32x1xf32> to vector<32x256xf32>
    %1070 = arith.mulf %1067, %1069 : vector<32x256xf32>
    %1071 = arith.addf %1061, %1070 : vector<32x256xf32>
    %c3_i32_238 = arith.constant 3 : i32
    %1072 = tpu.dynamic_rotate %1064 by %c3_i32_238 dim 1 : vector<32x256xf32>, i32 -> vector<32x256xf32>
    %1073 = vector.broadcast %50 : vector<1x256xf32> to vector<32x256xf32>
    %1074 = arith.mulf %1072, %1073 : vector<32x256xf32>
    %1075 = vector.extract_strided_slice %557 {offsets = [0, 73], sizes = [32, 1], strides = [1, 1]} : vector<32x81xf32> to vector<32x1xf32>
    %1076 = vector.broadcast %1075 : vector<32x1xf32> to vector<32x256xf32>
    %1077 = arith.mulf %1074, %1076 : vector<32x256xf32>
    %1078 = arith.addf %1071, %1077 : vector<32x256xf32>
    %c2_i32_239 = arith.constant 2 : i32
    %1079 = tpu.dynamic_rotate %1064 by %c2_i32_239 dim 1 : vector<32x256xf32>, i32 -> vector<32x256xf32>
    %1080 = vector.broadcast %72 : vector<1x256xf32> to vector<32x256xf32>
    %1081 = arith.mulf %1079, %1080 : vector<32x256xf32>
    %1082 = vector.extract_strided_slice %557 {offsets = [0, 74], sizes = [32, 1], strides = [1, 1]} : vector<32x81xf32> to vector<32x1xf32>
    %1083 = vector.broadcast %1082 : vector<32x1xf32> to vector<32x256xf32>
    %1084 = arith.mulf %1081, %1083 : vector<32x256xf32>
    %1085 = arith.addf %1078, %1084 : vector<32x256xf32>
    %c1_i32_240 = arith.constant 1 : i32
    %1086 = tpu.dynamic_rotate %1064 by %c1_i32_240 dim 1 : vector<32x256xf32>, i32 -> vector<32x256xf32>
    %1087 = vector.broadcast %94 : vector<1x256xf32> to vector<32x256xf32>
    %1088 = arith.mulf %1086, %1087 : vector<32x256xf32>
    %1089 = vector.extract_strided_slice %557 {offsets = [0, 75], sizes = [32, 1], strides = [1, 1]} : vector<32x81xf32> to vector<32x1xf32>
    %1090 = vector.broadcast %1089 : vector<32x1xf32> to vector<32x256xf32>
    %1091 = arith.mulf %1088, %1090 : vector<32x256xf32>
    %1092 = arith.addf %1085, %1091 : vector<32x256xf32>
    %1093 = vector.extract_strided_slice %557 {offsets = [0, 76], sizes = [32, 1], strides = [1, 1]} : vector<32x81xf32> to vector<32x1xf32>
    %1094 = vector.broadcast %1093 : vector<32x1xf32> to vector<32x256xf32>
    %1095 = arith.mulf %1064, %1094 : vector<32x256xf32>
    %1096 = arith.addf %1092, %1095 : vector<32x256xf32>
    %c255_i32_241 = arith.constant 255 : i32
    %1097 = tpu.dynamic_rotate %1064 by %c255_i32_241 dim 1 : vector<32x256xf32>, i32 -> vector<32x256xf32>
    %1098 = vector.broadcast %116 : vector<1x256xf32> to vector<32x256xf32>
    %1099 = arith.mulf %1097, %1098 : vector<32x256xf32>
    %1100 = vector.extract_strided_slice %557 {offsets = [0, 77], sizes = [32, 1], strides = [1, 1]} : vector<32x81xf32> to vector<32x1xf32>
    %1101 = vector.broadcast %1100 : vector<32x1xf32> to vector<32x256xf32>
    %1102 = arith.mulf %1099, %1101 : vector<32x256xf32>
    %1103 = arith.addf %1096, %1102 : vector<32x256xf32>
    %c254_i32_242 = arith.constant 254 : i32
    %1104 = tpu.dynamic_rotate %1064 by %c254_i32_242 dim 1 : vector<32x256xf32>, i32 -> vector<32x256xf32>
    %1105 = vector.broadcast %138 : vector<1x256xf32> to vector<32x256xf32>
    %1106 = arith.mulf %1104, %1105 : vector<32x256xf32>
    %1107 = vector.extract_strided_slice %557 {offsets = [0, 78], sizes = [32, 1], strides = [1, 1]} : vector<32x81xf32> to vector<32x1xf32>
    %1108 = vector.broadcast %1107 : vector<32x1xf32> to vector<32x256xf32>
    %1109 = arith.mulf %1106, %1108 : vector<32x256xf32>
    %1110 = arith.addf %1103, %1109 : vector<32x256xf32>
    %c253_i32_243 = arith.constant 253 : i32
    %1111 = tpu.dynamic_rotate %1064 by %c253_i32_243 dim 1 : vector<32x256xf32>, i32 -> vector<32x256xf32>
    %1112 = vector.broadcast %160 : vector<1x256xf32> to vector<32x256xf32>
    %1113 = arith.mulf %1111, %1112 : vector<32x256xf32>
    %1114 = vector.extract_strided_slice %557 {offsets = [0, 79], sizes = [32, 1], strides = [1, 1]} : vector<32x81xf32> to vector<32x1xf32>
    %1115 = vector.broadcast %1114 : vector<32x1xf32> to vector<32x256xf32>
    %1116 = arith.mulf %1113, %1115 : vector<32x256xf32>
    %1117 = arith.addf %1110, %1116 : vector<32x256xf32>
    %c252_i32_244 = arith.constant 252 : i32
    %1118 = tpu.dynamic_rotate %1064 by %c252_i32_244 dim 1 : vector<32x256xf32>, i32 -> vector<32x256xf32>
    %1119 = vector.broadcast %182 : vector<1x256xf32> to vector<32x256xf32>
    %1120 = arith.mulf %1118, %1119 : vector<32x256xf32>
    %1121 = vector.extract_strided_slice %557 {offsets = [0, 80], sizes = [32, 1], strides = [1, 1]} : vector<32x81xf32> to vector<32x1xf32>
    %1122 = vector.broadcast %1121 : vector<32x1xf32> to vector<32x256xf32>
    %1123 = arith.mulf %1120, %1122 : vector<32x256xf32>
    %1124 = arith.addf %1117, %1123 : vector<32x256xf32>
    %cst_245 = arith.constant 2.000000e-01 : f32
    %1125 = vector.broadcast %cst_245 : f32 to vector<32x256xf32>
    %1126 = arith.mulf %1125, %1124 : vector<32x256xf32>
    %1127 = arith.maximumf %1124, %1126 : vector<32x256xf32>
    %c176_246 = arith.constant 176 : index
    %c0_247 = arith.constant 0 : index
    %1128 = vector.load %arg4[%c176_246, %c0_247] : memref<184x64xf32, #tpu.memory_space<vmem>>, vector<3x32xf32>
    %cst_248 = arith.constant dense<0.000000e+00> : vector<3x256xf32>
    %1129 = tpu.matmul %1128, %1127, %cst_248 {dimension_numbers = #tpu.dot_dimension_numbers<[1], [0], [0], [1], [0, 0, 1, 1], [], []>} : vector<3x32xf32>, vector<32x256xf32>, vector<3x256xf32> -> vector<3x256xf32>
    %c0_249 = arith.constant 0 : index
    %c6 = arith.constant 6 : index
    %1130 = vector.load %arg5[%c0_249, %c6] : memref<64x8xf32, #tpu.memory_space<vmem>>, vector<3x1xf32>
    %1131 = vector.broadcast %1130 : vector<3x1xf32> to vector<3x256xf32>
    %1132 = arith.addf %1129, %1131 : vector<3x256xf32>
    %1133 = math.tanh %1132 : vector<3x256xf32>
    %c0_250 = arith.constant 0 : index
    %c0_251 = arith.constant 0 : index
    %1134 = vector.load %arg1[%c0_250, %c0_251] : memref<8x256xf32, #tpu.memory_space<vmem>>, vector<3x256xf32>
    %1135 = arith.addf %1133, %1134 : vector<3x256xf32>
    %c0_252 = arith.constant 0 : index
    %c0_253 = arith.constant 0 : index
    %1136 = vector.load %arg6[%c0_252, %c0_253] : memref<3x256xf32, #tpu.memory_space<vmem>>, vector<3x256xf32>
    tpu.vector_store %arg6[%c0_252, %c0_253], %1135 {strides = array<i32>} : memref<3x256xf32, #tpu.memory_space<vmem>>, vector<3x256xf32>,
    return
  }
  func.func @transform_0(%arg0: i32) -> (i32, i32) {
    %c0_i32 = arith.constant 0 : i32
    %c0_i32_0 = arith.constant 0 : i32
    return %c0_i32, %arg0 : i32, i32
  }
  func.func @transform_1(%arg0: i32) -> (i32, i32) {
    %c0_i32 = arith.constant 0 : i32
    %c0_i32_0 = arith.constant 0 : i32
    %c0_i32_1 = arith.constant 0 : i32
    return %c0_i32, %c0_i32_0 : i32, i32
  }
  func.func @transform_2(%arg0: i32) -> (i32, i32) {
    %c0_i32 = arith.constant 0 : i32
    %c0_i32_0 = arith.constant 0 : i32
    %c0_i32_1 = arith.constant 0 : i32
    return %c0_i32, %c0_i32_0 : i32, i32
  }
  func.func @transform_3(%arg0: i32) -> (i32, i32) {
    %c0_i32 = arith.constant 0 : i32
    %c0_i32_0 = arith.constant 0 : i32
    %c0_i32_1 = arith.constant 0 : i32
    return %c0_i32, %c0_i32_0 : i32, i32
  }
  func.func @transform_4(%arg0: i32) -> (i32, i32) {
    %c0_i32 = arith.constant 0 : i32
    %c0_i32_0 = arith.constant 0 : i32
    %c0_i32_1 = arith.constant 0 : i32
    return %c0_i32, %c0_i32_0 : i32, i32
  }
  func.func @transform_5(%arg0: i32) -> (i32, i32) {
    %c0_i32 = arith.constant 0 : i32
    %c0_i32_0 = arith.constant 0 : i32
    return %c0_i32, %arg0 : i32, i32
  }
}

</mosaic_0001>

<llo_original>
// kernel: tpu_custom_call.1
$region0: #{tpu_custom_call.1}
  #allocation0 [shape = 'u32[]', space=smem, size = 0x4, offset = 0x4, fixed_abs, tag = 'smem constant byte address 0x4 - core index']
  #allocation1 [shape = 'u32[144,128]{1,0:T(1,128)}', space=vmem, size = 0x12000, scoped, tag = 'internal scratch']
  #allocation2 [shape = 'f32[200,256]{1,0:T(8,128)}', space=vmem, size = 0x32000, scoped, tag = 'scratch operand']
  %s0 = inlined_call_operand.vmem [shape: f32[8,512], index: 0, kind: input, shape index: {}]
  %s1 = inlined_call_operand.vmem [shape: f32[32,200], index: 1, kind: input, shape index: {}]
  %s2 = inlined_call_operand.vmem [shape: f32[80,81], index: 2, kind: input, shape index: {}]
  %s3 = inlined_call_operand.vmem [shape: f32[184,64], index: 3, kind: input, shape index: {}]
  %s4 = inlined_call_operand.vmem [shape: f32[64,8], index: 4, kind: input, shape index: {}]
  %s5 = inlined_call_operand.hbm [shape: f32[3,512], index: 5, kind: output, shape index: {}]
  %s6 = sld [smem:[#allocation0]]
  $region53: #{tpu_custom_call.1} parent=0
    _
  %s8 = ssub.s32 1, %s6
  %s9 = scalar_select 0, %s8, %s6
  $region1: #{tpu_custom_call.1} parent=0
    #allocation3 [shape = 'u8[8192]{0}', space=vmem, size = 0x2000, scoped, tag = 'output window, operand 0']
    #allocation4 [shape = 's32[2]{0}', space=sflag, size = 0x8, scoped, tag = 'scoped memory for tpu_custom_call.1']
    %10 = vsyncpa [#allocation4], 0
    %s11 = scalar_lea.sflag [#allocation4], 1
    %12 = vsyncpa %s11, 0
    loop: start=0, step=1, limit=4
    $region2: #{tpu_custom_call.1} parent=1 // loop_pre_header
      _
    $region3: #{tpu_custom_call.1} parent=1 // loop_header
      %s14 = sphi 0, %s18
      %p15 = scmp.ge.s32.totalorder %s14, 4
      %s24 = sphi 0, %s26
      %s27 = sphi 0, %s24
      %s28 = sphi 0, %s27
      %s44 = sphi 0, %s28
      %s48 = sphi 0, %s48
      %s50 = sphi 0, %s48
      %s51 = sphi 0, %s50
      %s65 = sphi 0, %s51
      %s69 = sphi 0, %s69
      %s71 = sphi 0, %s69
      %s72 = sphi 0, %s71
      %s86 = sphi 0, %s72
      %s90 = sphi 0, %s90
      %s92 = sphi 0, %s90
      %s93 = sphi 0, %s92
      %s107 = sphi 0, %s93
      %s111 = sphi 0, %s111
      %s113 = sphi 0, %s111
      %s114 = sphi 0, %s113
      %s128 = sphi 0, %s114
      %s134 = sphi 0, %s136
      %s137 = sphi 0, %s134
      %s138 = sphi 0, %s137
      %s154 = sphi 0, %s138
    $region4: #{tpu_custom_call.1} parent=1 // loop_header_branch
      %17 = sbr.rel (%p15) target = $region8
    $region5: #{tpu_custom_call.1} parent=1 // loop_body
      %s19 = ssub.s32 %s14, 1
      %s20 = ssub.s32 %s14, 2
      %s21 = sadd.s32 %s14, 1
      %s22 = ssub.s32 %s14, %s21
      %p23 = scmp.eq.s32.totalorder %s22, 0
      %s25 = sadd.s32 %s24, 1
      %s26 = scalar_select %p23, %s24, %s25
      %p29 = pneg %p23
      %p30 = scmp.eq.s32.totalorder %s14, 1
      %p31 = por %p29, %p30
      %p32 = scmp.ne.s32.totalorder %s24, %s27
      %p33 = scmp.eq.s32.totalorder %s14, 0
      %p34 = por %p32, %p33
      %p35 = scmp.ne.s32.totalorder %s24, %s27
      %p36 = scmp.eq.s32.totalorder %s19, 1
      %p37 = por %p35, %p36
      %p38 = scmp.ne.s32.totalorder %s27, %s28
      %p39 = scmp.eq.s32.totalorder %s19, 0
      %p40 = por %p38, %p39
      %p41 = scmp.ne.s32.totalorder %s27, %s28
      %p42 = scmp.eq.s32.totalorder %s20, 1
      %p43 = por %p41, %p42
      %p45 = scmp.ne.s32.totalorder %s28, %s44
      %p46 = scmp.eq.s32.totalorder %s20, 0
      %p47 = por %p45, %p46
      %s49 = sadd.s32 %s48, 1
      %p52 = scmp.eq.s32.totalorder %s14, 1
      %p53 = scmp.ne.s32.totalorder %s48, %s50
      %p54 = scmp.eq.s32.totalorder %s14, 0
      %p55 = por %p53, %p54
      %p56 = scmp.ne.s32.totalorder %s48, %s50
      %p57 = scmp.eq.s32.totalorder %s19, 1
      %p58 = por %p56, %p57
      %p59 = scmp.ne.s32.totalorder %s50, %s51
      %p60 = scmp.eq.s32.totalorder %s19, 0
      %p61 = por %p59, %p60
      %p62 = scmp.ne.s32.totalorder %s50, %s51
      %p63 = scmp.eq.s32.totalorder %s20, 1
      %p64 = por %p62, %p63
      %p66 = scmp.ne.s32.totalorder %s51, %s65
      %p67 = scmp.eq.s32.totalorder %s20, 0
      %p68 = por %p66, %p67
      %s70 = sadd.s32 %s69, 1
      %p73 = scmp.eq.s32.totalorder %s14, 1
      %p74 = scmp.ne.s32.totalorder %s69, %s71
      %p75 = scmp.eq.s32.totalorder %s14, 0
      %p76 = por %p74, %p75
      %p77 = scmp.ne.s32.totalorder %s69, %s71
      %p78 = scmp.eq.s32.totalorder %s19, 1
      %p79 = por %p77, %p78
      %p80 = scmp.ne.s32.totalorder %s71, %s72
      %p81 = scmp.eq.s32.totalorder %s19, 0
      %p82 = por %p80, %p81
      %p83 = scmp.ne.s32.totalorder %s71, %s72
      %p84 = scmp.eq.s32.totalorder %s20, 1
      %p85 = por %p83, %p84
      %p87 = scmp.ne.s32.totalorder %s72, %s86
      %p88 = scmp.eq.s32.totalorder %s20, 0
      %p89 = por %p87, %p88
      %s91 = sadd.s32 %s90, 1
      %p94 = scmp.eq.s32.totalorder %s14, 1
      %p95 = scmp.ne.s32.totalorder %s90, %s92
      %p96 = scmp.eq.s32.totalorder %s14, 0
      %p97 = por %p95, %p96
      %p98 = scmp.ne.s32.totalorder %s90, %s92
      %p99 = scmp.eq.s32.totalorder %s19, 1
      %p100 = por %p98, %p99
      %p101 = scmp.ne.s32.totalorder %s92, %s93
      %p102 = scmp.eq.s32.totalorder %s19, 0
      %p103 = por %p101, %p102
      %p104 = scmp.ne.s32.totalorder %s92, %s93
      %p105 = scmp.eq.s32.totalorder %s20, 1
      %p106 = por %p104, %p105
      %p108 = scmp.ne.s32.totalorder %s93, %s107
      %p109 = scmp.eq.s32.totalorder %s20, 0
      %p110 = por %p108, %p109
      %s112 = sadd.s32 %s111, 1
      %p115 = scmp.eq.s32.totalorder %s14, 1
      %p116 = scmp.ne.s32.totalorder %s111, %s113
      %p117 = scmp.eq.s32.totalorder %s14, 0
      %p118 = por %p116, %p117
      %p119 = scmp.ne.s32.totalorder %s111, %s113
      %p120 = scmp.eq.s32.totalorder %s19, 1
      %p121 = por %p119, %p120
      %p122 = scmp.ne.s32.totalorder %s113, %s114
      %p123 = scmp.eq.s32.totalorder %s19, 0
      %p124 = por %p122, %p123
      %p125 = scmp.ne.s32.totalorder %s113, %s114
      %p126 = scmp.eq.s32.totalorder %s20, 1
      %p127 = por %p125, %p126
      %p129 = scmp.ne.s32.totalorder %s114, %s128
      %p130 = scmp.eq.s32.totalorder %s20, 0
      %p131 = por %p129, %p130
      %s132 = ssub.s32 %s14, %s21
      %p133 = scmp.eq.s32.totalorder %s132, 0
      %s135 = sadd.s32 %s134, 1
      %s136 = scalar_select %p133, %s134, %s135
      %p139 = pneg %p133
      %p140 = scmp.eq.s32.totalorder %s14, 1
      %p141 = por %p139, %p140
      %p142 = scmp.ne.s32.totalorder %s134, %s137
      %p143 = scmp.eq.s32.totalorder %s14, 0
      %p144 = por %p142, %p143
      %p145 = scmp.ne.s32.totalorder %s134, %s137
      %p146 = scmp.eq.s32.totalorder %s19, 1
      %p147 = por %p145, %p146
      %p148 = scmp.ne.s32.totalorder %s137, %s138
      %p149 = scmp.eq.s32.totalorder %s19, 0
      %p150 = por %p148, %p149
      %p151 = scmp.ne.s32.totalorder %s137, %s138
      %p152 = scmp.eq.s32.totalorder %s20, 1
      %p153 = por %p151, %p152
      %p155 = scmp.ne.s32.totalorder %s138, %s154
      %p156 = scmp.eq.s32.totalorder %s20, 0
      %p157 = por %p155, %p156
      %p158 = scmp.le.s32.totalorder 1, %s14
      %p159 = scmp.lt.s32.totalorder %s14, 3
      %p160 = pnand %p158, %p159
      %p161 = pneg %p160
      // Predicated region
      $region9: #{tpu_custom_call.1} parent=5 // pred_check
        _
      $region10: #{tpu_custom_call.1} parent=5 // pred_check_branch
        %163 = sbr.rel (%p160) target = $region12
      $region11: #{tpu_custom_call.1} parent=5 // pred_region
        %s164 = ssub.s32 %s14, 1
        // Predicated region
        $region13: #{tpu_custom_call.1} parent=11 // pred_check
          %p165 = pneg %p61
        $region14: #{tpu_custom_call.1} parent=11 // pred_check_branch
          %167 = sbr.rel (%p165) target = $region16
        $region15: #{tpu_custom_call.1} parent=11 // pred_region
          _
        $region16: #{tpu_custom_call.1} parent=11 // pred_fallthru
          _
        // Predicated region
        $region17: #{tpu_custom_call.1} parent=11 // pred_check
          %p168 = pneg %p82
        $region18: #{tpu_custom_call.1} parent=11 // pred_check_branch
          %170 = sbr.rel (%p168) target = $region20
        $region19: #{tpu_custom_call.1} parent=11 // pred_region
          _
        $region20: #{tpu_custom_call.1} parent=11 // pred_fallthru
          _
        // Predicated region
        $region21: #{tpu_custom_call.1} parent=11 // pred_check
          %p171 = pneg %p103
        $region22: #{tpu_custom_call.1} parent=11 // pred_check_branch
          %173 = sbr.rel (%p171) target = $region24
        $region23: #{tpu_custom_call.1} parent=11 // pred_region
          _
        $region24: #{tpu_custom_call.1} parent=11 // pred_fallthru
          _
        // Predicated region
        $region25: #{tpu_custom_call.1} parent=11 // pred_check
          %p174 = pneg %p124
        $region26: #{tpu_custom_call.1} parent=11 // pred_check_branch
          %176 = sbr.rel (%p174) target = $region28
        $region27: #{tpu_custom_call.1} parent=11 // pred_region
          _
        $region28: #{tpu_custom_call.1} parent=11 // pred_fallthru
          _
      $region12: #{tpu_custom_call.1} parent=5 // pred_fallthru
        _
      %p177 = scmp.lt.s32.totalorder %s14, 2
      // Predicated region
      $region29: #{tpu_custom_call.1} parent=5 // pred_check
        %p178 = pneg %p177
      $region30: #{tpu_custom_call.1} parent=5 // pred_check_branch
        %180 = sbr.rel (%p178) target = $region32
      $region31: #{tpu_custom_call.1} parent=5 // pred_region
        // Predicated region
        $region33: #{tpu_custom_call.1} parent=31 // pred_check
          %p181 = pneg %p34
        $region34: #{tpu_custom_call.1} parent=31 // pred_check_branch
          %183 = sbr.rel (%p181) target = $region36
        $region35: #{tpu_custom_call.1} parent=31 // pred_region
          %s184 = smul.u32 2, %s14
          %p185 = scmp.lt.s32.totalorder %s184, 3
          %s186 = scalar_select %p185, %s184, 3
          %s187 = smul.addr %s186, 8
          %s188 = scalar_lea.vmem %s0, %s187
          %s189 = smul.u32 2, %s14
        $region36: #{tpu_custom_call.1} parent=31 // pred_fallthru
          _
      $region32: #{tpu_custom_call.1} parent=5 // pred_fallthru
        _
      %p190 = scmp.le.s32.totalorder 1, %s14
      %p191 = scmp.lt.s32.totalorder %s14, 3
      %p192 = pnand %p190, %p191
      %p193 = pneg %p192
      // Predicated region
      $region37: #{tpu_custom_call.1} parent=5 // pred_check
        _
      $region38: #{tpu_custom_call.1} parent=5 // pred_check_branch
        %195 = sbr.rel (%p192) target = $region40
      $region39: #{tpu_custom_call.1} parent=5 // pred_region
        %s196 = ssub.s32 %s14, 1
        %s197 = smul.u32 2, %s19
        %p198 = scmp.lt.s32.totalorder %s197, 3
        %s199 = scalar_select %p198, %s197, 3
        %s200 = smul.addr %s199, 8
        %s201 = scalar_lea.vmem %s0, %s200
        %p202 = pneg %p40
        %p203 = pneg %p37
        %p204 = pneg %p61
        %p205 = pneg %p58
        %p206 = pneg %p82
        %p207 = pneg %p79
        %p208 = pneg %p103
        %p209 = pneg %p100
        %p210 = pneg %p124
        %p211 = pneg %p121
        %p212 = pneg %p150
        %p213 = pneg %p147
        %s214 = sand.u32 %s137, 1
        %s215 = scalar_lea.sflag [#allocation4], %s214
        %s216 = sand.u32 %s137, 1
        %s217 = smul.addr %s216, 8
        %s218 = scalar_lea.vmem [#allocation3], %s217
        %s219 = smul.u32 2, %s19
        %p220 = scmp.lt.s32.totalorder %s219, 3
        %s221 = scalar_select %p220, %s219, 3
        %s222 = smul.addr %s221, 8
        %s223 = scalar_lea.vmem %s0, %s222
        %s224 = smul.u32 2, %s19
        %s225 = smul.u32 2, %s19
        %v226 = vlaneseq
        %v227 = vand.u32 %v226, 127
        %v228 = vadd.s32 %v227, 128
        %v229 = vand.u32 %v227, 15
        %v230 = vand.u32 %v228, 15
        %v231 = vshra.s32 %v227, 4
        %v232 = vshra.s32 %v228, 4
        %v233 = vand.u32 %v231, 15
        %v234 = vand.u32 %v232, 15
        %v235 = vadd.s32 %v233, 4294967292
        %v236 = vadd.s32 %v234, 4294967292
        %vm237 = vcmp.ge.s32.totalorder %v235, 0
        %vm238 = vcmp.ge.s32.totalorder %v236, 0
        %vm239 = vcmp.lt.s32.totalorder %v235, 16
        %vm240 = vcmp.lt.s32.totalorder %v236, 16
        %vm241 = vmand %vm237, %vm239
        %vm242 = vmand %vm238, %vm240
        %v243 = vsel %vm241, 1, 0
        %v244 = vsel %vm242, 1, 0
        %v245 = vcvt.s32.f32 %v243
        %v246 = vcvt.s32.f32 %v244
        %v247 = vadd.s32 %v229, 4294967292
        %v248 = vadd.s32 %v230, 4294967292
        %vm249 = vcmp.ge.s32.totalorder %v247, 0
        %vm250 = vcmp.ge.s32.totalorder %v248, 0
        %vm251 = vcmp.lt.s32.totalorder %v247, 16
        %vm252 = vcmp.lt.s32.totalorder %v248, 16
        %vm253 = vmand %vm249, %vm251
        %vm254 = vmand %vm250, %vm252
        %v255 = vsel %vm253, 1, 0
        %v256 = vsel %vm254, 1, 0
        %v257 = vcvt.s32.f32 %v255
        %v258 = vcvt.s32.f32 %v256
        %v259 = vadd.s32 %v233, 4294967293
        %v260 = vadd.s32 %v234, 4294967293
        %vm261 = vcmp.ge.s32.totalorder %v259, 0
        %vm262 = vcmp.ge.s32.totalorder %v260, 0
        %vm263 = vcmp.lt.s32.totalorder %v259, 16
        %vm264 = vcmp.lt.s32.totalorder %v260, 16
        %vm265 = vmand %vm261, %vm263
        %vm266 = vmand %vm262, %vm264
        %v267 = vsel %vm265, 1, 0
        %v268 = vsel %vm266, 1, 0
        %v269 = vcvt.s32.f32 %v267
        %v270 = vcvt.s32.f32 %v268
        %v271 = vadd.s32 %v229, 4294967293
        %v272 = vadd.s32 %v230, 4294967293
        %vm273 = vcmp.ge.s32.totalorder %v271, 0
        %vm274 = vcmp.ge.s32.totalorder %v272, 0
        %vm275 = vcmp.lt.s32.totalorder %v271, 16
        %vm276 = vcmp.lt.s32.totalorder %v272, 16
        %vm277 = vmand %vm273, %vm275
        %vm278 = vmand %vm274, %vm276
        %v279 = vsel %vm277, 1, 0
        %v280 = vsel %vm278, 1, 0
        %v281 = vcvt.s32.f32 %v279
        %v282 = vcvt.s32.f32 %v280
        %v283 = vadd.s32 %v233, 4294967294
        %v284 = vadd.s32 %v234, 4294967294
        %vm285 = vcmp.ge.s32.totalorder %v283, 0
        %vm286 = vcmp.ge.s32.totalorder %v284, 0
        %vm287 = vcmp.lt.s32.totalorder %v283, 16
        %vm288 = vcmp.lt.s32.totalorder %v284, 16
        %vm289 = vmand %vm285, %vm287
        %vm290 = vmand %vm286, %vm288
        %v291 = vsel %vm289, 1, 0
        %v292 = vsel %vm290, 1, 0
        %v293 = vcvt.s32.f32 %v291
        %v294 = vcvt.s32.f32 %v292
        %v295 = vadd.s32 %v229, 4294967294
        %v296 = vadd.s32 %v230, 4294967294
        %vm297 = vcmp.ge.s32.totalorder %v295, 0
        %vm298 = vcmp.ge.s32.totalorder %v296, 0
        %vm299 = vcmp.lt.s32.totalorder %v295, 16
        %vm300 = vcmp.lt.s32.totalorder %v296, 16
        %vm301 = vmand %vm297, %vm299
        %vm302 = vmand %vm298, %vm300
        %v303 = vsel %vm301, 1, 0
        %v304 = vsel %vm302, 1, 0
        %v305 = vcvt.s32.f32 %v303
        %v306 = vcvt.s32.f32 %v304
        %v307 = vadd.s32 %v233, 4294967295
        %v308 = vadd.s32 %v234, 4294967295
        %vm309 = vcmp.ge.s32.totalorder %v307, 0
        %vm310 = vcmp.ge.s32.totalorder %v308, 0
        %vm311 = vcmp.lt.s32.totalorder %v307, 16
        %vm312 = vcmp.lt.s32.totalorder %v308, 16
        %vm313 = vmand %vm309, %vm311
        %vm314 = vmand %vm310, %vm312
        %v315 = vsel %vm313, 1, 0
        %v316 = vsel %vm314, 1, 0
        %v317 = vcvt.s32.f32 %v315
        %v318 = vcvt.s32.f32 %v316
        %v319 = vadd.s32 %v229, 4294967295
        %v320 = vadd.s32 %v230, 4294967295
        %vm321 = vcmp.ge.s32.totalorder %v319, 0
        %vm322 = vcmp.ge.s32.totalorder %v320, 0
        %vm323 = vcmp.lt.s32.totalorder %v319, 16
        %vm324 = vcmp.lt.s32.totalorder %v320, 16
        %vm325 = vmand %vm321, %vm323
        %vm326 = vmand %vm322, %vm324
        %v327 = vsel %vm325, 1, 0
        %v328 = vsel %vm326, 1, 0
        %v329 = vcvt.s32.f32 %v327
        %v330 = vcvt.s32.f32 %v328
        %v331 = vadd.s32 %v233, 1
        %v332 = vadd.s32 %v234, 1
        %vm333 = vcmp.ge.s32.totalorder %v331, 0
        %vm334 = vcmp.ge.s32.totalorder %v332, 0
        %vm335 = vcmp.lt.s32.totalorder %v331, 16
        %vm336 = vcmp.lt.s32.totalorder %v332, 16
        %vm337 = vmand %vm333, %vm335
        %vm338 = vmand %vm334, %vm336
        %v339 = vsel %vm337, 1, 0
        %v340 = vsel %vm338, 1, 0
        %v341 = vcvt.s32.f32 %v339
        %v342 = vcvt.s32.f32 %v340
        %v343 = vadd.s32 %v229, 1
        %v344 = vadd.s32 %v230, 1
        %vm345 = vcmp.ge.s32.totalorder %v343, 0
        %vm346 = vcmp.ge.s32.totalorder %v344, 0
        %vm347 = vcmp.lt.s32.totalorder %v343, 16
        %vm348 = vcmp.lt.s32.totalorder %v344, 16
        %vm349 = vmand %vm345, %vm347
        %vm350 = vmand %vm346, %vm348
        %v351 = vsel %vm349, 1, 0
        %v352 = vsel %vm350, 1, 0
        %v353 = vcvt.s32.f32 %v351
        %v354 = vcvt.s32.f32 %v352
        %v355 = vadd.s32 %v233, 2
        %v356 = vadd.s32 %v234, 2
        %vm357 = vcmp.ge.s32.totalorder %v355, 0
        %vm358 = vcmp.ge.s32.totalorder %v356, 0
        %vm359 = vcmp.lt.s32.totalorder %v355, 16
        %vm360 = vcmp.lt.s32.totalorder %v356, 16
        %vm361 = vmand %vm357, %vm359
        %vm362 = vmand %vm358, %vm360
        %v363 = vsel %vm361, 1, 0
        %v364 = vsel %vm362, 1, 0
        %v365 = vcvt.s32.f32 %v363
        %v366 = vcvt.s32.f32 %v364
        %v367 = vadd.s32 %v229, 2
        %v368 = vadd.s32 %v230, 2
        %vm369 = vcmp.ge.s32.totalorder %v367, 0
        %vm370 = vcmp.ge.s32.totalorder %v368, 0
        %vm371 = vcmp.lt.s32.totalorder %v367, 16
        %vm372 = vcmp.lt.s32.totalorder %v368, 16
        %vm373 = vmand %vm369, %vm371
        %vm374 = vmand %vm370, %vm372
        %v375 = vsel %vm373, 1, 0
        %v376 = vsel %vm374, 1, 0
        %v377 = vcvt.s32.f32 %v375
        %v378 = vcvt.s32.f32 %v376
        %v379 = vadd.s32 %v233, 3
        %v380 = vadd.s32 %v234, 3
        %vm381 = vcmp.ge.s32.totalorder %v379, 0
        %vm382 = vcmp.ge.s32.totalorder %v380, 0
        %vm383 = vcmp.lt.s32.totalorder %v379, 16
        %vm384 = vcmp.lt.s32.totalorder %v380, 16
        %vm385 = vmand %vm381, %vm383
        %vm386 = vmand %vm382, %vm384
        %v387 = vsel %vm385, 1, 0
        %v388 = vsel %vm386, 1, 0
        %v389 = vcvt.s32.f32 %v387
        %v390 = vcvt.s32.f32 %v388
        %v391 = vadd.s32 %v229, 3
        %v392 = vadd.s32 %v230, 3
        %vm393 = vcmp.ge.s32.totalorder %v391, 0
        %vm394 = vcmp.ge.s32.totalorder %v392, 0
        %vm395 = vcmp.lt.s32.totalorder %v391, 16
        %vm396 = vcmp.lt.s32.totalorder %v392, 16
        %vm397 = vmand %vm393, %vm395
        %vm398 = vmand %vm394, %vm396
        %v399 = vsel %vm397, 1, 0
        %v400 = vsel %vm398, 1, 0
        %v401 = vcvt.s32.f32 %v399
        %v402 = vcvt.s32.f32 %v400
        %v403 = vadd.s32 %v233, 4
        %v404 = vadd.s32 %v234, 4
        %vm405 = vcmp.ge.s32.totalorder %v403, 0
        %vm406 = vcmp.ge.s32.totalorder %v404, 0
        %vm407 = vcmp.lt.s32.totalorder %v403, 16
        %vm408 = vcmp.lt.s32.totalorder %v404, 16
        %vm409 = vmand %vm405, %vm407
        %vm410 = vmand %vm406, %vm408
        %v411 = vsel %vm409, 1, 0
        %v412 = vsel %vm410, 1, 0
        %v413 = vcvt.s32.f32 %v411
        %v414 = vcvt.s32.f32 %v412
        %v415 = vadd.s32 %v229, 4
        %v416 = vadd.s32 %v230, 4
        %vm417 = vcmp.ge.s32.totalorder %v415, 0
        %vm418 = vcmp.ge.s32.totalorder %v416, 0
        %vm419 = vcmp.lt.s32.totalorder %v415, 16
        %vm420 = vcmp.lt.s32.totalorder %v416, 16
        %vm421 = vmand %vm417, %vm419
        %vm422 = vmand %vm418, %vm420
        %v423 = vsel %vm421, 1, 0
        %v424 = vsel %vm422, 1, 0
        %v425 = vcvt.s32.f32 %v423
        %v426 = vcvt.s32.f32 %v424
        %v427 = vld [vmem:[%s223] sm:$0xff]
        %v428 = vld [vmem:[%s223 + $0x8] sm:$0xff]
        %429 = vrot.lane.b32.xlu0 %v427, 32
        %v430 = vpop.permute.xlu0 %429
        %431 = vrot.lane.b32.xlu0 %v428, 32
        %v432 = vpop.permute.xlu0 %431
        %vm433 = vcmp.lt.s32.totalorder %v227, 32
        %v434 = vsel %vm433, %v430, %v432
        %v435 = vsel %vm433, %v432, %v430
        %v436 = vmul.f32 %v435, %v293
        %v437 = vmul.f32 %v434, %v294
        %438 = vrot.lane.b32.xlu0 %v436, 2
        %v439 = vpop.permute.xlu0 %438
        %440 = vrot.lane.b32.xlu0 %v437, 2
        %v441 = vpop.permute.xlu0 %440
        %vm442 = vcmp.lt.s32.totalorder %v227, 2
        %v443 = vsel %vm442, %v439, %v441
        %v444 = vsel %vm442, %v441, %v439
        %v445 = vmul.f32 %v444, %v305
        %v446 = vmul.f32 %v443, %v306
        %447 = vst [vmem:[#allocation2] sm:$0xff] %v445
        %448 = vst [vmem:[#allocation2 + $0x8] sm:$0xff] %v446
        %449 = vrot.lane.b32.xlu0 %v436, 1
        %v450 = vpop.permute.xlu0 %449
        %451 = vrot.lane.b32.xlu0 %v437, 1
        %v452 = vpop.permute.xlu0 %451
        %vm453 = vcmp.lt.s32.totalorder %v227, 1
        %v454 = vsel %vm453, %v450, %v452
        %v455 = vsel %vm453, %v452, %v450
        %v456 = vmul.f32 %v455, %v329
        %v457 = vmul.f32 %v454, %v330
        %458 = vst [vmem:[#allocation2 + $0x10] sm:$0xff] %v456
        %459 = vst [vmem:[#allocation2 + $0x18] sm:$0xff] %v457
        %460 = vst [vmem:[#allocation2 + $0x20] sm:$0xff] %v436
        %461 = vst [vmem:[#allocation2 + $0x28] sm:$0xff] %v437
        %462 = vrot.lane.b32.xlu0 %v436, 127
        %v463 = vpop.permute.xlu0 %462
        %464 = vrot.lane.b32.xlu0 %v437, 127
        %v465 = vpop.permute.xlu0 %464
        %vm466 = vcmp.lt.s32.totalorder %v227, 127
        %v467 = vsel %vm466, %v463, %v465
        %v468 = vsel %vm466, %v465, %v463
        %v469 = vmul.f32 %v467, %v353
        %v470 = vmul.f32 %v468, %v354
        %471 = vst [vmem:[#allocation2 + $0x30] sm:$0xff] %v469
        %472 = vst [vmem:[#allocation2 + $0x38] sm:$0xff] %v470
        %473 = vrot.lane.b32.xlu0 %v436, 126
        %v474 = vpop.permute.xlu0 %473
        %475 = vrot.lane.b32.xlu0 %v437, 126
        %v476 = vpop.permute.xlu0 %475
        %vm477 = vcmp.lt.s32.totalorder %v227, 126
        %v478 = vsel %vm477, %v474, %v476
        %v479 = vsel %vm477, %v476, %v474
        %v480 = vmul.f32 %v478, %v377
        %v481 = vmul.f32 %v479, %v378
        %482 = vst [vmem:[#allocation2 + $0x40] sm:$0xff] %v480
        %483 = vst [vmem:[#allocation2 + $0x48] sm:$0xff] %v481
        %484 = vrot.lane.b32.xlu0 %v427, 16
        %v485 = vpop.permute.xlu0 %484
        %486 = vrot.lane.b32.xlu0 %v428, 16
        %v487 = vpop.permute.xlu0 %486
        %vm488 = vcmp.lt.s32.totalorder %v227, 16
        %v489 = vsel %vm488, %v485, %v487
        %v490 = vsel %vm488, %v487, %v485
        %v491 = vmul.f32 %v490, %v317
        %v492 = vmul.f32 %v489, %v318
        %493 = vrot.lane.b32.xlu0 %v491, 2
        %v494 = vpop.permute.xlu0 %493
        %495 = vrot.lane.b32.xlu0 %v492, 2
        %v496 = vpop.permute.xlu0 %495
        %v497 = vsel %vm442, %v494, %v496
        %v498 = vsel %vm442, %v496, %v494
        %v499 = vmul.f32 %v498, %v305
        %v500 = vmul.f32 %v497, %v306
        %501 = vst [vmem:[#allocation2 + $0x50] sm:$0xff] %v499
        %502 = vst [vmem:[#allocation2 + $0x58] sm:$0xff] %v500
        %503 = vrot.lane.b32.xlu0 %v491, 1
        %v504 = vpop.permute.xlu0 %503
        %505 = vrot.lane.b32.xlu0 %v492, 1
        %v506 = vpop.permute.xlu0 %505
        %v507 = vsel %vm453, %v504, %v506
        %v508 = vsel %vm453, %v506, %v504
        %v509 = vmul.f32 %v508, %v329
        %v510 = vmul.f32 %v507, %v330
        %511 = vst [vmem:[#allocation2 + $0x60] sm:$0xff] %v509
        %512 = vst [vmem:[#allocation2 + $0x68] sm:$0xff] %v510
        %513 = vst [vmem:[#allocation2 + $0x70] sm:$0xff] %v491
        %514 = vst [vmem:[#allocation2 + $0x78] sm:$0xff] %v492
        %515 = vrot.lane.b32.xlu0 %v491, 127
        %v516 = vpop.permute.xlu0 %515
        %517 = vrot.lane.b32.xlu0 %v492, 127
        %v518 = vpop.permute.xlu0 %517
        %v519 = vsel %vm466, %v516, %v518
        %v520 = vsel %vm466, %v518, %v516
        %v521 = vmul.f32 %v519, %v353
        %v522 = vmul.f32 %v520, %v354
        %523 = vst [vmem:[#allocation2 + $0x80] sm:$0xff] %v521
        %524 = vst [vmem:[#allocation2 + $0x88] sm:$0xff] %v522
        %525 = vrot.lane.b32.xlu0 %v491, 126
        %v526 = vpop.permute.xlu0 %525
        %527 = vrot.lane.b32.xlu0 %v492, 126
        %v528 = vpop.permute.xlu0 %527
        %v529 = vsel %vm477, %v526, %v528
        %v530 = vsel %vm477, %v528, %v526
        %v531 = vmul.f32 %v529, %v377
        %v532 = vmul.f32 %v530, %v378
        %533 = vst [vmem:[#allocation2 + $0x90] sm:$0xff] %v531
        %534 = vst [vmem:[#allocation2 + $0x98] sm:$0xff] %v532
        %535 = vrot.lane.b32.xlu0 %v427, 2
        %v536 = vpop.permute.xlu0 %535
        %537 = vrot.lane.b32.xlu0 %v428, 2
        %v538 = vpop.permute.xlu0 %537
        %v539 = vsel %vm442, %v536, %v538
        %v540 = vsel %vm442, %v538, %v536
        %v541 = vmul.f32 %v540, %v305
        %v542 = vmul.f32 %v539, %v306
        %543 = vst [vmem:[#allocation2 + $0xa0] sm:$0xff] %v541
        %544 = vst [vmem:[#allocation2 + $0xa8] sm:$0xff] %v542
        %545 = vrot.lane.b32.xlu0 %v427, 1
        %v546 = vpop.permute.xlu0 %545
        %547 = vrot.lane.b32.xlu0 %v428, 1
        %v548 = vpop.permute.xlu0 %547
        %v549 = vsel %vm453, %v546, %v548
        %v550 = vsel %vm453, %v548, %v546
        %v551 = vmul.f32 %v550, %v329
        %v552 = vmul.f32 %v549, %v330
        %553 = vst [vmem:[#allocation2 + $0xb0] sm:$0xff] %v551
        %554 = vst [vmem:[#allocation2 + $0xb8] sm:$0xff] %v552
        %555 = vst [vmem:[#allocation2 + $0xc0] sm:$0xff] %v427
        %556 = vst [vmem:[#allocation2 + $0xc8] sm:$0xff] %v428
        %557 = vrot.lane.b32.xlu0 %v427, 127
        %v558 = vpop.permute.xlu0 %557
        %559 = vrot.lane.b32.xlu0 %v428, 127
        %v560 = vpop.permute.xlu0 %559
        %v561 = vsel %vm466, %v558, %v560
        %v562 = vsel %vm466, %v560, %v558
        %v563 = vmul.f32 %v561, %v353
        %v564 = vmul.f32 %v562, %v354
        %565 = vst [vmem:[#allocation2 + $0xd0] sm:$0xff] %v563
        %566 = vst [vmem:[#allocation2 + $0xd8] sm:$0xff] %v564
        %567 = vrot.lane.b32.xlu0 %v427, 126
        %v568 = vpop.permute.xlu0 %567
        %569 = vrot.lane.b32.xlu0 %v428, 126
        %v570 = vpop.permute.xlu0 %569
        %v571 = vsel %vm477, %v568, %v570
        %v572 = vsel %vm477, %v570, %v568
        %v573 = vmul.f32 %v571, %v377
        %v574 = vmul.f32 %v572, %v378
        %575 = vst [vmem:[#allocation2 + $0xe0] sm:$0xff] %v573
        %576 = vst [vmem:[#allocation2 + $0xe8] sm:$0xff] %v574
        %577 = vrot.lane.b32.xlu0 %v427, 112
        %v578 = vpop.permute.xlu0 %577
        %579 = vrot.lane.b32.xlu0 %v428, 112
        %v580 = vpop.permute.xlu0 %579
        %vm581 = vcmp.lt.s32.totalorder %v227, 112
        %v582 = vsel %vm581, %v578, %v580
        %v583 = vsel %vm581, %v580, %v578
        %v584 = vmul.f32 %v582, %v341
        %v585 = vmul.f32 %v583, %v342
        %586 = vrot.lane.b32.xlu0 %v584, 2
        %v587 = vpop.permute.xlu0 %586
        %588 = vrot.lane.b32.xlu0 %v585, 2
        %v589 = vpop.permute.xlu0 %588
        %v590 = vsel %vm442, %v587, %v589
        %v591 = vsel %vm442, %v589, %v587
        %v592 = vmul.f32 %v591, %v305
        %v593 = vmul.f32 %v590, %v306
        %594 = vst [vmem:[#allocation2 + $0xf0] sm:$0xff] %v592
        %595 = vst [vmem:[#allocation2 + $0xf8] sm:$0xff] %v593
        %596 = vrot.lane.b32.xlu0 %v584, 1
        %v597 = vpop.permute.xlu0 %596
        %598 = vrot.lane.b32.xlu0 %v585, 1
        %v599 = vpop.permute.xlu0 %598
        %v600 = vsel %vm453, %v597, %v599
        %v601 = vsel %vm453, %v599, %v597
        %v602 = vmul.f32 %v601, %v329
        %v603 = vmul.f32 %v600, %v330
        %604 = vst [vmem:[#allocation2 + $0x100] sm:$0xff] %v602
        %605 = vst [vmem:[#allocation2 + $0x108] sm:$0xff] %v603
        %606 = vst [vmem:[#allocation2 + $0x110] sm:$0xff] %v584
        %607 = vst [vmem:[#allocation2 + $0x118] sm:$0xff] %v585
        %608 = vrot.lane.b32.xlu0 %v584, 127
        %v609 = vpop.permute.xlu0 %608
        %610 = vrot.lane.b32.xlu0 %v585, 127
        %v611 = vpop.permute.xlu0 %610
        %v612 = vsel %vm466, %v609, %v611
        %v613 = vsel %vm466, %v611, %v609
        %v614 = vmul.f32 %v612, %v353
        %v615 = vmul.f32 %v613, %v354
        %616 = vst [vmem:[#allocation2 + $0x120] sm:$0xff] %v614
        %617 = vst [vmem:[#allocation2 + $0x128] sm:$0xff] %v615
        %618 = vrot.lane.b32.xlu0 %v584, 126
        %v619 = vpop.permute.xlu0 %618
        %620 = vrot.lane.b32.xlu0 %v585, 126
        %v621 = vpop.permute.xlu0 %620
        %v622 = vsel %vm477, %v619, %v621
        %v623 = vsel %vm477, %v621, %v619
        %v624 = vmul.f32 %v622, %v377
        %v625 = vmul.f32 %v623, %v378
        %626 = vst [vmem:[#allocation2 + $0x130] sm:$0xff] %v624
        %627 = vst [vmem:[#allocation2 + $0x138] sm:$0xff] %v625
        %628 = vrot.lane.b32.xlu0 %v427, 96
        %v629 = vpop.permute.xlu0 %628
        %630 = vrot.lane.b32.xlu0 %v428, 96
        %v631 = vpop.permute.xlu0 %630
        %vm632 = vcmp.lt.s32.totalorder %v227, 96
        %v633 = vsel %vm632, %v629, %v631
        %v634 = vsel %vm632, %v631, %v629
        %v635 = vmul.f32 %v633, %v365
        %v636 = vmul.f32 %v634, %v366
        %637 = vrot.lane.b32.xlu0 %v635, 2
        %v638 = vpop.permute.xlu0 %637
        %639 = vrot.lane.b32.xlu0 %v636, 2
        %v640 = vpop.permute.xlu0 %639
        %v641 = vsel %vm442, %v638, %v640
        %v642 = vsel %vm442, %v640, %v638
        %v643 = vmul.f32 %v642, %v305
        %v644 = vmul.f32 %v641, %v306
        %645 = vst [vmem:[#allocation2 + $0x140] sm:$0xff] %v643
        %646 = vst [vmem:[#allocation2 + $0x148] sm:$0xff] %v644
        %647 = vrot.lane.b32.xlu0 %v635, 1
        %v648 = vpop.permute.xlu0 %647
        %649 = vrot.lane.b32.xlu0 %v636, 1
        %v650 = vpop.permute.xlu0 %649
        %v651 = vsel %vm453, %v648, %v650
        %v652 = vsel %vm453, %v650, %v648
        %v653 = vmul.f32 %v652, %v329
        %v654 = vmul.f32 %v651, %v330
        %655 = vst [vmem:[#allocation2 + $0x150] sm:$0xff] %v653
        %656 = vst [vmem:[#allocation2 + $0x158] sm:$0xff] %v654
        %657 = vst [vmem:[#allocation2 + $0x160] sm:$0xff] %v635
        %658 = vst [vmem:[#allocation2 + $0x168] sm:$0xff] %v636
        %659 = vrot.lane.b32.xlu0 %v635, 127
        %v660 = vpop.permute.xlu0 %659
        %661 = vrot.lane.b32.xlu0 %v636, 127
        %v662 = vpop.permute.xlu0 %661
        %v663 = vsel %vm466, %v660, %v662
        %v664 = vsel %vm466, %v662, %v660
        %v665 = vmul.f32 %v663, %v353
        %v666 = vmul.f32 %v664, %v354
        %667 = vst [vmem:[#allocation2 + $0x170] sm:$0xff] %v665
        %668 = vst [vmem:[#allocation2 + $0x178] sm:$0xff] %v666
        %669 = vrot.lane.b32.xlu0 %v635, 126
        %v670 = vpop.permute.xlu0 %669
        %671 = vrot.lane.b32.xlu0 %v636, 126
        %v672 = vpop.permute.xlu0 %671
        %v673 = vsel %vm477, %v670, %v672
        %v674 = vsel %vm477, %v672, %v670
        %v675 = vmul.f32 %v673, %v377
        %v676 = vmul.f32 %v674, %v378
        %677 = vst [vmem:[#allocation2 + $0x180] sm:$0xff] %v675
        %678 = vst [vmem:[#allocation2 + $0x188] sm:$0xff] %v676
        %v679 = vld [vmem:[%s1] sm:$0xff]
        %v680 = vld [vmem:[%s1 + $0x8] sm:$0xff]
        %v681 = vld [vmem:[%s1 + $0x10] sm:$0xff]
        %v682 = vld [vmem:[%s1 + $0x18] sm:$0xff]
        %v683 = vld [vmem:[%s1 + $0x20] sm:$0xff]
        %v684 = vld [vmem:[%s1 + $0x28] sm:$0xff]
        %v685 = vld [vmem:[%s1 + $0x30] sm:$0xff]
        %v686 = vld [vmem:[%s1 + $0x38] sm:$0xff]
        %v687 = vld [vmem:[#allocation2] sm:$0xff]
        %v688 = vld [vmem:[#allocation2 + $0x8] sm:$0xff]
        %v689 = vld [vmem:[#allocation2 + $0x10] sm:$0xff]
        %v690 = vld [vmem:[#allocation2 + $0x18] sm:$0xff]
        %v691 = vld [vmem:[#allocation2 + $0x20] sm:$0xff]
        %v692 = vld [vmem:[#allocation2 + $0x28] sm:$0xff]
        %v693 = vld [vmem:[#allocation2 + $0x30] sm:$0xff]
        %v694 = vld [vmem:[#allocation2 + $0x38] sm:$0xff]
        %v695 = vld [vmem:[#allocation2 + $0x40] sm:$0xff]
        %v696 = vld [vmem:[#allocation2 + $0x48] sm:$0xff]
        %v697 = vld [vmem:[#allocation2 + $0x50] sm:$0xff]
        %v698 = vld [vmem:[#allocation2 + $0x58] sm:$0xff]
        %v699 = vld [vmem:[#allocation2 + $0x60] sm:$0xff]
        %v700 = vld [vmem:[#allocation2 + $0x68] sm:$0xff]
        %v701 = vld [vmem:[#allocation2 + $0x70] sm:$0xff]
        %v702 = vld [vmem:[#allocation2 + $0x78] sm:$0xff]
        %v703 = vld [vmem:[#allocation2 + $0x80] sm:$0xff]
        %v704 = vld [vmem:[#allocation2 + $0x88] sm:$0xff]
        %v705 = vld [vmem:[#allocation2 + $0x90] sm:$0xff]
        %v706 = vld [vmem:[#allocation2 + $0x98] sm:$0xff]
        %v707 = vld [vmem:[#allocation2 + $0xa0] sm:$0xff]
        %v708 = vld [vmem:[#allocation2 + $0xa8] sm:$0xff]
        %v709 = vld [vmem:[#allocation2 + $0xb0] sm:$0xff]
        %v710 = vld [vmem:[#allocation2 + $0xb8] sm:$0xff]
        %v711 = vld [vmem:[#allocation2 + $0xc0] sm:$0xff]
        %v712 = vld [vmem:[#allocation2 + $0xc8] sm:$0xff]
        %v713 = vld [vmem:[#allocation2 + $0xd0] sm:$0xff]
        %v714 = vld [vmem:[#allocation2 + $0xd8] sm:$0xff]
        %v715 = vld [vmem:[#allocation2 + $0xe0] sm:$0xff]
        %v716 = vld [vmem:[#allocation2 + $0xe8] sm:$0xff]
        %v717 = vld [vmem:[#allocation2 + $0xf0] sm:$0xff]
        %v718 = vld [vmem:[#allocation2 + $0xf8] sm:$0xff]
        %v719 = vld [vmem:[#allocation2 + $0x100] sm:$0xff]
        %v720 = vld [vmem:[#allocation2 + $0x108] sm:$0xff]
        %v721 = vld [vmem:[#allocation2 + $0x110] sm:$0xff]
        %v722 = vld [vmem:[#allocation2 + $0x118] sm:$0xff]
        %v723 = vld [vmem:[#allocation2 + $0x120] sm:$0xff]
        %v724 = vld [vmem:[#allocation2 + $0x128] sm:$0xff]
        %v725 = vld [vmem:[#allocation2 + $0x130] sm:$0xff]
        %v726 = vld [vmem:[#allocation2 + $0x138] sm:$0xff]
        %v727 = vld [vmem:[#allocation2 + $0x140] sm:$0xff]
        %v728 = vld [vmem:[#allocation2 + $0x148] sm:$0xff]
        %v729 = vld [vmem:[#allocation2 + $0x150] sm:$0xff]
        %v730 = vld [vmem:[#allocation2 + $0x158] sm:$0xff]
        %v731 = vld [vmem:[#allocation2 + $0x160] sm:$0xff]
        %v732 = vld [vmem:[#allocation2 + $0x168] sm:$0xff]
        %v733 = vld [vmem:[#allocation2 + $0x170] sm:$0xff]
        %v734 = vld [vmem:[#allocation2 + $0x178] sm:$0xff]
        %v735 = vld [vmem:[#allocation2 + $0x180] sm:$0xff]
        %v736 = vld [vmem:[#allocation2 + $0x188] sm:$0xff]
        %vm737 = vcmask 588800
        %v739 = vsel %vm737, %v680, 0
        %v742 = vsel %vm737, %v682, 0
        %v745 = vsel %vm737, %v684, 0
        %v748 = vsel %vm737, %v686, 0
        %750 = vmatprep.subr.mxu0 %v718
        %751 = vmatpush1.msra.mxu0 %v717
        %752 = vmatprep.subr.mxu0 %v716
        %753 = vmatpush1.msra.mxu0 %v715
        %754 = vmatprep.subr.mxu0 %v714
        %755 = vmatpush1.msra.mxu0 %v713
        %756 = vmatprep.subr.mxu0 %v712
        %757 = vmatpush1.msra.mxu0 %v711
        %758 = vmatprep.subr.mxu0 %v710
        %759 = vmatpush1.msra.mxu0 %v709
        %760 = vmatprep.subr.mxu0 %v708
        %761 = vmatpush1.msra.mxu0 %v707
        %762 = vmatprep.subr.mxu0 %v706
        %763 = vmatpush1.msra.mxu0 %v705
        %764 = vmatprep.subr.mxu0 %v704
        %765 = vmatpush1.msra.mxu0 %v703
        %766 = vmatprep.subr.mxu0 %v702
        %767 = vmatpush1.msra.mxu0 %v701
        %768 = vmatprep.subr.mxu0 %v700
        %769 = vmatpush1.msra.mxu0 %v699
        %770 = vmatprep.subr.mxu0 %v698
        %771 = vmatpush1.msra.mxu0 %v697
        %772 = vmatprep.subr.mxu0 %v696
        %773 = vmatpush1.msra.mxu0 %v695
        %774 = vmatprep.subr.mxu0 %v694
        %775 = vmatpush1.msra.mxu0 %v693
        %776 = vmatprep.subr.mxu0 %v692
        %777 = vmatpush1.msra.mxu0 %v691
        %778 = vmatprep.subr.mxu0 %v690
        %779 = vmatpush1.msra.mxu0 %v689
        %780 = vmatprep.subr.mxu0 %v688
        %781 = vmatpush1.msra.mxu0 %v687
        %782 = vmatprep.subr.mxu0 0.0
        %783 = vmatpush2.msra.mxu0 0.0
        %784 = vmatprep.subr.mxu0 0.0
        %785 = vmatpush2.msra.mxu0 0.0
        %786 = vmatprep.subr.mxu0 0.0
        %787 = vmatpush2.msra.mxu0 0.0
        %788 = vmatprep.subr.mxu0 0.0
        %789 = vmatpush2.msra.mxu0 0.0
        %790 = vmatprep.subr.mxu0 0.0
        %791 = vmatpush2.msra.mxu0 0.0
        %792 = vmatprep.subr.mxu0 0.0
        %793 = vmatpush2.msra.mxu0 0.0
        %794 = vmatprep.subr.mxu0 0.0
        %795 = vmatpush2.msra.mxu0 0.0
        %796 = vmatprep.subr.mxu0 %v736
        %797 = vmatpush2.msra.mxu0 %v735
        %798 = vmatprep.subr.mxu0 %v734
        %799 = vmatpush2.msra.mxu0 %v733
        %800 = vmatprep.subr.mxu0 %v732
        %801 = vmatpush2.msra.mxu0 %v731
        %802 = vmatprep.subr.mxu0 %v730
        %803 = vmatpush2.msra.mxu0 %v729
        %804 = vmatprep.subr.mxu0 %v728
        %805 = vmatpush2.msra.mxu0 %v727
        %806 = vmatprep.subr.mxu0 %v726
        %807 = vmatpush2.msra.mxu0 %v725
        %808 = vmatprep.subr.mxu0 %v724
        %809 = vmatpush2.msra.mxu0 %v723
        %810 = vmatprep.subr.mxu0 %v722
        %811 = vmatpush2.msra.mxu0 %v721
        %812 = vmatprep.subr.mxu0 %v720
        %813 = vmatpush2.msra.mxu0 %v719
        %814 = vmatprep.mubr.f32.mxu0 %v739
        %815 = vmatmul.mubr.f32.gmra.mxu0 %v679
        %v816 = vpop.f32.mrf.mxu0
        %v817 = vadd.f32 0.0, %v816
        %v818 = vpop.f32.mrf.mxu0
        %v819 = vadd.f32 0.0, %v818
        %820 = vmatprep.mubr.f32.mxu0 %v742
        %821 = vmatmul.mubr.f32.gmra.mxu0 %v681
        %v822 = vpop.f32.mrf.mxu0
        %v823 = vadd.f32 0.0, %v822
        %v824 = vpop.f32.mrf.mxu0
        %v825 = vadd.f32 0.0, %v824
        %826 = vmatprep.mubr.f32.mxu0 %v745
        %827 = vmatmul.mubr.f32.gmra.mxu0 %v683
        %v828 = vpop.f32.mrf.mxu0
        %v829 = vadd.f32 0.0, %v828
        %v830 = vpop.f32.mrf.mxu0
        %v831 = vadd.f32 0.0, %v830
        %832 = vmatprep.mubr.f32.mxu0 %v748
        %833 = vmatmul.mubr.f32.gmra.mxu0 %v685
        %v834 = vpop.f32.mrf.mxu0
        %v835 = vadd.f32 0.0, %v834
        %v836 = vpop.f32.mrf.mxu0
        %v837 = vadd.f32 0.0, %v836
        %838 = vdwg.mxu0
        %v839 = vmax.f32 %v817, 0.0
        %v840 = vmax.f32 %v819, 0.0
        %v841 = vmax.f32 %v823, 0.0
        %v842 = vmax.f32 %v825, 0.0
        %v843 = vmax.f32 %v829, 0.0
        %v844 = vmax.f32 %v831, 0.0
        %v845 = vmax.f32 %v835, 0.0
        %v846 = vmax.f32 %v837, 0.0
        %v847 = vld [vmem:[%s2] sm:$0xff]
        %v848 = vld [vmem:[%s2 + $0x8] sm:$0xff]
        %v849 = vld [vmem:[%s2 + $0x10] sm:$0xff]
        %v850 = vld [vmem:[%s2 + $0x18] sm:$0xff]
        %851 = vrot.lane.b32.xlu0 %v839, 32
        %v852 = vpop.permute.xlu0 %851
        %853 = vrot.lane.b32.xlu0 %v841, 32
        %v854 = vpop.permute.xlu0 %853
        %855 = vrot.lane.b32.xlu0 %v843, 32
        %v856 = vpop.permute.xlu0 %855
        %857 = vrot.lane.b32.xlu0 %v845, 32
        %v858 = vpop.permute.xlu0 %857
        %859 = vrot.lane.b32.xlu0 %v840, 32
        %v860 = vpop.permute.xlu0 %859
        %861 = vrot.lane.b32.xlu0 %v842, 32
        %v862 = vpop.permute.xlu0 %861
        %863 = vrot.lane.b32.xlu0 %v844, 32
        %v864 = vpop.permute.xlu0 %863
        %865 = vrot.lane.b32.xlu0 %v846, 32
        %v866 = vpop.permute.xlu0 %865
        %v867 = vsel %vm433, %v852, %v860
        %v868 = vsel %vm433, %v854, %v862
        %v869 = vsel %vm433, %v856, %v864
        %v870 = vsel %vm433, %v858, %v866
        %v871 = vsel %vm433, %v860, %v852
        %v872 = vsel %vm433, %v862, %v854
        %v873 = vsel %vm433, %v864, %v856
        %v874 = vsel %vm433, %v866, %v858
        %v875 = vmul.f32 %v871, %v293
        %v876 = vmul.f32 %v867, %v294
        %v877 = vmul.f32 %v872, %v293
        %v878 = vmul.f32 %v868, %v294
        %v879 = vmul.f32 %v873, %v293
        %v880 = vmul.f32 %v869, %v294
        %v881 = vmul.f32 %v874, %v293
        %v882 = vmul.f32 %v870, %v294
        %883 = vrot.lane.b32.xlu0 %v875, 2
        %v884 = vpop.permute.xlu0 %883
        %885 = vrot.lane.b32.xlu0 %v877, 2
        %v886 = vpop.permute.xlu0 %885
        %887 = vrot.lane.b32.xlu0 %v879, 2
        %v888 = vpop.permute.xlu0 %887
        %889 = vrot.lane.b32.xlu0 %v881, 2
        %v890 = vpop.permute.xlu0 %889
        %891 = vrot.lane.b32.xlu0 %v876, 2
        %v892 = vpop.permute.xlu0 %891
        %893 = vrot.lane.b32.xlu0 %v878, 2
        %v894 = vpop.permute.xlu0 %893
        %895 = vrot.lane.b32.xlu0 %v880, 2
        %v896 = vpop.permute.xlu0 %895
        %897 = vrot.lane.b32.xlu0 %v882, 2
        %v898 = vpop.permute.xlu0 %897
        %v899 = vsel %vm442, %v884, %v892
        %v900 = vsel %vm442, %v886, %v894
        %v901 = vsel %vm442, %v888, %v896
        %v902 = vsel %vm442, %v890, %v898
        %v903 = vsel %vm442, %v892, %v884
        %v904 = vsel %vm442, %v894, %v886
        %v905 = vsel %vm442, %v896, %v888
        %v906 = vsel %vm442, %v898, %v890
        %v907 = vmul.f32 %v903, %v305
        %v908 = vmul.f32 %v899, %v306
        %v909 = vmul.f32 %v904, %v305
        %v910 = vmul.f32 %v900, %v306
        %v911 = vmul.f32 %v905, %v305
        %v912 = vmul.f32 %v901, %v306
        %v913 = vmul.f32 %v906, %v305
        %v914 = vmul.f32 %v902, %v306
        %916 = vset.pattern.permute.xlu0 0
        %917 = vperm.xlu0 %916, %v847
        %v918 = vpop.permute.xlu0 %917
        %921 = vset.pattern.permute.xlu0 0
        %922 = vperm.xlu0 %921, %v848
        %v923 = vpop.permute.xlu0 %922
        %926 = vset.pattern.permute.xlu0 0
        %927 = vperm.xlu0 %926, %v849
        %v928 = vpop.permute.xlu0 %927
        %931 = vset.pattern.permute.xlu0 0
        %932 = vperm.xlu0 %931, %v850
        %v933 = vpop.permute.xlu0 %932
        %v935 = vmul.f32 %v907, %v918
        %v936 = vmul.f32 %v908, %v918
        %v937 = vmul.f32 %v909, %v923
        %v938 = vmul.f32 %v910, %v923
        %v939 = vmul.f32 %v911, %v928
        %v940 = vmul.f32 %v912, %v928
        %v941 = vmul.f32 %v913, %v933
        %v942 = vmul.f32 %v914, %v933
        %v943 = vadd.f32 %v935, 0.0
        %v944 = vadd.f32 %v936, 0.0
        %v945 = vadd.f32 %v937, 0.0
        %v946 = vadd.f32 %v938, 0.0
        %v947 = vadd.f32 %v939, 0.0
        %v948 = vadd.f32 %v940, 0.0
        %v949 = vadd.f32 %v941, 0.0
        %v950 = vadd.f32 %v942, 0.0
        %951 = vrot.lane.b32.xlu0 %v875, 1
        %v952 = vpop.permute.xlu0 %951
        %953 = vrot.lane.b32.xlu0 %v877, 1
        %v954 = vpop.permute.xlu0 %953
        %955 = vrot.lane.b32.xlu0 %v879, 1
        %v956 = vpop.permute.xlu0 %955
        %957 = vrot.lane.b32.xlu0 %v881, 1
        %v958 = vpop.permute.xlu0 %957
        %959 = vrot.lane.b32.xlu0 %v876, 1
        %v960 = vpop.permute.xlu0 %959
        %961 = vrot.lane.b32.xlu0 %v878, 1
        %v962 = vpop.permute.xlu0 %961
        %963 = vrot.lane.b32.xlu0 %v880, 1
        %v964 = vpop.permute.xlu0 %963
        %965 = vrot.lane.b32.xlu0 %v882, 1
        %v966 = vpop.permute.xlu0 %965
        %v967 = vsel %vm453, %v952, %v960
        %v968 = vsel %vm453, %v954, %v962
        %v969 = vsel %vm453, %v956, %v964
        %v970 = vsel %vm453, %v958, %v966
        %v971 = vsel %vm453, %v960, %v952
        %v972 = vsel %vm453, %v962, %v954
        %v973 = vsel %vm453, %v964, %v956
        %v974 = vsel %vm453, %v966, %v958
        %v975 = vmul.f32 %v971, %v329
        %v976 = vmul.f32 %v967, %v330
        %v977 = vmul.f32 %v972, %v329
        %v978 = vmul.f32 %v968, %v330
        %v979 = vmul.f32 %v973, %v329
        %v980 = vmul.f32 %v969, %v330
        %v981 = vmul.f32 %v974, %v329
        %v982 = vmul.f32 %v970, %v330
        %983 = vset.pattern.permute.xlu0 1
        %984 = vperm.xlu0 %983, %v847
        %v985 = vpop.permute.xlu0 %984
        %987 = vset.pattern.permute.xlu0 1
        %988 = vperm.xlu0 %987, %v848
        %v989 = vpop.permute.xlu0 %988
        %991 = vset.pattern.permute.xlu0 1
        %992 = vperm.xlu0 %991, %v849
        %v993 = vpop.permute.xlu0 %992
        %995 = vset.pattern.permute.xlu0 1
        %996 = vperm.xlu0 %995, %v850
        %v997 = vpop.permute.xlu0 %996
        %v999 = vmul.f32 %v975, %v985
        %v1000 = vmul.f32 %v976, %v985
        %v1001 = vmul.f32 %v977, %v989
        %v1002 = vmul.f32 %v978, %v989
        %v1003 = vmul.f32 %v979, %v993
        %v1004 = vmul.f32 %v980, %v993
        %v1005 = vmul.f32 %v981, %v997
        %v1006 = vmul.f32 %v982, %v997
        %v1007 = vadd.f32 %v943, %v999
        %v1008 = vadd.f32 %v944, %v1000
        %v1009 = vadd.f32 %v945, %v1001
        %v1010 = vadd.f32 %v946, %v1002
        %v1011 = vadd.f32 %v947, %v1003
        %v1012 = vadd.f32 %v948, %v1004
        %v1013 = vadd.f32 %v949, %v1005
        %v1014 = vadd.f32 %v950, %v1006
        %1015 = vset.pattern.permute.xlu0 2
        %1016 = vperm.xlu0 %1015, %v847
        %v1017 = vpop.permute.xlu0 %1016
        %1019 = vset.pattern.permute.xlu0 2
        %1020 = vperm.xlu0 %1019, %v848
        %v1021 = vpop.permute.xlu0 %1020
        %1023 = vset.pattern.permute.xlu0 2
        %1024 = vperm.xlu0 %1023, %v849
        %v1025 = vpop.permute.xlu0 %1024
        %1027 = vset.pattern.permute.xlu0 2
        %1028 = vperm.xlu0 %1027, %v850
        %v1029 = vpop.permute.xlu0 %1028
        %v1031 = vmul.f32 %v875, %v1017
        %v1032 = vmul.f32 %v876, %v1017
        %v1033 = vmul.f32 %v877, %v1021
        %v1034 = vmul.f32 %v878, %v1021
        %v1035 = vmul.f32 %v879, %v1025
        %v1036 = vmul.f32 %v880, %v1025
        %v1037 = vmul.f32 %v881, %v1029
        %v1038 = vmul.f32 %v882, %v1029
        %v1039 = vadd.f32 %v1007, %v1031
        %v1040 = vadd.f32 %v1008, %v1032
        %v1041 = vadd.f32 %v1009, %v1033
        %v1042 = vadd.f32 %v1010, %v1034
        %v1043 = vadd.f32 %v1011, %v1035
        %v1044 = vadd.f32 %v1012, %v1036
        %v1045 = vadd.f32 %v1013, %v1037
        %v1046 = vadd.f32 %v1014, %v1038
        %1047 = vrot.lane.b32.xlu0 %v875, 127
        %v1048 = vpop.permute.xlu0 %1047
        %1049 = vrot.lane.b32.xlu0 %v877, 127
        %v1050 = vpop.permute.xlu0 %1049
        %1051 = vrot.lane.b32.xlu0 %v879, 127
        %v1052 = vpop.permute.xlu0 %1051
        %1053 = vrot.lane.b32.xlu0 %v881, 127
        %v1054 = vpop.permute.xlu0 %1053
        %1055 = vrot.lane.b32.xlu0 %v876, 127
        %v1056 = vpop.permute.xlu0 %1055
        %1057 = vrot.lane.b32.xlu0 %v878, 127
        %v1058 = vpop.permute.xlu0 %1057
        %1059 = vrot.lane.b32.xlu0 %v880, 127
        %v1060 = vpop.permute.xlu0 %1059
        %1061 = vrot.lane.b32.xlu0 %v882, 127
        %v1062 = vpop.permute.xlu0 %1061
        %v1063 = vsel %vm466, %v1048, %v1056
        %v1064 = vsel %vm466, %v1050, %v1058
        %v1065 = vsel %vm466, %v1052, %v1060
        %v1066 = vsel %vm466, %v1054, %v1062
        %v1067 = vsel %vm466, %v1056, %v1048
        %v1068 = vsel %vm466, %v1058, %v1050
        %v1069 = vsel %vm466, %v1060, %v1052
        %v1070 = vsel %vm466, %v1062, %v1054
        %v1071 = vmul.f32 %v1063, %v353
        %v1072 = vmul.f32 %v1067, %v354
        %v1073 = vmul.f32 %v1064, %v353
        %v1074 = vmul.f32 %v1068, %v354
        %v1075 = vmul.f32 %v1065, %v353
        %v1076 = vmul.f32 %v1069, %v354
        %v1077 = vmul.f32 %v1066, %v353
        %v1078 = vmul.f32 %v1070, %v354
        %1079 = vset.pattern.permute.xlu0 3
        %1080 = vperm.xlu0 %1079, %v847
        %v1081 = vpop.permute.xlu0 %1080
        %1083 = vset.pattern.permute.xlu0 3
        %1084 = vperm.xlu0 %1083, %v848
        %v1085 = vpop.permute.xlu0 %1084
        %1087 = vset.pattern.permute.xlu0 3
        %1088 = vperm.xlu0 %1087, %v849
        %v1089 = vpop.permute.xlu0 %1088
        %1091 = vset.pattern.permute.xlu0 3
        %1092 = vperm.xlu0 %1091, %v850
        %v1093 = vpop.permute.xlu0 %1092
        %v1095 = vmul.f32 %v1071, %v1081
        %v1096 = vmul.f32 %v1072, %v1081
        %v1097 = vmul.f32 %v1073, %v1085
        %v1098 = vmul.f32 %v1074, %v1085
        %v1099 = vmul.f32 %v1075, %v1089
        %v1100 = vmul.f32 %v1076, %v1089
        %v1101 = vmul.f32 %v1077, %v1093
        %v1102 = vmul.f32 %v1078, %v1093
        %v1103 = vadd.f32 %v1039, %v1095
        %v1104 = vadd.f32 %v1040, %v1096
        %v1105 = vadd.f32 %v1041, %v1097
        %v1106 = vadd.f32 %v1042, %v1098
        %v1107 = vadd.f32 %v1043, %v1099
        %v1108 = vadd.f32 %v1044, %v1100
        %v1109 = vadd.f32 %v1045, %v1101
        %v1110 = vadd.f32 %v1046, %v1102
        %1111 = vrot.lane.b32.xlu0 %v875, 126
        %v1112 = vpop.permute.xlu0 %1111
        %1113 = vrot.lane.b32.xlu0 %v877, 126
        %v1114 = vpop.permute.xlu0 %1113
        %1115 = vrot.lane.b32.xlu0 %v879, 126
        %v1116 = vpop.permute.xlu0 %1115
        %1117 = vrot.lane.b32.xlu0 %v881, 126
        %v1118 = vpop.permute.xlu0 %1117
        %1119 = vrot.lane.b32.xlu0 %v876, 126
        %v1120 = vpop.permute.xlu0 %1119
        %1121 = vrot.lane.b32.xlu0 %v878, 126
        %v1122 = vpop.permute.xlu0 %1121
        %1123 = vrot.lane.b32.xlu0 %v880, 126
        %v1124 = vpop.permute.xlu0 %1123
        %1125 = vrot.lane.b32.xlu0 %v882, 126
        %v1126 = vpop.permute.xlu0 %1125
        %v1127 = vsel %vm477, %v1112, %v1120
        %v1128 = vsel %vm477, %v1114, %v1122
        %v1129 = vsel %vm477, %v1116, %v1124
        %v1130 = vsel %vm477, %v1118, %v1126
        %v1131 = vsel %vm477, %v1120, %v1112
        %v1132 = vsel %vm477, %v1122, %v1114
        %v1133 = vsel %vm477, %v1124, %v1116
        %v1134 = vsel %vm477, %v1126, %v1118
        %v1135 = vmul.f32 %v1127, %v377
        %v1136 = vmul.f32 %v1131, %v378
        %v1137 = vmul.f32 %v1128, %v377
        %v1138 = vmul.f32 %v1132, %v378
        %v1139 = vmul.f32 %v1129, %v377
        %v1140 = vmul.f32 %v1133, %v378
        %v1141 = vmul.f32 %v1130, %v377
        %v1142 = vmul.f32 %v1134, %v378
        %1143 = vset.pattern.permute.xlu0 4
        %1144 = vperm.xlu0 %1143, %v847
        %v1145 = vpop.permute.xlu0 %1144
        %1147 = vset.pattern.permute.xlu0 4
        %1148 = vperm.xlu0 %1147, %v848
        %v1149 = vpop.permute.xlu0 %1148
        %1151 = vset.pattern.permute.xlu0 4
        %1152 = vperm.xlu0 %1151, %v849
        %v1153 = vpop.permute.xlu0 %1152
        %1155 = vset.pattern.permute.xlu0 4
        %1156 = vperm.xlu0 %1155, %v850
        %v1157 = vpop.permute.xlu0 %1156
        %v1159 = vmul.f32 %v1135, %v1145
        %v1160 = vmul.f32 %v1136, %v1145
        %v1161 = vmul.f32 %v1137, %v1149
        %v1162 = vmul.f32 %v1138, %v1149
        %v1163 = vmul.f32 %v1139, %v1153
        %v1164 = vmul.f32 %v1140, %v1153
        %v1165 = vmul.f32 %v1141, %v1157
        %v1166 = vmul.f32 %v1142, %v1157
        %v1167 = vadd.f32 %v1103, %v1159
        %v1168 = vadd.f32 %v1104, %v1160
        %v1169 = vadd.f32 %v1105, %v1161
        %v1170 = vadd.f32 %v1106, %v1162
        %v1171 = vadd.f32 %v1107, %v1163
        %v1172 = vadd.f32 %v1108, %v1164
        %v1173 = vadd.f32 %v1109, %v1165
        %v1174 = vadd.f32 %v1110, %v1166
        %1175 = vrot.lane.b32.xlu0 %v839, 16
        %v1176 = vpop.permute.xlu0 %1175
        %1177 = vrot.lane.b32.xlu0 %v841, 16
        %v1178 = vpop.permute.xlu0 %1177
        %1179 = vrot.lane.b32.xlu0 %v843, 16
        %v1180 = vpop.permute.xlu0 %1179
        %1181 = vrot.lane.b32.xlu0 %v845, 16
        %v1182 = vpop.permute.xlu0 %1181
        %1183 = vrot.lane.b32.xlu0 %v840, 16
        %v1184 = vpop.permute.xlu0 %1183
        %1185 = vrot.lane.b32.xlu0 %v842, 16
        %v1186 = vpop.permute.xlu0 %1185
        %1187 = vrot.lane.b32.xlu0 %v844, 16
        %v1188 = vpop.permute.xlu0 %1187
        %1189 = vrot.lane.b32.xlu0 %v846, 16
        %v1190 = vpop.permute.xlu0 %1189
        %v1191 = vsel %vm488, %v1176, %v1184
        %v1192 = vsel %vm488, %v1178, %v1186
        %v1193 = vsel %vm488, %v1180, %v1188
        %v1194 = vsel %vm488, %v1182, %v1190
        %v1195 = vsel %vm488, %v1184, %v1176
        %v1196 = vsel %vm488, %v1186, %v1178
        %v1197 = vsel %vm488, %v1188, %v1180
        %v1198 = vsel %vm488, %v1190, %v1182
        %v1199 = vmul.f32 %v1195, %v317
        %v1200 = vmul.f32 %v1191, %v318
        %v1201 = vmul.f32 %v1196, %v317
        %v1202 = vmul.f32 %v1192, %v318
        %v1203 = vmul.f32 %v1197, %v317
        %v1204 = vmul.f32 %v1193, %v318
        %v1205 = vmul.f32 %v1198, %v317
        %v1206 = vmul.f32 %v1194, %v318
        %1207 = vrot.lane.b32.xlu0 %v1199, 2
        %v1208 = vpop.permute.xlu0 %1207
        %1209 = vrot.lane.b32.xlu0 %v1201, 2
        %v1210 = vpop.permute.xlu0 %1209
        %1211 = vrot.lane.b32.xlu0 %v1203, 2
        %v1212 = vpop.permute.xlu0 %1211
        %1213 = vrot.lane.b32.xlu0 %v1205, 2
        %v1214 = vpop.permute.xlu0 %1213
        %1215 = vrot.lane.b32.xlu0 %v1200, 2
        %v1216 = vpop.permute.xlu0 %1215
        %1217 = vrot.lane.b32.xlu0 %v1202, 2
        %v1218 = vpop.permute.xlu0 %1217
        %1219 = vrot.lane.b32.xlu0 %v1204, 2
        %v1220 = vpop.permute.xlu0 %1219
        %1221 = vrot.lane.b32.xlu0 %v1206, 2
        %v1222 = vpop.permute.xlu0 %1221
        %v1223 = vsel %vm442, %v1208, %v1216
        %v1224 = vsel %vm442, %v1210, %v1218
        %v1225 = vsel %vm442, %v1212, %v1220
        %v1226 = vsel %vm442, %v1214, %v1222
        %v1227 = vsel %vm442, %v1216, %v1208
        %v1228 = vsel %vm442, %v1218, %v1210
        %v1229 = vsel %vm442, %v1220, %v1212
        %v1230 = vsel %vm442, %v1222, %v1214
        %v1231 = vmul.f32 %v1227, %v305
        %v1232 = vmul.f32 %v1223, %v306
        %v1233 = vmul.f32 %v1228, %v305
        %v1234 = vmul.f32 %v1224, %v306
        %v1235 = vmul.f32 %v1229, %v305
        %v1236 = vmul.f32 %v1225, %v306
        %v1237 = vmul.f32 %v1230, %v305
        %v1238 = vmul.f32 %v1226, %v306
        %1239 = vset.pattern.permute.xlu0 5
        %1240 = vperm.xlu0 %1239, %v847
        %v1241 = vpop.permute.xlu0 %1240
        %1243 = vset.pattern.permute.xlu0 5
        %1244 = vperm.xlu0 %1243, %v848
        %v1245 = vpop.permute.xlu0 %1244
        %1247 = vset.pattern.permute.xlu0 5
        %1248 = vperm.xlu0 %1247, %v849
        %v1249 = vpop.permute.xlu0 %1248
        %1251 = vset.pattern.permute.xlu0 5
        %1252 = vperm.xlu0 %1251, %v850
        %v1253 = vpop.permute.xlu0 %1252
        %v1255 = vmul.f32 %v1231, %v1241
        %v1256 = vmul.f32 %v1232, %v1241
        %v1257 = vmul.f32 %v1233, %v1245
        %v1258 = vmul.f32 %v1234, %v1245
        %v1259 = vmul.f32 %v1235, %v1249
        %v1260 = vmul.f32 %v1236, %v1249
        %v1261 = vmul.f32 %v1237, %v1253
        %v1262 = vmul.f32 %v1238, %v1253
        %v1263 = vadd.f32 %v1167, %v1255
        %v1264 = vadd.f32 %v1168, %v1256
        %v1265 = vadd.f32 %v1169, %v1257
        %v1266 = vadd.f32 %v1170, %v1258
        %v1267 = vadd.f32 %v1171, %v1259
        %v1268 = vadd.f32 %v1172, %v1260
        %v1269 = vadd.f32 %v1173, %v1261
        %v1270 = vadd.f32 %v1174, %v1262
        %1271 = vrot.lane.b32.xlu0 %v1199, 1
        %v1272 = vpop.permute.xlu0 %1271
        %1273 = vrot.lane.b32.xlu0 %v1201, 1
        %v1274 = vpop.permute.xlu0 %1273
        %1275 = vrot.lane.b32.xlu0 %v1203, 1
        %v1276 = vpop.permute.xlu0 %1275
        %1277 = vrot.lane.b32.xlu0 %v1205, 1
        %v1278 = vpop.permute.xlu0 %1277
        %1279 = vrot.lane.b32.xlu0 %v1200, 1
        %v1280 = vpop.permute.xlu0 %1279
        %1281 = vrot.lane.b32.xlu0 %v1202, 1
        %v1282 = vpop.permute.xlu0 %1281
        %1283 = vrot.lane.b32.xlu0 %v1204, 1
        %v1284 = vpop.permute.xlu0 %1283
        %1285 = vrot.lane.b32.xlu0 %v1206, 1
        %v1286 = vpop.permute.xlu0 %1285
        %v1287 = vsel %vm453, %v1272, %v1280
        %v1288 = vsel %vm453, %v1274, %v1282
        %v1289 = vsel %vm453, %v1276, %v1284
        %v1290 = vsel %vm453, %v1278, %v1286
        %v1291 = vsel %vm453, %v1280, %v1272
        %v1292 = vsel %vm453, %v1282, %v1274
        %v1293 = vsel %vm453, %v1284, %v1276
        %v1294 = vsel %vm453, %v1286, %v1278
        %v1295 = vmul.f32 %v1291, %v329
        %v1296 = vmul.f32 %v1287, %v330
        %v1297 = vmul.f32 %v1292, %v329
        %v1298 = vmul.f32 %v1288, %v330
        %v1299 = vmul.f32 %v1293, %v329
        %v1300 = vmul.f32 %v1289, %v330
        %v1301 = vmul.f32 %v1294, %v329
        %v1302 = vmul.f32 %v1290, %v330
        %1303 = vset.pattern.permute.xlu0 6
        %1304 = vperm.xlu0 %1303, %v847
        %v1305 = vpop.permute.xlu0 %1304
        %1307 = vset.pattern.permute.xlu0 6
        %1308 = vperm.xlu0 %1307, %v848
        %v1309 = vpop.permute.xlu0 %1308
        %1311 = vset.pattern.permute.xlu0 6
        %1312 = vperm.xlu0 %1311, %v849
        %v1313 = vpop.permute.xlu0 %1312
        %1315 = vset.pattern.permute.xlu0 6
        %1316 = vperm.xlu0 %1315, %v850
        %v1317 = vpop.permute.xlu0 %1316
        %v1319 = vmul.f32 %v1295, %v1305
        %v1320 = vmul.f32 %v1296, %v1305
        %v1321 = vmul.f32 %v1297, %v1309
        %v1322 = vmul.f32 %v1298, %v1309
        %v1323 = vmul.f32 %v1299, %v1313
        %v1324 = vmul.f32 %v1300, %v1313
        %v1325 = vmul.f32 %v1301, %v1317
        %v1326 = vmul.f32 %v1302, %v1317
        %v1327 = vadd.f32 %v1263, %v1319
        %v1328 = vadd.f32 %v1264, %v1320
        %v1329 = vadd.f32 %v1265, %v1321
        %v1330 = vadd.f32 %v1266, %v1322
        %v1331 = vadd.f32 %v1267, %v1323
        %v1332 = vadd.f32 %v1268, %v1324
        %v1333 = vadd.f32 %v1269, %v1325
        %v1334 = vadd.f32 %v1270, %v1326
        %1335 = vset.pattern.permute.xlu0 7
        %1336 = vperm.xlu0 %1335, %v847
        %v1337 = vpop.permute.xlu0 %1336
        %1339 = vset.pattern.permute.xlu0 7
        %1340 = vperm.xlu0 %1339, %v848
        %v1341 = vpop.permute.xlu0 %1340
        %1343 = vset.pattern.permute.xlu0 7
        %1344 = vperm.xlu0 %1343, %v849
        %v1345 = vpop.permute.xlu0 %1344
        %1347 = vset.pattern.permute.xlu0 7
        %1348 = vperm.xlu0 %1347, %v850
        %v1349 = vpop.permute.xlu0 %1348
        %v1351 = vmul.f32 %v1199, %v1337
        %v1352 = vmul.f32 %v1200, %v1337
        %v1353 = vmul.f32 %v1201, %v1341
        %v1354 = vmul.f32 %v1202, %v1341
        %v1355 = vmul.f32 %v1203, %v1345
        %v1356 = vmul.f32 %v1204, %v1345
        %v1357 = vmul.f32 %v1205, %v1349
        %v1358 = vmul.f32 %v1206, %v1349
        %v1359 = vadd.f32 %v1327, %v1351
        %v1360 = vadd.f32 %v1328, %v1352
        %v1361 = vadd.f32 %v1329, %v1353
        %v1362 = vadd.f32 %v1330, %v1354
        %v1363 = vadd.f32 %v1331, %v1355
        %v1364 = vadd.f32 %v1332, %v1356
        %v1365 = vadd.f32 %v1333, %v1357
        %v1366 = vadd.f32 %v1334, %v1358
        %1367 = vrot.lane.b32.xlu0 %v1199, 127
        %v1368 = vpop.permute.xlu0 %1367
        %1369 = vrot.lane.b32.xlu0 %v1201, 127
        %v1370 = vpop.permute.xlu0 %1369
        %1371 = vrot.lane.b32.xlu0 %v1203, 127
        %v1372 = vpop.permute.xlu0 %1371
        %1373 = vrot.lane.b32.xlu0 %v1205, 127
        %v1374 = vpop.permute.xlu0 %1373
        %1375 = vrot.lane.b32.xlu0 %v1200, 127
        %v1376 = vpop.permute.xlu0 %1375
        %1377 = vrot.lane.b32.xlu0 %v1202, 127
        %v1378 = vpop.permute.xlu0 %1377
        %1379 = vrot.lane.b32.xlu0 %v1204, 127
        %v1380 = vpop.permute.xlu0 %1379
        %1381 = vrot.lane.b32.xlu0 %v1206, 127
        %v1382 = vpop.permute.xlu0 %1381
        %v1383 = vsel %vm466, %v1368, %v1376
        %v1384 = vsel %vm466, %v1370, %v1378
        %v1385 = vsel %vm466, %v1372, %v1380
        %v1386 = vsel %vm466, %v1374, %v1382
        %v1387 = vsel %vm466, %v1376, %v1368
        %v1388 = vsel %vm466, %v1378, %v1370
        %v1389 = vsel %vm466, %v1380, %v1372
        %v1390 = vsel %vm466, %v1382, %v1374
        %v1391 = vmul.f32 %v1383, %v353
        %v1392 = vmul.f32 %v1387, %v354
        %v1393 = vmul.f32 %v1384, %v353
        %v1394 = vmul.f32 %v1388, %v354
        %v1395 = vmul.f32 %v1385, %v353
        %v1396 = vmul.f32 %v1389, %v354
        %v1397 = vmul.f32 %v1386, %v353
        %v1398 = vmul.f32 %v1390, %v354
        %1399 = vset.pattern.permute.xlu0 8
        %1400 = vperm.xlu0 %1399, %v847
        %v1401 = vpop.permute.xlu0 %1400
        %1403 = vset.pattern.permute.xlu0 8
        %1404 = vperm.xlu0 %1403, %v848
        %v1405 = vpop.permute.xlu0 %1404
        %1407 = vset.pattern.permute.xlu0 8
        %1408 = vperm.xlu0 %1407, %v849
        %v1409 = vpop.permute.xlu0 %1408
        %1411 = vset.pattern.permute.xlu0 8
        %1412 = vperm.xlu0 %1411, %v850
        %v1413 = vpop.permute.xlu0 %1412
        %v1415 = vmul.f32 %v1391, %v1401
        %v1416 = vmul.f32 %v1392, %v1401
        %v1417 = vmul.f32 %v1393, %v1405
        %v1418 = vmul.f32 %v1394, %v1405
        %v1419 = vmul.f32 %v1395, %v1409
        %v1420 = vmul.f32 %v1396, %v1409
        %v1421 = vmul.f32 %v1397, %v1413
        %v1422 = vmul.f32 %v1398, %v1413
        %v1423 = vadd.f32 %v1359, %v1415
        %v1424 = vadd.f32 %v1360, %v1416
        %v1425 = vadd.f32 %v1361, %v1417
        %v1426 = vadd.f32 %v1362, %v1418
        %v1427 = vadd.f32 %v1363, %v1419
        %v1428 = vadd.f32 %v1364, %v1420
        %v1429 = vadd.f32 %v1365, %v1421
        %v1430 = vadd.f32 %v1366, %v1422
        %1431 = vrot.lane.b32.xlu0 %v1199, 126
        %v1432 = vpop.permute.xlu0 %1431
        %1433 = vrot.lane.b32.xlu0 %v1201, 126
        %v1434 = vpop.permute.xlu0 %1433
        %1435 = vrot.lane.b32.xlu0 %v1203, 126
        %v1436 = vpop.permute.xlu0 %1435
        %1437 = vrot.lane.b32.xlu0 %v1205, 126
        %v1438 = vpop.permute.xlu0 %1437
        %1439 = vrot.lane.b32.xlu0 %v1200, 126
        %v1440 = vpop.permute.xlu0 %1439
        %1441 = vrot.lane.b32.xlu0 %v1202, 126
        %v1442 = vpop.permute.xlu0 %1441
        %1443 = vrot.lane.b32.xlu0 %v1204, 126
        %v1444 = vpop.permute.xlu0 %1443
        %1445 = vrot.lane.b32.xlu0 %v1206, 126
        %v1446 = vpop.permute.xlu0 %1445
        %v1447 = vsel %vm477, %v1432, %v1440
        %v1448 = vsel %vm477, %v1434, %v1442
        %v1449 = vsel %vm477, %v1436, %v1444
        %v1450 = vsel %vm477, %v1438, %v1446
        %v1451 = vsel %vm477, %v1440, %v1432
        %v1452 = vsel %vm477, %v1442, %v1434
        %v1453 = vsel %vm477, %v1444, %v1436
        %v1454 = vsel %vm477, %v1446, %v1438
        %v1455 = vmul.f32 %v1447, %v377
        %v1456 = vmul.f32 %v1451, %v378
        %v1457 = vmul.f32 %v1448, %v377
        %v1458 = vmul.f32 %v1452, %v378
        %v1459 = vmul.f32 %v1449, %v377
        %v1460 = vmul.f32 %v1453, %v378
        %v1461 = vmul.f32 %v1450, %v377
        %v1462 = vmul.f32 %v1454, %v378
        %1463 = vset.pattern.permute.xlu0 9
        %1464 = vperm.xlu0 %1463, %v847
        %v1465 = vpop.permute.xlu0 %1464
        %1467 = vset.pattern.permute.xlu0 9
        %1468 = vperm.xlu0 %1467, %v848
        %v1469 = vpop.permute.xlu0 %1468
        %1471 = vset.pattern.permute.xlu0 9
        %1472 = vperm.xlu0 %1471, %v849
        %v1473 = vpop.permute.xlu0 %1472
        %1475 = vset.pattern.permute.xlu0 9
        %1476 = vperm.xlu0 %1475, %v850
        %v1477 = vpop.permute.xlu0 %1476
        %v1479 = vmul.f32 %v1455, %v1465
        %v1480 = vmul.f32 %v1456, %v1465
        %v1481 = vmul.f32 %v1457, %v1469
        %v1482 = vmul.f32 %v1458, %v1469
        %v1483 = vmul.f32 %v1459, %v1473
        %v1484 = vmul.f32 %v1460, %v1473
        %v1485 = vmul.f32 %v1461, %v1477
        %v1486 = vmul.f32 %v1462, %v1477
        %v1487 = vadd.f32 %v1423, %v1479
        %v1488 = vadd.f32 %v1424, %v1480
        %v1489 = vadd.f32 %v1425, %v1481
        %v1490 = vadd.f32 %v1426, %v1482
        %v1491 = vadd.f32 %v1427, %v1483
        %v1492 = vadd.f32 %v1428, %v1484
        %v1493 = vadd.f32 %v1429, %v1485
        %v1494 = vadd.f32 %v1430, %v1486
        %1495 = vrot.lane.b32.xlu0 %v839, 2
        %v1496 = vpop.permute.xlu0 %1495
        %1497 = vrot.lane.b32.xlu0 %v841, 2
        %v1498 = vpop.permute.xlu0 %1497
        %1499 = vrot.lane.b32.xlu0 %v843, 2
        %v1500 = vpop.permute.xlu0 %1499
        %1501 = vrot.lane.b32.xlu0 %v845, 2
        %v1502 = vpop.permute.xlu0 %1501
        %1503 = vrot.lane.b32.xlu0 %v840, 2
        %v1504 = vpop.permute.xlu0 %1503
        %1505 = vrot.lane.b32.xlu0 %v842, 2
        %v1506 = vpop.permute.xlu0 %1505
        %1507 = vrot.lane.b32.xlu0 %v844, 2
        %v1508 = vpop.permute.xlu0 %1507
        %1509 = vrot.lane.b32.xlu0 %v846, 2
        %v1510 = vpop.permute.xlu0 %1509
        %v1511 = vsel %vm442, %v1496, %v1504
        %v1512 = vsel %vm442, %v1498, %v1506
        %v1513 = vsel %vm442, %v1500, %v1508
        %v1514 = vsel %vm442, %v1502, %v1510
        %v1515 = vsel %vm442, %v1504, %v1496
        %v1516 = vsel %vm442, %v1506, %v1498
        %v1517 = vsel %vm442, %v1508, %v1500
        %v1518 = vsel %vm442, %v1510, %v1502
        %v1519 = vmul.f32 %v1515, %v305
        %v1520 = vmul.f32 %v1511, %v306
        %v1521 = vmul.f32 %v1516, %v305
        %v1522 = vmul.f32 %v1512, %v306
        %v1523 = vmul.f32 %v1517, %v305
        %v1524 = vmul.f32 %v1513, %v306
        %v1525 = vmul.f32 %v1518, %v305
        %v1526 = vmul.f32 %v1514, %v306
        %1527 = vset.pattern.permute.xlu0 10
        %1528 = vperm.xlu0 %1527, %v847
        %v1529 = vpop.permute.xlu0 %1528
        %1531 = vset.pattern.permute.xlu0 10
        %1532 = vperm.xlu0 %1531, %v848
        %v1533 = vpop.permute.xlu0 %1532
        %1535 = vset.pattern.permute.xlu0 10
        %1536 = vperm.xlu0 %1535, %v849
        %v1537 = vpop.permute.xlu0 %1536
        %1539 = vset.pattern.permute.xlu0 10
        %1540 = vperm.xlu0 %1539, %v850
        %v1541 = vpop.permute.xlu0 %1540
        %v1543 = vmul.f32 %v1519, %v1529
        %v1544 = vmul.f32 %v1520, %v1529
        %v1545 = vmul.f32 %v1521, %v1533
        %v1546 = vmul.f32 %v1522, %v1533
        %v1547 = vmul.f32 %v1523, %v1537
        %v1548 = vmul.f32 %v1524, %v1537
        %v1549 = vmul.f32 %v1525, %v1541
        %v1550 = vmul.f32 %v1526, %v1541
        %v1551 = vadd.f32 %v1487, %v1543
        %v1552 = vadd.f32 %v1488, %v1544
        %v1553 = vadd.f32 %v1489, %v1545
        %v1554 = vadd.f32 %v1490, %v1546
        %v1555 = vadd.f32 %v1491, %v1547
        %v1556 = vadd.f32 %v1492, %v1548
        %v1557 = vadd.f32 %v1493, %v1549
        %v1558 = vadd.f32 %v1494, %v1550
        %1559 = vrot.lane.b32.xlu0 %v839, 1
        %v1560 = vpop.permute.xlu0 %1559
        %1561 = vrot.lane.b32.xlu0 %v841, 1
        %v1562 = vpop.permute.xlu0 %1561
        %1563 = vrot.lane.b32.xlu0 %v843, 1
        %v1564 = vpop.permute.xlu0 %1563
        %1565 = vrot.lane.b32.xlu0 %v845, 1
        %v1566 = vpop.permute.xlu0 %1565
        %1567 = vrot.lane.b32.xlu0 %v840, 1
        %v1568 = vpop.permute.xlu0 %1567
        %1569 = vrot.lane.b32.xlu0 %v842, 1
        %v1570 = vpop.permute.xlu0 %1569
        %1571 = vrot.lane.b32.xlu0 %v844, 1
        %v1572 = vpop.permute.xlu0 %1571
        %1573 = vrot.lane.b32.xlu0 %v846, 1
        %v1574 = vpop.permute.xlu0 %1573
        %v1575 = vsel %vm453, %v1560, %v1568
        %v1576 = vsel %vm453, %v1562, %v1570
        %v1577 = vsel %vm453, %v1564, %v1572
        %v1578 = vsel %vm453, %v1566, %v1574
        %v1579 = vsel %vm453, %v1568, %v1560
        %v1580 = vsel %vm453, %v1570, %v1562
        %v1581 = vsel %vm453, %v1572, %v1564
        %v1582 = vsel %vm453, %v1574, %v1566
        %v1583 = vmul.f32 %v1579, %v329
        %v1584 = vmul.f32 %v1575, %v330
        %v1585 = vmul.f32 %v1580, %v329
        %v1586 = vmul.f32 %v1576, %v330
        %v1587 = vmul.f32 %v1581, %v329
        %v1588 = vmul.f32 %v1577, %v330
        %v1589 = vmul.f32 %v1582, %v329
        %v1590 = vmul.f32 %v1578, %v330
        %1591 = vset.pattern.permute.xlu0 11
        %1592 = vperm.xlu0 %1591, %v847
        %v1593 = vpop.permute.xlu0 %1592
        %1595 = vset.pattern.permute.xlu0 11
        %1596 = vperm.xlu0 %1595, %v848
        %v1597 = vpop.permute.xlu0 %1596
        %1599 = vset.pattern.permute.xlu0 11
        %1600 = vperm.xlu0 %1599, %v849
        %v1601 = vpop.permute.xlu0 %1600
        %1603 = vset.pattern.permute.xlu0 11
        %1604 = vperm.xlu0 %1603, %v850
        %v1605 = vpop.permute.xlu0 %1604
        %v1607 = vmul.f32 %v1583, %v1593
        %v1608 = vmul.f32 %v1584, %v1593
        %v1609 = vmul.f32 %v1585, %v1597
        %v1610 = vmul.f32 %v1586, %v1597
        %v1611 = vmul.f32 %v1587, %v1601
        %v1612 = vmul.f32 %v1588, %v1601
        %v1613 = vmul.f32 %v1589, %v1605
        %v1614 = vmul.f32 %v1590, %v1605
        %v1615 = vadd.f32 %v1551, %v1607
        %v1616 = vadd.f32 %v1552, %v1608
        %v1617 = vadd.f32 %v1553, %v1609
        %v1618 = vadd.f32 %v1554, %v1610
        %v1619 = vadd.f32 %v1555, %v1611
        %v1620 = vadd.f32 %v1556, %v1612
        %v1621 = vadd.f32 %v1557, %v1613
        %v1622 = vadd.f32 %v1558, %v1614
        %1623 = vset.pattern.permute.xlu0 12
        %1624 = vperm.xlu0 %1623, %v847
        %v1625 = vpop.permute.xlu0 %1624
        %1627 = vset.pattern.permute.xlu0 12
        %1628 = vperm.xlu0 %1627, %v848
        %v1629 = vpop.permute.xlu0 %1628
        %1631 = vset.pattern.permute.xlu0 12
        %1632 = vperm.xlu0 %1631, %v849
        %v1633 = vpop.permute.xlu0 %1632
        %1635 = vset.pattern.permute.xlu0 12
        %1636 = vperm.xlu0 %1635, %v850
        %v1637 = vpop.permute.xlu0 %1636
        %v1639 = vmul.f32 %v839, %v1625
        %v1640 = vmul.f32 %v840, %v1625
        %v1641 = vmul.f32 %v841, %v1629
        %v1642 = vmul.f32 %v842, %v1629
        %v1643 = vmul.f32 %v843, %v1633
        %v1644 = vmul.f32 %v844, %v1633
        %v1645 = vmul.f32 %v845, %v1637
        %v1646 = vmul.f32 %v846, %v1637
        %v1647 = vadd.f32 %v1615, %v1639
        %v1648 = vadd.f32 %v1616, %v1640
        %v1649 = vadd.f32 %v1617, %v1641
        %v1650 = vadd.f32 %v1618, %v1642
        %v1651 = vadd.f32 %v1619, %v1643
        %v1652 = vadd.f32 %v1620, %v1644
        %v1653 = vadd.f32 %v1621, %v1645
        %v1654 = vadd.f32 %v1622, %v1646
        %1655 = vrot.lane.b32.xlu0 %v839, 127
        %v1656 = vpop.permute.xlu0 %1655
        %1657 = vrot.lane.b32.xlu0 %v841, 127
        %v1658 = vpop.permute.xlu0 %1657
        %1659 = vrot.lane.b32.xlu0 %v843, 127
        %v1660 = vpop.permute.xlu0 %1659
        %1661 = vrot.lane.b32.xlu0 %v845, 127
        %v1662 = vpop.permute.xlu0 %1661
        %1663 = vrot.lane.b32.xlu0 %v840, 127
        %v1664 = vpop.permute.xlu0 %1663
        %1665 = vrot.lane.b32.xlu0 %v842, 127
        %v1666 = vpop.permute.xlu0 %1665
        %1667 = vrot.lane.b32.xlu0 %v844, 127
        %v1668 = vpop.permute.xlu0 %1667
        %1669 = vrot.lane.b32.xlu0 %v846, 127
        %v1670 = vpop.permute.xlu0 %1669
        %v1671 = vsel %vm466, %v1656, %v1664
        %v1672 = vsel %vm466, %v1658, %v1666
        %v1673 = vsel %vm466, %v1660, %v1668
        %v1674 = vsel %vm466, %v1662, %v1670
        %v1675 = vsel %vm466, %v1664, %v1656
        %v1676 = vsel %vm466, %v1666, %v1658
        %v1677 = vsel %vm466, %v1668, %v1660
        %v1678 = vsel %vm466, %v1670, %v1662
        %v1679 = vmul.f32 %v1671, %v353
        %v1680 = vmul.f32 %v1675, %v354
        %v1681 = vmul.f32 %v1672, %v353
        %v1682 = vmul.f32 %v1676, %v354
        %v1683 = vmul.f32 %v1673, %v353
        %v1684 = vmul.f32 %v1677, %v354
        %v1685 = vmul.f32 %v1674, %v353
        %v1686 = vmul.f32 %v1678, %v354
        %1687 = vset.pattern.permute.xlu0 13
        %1688 = vperm.xlu0 %1687, %v847
        %v1689 = vpop.permute.xlu0 %1688
        %1691 = vset.pattern.permute.xlu0 13
        %1692 = vperm.xlu0 %1691, %v848
        %v1693 = vpop.permute.xlu0 %1692
        %1695 = vset.pattern.permute.xlu0 13
        %1696 = vperm.xlu0 %1695, %v849
        %v1697 = vpop.permute.xlu0 %1696
        %1699 = vset.pattern.permute.xlu0 13
        %1700 = vperm.xlu0 %1699, %v850
        %v1701 = vpop.permute.xlu0 %1700
        %v1703 = vmul.f32 %v1679, %v1689
        %v1704 = vmul.f32 %v1680, %v1689
        %v1705 = vmul.f32 %v1681, %v1693
        %v1706 = vmul.f32 %v1682, %v1693
        %v1707 = vmul.f32 %v1683, %v1697
        %v1708 = vmul.f32 %v1684, %v1697
        %v1709 = vmul.f32 %v1685, %v1701
        %v1710 = vmul.f32 %v1686, %v1701
        %v1711 = vadd.f32 %v1647, %v1703
        %v1712 = vadd.f32 %v1648, %v1704
        %v1713 = vadd.f32 %v1649, %v1705
        %v1714 = vadd.f32 %v1650, %v1706
        %v1715 = vadd.f32 %v1651, %v1707
        %v1716 = vadd.f32 %v1652, %v1708
        %v1717 = vadd.f32 %v1653, %v1709
        %v1718 = vadd.f32 %v1654, %v1710
        %1719 = vrot.lane.b32.xlu0 %v839, 126
        %v1720 = vpop.permute.xlu0 %1719
        %1721 = vrot.lane.b32.xlu0 %v841, 126
        %v1722 = vpop.permute.xlu0 %1721
        %1723 = vrot.lane.b32.xlu0 %v843, 126
        %v1724 = vpop.permute.xlu0 %1723
        %1725 = vrot.lane.b32.xlu0 %v845, 126
        %v1726 = vpop.permute.xlu0 %1725
        %1727 = vrot.lane.b32.xlu0 %v840, 126
        %v1728 = vpop.permute.xlu0 %1727
        %1729 = vrot.lane.b32.xlu0 %v842, 126
        %v1730 = vpop.permute.xlu0 %1729
        %1731 = vrot.lane.b32.xlu0 %v844, 126
        %v1732 = vpop.permute.xlu0 %1731
        %1733 = vrot.lane.b32.xlu0 %v846, 126
        %v1734 = vpop.permute.xlu0 %1733
        %v1735 = vsel %vm477, %v1720, %v1728
        %v1736 = vsel %vm477, %v1722, %v1730
        %v1737 = vsel %vm477, %v1724, %v1732
        %v1738 = vsel %vm477, %v1726, %v1734
        %v1739 = vsel %vm477, %v1728, %v1720
        %v1740 = vsel %vm477, %v1730, %v1722
        %v1741 = vsel %vm477, %v1732, %v1724
        %v1742 = vsel %vm477, %v1734, %v1726
        %v1743 = vmul.f32 %v1735, %v377
        %v1744 = vmul.f32 %v1739, %v378
        %v1745 = vmul.f32 %v1736, %v377
        %v1746 = vmul.f32 %v1740, %v378
        %v1747 = vmul.f32 %v1737, %v377
        %v1748 = vmul.f32 %v1741, %v378
        %v1749 = vmul.f32 %v1738, %v377
        %v1750 = vmul.f32 %v1742, %v378
        %1751 = vset.pattern.permute.xlu0 14
        %1752 = vperm.xlu0 %1751, %v847
        %v1753 = vpop.permute.xlu0 %1752
        %1755 = vset.pattern.permute.xlu0 14
        %1756 = vperm.xlu0 %1755, %v848
        %v1757 = vpop.permute.xlu0 %1756
        %1759 = vset.pattern.permute.xlu0 14
        %1760 = vperm.xlu0 %1759, %v849
        %v1761 = vpop.permute.xlu0 %1760
        %1763 = vset.pattern.permute.xlu0 14
        %1764 = vperm.xlu0 %1763, %v850
        %v1765 = vpop.permute.xlu0 %1764
        %v1767 = vmul.f32 %v1743, %v1753
        %v1768 = vmul.f32 %v1744, %v1753
        %v1769 = vmul.f32 %v1745, %v1757
        %v1770 = vmul.f32 %v1746, %v1757
        %v1771 = vmul.f32 %v1747, %v1761
        %v1772 = vmul.f32 %v1748, %v1761
        %v1773 = vmul.f32 %v1749, %v1765
        %v1774 = vmul.f32 %v1750, %v1765
        %v1775 = vadd.f32 %v1711, %v1767
        %v1776 = vadd.f32 %v1712, %v1768
        %v1777 = vadd.f32 %v1713, %v1769
        %v1778 = vadd.f32 %v1714, %v1770
        %v1779 = vadd.f32 %v1715, %v1771
        %v1780 = vadd.f32 %v1716, %v1772
        %v1781 = vadd.f32 %v1717, %v1773
        %v1782 = vadd.f32 %v1718, %v1774
        %1783 = vrot.lane.b32.xlu0 %v839, 112
        %v1784 = vpop.permute.xlu0 %1783
        %1785 = vrot.lane.b32.xlu0 %v841, 112
        %v1786 = vpop.permute.xlu0 %1785
        %1787 = vrot.lane.b32.xlu0 %v843, 112
        %v1788 = vpop.permute.xlu0 %1787
        %1789 = vrot.lane.b32.xlu0 %v845, 112
        %v1790 = vpop.permute.xlu0 %1789
        %1791 = vrot.lane.b32.xlu0 %v840, 112
        %v1792 = vpop.permute.xlu0 %1791
        %1793 = vrot.lane.b32.xlu0 %v842, 112
        %v1794 = vpop.permute.xlu0 %1793
        %1795 = vrot.lane.b32.xlu0 %v844, 112
        %v1796 = vpop.permute.xlu0 %1795
        %1797 = vrot.lane.b32.xlu0 %v846, 112
        %v1798 = vpop.permute.xlu0 %1797
        %v1799 = vsel %vm581, %v1784, %v1792
        %v1800 = vsel %vm581, %v1786, %v1794
        %v1801 = vsel %vm581, %v1788, %v1796
        %v1802 = vsel %vm581, %v1790, %v1798
        %v1803 = vsel %vm581, %v1792, %v1784
        %v1804 = vsel %vm581, %v1794, %v1786
        %v1805 = vsel %vm581, %v1796, %v1788
        %v1806 = vsel %vm581, %v1798, %v1790
        %v1807 = vmul.f32 %v1799, %v341
        %v1808 = vmul.f32 %v1803, %v342
        %v1809 = vmul.f32 %v1800, %v341
        %v1810 = vmul.f32 %v1804, %v342
        %v1811 = vmul.f32 %v1801, %v341
        %v1812 = vmul.f32 %v1805, %v342
        %v1813 = vmul.f32 %v1802, %v341
        %v1814 = vmul.f32 %v1806, %v342
        %1815 = vrot.lane.b32.xlu0 %v1807, 2
        %v1816 = vpop.permute.xlu0 %1815
        %1817 = vrot.lane.b32.xlu0 %v1809, 2
        %v1818 = vpop.permute.xlu0 %1817
        %1819 = vrot.lane.b32.xlu0 %v1811, 2
        %v1820 = vpop.permute.xlu0 %1819
        %1821 = vrot.lane.b32.xlu0 %v1813, 2
        %v1822 = vpop.permute.xlu0 %1821
        %1823 = vrot.lane.b32.xlu0 %v1808, 2
        %v1824 = vpop.permute.xlu0 %1823
        %1825 = vrot.lane.b32.xlu0 %v1810, 2
        %v1826 = vpop.permute.xlu0 %1825
        %1827 = vrot.lane.b32.xlu0 %v1812, 2
        %v1828 = vpop.permute.xlu0 %1827
        %1829 = vrot.lane.b32.xlu0 %v1814, 2
        %v1830 = vpop.permute.xlu0 %1829
        %v1831 = vsel %vm442, %v1816, %v1824
        %v1832 = vsel %vm442, %v1818, %v1826
        %v1833 = vsel %vm442, %v1820, %v1828
        %v1834 = vsel %vm442, %v1822, %v1830
        %v1835 = vsel %vm442, %v1824, %v1816
        %v1836 = vsel %vm442, %v1826, %v1818
        %v1837 = vsel %vm442, %v1828, %v1820
        %v1838 = vsel %vm442, %v1830, %v1822
        %v1839 = vmul.f32 %v1835, %v305
        %v1840 = vmul.f32 %v1831, %v306
        %v1841 = vmul.f32 %v1836, %v305
        %v1842 = vmul.f32 %v1832, %v306
        %v1843 = vmul.f32 %v1837, %v305
        %v1844 = vmul.f32 %v1833, %v306
        %v1845 = vmul.f32 %v1838, %v305
        %v1846 = vmul.f32 %v1834, %v306
        %1847 = vset.pattern.permute.xlu0 15
        %1848 = vperm.xlu0 %1847, %v847
        %v1849 = vpop.permute.xlu0 %1848
        %1851 = vset.pattern.permute.xlu0 15
        %1852 = vperm.xlu0 %1851, %v848
        %v1853 = vpop.permute.xlu0 %1852
        %1855 = vset.pattern.permute.xlu0 15
        %1856 = vperm.xlu0 %1855, %v849
        %v1857 = vpop.permute.xlu0 %1856
        %1859 = vset.pattern.permute.xlu0 15
        %1860 = vperm.xlu0 %1859, %v850
        %v1861 = vpop.permute.xlu0 %1860
        %v1863 = vmul.f32 %v1839, %v1849
        %v1864 = vmul.f32 %v1840, %v1849
        %v1865 = vmul.f32 %v1841, %v1853
        %v1866 = vmul.f32 %v1842, %v1853
        %v1867 = vmul.f32 %v1843, %v1857
        %v1868 = vmul.f32 %v1844, %v1857
        %v1869 = vmul.f32 %v1845, %v1861
        %v1870 = vmul.f32 %v1846, %v1861
        %v1871 = vadd.f32 %v1775, %v1863
        %v1872 = vadd.f32 %v1776, %v1864
        %v1873 = vadd.f32 %v1777, %v1865
        %v1874 = vadd.f32 %v1778, %v1866
        %v1875 = vadd.f32 %v1779, %v1867
        %v1876 = vadd.f32 %v1780, %v1868
        %v1877 = vadd.f32 %v1781, %v1869
        %v1878 = vadd.f32 %v1782, %v1870
        %1879 = vrot.lane.b32.xlu0 %v1807, 1
        %v1880 = vpop.permute.xlu0 %1879
        %1881 = vrot.lane.b32.xlu0 %v1809, 1
        %v1882 = vpop.permute.xlu0 %1881
        %1883 = vrot.lane.b32.xlu0 %v1811, 1
        %v1884 = vpop.permute.xlu0 %1883
        %1885 = vrot.lane.b32.xlu0 %v1813, 1
        %v1886 = vpop.permute.xlu0 %1885
        %1887 = vrot.lane.b32.xlu0 %v1808, 1
        %v1888 = vpop.permute.xlu0 %1887
        %1889 = vrot.lane.b32.xlu0 %v1810, 1
        %v1890 = vpop.permute.xlu0 %1889
        %1891 = vrot.lane.b32.xlu0 %v1812, 1
        %v1892 = vpop.permute.xlu0 %1891
        %1893 = vrot.lane.b32.xlu0 %v1814, 1
        %v1894 = vpop.permute.xlu0 %1893
        %v1895 = vsel %vm453, %v1880, %v1888
        %v1896 = vsel %vm453, %v1882, %v1890
        %v1897 = vsel %vm453, %v1884, %v1892
        %v1898 = vsel %vm453, %v1886, %v1894
        %v1899 = vsel %vm453, %v1888, %v1880
        %v1900 = vsel %vm453, %v1890, %v1882
        %v1901 = vsel %vm453, %v1892, %v1884
        %v1902 = vsel %vm453, %v1894, %v1886
        %v1903 = vmul.f32 %v1899, %v329
        %v1904 = vmul.f32 %v1895, %v330
        %v1905 = vmul.f32 %v1900, %v329
        %v1906 = vmul.f32 %v1896, %v330
        %v1907 = vmul.f32 %v1901, %v329
        %v1908 = vmul.f32 %v1897, %v330
        %v1909 = vmul.f32 %v1902, %v329
        %v1910 = vmul.f32 %v1898, %v330
        %1911 = vset.pattern.permute.xlu0 16
        %1912 = vperm.xlu0 %1911, %v847
        %v1913 = vpop.permute.xlu0 %1912
        %1915 = vset.pattern.permute.xlu0 16
        %1916 = vperm.xlu0 %1915, %v848
        %v1917 = vpop.permute.xlu0 %1916
        %1919 = vset.pattern.permute.xlu0 16
        %1920 = vperm.xlu0 %1919, %v849
        %v1921 = vpop.permute.xlu0 %1920
        %1923 = vset.pattern.permute.xlu0 16
        %1924 = vperm.xlu0 %1923, %v850
        %v1925 = vpop.permute.xlu0 %1924
        %v1927 = vmul.f32 %v1903, %v1913
        %v1928 = vmul.f32 %v1904, %v1913
        %v1929 = vmul.f32 %v1905, %v1917
        %v1930 = vmul.f32 %v1906, %v1917
        %v1931 = vmul.f32 %v1907, %v1921
        %v1932 = vmul.f32 %v1908, %v1921
        %v1933 = vmul.f32 %v1909, %v1925
        %v1934 = vmul.f32 %v1910, %v1925
        %v1935 = vadd.f32 %v1871, %v1927
        %v1936 = vadd.f32 %v1872, %v1928
        %v1937 = vadd.f32 %v1873, %v1929
        %v1938 = vadd.f32 %v1874, %v1930
        %v1939 = vadd.f32 %v1875, %v1931
        %v1940 = vadd.f32 %v1876, %v1932
        %v1941 = vadd.f32 %v1877, %v1933
        %v1942 = vadd.f32 %v1878, %v1934
        %1943 = vset.pattern.permute.xlu0 17
        %1944 = vperm.xlu0 %1943, %v847
        %v1945 = vpop.permute.xlu0 %1944
        %1947 = vset.pattern.permute.xlu0 17
        %1948 = vperm.xlu0 %1947, %v848
        %v1949 = vpop.permute.xlu0 %1948
        %1951 = vset.pattern.permute.xlu0 17
        %1952 = vperm.xlu0 %1951, %v849
        %v1953 = vpop.permute.xlu0 %1952
        %1955 = vset.pattern.permute.xlu0 17
        %1956 = vperm.xlu0 %1955, %v850
        %v1957 = vpop.permute.xlu0 %1956
        %v1959 = vmul.f32 %v1807, %v1945
        %v1960 = vmul.f32 %v1808, %v1945
        %v1961 = vmul.f32 %v1809, %v1949
        %v1962 = vmul.f32 %v1810, %v1949
        %v1963 = vmul.f32 %v1811, %v1953
        %v1964 = vmul.f32 %v1812, %v1953
        %v1965 = vmul.f32 %v1813, %v1957
        %v1966 = vmul.f32 %v1814, %v1957
        %v1967 = vadd.f32 %v1935, %v1959
        %v1968 = vadd.f32 %v1936, %v1960
        %v1969 = vadd.f32 %v1937, %v1961
        %v1970 = vadd.f32 %v1938, %v1962
        %v1971 = vadd.f32 %v1939, %v1963
        %v1972 = vadd.f32 %v1940, %v1964
        %v1973 = vadd.f32 %v1941, %v1965
        %v1974 = vadd.f32 %v1942, %v1966
        %1975 = vrot.lane.b32.xlu0 %v1807, 127
        %v1976 = vpop.permute.xlu0 %1975
        %1977 = vrot.lane.b32.xlu0 %v1809, 127
        %v1978 = vpop.permute.xlu0 %1977
        %1979 = vrot.lane.b32.xlu0 %v1811, 127
        %v1980 = vpop.permute.xlu0 %1979
        %1981 = vrot.lane.b32.xlu0 %v1813, 127
        %v1982 = vpop.permute.xlu0 %1981
        %1983 = vrot.lane.b32.xlu0 %v1808, 127
        %v1984 = vpop.permute.xlu0 %1983
        %1985 = vrot.lane.b32.xlu0 %v1810, 127
        %v1986 = vpop.permute.xlu0 %1985
        %1987 = vrot.lane.b32.xlu0 %v1812, 127
        %v1988 = vpop.permute.xlu0 %1987
        %1989 = vrot.lane.b32.xlu0 %v1814, 127
        %v1990 = vpop.permute.xlu0 %1989
        %v1991 = vsel %vm466, %v1976, %v1984
        %v1992 = vsel %vm466, %v1978, %v1986
        %v1993 = vsel %vm466, %v1980, %v1988
        %v1994 = vsel %vm466, %v1982, %v1990
        %v1995 = vsel %vm466, %v1984, %v1976
        %v1996 = vsel %vm466, %v1986, %v1978
        %v1997 = vsel %vm466, %v1988, %v1980
        %v1998 = vsel %vm466, %v1990, %v1982
        %v1999 = vmul.f32 %v1991, %v353
        %v2000 = vmul.f32 %v1995, %v354
        %v2001 = vmul.f32 %v1992, %v353
        %v2002 = vmul.f32 %v1996, %v354
        %v2003 = vmul.f32 %v1993, %v353
        %v2004 = vmul.f32 %v1997, %v354
        %v2005 = vmul.f32 %v1994, %v353
        %v2006 = vmul.f32 %v1998, %v354
        %2007 = vset.pattern.permute.xlu0 18
        %2008 = vperm.xlu0 %2007, %v847
        %v2009 = vpop.permute.xlu0 %2008
        %2011 = vset.pattern.permute.xlu0 18
        %2012 = vperm.xlu0 %2011, %v848
        %v2013 = vpop.permute.xlu0 %2012
        %2015 = vset.pattern.permute.xlu0 18
        %2016 = vperm.xlu0 %2015, %v849
        %v2017 = vpop.permute.xlu0 %2016
        %2019 = vset.pattern.permute.xlu0 18
        %2020 = vperm.xlu0 %2019, %v850
        %v2021 = vpop.permute.xlu0 %2020
        %v2023 = vmul.f32 %v1999, %v2009
        %v2024 = vmul.f32 %v2000, %v2009
        %v2025 = vmul.f32 %v2001, %v2013
        %v2026 = vmul.f32 %v2002, %v2013
        %v2027 = vmul.f32 %v2003, %v2017
        %v2028 = vmul.f32 %v2004, %v2017
        %v2029 = vmul.f32 %v2005, %v2021
        %v2030 = vmul.f32 %v2006, %v2021
        %v2031 = vadd.f32 %v1967, %v2023
        %v2032 = vadd.f32 %v1968, %v2024
        %v2033 = vadd.f32 %v1969, %v2025
        %v2034 = vadd.f32 %v1970, %v2026
        %v2035 = vadd.f32 %v1971, %v2027
        %v2036 = vadd.f32 %v1972, %v2028
        %v2037 = vadd.f32 %v1973, %v2029
        %v2038 = vadd.f32 %v1974, %v2030
        %2039 = vrot.lane.b32.xlu0 %v1807, 126
        %v2040 = vpop.permute.xlu0 %2039
        %2041 = vrot.lane.b32.xlu0 %v1809, 126
        %v2042 = vpop.permute.xlu0 %2041
        %2043 = vrot.lane.b32.xlu0 %v1811, 126
        %v2044 = vpop.permute.xlu0 %2043
        %2045 = vrot.lane.b32.xlu0 %v1813, 126
        %v2046 = vpop.permute.xlu0 %2045
        %2047 = vrot.lane.b32.xlu0 %v1808, 126
        %v2048 = vpop.permute.xlu0 %2047
        %2049 = vrot.lane.b32.xlu0 %v1810, 126
        %v2050 = vpop.permute.xlu0 %2049
        %2051 = vrot.lane.b32.xlu0 %v1812, 126
        %v2052 = vpop.permute.xlu0 %2051
        %2053 = vrot.lane.b32.xlu0 %v1814, 126
        %v2054 = vpop.permute.xlu0 %2053
        %v2055 = vsel %vm477, %v2040, %v2048
        %v2056 = vsel %vm477, %v2042, %v2050
        %v2057 = vsel %vm477, %v2044, %v2052
        %v2058 = vsel %vm477, %v2046, %v2054
        %v2059 = vsel %vm477, %v2048, %v2040
        %v2060 = vsel %vm477, %v2050, %v2042
        %v2061 = vsel %vm477, %v2052, %v2044
        %v2062 = vsel %vm477, %v2054, %v2046
        %v2063 = vmul.f32 %v2055, %v377
        %v2064 = vmul.f32 %v2059, %v378
        %v2065 = vmul.f32 %v2056, %v377
        %v2066 = vmul.f32 %v2060, %v378
        %v2067 = vmul.f32 %v2057, %v377
        %v2068 = vmul.f32 %v2061, %v378
        %v2069 = vmul.f32 %v2058, %v377
        %v2070 = vmul.f32 %v2062, %v378
        %2071 = vset.pattern.permute.xlu0 19
        %2072 = vperm.xlu0 %2071, %v847
        %v2073 = vpop.permute.xlu0 %2072
        %2075 = vset.pattern.permute.xlu0 19
        %2076 = vperm.xlu0 %2075, %v848
        %v2077 = vpop.permute.xlu0 %2076
        %2079 = vset.pattern.permute.xlu0 19
        %2080 = vperm.xlu0 %2079, %v849
        %v2081 = vpop.permute.xlu0 %2080
        %2083 = vset.pattern.permute.xlu0 19
        %2084 = vperm.xlu0 %2083, %v850
        %v2085 = vpop.permute.xlu0 %2084
        %v2087 = vmul.f32 %v2063, %v2073
        %v2088 = vmul.f32 %v2064, %v2073
        %v2089 = vmul.f32 %v2065, %v2077
        %v2090 = vmul.f32 %v2066, %v2077
        %v2091 = vmul.f32 %v2067, %v2081
        %v2092 = vmul.f32 %v2068, %v2081
        %v2093 = vmul.f32 %v2069, %v2085
        %v2094 = vmul.f32 %v2070, %v2085
        %v2095 = vadd.f32 %v2031, %v2087
        %v2096 = vadd.f32 %v2032, %v2088
        %v2097 = vadd.f32 %v2033, %v2089
        %v2098 = vadd.f32 %v2034, %v2090
        %v2099 = vadd.f32 %v2035, %v2091
        %v2100 = vadd.f32 %v2036, %v2092
        %v2101 = vadd.f32 %v2037, %v2093
        %v2102 = vadd.f32 %v2038, %v2094
        %2103 = vrot.lane.b32.xlu0 %v839, 96
        %v2104 = vpop.permute.xlu0 %2103
        %2105 = vrot.lane.b32.xlu0 %v841, 96
        %v2106 = vpop.permute.xlu0 %2105
        %2107 = vrot.lane.b32.xlu0 %v843, 96
        %v2108 = vpop.permute.xlu0 %2107
        %2109 = vrot.lane.b32.xlu0 %v845, 96
        %v2110 = vpop.permute.xlu0 %2109
        %2111 = vrot.lane.b32.xlu0 %v840, 96
        %v2112 = vpop.permute.xlu0 %2111
        %2113 = vrot.lane.b32.xlu0 %v842, 96
        %v2114 = vpop.permute.xlu0 %2113
        %2115 = vrot.lane.b32.xlu0 %v844, 96
        %v2116 = vpop.permute.xlu0 %2115
        %2117 = vrot.lane.b32.xlu0 %v846, 96
        %v2118 = vpop.permute.xlu0 %2117
        %v2119 = vsel %vm632, %v2104, %v2112
        %v2120 = vsel %vm632, %v2106, %v2114
        %v2121 = vsel %vm632, %v2108, %v2116
        %v2122 = vsel %vm632, %v2110, %v2118
        %v2123 = vsel %vm632, %v2112, %v2104
        %v2124 = vsel %vm632, %v2114, %v2106
        %v2125 = vsel %vm632, %v2116, %v2108
        %v2126 = vsel %vm632, %v2118, %v2110
        %v2127 = vmul.f32 %v2119, %v365
        %v2128 = vmul.f32 %v2123, %v366
        %v2129 = vmul.f32 %v2120, %v365
        %v2130 = vmul.f32 %v2124, %v366
        %v2131 = vmul.f32 %v2121, %v365
        %v2132 = vmul.f32 %v2125, %v366
        %v2133 = vmul.f32 %v2122, %v365
        %v2134 = vmul.f32 %v2126, %v366
        %2135 = vrot.lane.b32.xlu0 %v2127, 2
        %v2136 = vpop.permute.xlu0 %2135
        %2137 = vrot.lane.b32.xlu0 %v2129, 2
        %v2138 = vpop.permute.xlu0 %2137
        %2139 = vrot.lane.b32.xlu0 %v2131, 2
        %v2140 = vpop.permute.xlu0 %2139
        %2141 = vrot.lane.b32.xlu0 %v2133, 2
        %v2142 = vpop.permute.xlu0 %2141
        %2143 = vrot.lane.b32.xlu0 %v2128, 2
        %v2144 = vpop.permute.xlu0 %2143
        %2145 = vrot.lane.b32.xlu0 %v2130, 2
        %v2146 = vpop.permute.xlu0 %2145
        %2147 = vrot.lane.b32.xlu0 %v2132, 2
        %v2148 = vpop.permute.xlu0 %2147
        %2149 = vrot.lane.b32.xlu0 %v2134, 2
        %v2150 = vpop.permute.xlu0 %2149
        %v2151 = vsel %vm442, %v2136, %v2144
        %v2152 = vsel %vm442, %v2138, %v2146
        %v2153 = vsel %vm442, %v2140, %v2148
        %v2154 = vsel %vm442, %v2142, %v2150
        %v2155 = vsel %vm442, %v2144, %v2136
        %v2156 = vsel %vm442, %v2146, %v2138
        %v2157 = vsel %vm442, %v2148, %v2140
        %v2158 = vsel %vm442, %v2150, %v2142
        %v2159 = vmul.f32 %v2155, %v305
        %v2160 = vmul.f32 %v2151, %v306
        %v2161 = vmul.f32 %v2156, %v305
        %v2162 = vmul.f32 %v2152, %v306
        %v2163 = vmul.f32 %v2157, %v305
        %v2164 = vmul.f32 %v2153, %v306
        %v2165 = vmul.f32 %v2158, %v305
        %v2166 = vmul.f32 %v2154, %v306
        %2167 = vset.pattern.permute.xlu0 20
        %2168 = vperm.xlu0 %2167, %v847
        %v2169 = vpop.permute.xlu0 %2168
        %2171 = vset.pattern.permute.xlu0 20
        %2172 = vperm.xlu0 %2171, %v848
        %v2173 = vpop.permute.xlu0 %2172
        %2175 = vset.pattern.permute.xlu0 20
        %2176 = vperm.xlu0 %2175, %v849
        %v2177 = vpop.permute.xlu0 %2176
        %2179 = vset.pattern.permute.xlu0 20
        %2180 = vperm.xlu0 %2179, %v850
        %v2181 = vpop.permute.xlu0 %2180
        %v2183 = vmul.f32 %v2159, %v2169
        %v2184 = vmul.f32 %v2160, %v2169
        %v2185 = vmul.f32 %v2161, %v2173
        %v2186 = vmul.f32 %v2162, %v2173
        %v2187 = vmul.f32 %v2163, %v2177
        %v2188 = vmul.f32 %v2164, %v2177
        %v2189 = vmul.f32 %v2165, %v2181
        %v2190 = vmul.f32 %v2166, %v2181
        %v2191 = vadd.f32 %v2095, %v2183
        %v2192 = vadd.f32 %v2096, %v2184
        %v2193 = vadd.f32 %v2097, %v2185
        %v2194 = vadd.f32 %v2098, %v2186
        %v2195 = vadd.f32 %v2099, %v2187
        %v2196 = vadd.f32 %v2100, %v2188
        %v2197 = vadd.f32 %v2101, %v2189
        %v2198 = vadd.f32 %v2102, %v2190
        %2199 = vrot.lane.b32.xlu0 %v2127, 1
        %v2200 = vpop.permute.xlu0 %2199
        %2201 = vrot.lane.b32.xlu0 %v2129, 1
        %v2202 = vpop.permute.xlu0 %2201
        %2203 = vrot.lane.b32.xlu0 %v2131, 1
        %v2204 = vpop.permute.xlu0 %2203
        %2205 = vrot.lane.b32.xlu0 %v2133, 1
        %v2206 = vpop.permute.xlu0 %2205
        %2207 = vrot.lane.b32.xlu0 %v2128, 1
        %v2208 = vpop.permute.xlu0 %2207
        %2209 = vrot.lane.b32.xlu0 %v2130, 1
        %v2210 = vpop.permute.xlu0 %2209
        %2211 = vrot.lane.b32.xlu0 %v2132, 1
        %v2212 = vpop.permute.xlu0 %2211
        %2213 = vrot.lane.b32.xlu0 %v2134, 1
        %v2214 = vpop.permute.xlu0 %2213
        %v2215 = vsel %vm453, %v2200, %v2208
        %v2216 = vsel %vm453, %v2202, %v2210
        %v2217 = vsel %vm453, %v2204, %v2212
        %v2218 = vsel %vm453, %v2206, %v2214
        %v2219 = vsel %vm453, %v2208, %v2200
        %v2220 = vsel %vm453, %v2210, %v2202
        %v2221 = vsel %vm453, %v2212, %v2204
        %v2222 = vsel %vm453, %v2214, %v2206
        %v2223 = vmul.f32 %v2219, %v329
        %v2224 = vmul.f32 %v2215, %v330
        %v2225 = vmul.f32 %v2220, %v329
        %v2226 = vmul.f32 %v2216, %v330
        %v2227 = vmul.f32 %v2221, %v329
        %v2228 = vmul.f32 %v2217, %v330
        %v2229 = vmul.f32 %v2222, %v329
        %v2230 = vmul.f32 %v2218, %v330
        %2231 = vset.pattern.permute.xlu0 21
        %2232 = vperm.xlu0 %2231, %v847
        %v2233 = vpop.permute.xlu0 %2232
        %2235 = vset.pattern.permute.xlu0 21
        %2236 = vperm.xlu0 %2235, %v848
        %v2237 = vpop.permute.xlu0 %2236
        %2239 = vset.pattern.permute.xlu0 21
        %2240 = vperm.xlu0 %2239, %v849
        %v2241 = vpop.permute.xlu0 %2240
        %2243 = vset.pattern.permute.xlu0 21
        %2244 = vperm.xlu0 %2243, %v850
        %v2245 = vpop.permute.xlu0 %2244
        %v2247 = vmul.f32 %v2223, %v2233
        %v2248 = vmul.f32 %v2224, %v2233
        %v2249 = vmul.f32 %v2225, %v2237
        %v2250 = vmul.f32 %v2226, %v2237
        %v2251 = vmul.f32 %v2227, %v2241
        %v2252 = vmul.f32 %v2228, %v2241
        %v2253 = vmul.f32 %v2229, %v2245
        %v2254 = vmul.f32 %v2230, %v2245
        %v2255 = vadd.f32 %v2191, %v2247
        %v2256 = vadd.f32 %v2192, %v2248
        %v2257 = vadd.f32 %v2193, %v2249
        %v2258 = vadd.f32 %v2194, %v2250
        %v2259 = vadd.f32 %v2195, %v2251
        %v2260 = vadd.f32 %v2196, %v2252
        %v2261 = vadd.f32 %v2197, %v2253
        %v2262 = vadd.f32 %v2198, %v2254
        %2263 = vset.pattern.permute.xlu0 22
        %2264 = vperm.xlu0 %2263, %v847
        %v2265 = vpop.permute.xlu0 %2264
        %2267 = vset.pattern.permute.xlu0 22
        %2268 = vperm.xlu0 %2267, %v848
        %v2269 = vpop.permute.xlu0 %2268
        %2271 = vset.pattern.permute.xlu0 22
        %2272 = vperm.xlu0 %2271, %v849
        %v2273 = vpop.permute.xlu0 %2272
        %2275 = vset.pattern.permute.xlu0 22
        %2276 = vperm.xlu0 %2275, %v850
        %v2277 = vpop.permute.xlu0 %2276
        %v2279 = vmul.f32 %v2127, %v2265
        %v2280 = vmul.f32 %v2128, %v2265
        %v2281 = vmul.f32 %v2129, %v2269
        %v2282 = vmul.f32 %v2130, %v2269
        %v2283 = vmul.f32 %v2131, %v2273
        %v2284 = vmul.f32 %v2132, %v2273
        %v2285 = vmul.f32 %v2133, %v2277
        %v2286 = vmul.f32 %v2134, %v2277
        %v2287 = vadd.f32 %v2255, %v2279
        %v2288 = vadd.f32 %v2256, %v2280
        %v2289 = vadd.f32 %v2257, %v2281
        %v2290 = vadd.f32 %v2258, %v2282
        %v2291 = vadd.f32 %v2259, %v2283
        %v2292 = vadd.f32 %v2260, %v2284
        %v2293 = vadd.f32 %v2261, %v2285
        %v2294 = vadd.f32 %v2262, %v2286
        %2295 = vrot.lane.b32.xlu0 %v2127, 127
        %v2296 = vpop.permute.xlu0 %2295
        %2297 = vrot.lane.b32.xlu0 %v2129, 127
        %v2298 = vpop.permute.xlu0 %2297
        %2299 = vrot.lane.b32.xlu0 %v2131, 127
        %v2300 = vpop.permute.xlu0 %2299
        %2301 = vrot.lane.b32.xlu0 %v2133, 127
        %v2302 = vpop.permute.xlu0 %2301
        %2303 = vrot.lane.b32.xlu0 %v2128, 127
        %v2304 = vpop.permute.xlu0 %2303
        %2305 = vrot.lane.b32.xlu0 %v2130, 127
        %v2306 = vpop.permute.xlu0 %2305
        %2307 = vrot.lane.b32.xlu0 %v2132, 127
        %v2308 = vpop.permute.xlu0 %2307
        %2309 = vrot.lane.b32.xlu0 %v2134, 127
        %v2310 = vpop.permute.xlu0 %2309
        %v2311 = vsel %vm466, %v2296, %v2304
        %v2312 = vsel %vm466, %v2298, %v2306
        %v2313 = vsel %vm466, %v2300, %v2308
        %v2314 = vsel %vm466, %v2302, %v2310
        %v2315 = vsel %vm466, %v2304, %v2296
        %v2316 = vsel %vm466, %v2306, %v2298
        %v2317 = vsel %vm466, %v2308, %v2300
        %v2318 = vsel %vm466, %v2310, %v2302
        %v2319 = vmul.f32 %v2311, %v353
        %v2320 = vmul.f32 %v2315, %v354
        %v2321 = vmul.f32 %v2312, %v353
        %v2322 = vmul.f32 %v2316, %v354
        %v2323 = vmul.f32 %v2313, %v353
        %v2324 = vmul.f32 %v2317, %v354
        %v2325 = vmul.f32 %v2314, %v353
        %v2326 = vmul.f32 %v2318, %v354
        %2327 = vset.pattern.permute.xlu0 23
        %2328 = vperm.xlu0 %2327, %v847
        %v2329 = vpop.permute.xlu0 %2328
        %2331 = vset.pattern.permute.xlu0 23
        %2332 = vperm.xlu0 %2331, %v848
        %v2333 = vpop.permute.xlu0 %2332
        %2335 = vset.pattern.permute.xlu0 23
        %2336 = vperm.xlu0 %2335, %v849
        %v2337 = vpop.permute.xlu0 %2336
        %2339 = vset.pattern.permute.xlu0 23
        %2340 = vperm.xlu0 %2339, %v850
        %v2341 = vpop.permute.xlu0 %2340
        %v2343 = vmul.f32 %v2319, %v2329
        %v2344 = vmul.f32 %v2320, %v2329
        %v2345 = vmul.f32 %v2321, %v2333
        %v2346 = vmul.f32 %v2322, %v2333
        %v2347 = vmul.f32 %v2323, %v2337
        %v2348 = vmul.f32 %v2324, %v2337
        %v2349 = vmul.f32 %v2325, %v2341
        %v2350 = vmul.f32 %v2326, %v2341
        %v2351 = vadd.f32 %v2287, %v2343
        %v2352 = vadd.f32 %v2288, %v2344
        %v2353 = vadd.f32 %v2289, %v2345
        %v2354 = vadd.f32 %v2290, %v2346
        %v2355 = vadd.f32 %v2291, %v2347
        %v2356 = vadd.f32 %v2292, %v2348
        %v2357 = vadd.f32 %v2293, %v2349
        %v2358 = vadd.f32 %v2294, %v2350
        %2359 = vrot.lane.b32.xlu0 %v2127, 126
        %v2360 = vpop.permute.xlu0 %2359
        %2361 = vrot.lane.b32.xlu0 %v2129, 126
        %v2362 = vpop.permute.xlu0 %2361
        %2363 = vrot.lane.b32.xlu0 %v2131, 126
        %v2364 = vpop.permute.xlu0 %2363
        %2365 = vrot.lane.b32.xlu0 %v2133, 126
        %v2366 = vpop.permute.xlu0 %2365
        %2367 = vrot.lane.b32.xlu0 %v2128, 126
        %v2368 = vpop.permute.xlu0 %2367
        %2369 = vrot.lane.b32.xlu0 %v2130, 126
        %v2370 = vpop.permute.xlu0 %2369
        %2371 = vrot.lane.b32.xlu0 %v2132, 126
        %v2372 = vpop.permute.xlu0 %2371
        %2373 = vrot.lane.b32.xlu0 %v2134, 126
        %v2374 = vpop.permute.xlu0 %2373
        %v2375 = vsel %vm477, %v2360, %v2368
        %v2376 = vsel %vm477, %v2362, %v2370
        %v2377 = vsel %vm477, %v2364, %v2372
        %v2378 = vsel %vm477, %v2366, %v2374
        %v2379 = vsel %vm477, %v2368, %v2360
        %v2380 = vsel %vm477, %v2370, %v2362
        %v2381 = vsel %vm477, %v2372, %v2364
        %v2382 = vsel %vm477, %v2374, %v2366
        %v2383 = vmul.f32 %v2375, %v377
        %v2384 = vmul.f32 %v2379, %v378
        %v2385 = vmul.f32 %v2376, %v377
        %v2386 = vmul.f32 %v2380, %v378
        %v2387 = vmul.f32 %v2377, %v377
        %v2388 = vmul.f32 %v2381, %v378
        %v2389 = vmul.f32 %v2378, %v377
        %v2390 = vmul.f32 %v2382, %v378
        %2391 = vset.pattern.permute.xlu0 24
        %2392 = vperm.xlu0 %2391, %v847
        %v2393 = vpop.permute.xlu0 %2392
        %2395 = vset.pattern.permute.xlu0 24
        %2396 = vperm.xlu0 %2395, %v848
        %v2397 = vpop.permute.xlu0 %2396
        %2399 = vset.pattern.permute.xlu0 24
        %2400 = vperm.xlu0 %2399, %v849
        %v2401 = vpop.permute.xlu0 %2400
        %2403 = vset.pattern.permute.xlu0 24
        %2404 = vperm.xlu0 %2403, %v850
        %v2405 = vpop.permute.xlu0 %2404
        %v2407 = vmul.f32 %v2383, %v2393
        %v2408 = vmul.f32 %v2384, %v2393
        %v2409 = vmul.f32 %v2385, %v2397
        %v2410 = vmul.f32 %v2386, %v2397
        %v2411 = vmul.f32 %v2387, %v2401
        %v2412 = vmul.f32 %v2388, %v2401
        %v2413 = vmul.f32 %v2389, %v2405
        %v2414 = vmul.f32 %v2390, %v2405
        %v2415 = vadd.f32 %v2351, %v2407
        %v2416 = vadd.f32 %v2352, %v2408
        %v2417 = vadd.f32 %v2353, %v2409
        %v2418 = vadd.f32 %v2354, %v2410
        %v2419 = vadd.f32 %v2355, %v2411
        %v2420 = vadd.f32 %v2356, %v2412
        %v2421 = vadd.f32 %v2357, %v2413
        %v2422 = vadd.f32 %v2358, %v2414
        %v2423 = vmax.f32 %v2415, 0.0
        %v2424 = vmax.f32 %v2416, 0.0
        %v2425 = vmax.f32 %v2417, 0.0
        %v2426 = vmax.f32 %v2418, 0.0
        %v2427 = vmax.f32 %v2419, 0.0
        %v2428 = vmax.f32 %v2420, 0.0
        %v2429 = vmax.f32 %v2421, 0.0
        %v2430 = vmax.f32 %v2422, 0.0
        %v2431 = vld [vmem:[%s3] sm:$0xff]
        %v2432 = vld [vmem:[%s3 + $0x8] sm:$0xff]
        %v2433 = vld [vmem:[%s3 + $0x10] sm:$0xff]
        %v2434 = vld [vmem:[%s3 + $0x18] sm:$0xff]
        %v2435 = vld [vmem:[%s3 + $0x20] sm:$0xff]
        %v2436 = vld [vmem:[%s3 + $0x28] sm:$0xff]
        %v2437 = vld [vmem:[%s3 + $0x30] sm:$0xff]
        %v2438 = vld [vmem:[%s3 + $0x38] sm:$0xff]
        %v2439 = vld [vmem:[%s4] sm:$0xff]
        %v2440 = vld [vmem:[%s4 + $0x8] sm:$0xff]
        %v2441 = vld [vmem:[%s4 + $0x10] sm:$0xff]
        %v2442 = vld [vmem:[%s4 + $0x18] sm:$0xff]
        %v2443 = vld [vmem:[%s4 + $0x20] sm:$0xff]
        %v2444 = vld [vmem:[%s4 + $0x28] sm:$0xff]
        %v2445 = vld [vmem:[%s4 + $0x30] sm:$0xff]
        %v2446 = vld [vmem:[%s4 + $0x38] sm:$0xff]
        %2448 = vset.pattern.permute.xlu0 0
        %2449 = vperm.xlu0 %2448, %v2439
        %v2450 = vpop.permute.xlu0 %2449
        %2453 = vset.pattern.permute.xlu0 0
        %2454 = vperm.xlu0 %2453, %v2440
        %v2455 = vpop.permute.xlu0 %2454
        %2458 = vset.pattern.permute.xlu0 0
        %2459 = vperm.xlu0 %2458, %v2441
        %v2460 = vpop.permute.xlu0 %2459
        %2463 = vset.pattern.permute.xlu0 0
        %2464 = vperm.xlu0 %2463, %v2442
        %v2465 = vpop.permute.xlu0 %2464
        %2468 = vset.pattern.permute.xlu0 0
        %2469 = vperm.xlu0 %2468, %v2443
        %v2470 = vpop.permute.xlu0 %2469
        %2473 = vset.pattern.permute.xlu0 0
        %2474 = vperm.xlu0 %2473, %v2444
        %v2475 = vpop.permute.xlu0 %2474
        %2478 = vset.pattern.permute.xlu0 0
        %2479 = vperm.xlu0 %2478, %v2445
        %v2480 = vpop.permute.xlu0 %2479
        %2483 = vset.pattern.permute.xlu0 0
        %2484 = vperm.xlu0 %2483, %v2446
        %v2485 = vpop.permute.xlu0 %2484
        %vm2487 = vcmask 261120
        %v2489 = vsel %vm2487, %v2431, 0
        %v2492 = vsel %vm2487, %v2432, 0
        %v2495 = vsel %vm2487, %v2433, 0
        %v2498 = vsel %vm2487, %v2434, 0
        %v2501 = vsel %vm2487, %v2435, 0
        %v2504 = vsel %vm2487, %v2436, 0
        %v2507 = vsel %vm2487, %v2437, 0
        %v2510 = vsel %vm2487, %v2438, 0
        %2512 = vmatprep.subr.mxu0 0.0
        %2513 = vmatpush1.msra.mxu0 0.0
        %2514 = vmatprep.subr.mxu0 0.0
        %2515 = vmatpush1.msra.mxu0 0.0
        %2516 = vmatprep.subr.mxu0 0.0
        %2517 = vmatpush1.msra.mxu0 0.0
        %2518 = vmatprep.subr.mxu0 0.0
        %2519 = vmatpush1.msra.mxu0 0.0
        %2520 = vmatprep.subr.mxu0 0.0
        %2521 = vmatpush1.msra.mxu0 0.0
        %2522 = vmatprep.subr.mxu0 0.0
        %2523 = vmatpush1.msra.mxu0 0.0
        %2524 = vmatprep.subr.mxu0 0.0
        %2525 = vmatpush1.msra.mxu0 0.0
        %2526 = vmatprep.subr.mxu0 0.0
        %2527 = vmatpush1.msra.mxu0 0.0
        %2528 = vmatprep.subr.mxu0 0.0
        %2529 = vmatpush1.msra.mxu0 0.0
        %2530 = vmatprep.subr.mxu0 0.0
        %2531 = vmatpush1.msra.mxu0 0.0
        %2532 = vmatprep.subr.mxu0 0.0
        %2533 = vmatpush1.msra.mxu0 0.0
        %2534 = vmatprep.subr.mxu0 0.0
        %2535 = vmatpush1.msra.mxu0 0.0
        %2536 = vmatprep.subr.mxu0 %v2430
        %2537 = vmatpush1.msra.mxu0 %v2429
        %2538 = vmatprep.subr.mxu0 %v2428
        %2539 = vmatpush1.msra.mxu0 %v2427
        %2540 = vmatprep.subr.mxu0 %v2426
        %2541 = vmatpush1.msra.mxu0 %v2425
        %2542 = vmatprep.subr.mxu0 %v2424
        %2543 = vmatpush1.msra.mxu0 %v2423
        %2544 = vmatprep.subr.mxu0 0.0
        %2545 = vmatpush2.msra.mxu0 0.0
        %2546 = vmatprep.subr.mxu0 0.0
        %2547 = vmatpush2.msra.mxu0 0.0
        %2548 = vmatprep.subr.mxu0 0.0
        %2549 = vmatpush2.msra.mxu0 0.0
        %2550 = vmatprep.subr.mxu0 0.0
        %2551 = vmatpush2.msra.mxu0 0.0
        %2552 = vmatprep.subr.mxu0 0.0
        %2553 = vmatpush2.msra.mxu0 0.0
        %2554 = vmatprep.subr.mxu0 0.0
        %2555 = vmatpush2.msra.mxu0 0.0
        %2556 = vmatprep.subr.mxu0 0.0
        %2557 = vmatpush2.msra.mxu0 0.0
        %2558 = vmatprep.subr.mxu0 0.0
        %2559 = vmatpush2.msra.mxu0 0.0
        %2560 = vmatprep.subr.mxu0 0.0
        %2561 = vmatpush2.msra.mxu0 0.0
        %2562 = vmatprep.subr.mxu0 0.0
        %2563 = vmatpush2.msra.mxu0 0.0
        %2564 = vmatprep.subr.mxu0 0.0
        %2565 = vmatpush2.msra.mxu0 0.0
        %2566 = vmatprep.subr.mxu0 0.0
        %2567 = vmatpush2.msra.mxu0 0.0
        %2568 = vmatprep.subr.mxu0 0.0
        %2569 = vmatpush2.msra.mxu0 0.0
        %2570 = vmatprep.subr.mxu0 0.0
        %2571 = vmatpush2.msra.mxu0 0.0
        %2572 = vmatprep.subr.mxu0 0.0
        %2573 = vmatpush2.msra.mxu0 0.0
        %2574 = vmatprep.subr.mxu0 0.0
        %2575 = vmatpush2.msra.mxu0 0.0
        %2576 = vmatprep.mubr.f32.mxu0 0.0
        %2577 = vmatmul.mubr.f32.gmra.mxu0 %v2489
        %v2578 = vpop.f32.mrf.mxu0
        %v2579 = vadd.f32 %v2450, %v2578
        %v2580 = vpop.f32.mrf.mxu0
        %v2581 = vadd.f32 %v2450, %v2580
        %2582 = vmatprep.mubr.f32.mxu0 0.0
        %2583 = vmatmul.mubr.f32.gmra.mxu0 %v2492
        %v2584 = vpop.f32.mrf.mxu0
        %v2585 = vadd.f32 %v2455, %v2584
        %v2586 = vpop.f32.mrf.mxu0
        %v2587 = vadd.f32 %v2455, %v2586
        %2588 = vmatprep.mubr.f32.mxu0 0.0
        %2589 = vmatmul.mubr.f32.gmra.mxu0 %v2495
        %v2590 = vpop.f32.mrf.mxu0
        %v2591 = vadd.f32 %v2460, %v2590
        %v2592 = vpop.f32.mrf.mxu0
        %v2593 = vadd.f32 %v2460, %v2592
        %2594 = vmatprep.mubr.f32.mxu0 0.0
        %2595 = vmatmul.mubr.f32.gmra.mxu0 %v2498
        %v2596 = vpop.f32.mrf.mxu0
        %v2597 = vadd.f32 %v2465, %v2596
        %v2598 = vpop.f32.mrf.mxu0
        %v2599 = vadd.f32 %v2465, %v2598
        %2600 = vmatprep.mubr.f32.mxu0 0.0
        %2601 = vmatmul.mubr.f32.gmra.mxu0 %v2501
        %v2602 = vpop.f32.mrf.mxu0
        %v2603 = vadd.f32 %v2470, %v2602
        %v2604 = vpop.f32.mrf.mxu0
        %v2605 = vadd.f32 %v2470, %v2604
        %2606 = vmatprep.mubr.f32.mxu0 0.0
        %2607 = vmatmul.mubr.f32.gmra.mxu0 %v2504
        %v2608 = vpop.f32.mrf.mxu0
        %v2609 = vadd.f32 %v2475, %v2608
        %v2610 = vpop.f32.mrf.mxu0
        %v2611 = vadd.f32 %v2475, %v2610
        %2612 = vmatprep.mubr.f32.mxu0 0.0
        %2613 = vmatmul.mubr.f32.gmra.mxu0 %v2507
        %v2614 = vpop.f32.mrf.mxu0
        %v2615 = vadd.f32 %v2480, %v2614
        %v2616 = vpop.f32.mrf.mxu0
        %v2617 = vadd.f32 %v2480, %v2616
        %2618 = vmatprep.mubr.f32.mxu0 0.0
        %2619 = vmatmul.mubr.f32.gmra.mxu0 %v2510
        %v2620 = vpop.f32.mrf.mxu0
        %v2621 = vadd.f32 %v2485, %v2620
        %v2622 = vpop.f32.mrf.mxu0
        %v2623 = vadd.f32 %v2485, %v2622
        %2624 = vdwg.mxu0
        %v2625 = vmax.f32 %v2579, 0.0
        %v2626 = vmax.f32 %v2581, 0.0
        %v2627 = vmax.f32 %v2585, 0.0
        %v2628 = vmax.f32 %v2587, 0.0
        %v2629 = vmax.f32 %v2591, 0.0
        %v2630 = vmax.f32 %v2593, 0.0
        %v2631 = vmax.f32 %v2597, 0.0
        %v2632 = vmax.f32 %v2599, 0.0
        %v2633 = vmax.f32 %v2603, 0.0
        %v2634 = vmax.f32 %v2605, 0.0
        %v2635 = vmax.f32 %v2609, 0.0
        %v2636 = vmax.f32 %v2611, 0.0
        %v2637 = vmax.f32 %v2615, 0.0
        %v2638 = vmax.f32 %v2617, 0.0
        %v2639 = vmax.f32 %v2621, 0.0
        %v2640 = vmax.f32 %v2623, 0.0
        %v2641 = vld [vmem:[%s3 + $0x40] sm:$0xff]
        %v2642 = vld [vmem:[%s3 + $0x48] sm:$0xff]
        %v2643 = vld [vmem:[%s4] sm:$0xff]
        %v2644 = vld [vmem:[%s4 + $0x8] sm:$0xff]
        %2646 = vset.pattern.permute.xlu0 1
        %2647 = vperm.xlu0 %2646, %v2643
        %v2648 = vpop.permute.xlu0 %2647
        %2651 = vset.pattern.permute.xlu0 1
        %2652 = vperm.xlu0 %2651, %v2644
        %v2653 = vpop.permute.xlu0 %2652
        %vm2655 = vcmask 523264
        %v2657 = vsel %vm2655, %v2641, 0
        %v2660 = vsel %vm2655, %v2642, 0
        %2662 = vmatprep.subr.mxu0 0.0
        %2663 = vmatpush1.msra.mxu0 0.0
        %2664 = vmatprep.subr.mxu0 0.0
        %2665 = vmatpush1.msra.mxu0 0.0
        %2666 = vmatprep.subr.mxu0 0.0
        %2667 = vmatpush1.msra.mxu0 0.0
        %2668 = vmatprep.subr.mxu0 0.0
        %2669 = vmatpush1.msra.mxu0 0.0
        %2670 = vmatprep.subr.mxu0 0.0
        %2671 = vmatpush1.msra.mxu0 0.0
        %2672 = vmatprep.subr.mxu0 0.0
        %2673 = vmatpush1.msra.mxu0 0.0
        %2674 = vmatprep.subr.mxu0 0.0
        %2675 = vmatpush1.msra.mxu0 0.0
        %2676 = vmatprep.subr.mxu0 0.0
        %2677 = vmatpush1.msra.mxu0 0.0
        %2678 = vmatprep.subr.mxu0 %v2640
        %2679 = vmatpush1.msra.mxu0 %v2639
        %2680 = vmatprep.subr.mxu0 %v2638
        %2681 = vmatpush1.msra.mxu0 %v2637
        %2682 = vmatprep.subr.mxu0 %v2636
        %2683 = vmatpush1.msra.mxu0 %v2635
        %2684 = vmatprep.subr.mxu0 %v2634
        %2685 = vmatpush1.msra.mxu0 %v2633
        %2686 = vmatprep.subr.mxu0 %v2632
        %2687 = vmatpush1.msra.mxu0 %v2631
        %2688 = vmatprep.subr.mxu0 %v2630
        %2689 = vmatpush1.msra.mxu0 %v2629
        %2690 = vmatprep.subr.mxu0 %v2628
        %2691 = vmatpush1.msra.mxu0 %v2627
        %2692 = vmatprep.subr.mxu0 %v2626
        %2693 = vmatpush1.msra.mxu0 %v2625
        %2694 = vmatprep.subr.mxu0 0.0
        %2695 = vmatpush2.msra.mxu0 0.0
        %2696 = vmatprep.subr.mxu0 0.0
        %2697 = vmatpush2.msra.mxu0 0.0
        %2698 = vmatprep.subr.mxu0 0.0
        %2699 = vmatpush2.msra.mxu0 0.0
        %2700 = vmatprep.subr.mxu0 0.0
        %2701 = vmatpush2.msra.mxu0 0.0
        %2702 = vmatprep.subr.mxu0 0.0
        %2703 = vmatpush2.msra.mxu0 0.0
        %2704 = vmatprep.subr.mxu0 0.0
        %2705 = vmatpush2.msra.mxu0 0.0
        %2706 = vmatprep.subr.mxu0 0.0
        %2707 = vmatpush2.msra.mxu0 0.0
        %2708 = vmatprep.subr.mxu0 0.0
        %2709 = vmatpush2.msra.mxu0 0.0
        %2710 = vmatprep.subr.mxu0 0.0
        %2711 = vmatpush2.msra.mxu0 0.0
        %2712 = vmatprep.subr.mxu0 0.0
        %2713 = vmatpush2.msra.mxu0 0.0
        %2714 = vmatprep.subr.mxu0 0.0
        %2715 = vmatpush2.msra.mxu0 0.0
        %2716 = vmatprep.subr.mxu0 0.0
        %2717 = vmatpush2.msra.mxu0 0.0
        %2718 = vmatprep.subr.mxu0 0.0
        %2719 = vmatpush2.msra.mxu0 0.0
        %2720 = vmatprep.subr.mxu0 0.0
        %2721 = vmatpush2.msra.mxu0 0.0
        %2722 = vmatprep.subr.mxu0 0.0
        %2723 = vmatpush2.msra.mxu0 0.0
        %2724 = vmatprep.subr.mxu0 0.0
        %2725 = vmatpush2.msra.mxu0 0.0
        %2726 = vmatprep.mubr.f32.mxu0 0.0
        %2727 = vmatmul.mubr.f32.gmra.mxu0 %v2657
        %v2728 = vpop.f32.mrf.mxu0
        %v2729 = vadd.f32 %v2648, %v2728
        %v2730 = vpop.f32.mrf.mxu0
        %v2731 = vadd.f32 %v2648, %v2730
        %2732 = vmatprep.mubr.f32.mxu0 0.0
        %2733 = vmatmul.mubr.f32.gmra.mxu0 %v2660
        %v2734 = vpop.f32.mrf.mxu0
        %v2735 = vadd.f32 %v2653, %v2734
        %v2736 = vpop.f32.mrf.mxu0
        %v2737 = vadd.f32 %v2653, %v2736
        %2738 = vdwg.mxu0
        %v2739 = vmax.f32 %v2729, 0.0
        %v2740 = vmax.f32 %v2731, 0.0
        %v2741 = vmax.f32 %v2735, 0.0
        %v2742 = vmax.f32 %v2737, 0.0
        %v2743 = vld [vmem:[%s2 + $0x20] sm:$0xff]
        %v2744 = vld [vmem:[%s2 + $0x28] sm:$0xff]
        %2745 = vset.pattern.permute.xlu0 2
        %2746 = vperm.xlu0 %2745, %v2643
        %v2747 = vpop.permute.xlu0 %2746
        %2749 = vset.pattern.permute.xlu0 2
        %2750 = vperm.xlu0 %2749, %v2644
        %v2751 = vpop.permute.xlu0 %2750
        %2753 = vrot.lane.b32.xlu0 %v2739, 16
        %v2754 = vpop.permute.xlu0 %2753
        %2755 = vrot.lane.b32.xlu0 %v2741, 16
        %v2756 = vpop.permute.xlu0 %2755
        %2757 = vrot.lane.b32.xlu0 %v2740, 16
        %v2758 = vpop.permute.xlu0 %2757
        %2759 = vrot.lane.b32.xlu0 %v2742, 16
        %v2760 = vpop.permute.xlu0 %2759
        %v2761 = vsel %vm488, %v2754, %v2758
        %v2762 = vsel %vm488, %v2756, %v2760
        %v2763 = vsel %vm488, %v2758, %v2754
        %v2764 = vsel %vm488, %v2760, %v2756
        %v2765 = vmul.f32 %v2763, %v317
        %v2766 = vmul.f32 %v2761, %v318
        %v2767 = vmul.f32 %v2764, %v317
        %v2768 = vmul.f32 %v2762, %v318
        %2769 = vrot.lane.b32.xlu0 %v2765, 1
        %v2770 = vpop.permute.xlu0 %2769
        %2771 = vrot.lane.b32.xlu0 %v2767, 1
        %v2772 = vpop.permute.xlu0 %2771
        %2773 = vrot.lane.b32.xlu0 %v2766, 1
        %v2774 = vpop.permute.xlu0 %2773
        %2775 = vrot.lane.b32.xlu0 %v2768, 1
        %v2776 = vpop.permute.xlu0 %2775
        %v2777 = vsel %vm453, %v2770, %v2774
        %v2778 = vsel %vm453, %v2772, %v2776
        %v2779 = vsel %vm453, %v2774, %v2770
        %v2780 = vsel %vm453, %v2776, %v2772
        %v2781 = vmul.f32 %v2779, %v329
        %v2782 = vmul.f32 %v2777, %v330
        %v2783 = vmul.f32 %v2780, %v329
        %v2784 = vmul.f32 %v2778, %v330
        %2786 = vset.pattern.permute.xlu0 0
        %2787 = vperm.xlu0 %2786, %v2743
        %v2788 = vpop.permute.xlu0 %2787
        %2791 = vset.pattern.permute.xlu0 0
        %2792 = vperm.xlu0 %2791, %v2744
        %v2793 = vpop.permute.xlu0 %2792
        %v2795 = vmul.f32 %v2781, %v2788
        %v2796 = vmul.f32 %v2782, %v2788
        %v2797 = vmul.f32 %v2783, %v2793
        %v2798 = vmul.f32 %v2784, %v2793
        %v2799 = vadd.f32 %v2747, %v2795
        %v2800 = vadd.f32 %v2747, %v2796
        %v2801 = vadd.f32 %v2751, %v2797
        %v2802 = vadd.f32 %v2751, %v2798
        %2803 = vset.pattern.permute.xlu0 1
        %2804 = vperm.xlu0 %2803, %v2743
        %v2805 = vpop.permute.xlu0 %2804
        %2807 = vset.pattern.permute.xlu0 1
        %2808 = vperm.xlu0 %2807, %v2744
        %v2809 = vpop.permute.xlu0 %2808
        %v2811 = vmul.f32 %v2765, %v2805
        %v2812 = vmul.f32 %v2766, %v2805
        %v2813 = vmul.f32 %v2767, %v2809
        %v2814 = vmul.f32 %v2768, %v2809
        %v2815 = vadd.f32 %v2799, %v2811
        %v2816 = vadd.f32 %v2800, %v2812
        %v2817 = vadd.f32 %v2801, %v2813
        %v2818 = vadd.f32 %v2802, %v2814
        %2819 = vrot.lane.b32.xlu0 %v2765, 127
        %v2820 = vpop.permute.xlu0 %2819
        %2821 = vrot.lane.b32.xlu0 %v2767, 127
        %v2822 = vpop.permute.xlu0 %2821
        %2823 = vrot.lane.b32.xlu0 %v2766, 127
        %v2824 = vpop.permute.xlu0 %2823
        %2825 = vrot.lane.b32.xlu0 %v2768, 127
        %v2826 = vpop.permute.xlu0 %2825
        %v2827 = vsel %vm466, %v2820, %v2824
        %v2828 = vsel %vm466, %v2822, %v2826
        %v2829 = vsel %vm466, %v2824, %v2820
        %v2830 = vsel %vm466, %v2826, %v2822
        %v2831 = vmul.f32 %v2827, %v353
        %v2832 = vmul.f32 %v2829, %v354
        %v2833 = vmul.f32 %v2828, %v353
        %v2834 = vmul.f32 %v2830, %v354
        %2835 = vset.pattern.permute.xlu0 2
        %2836 = vperm.xlu0 %2835, %v2743
        %v2837 = vpop.permute.xlu0 %2836
        %2839 = vset.pattern.permute.xlu0 2
        %2840 = vperm.xlu0 %2839, %v2744
        %v2841 = vpop.permute.xlu0 %2840
        %v2843 = vmul.f32 %v2831, %v2837
        %v2844 = vmul.f32 %v2832, %v2837
        %v2845 = vmul.f32 %v2833, %v2841
        %v2846 = vmul.f32 %v2834, %v2841
        %v2847 = vadd.f32 %v2815, %v2843
        %v2848 = vadd.f32 %v2816, %v2844
        %v2849 = vadd.f32 %v2817, %v2845
        %v2850 = vadd.f32 %v2818, %v2846
        %2851 = vrot.lane.b32.xlu0 %v2739, 1
        %v2852 = vpop.permute.xlu0 %2851
        %2853 = vrot.lane.b32.xlu0 %v2741, 1
        %v2854 = vpop.permute.xlu0 %2853
        %2855 = vrot.lane.b32.xlu0 %v2740, 1
        %v2856 = vpop.permute.xlu0 %2855
        %2857 = vrot.lane.b32.xlu0 %v2742, 1
        %v2858 = vpop.permute.xlu0 %2857
        %v2859 = vsel %vm453, %v2852, %v2856
        %v2860 = vsel %vm453, %v2854, %v2858
        %v2861 = vsel %vm453, %v2856, %v2852
        %v2862 = vsel %vm453, %v2858, %v2854
        %v2863 = vmul.f32 %v2861, %v329
        %v2864 = vmul.f32 %v2859, %v330
        %v2865 = vmul.f32 %v2862, %v329
        %v2866 = vmul.f32 %v2860, %v330
        %2867 = vset.pattern.permute.xlu0 3
        %2868 = vperm.xlu0 %2867, %v2743
        %v2869 = vpop.permute.xlu0 %2868
        %2871 = vset.pattern.permute.xlu0 3
        %2872 = vperm.xlu0 %2871, %v2744
        %v2873 = vpop.permute.xlu0 %2872
        %v2875 = vmul.f32 %v2863, %v2869
        %v2876 = vmul.f32 %v2864, %v2869
        %v2877 = vmul.f32 %v2865, %v2873
        %v2878 = vmul.f32 %v2866, %v2873
        %v2879 = vadd.f32 %v2847, %v2875
        %v2880 = vadd.f32 %v2848, %v2876
        %v2881 = vadd.f32 %v2849, %v2877
        %v2882 = vadd.f32 %v2850, %v2878
        %2883 = vset.pattern.permute.xlu0 4
        %2884 = vperm.xlu0 %2883, %v2743
        %v2885 = vpop.permute.xlu0 %2884
        %2887 = vset.pattern.permute.xlu0 4
        %2888 = vperm.xlu0 %2887, %v2744
        %v2889 = vpop.permute.xlu0 %2888
        %v2891 = vmul.f32 %v2739, %v2885
        %v2892 = vmul.f32 %v2740, %v2885
        %v2893 = vmul.f32 %v2741, %v2889
        %v2894 = vmul.f32 %v2742, %v2889
        %v2895 = vadd.f32 %v2879, %v2891
        %v2896 = vadd.f32 %v2880, %v2892
        %v2897 = vadd.f32 %v2881, %v2893
        %v2898 = vadd.f32 %v2882, %v2894
        %2899 = vrot.lane.b32.xlu0 %v2739, 127
        %v2900 = vpop.permute.xlu0 %2899
        %2901 = vrot.lane.b32.xlu0 %v2741, 127
        %v2902 = vpop.permute.xlu0 %2901
        %2903 = vrot.lane.b32.xlu0 %v2740, 127
        %v2904 = vpop.permute.xlu0 %2903
        %2905 = vrot.lane.b32.xlu0 %v2742, 127
        %v2906 = vpop.permute.xlu0 %2905
        %v2907 = vsel %vm466, %v2900, %v2904
        %v2908 = vsel %vm466, %v2902, %v2906
        %v2909 = vsel %vm466, %v2904, %v2900
        %v2910 = vsel %vm466, %v2906, %v2902
        %v2911 = vmul.f32 %v2907, %v353
        %v2912 = vmul.f32 %v2909, %v354
        %v2913 = vmul.f32 %v2908, %v353
        %v2914 = vmul.f32 %v2910, %v354
        %2915 = vset.pattern.permute.xlu0 5
        %2916 = vperm.xlu0 %2915, %v2743
        %v2917 = vpop.permute.xlu0 %2916
        %2919 = vset.pattern.permute.xlu0 5
        %2920 = vperm.xlu0 %2919, %v2744
        %v2921 = vpop.permute.xlu0 %2920
        %v2923 = vmul.f32 %v2911, %v2917
        %v2924 = vmul.f32 %v2912, %v2917
        %v2925 = vmul.f32 %v2913, %v2921
        %v2926 = vmul.f32 %v2914, %v2921
        %v2927 = vadd.f32 %v2895, %v2923
        %v2928 = vadd.f32 %v2896, %v2924
        %v2929 = vadd.f32 %v2897, %v2925
        %v2930 = vadd.f32 %v2898, %v2926
        %2931 = vrot.lane.b32.xlu0 %v2739, 112
        %v2932 = vpop.permute.xlu0 %2931
        %2933 = vrot.lane.b32.xlu0 %v2741, 112
        %v2934 = vpop.permute.xlu0 %2933
        %2935 = vrot.lane.b32.xlu0 %v2740, 112
        %v2936 = vpop.permute.xlu0 %2935
        %2937 = vrot.lane.b32.xlu0 %v2742, 112
        %v2938 = vpop.permute.xlu0 %2937
        %v2939 = vsel %vm581, %v2932, %v2936
        %v2940 = vsel %vm581, %v2934, %v2938
        %v2941 = vsel %vm581, %v2936, %v2932
        %v2942 = vsel %vm581, %v2938, %v2934
        %v2943 = vmul.f32 %v2939, %v341
        %v2944 = vmul.f32 %v2941, %v342
        %v2945 = vmul.f32 %v2940, %v341
        %v2946 = vmul.f32 %v2942, %v342
        %2947 = vrot.lane.b32.xlu0 %v2943, 1
        %v2948 = vpop.permute.xlu0 %2947
        %2949 = vrot.lane.b32.xlu0 %v2945, 1
        %v2950 = vpop.permute.xlu0 %2949
        %2951 = vrot.lane.b32.xlu0 %v2944, 1
        %v2952 = vpop.permute.xlu0 %2951
        %2953 = vrot.lane.b32.xlu0 %v2946, 1
        %v2954 = vpop.permute.xlu0 %2953
        %v2955 = vsel %vm453, %v2948, %v2952
        %v2956 = vsel %vm453, %v2950, %v2954
        %v2957 = vsel %vm453, %v2952, %v2948
        %v2958 = vsel %vm453, %v2954, %v2950
        %v2959 = vmul.f32 %v2957, %v329
        %v2960 = vmul.f32 %v2955, %v330
        %v2961 = vmul.f32 %v2958, %v329
        %v2962 = vmul.f32 %v2956, %v330
        %2963 = vset.pattern.permute.xlu0 6
        %2964 = vperm.xlu0 %2963, %v2743
        %v2965 = vpop.permute.xlu0 %2964
        %2967 = vset.pattern.permute.xlu0 6
        %2968 = vperm.xlu0 %2967, %v2744
        %v2969 = vpop.permute.xlu0 %2968
        %v2971 = vmul.f32 %v2959, %v2965
        %v2972 = vmul.f32 %v2960, %v2965
        %v2973 = vmul.f32 %v2961, %v2969
        %v2974 = vmul.f32 %v2962, %v2969
        %v2975 = vadd.f32 %v2927, %v2971
        %v2976 = vadd.f32 %v2928, %v2972
        %v2977 = vadd.f32 %v2929, %v2973
        %v2978 = vadd.f32 %v2930, %v2974
        %2979 = vset.pattern.permute.xlu0 7
        %2980 = vperm.xlu0 %2979, %v2743
        %v2981 = vpop.permute.xlu0 %2980
        %2983 = vset.pattern.permute.xlu0 7
        %2984 = vperm.xlu0 %2983, %v2744
        %v2985 = vpop.permute.xlu0 %2984
        %v2987 = vmul.f32 %v2943, %v2981
        %v2988 = vmul.f32 %v2944, %v2981
        %v2989 = vmul.f32 %v2945, %v2985
        %v2990 = vmul.f32 %v2946, %v2985
        %v2991 = vadd.f32 %v2975, %v2987
        %v2992 = vadd.f32 %v2976, %v2988
        %v2993 = vadd.f32 %v2977, %v2989
        %v2994 = vadd.f32 %v2978, %v2990
        %2995 = vrot.lane.b32.xlu0 %v2943, 127
        %v2996 = vpop.permute.xlu0 %2995
        %2997 = vrot.lane.b32.xlu0 %v2945, 127
        %v2998 = vpop.permute.xlu0 %2997
        %2999 = vrot.lane.b32.xlu0 %v2944, 127
        %v3000 = vpop.permute.xlu0 %2999
        %3001 = vrot.lane.b32.xlu0 %v2946, 127
        %v3002 = vpop.permute.xlu0 %3001
        %v3003 = vsel %vm466, %v2996, %v3000
        %v3004 = vsel %vm466, %v2998, %v3002
        %v3005 = vsel %vm466, %v3000, %v2996
        %v3006 = vsel %vm466, %v3002, %v2998
        %v3007 = vmul.f32 %v3003, %v353
        %v3008 = vmul.f32 %v3005, %v354
        %v3009 = vmul.f32 %v3004, %v353
        %v3010 = vmul.f32 %v3006, %v354
        %3011 = vset.pattern.permute.xlu0 8
        %3012 = vperm.xlu0 %3011, %v2743
        %v3013 = vpop.permute.xlu0 %3012
        %3015 = vset.pattern.permute.xlu0 8
        %3016 = vperm.xlu0 %3015, %v2744
        %v3017 = vpop.permute.xlu0 %3016
        %v3019 = vmul.f32 %v3007, %v3013
        %v3020 = vmul.f32 %v3008, %v3013
        %v3021 = vmul.f32 %v3009, %v3017
        %v3022 = vmul.f32 %v3010, %v3017
        %v3023 = vadd.f32 %v2991, %v3019
        %v3024 = vadd.f32 %v2992, %v3020
        %v3025 = vadd.f32 %v2993, %v3021
        %v3026 = vadd.f32 %v2994, %v3022
        %v3027 = vmax.f32 %v3023, 0.0
        %v3028 = vmax.f32 %v3024, 0.0
        %v3029 = vmax.f32 %v3025, 0.0
        %v3030 = vmax.f32 %v3026, 0.0
        %v3031 = vld [vmem:[%s3 + $0x50] sm:$0xff]
        %v3032 = vld [vmem:[%s3 + $0x58] sm:$0xff]
        %v3033 = vld [vmem:[%s3 + $0x60] sm:$0xff]
        %v3034 = vld [vmem:[%s3 + $0x68] sm:$0xff]
        %v3035 = vld [vmem:[%s3 + $0x70] sm:$0xff]
        %v3036 = vld [vmem:[%s3 + $0x78] sm:$0xff]
        %v3037 = vld [vmem:[%s3 + $0x80] sm:$0xff]
        %v3038 = vld [vmem:[%s3 + $0x88] sm:$0xff]
        %3039 = vset.pattern.permute.xlu0 3
        %3040 = vperm.xlu0 %3039, %v2439
        %v3041 = vpop.permute.xlu0 %3040
        %3043 = vset.pattern.permute.xlu0 3
        %3044 = vperm.xlu0 %3043, %v2440
        %v3045 = vpop.permute.xlu0 %3044
        %3047 = vset.pattern.permute.xlu0 3
        %3048 = vperm.xlu0 %3047, %v2441
        %v3049 = vpop.permute.xlu0 %3048
        %3051 = vset.pattern.permute.xlu0 3
        %3052 = vperm.xlu0 %3051, %v2442
        %v3053 = vpop.permute.xlu0 %3052
        %3055 = vset.pattern.permute.xlu0 3
        %3056 = vperm.xlu0 %3055, %v2443
        %v3057 = vpop.permute.xlu0 %3056
        %3059 = vset.pattern.permute.xlu0 3
        %3060 = vperm.xlu0 %3059, %v2444
        %v3061 = vpop.permute.xlu0 %3060
        %3063 = vset.pattern.permute.xlu0 3
        %3064 = vperm.xlu0 %3063, %v2445
        %v3065 = vpop.permute.xlu0 %3064
        %3067 = vset.pattern.permute.xlu0 3
        %3068 = vperm.xlu0 %3067, %v2446
        %v3069 = vpop.permute.xlu0 %3068
        %vm3071 = vcmask 130048
        %v3073 = vsel %vm3071, %v3031, 0
        %v3076 = vsel %vm3071, %v3032, 0
        %v3079 = vsel %vm3071, %v3033, 0
        %v3082 = vsel %vm3071, %v3034, 0
        %v3085 = vsel %vm3071, %v3035, 0
        %v3088 = vsel %vm3071, %v3036, 0
        %v3091 = vsel %vm3071, %v3037, 0
        %v3094 = vsel %vm3071, %v3038, 0
        %3096 = vmatprep.subr.mxu0 0.0
        %3097 = vmatpush1.msra.mxu0 0.0
        %3098 = vmatprep.subr.mxu0 0.0
        %3099 = vmatpush1.msra.mxu0 0.0
        %3100 = vmatprep.subr.mxu0 0.0
        %3101 = vmatpush1.msra.mxu0 0.0
        %3102 = vmatprep.subr.mxu0 0.0
        %3103 = vmatpush1.msra.mxu0 0.0
        %3104 = vmatprep.subr.mxu0 0.0
        %3105 = vmatpush1.msra.mxu0 0.0
        %3106 = vmatprep.subr.mxu0 0.0
        %3107 = vmatpush1.msra.mxu0 0.0
        %3108 = vmatprep.subr.mxu0 0.0
        %3109 = vmatpush1.msra.mxu0 0.0
        %3110 = vmatprep.subr.mxu0 0.0
        %3111 = vmatpush1.msra.mxu0 0.0
        %3112 = vmatprep.subr.mxu0 0.0
        %3113 = vmatpush1.msra.mxu0 0.0
        %3114 = vmatprep.subr.mxu0 0.0
        %3115 = vmatpush1.msra.mxu0 0.0
        %3116 = vmatprep.subr.mxu0 0.0
        %3117 = vmatpush1.msra.mxu0 0.0
        %3118 = vmatprep.subr.mxu0 0.0
        %3119 = vmatpush1.msra.mxu0 0.0
        %3120 = vmatprep.subr.mxu0 0.0
        %3121 = vmatpush1.msra.mxu0 0.0
        %3122 = vmatprep.subr.mxu0 0.0
        %3123 = vmatpush1.msra.mxu0 0.0
        %3124 = vmatprep.subr.mxu0 %v3030
        %3125 = vmatpush1.msra.mxu0 %v3029
        %3126 = vmatprep.subr.mxu0 %v3028
        %3127 = vmatpush1.msra.mxu0 %v3027
        %3128 = vmatprep.subr.mxu0 0.0
        %3129 = vmatpush2.msra.mxu0 0.0
        %3130 = vmatprep.subr.mxu0 0.0
        %3131 = vmatpush2.msra.mxu0 0.0
        %3132 = vmatprep.subr.mxu0 0.0
        %3133 = vmatpush2.msra.mxu0 0.0
        %3134 = vmatprep.subr.mxu0 0.0
        %3135 = vmatpush2.msra.mxu0 0.0
        %3136 = vmatprep.subr.mxu0 0.0
        %3137 = vmatpush2.msra.mxu0 0.0
        %3138 = vmatprep.subr.mxu0 0.0
        %3139 = vmatpush2.msra.mxu0 0.0
        %3140 = vmatprep.subr.mxu0 0.0
        %3141 = vmatpush2.msra.mxu0 0.0
        %3142 = vmatprep.subr.mxu0 0.0
        %3143 = vmatpush2.msra.mxu0 0.0
        %3144 = vmatprep.subr.mxu0 0.0
        %3145 = vmatpush2.msra.mxu0 0.0
        %3146 = vmatprep.subr.mxu0 0.0
        %3147 = vmatpush2.msra.mxu0 0.0
        %3148 = vmatprep.subr.mxu0 0.0
        %3149 = vmatpush2.msra.mxu0 0.0
        %3150 = vmatprep.subr.mxu0 0.0
        %3151 = vmatpush2.msra.mxu0 0.0
        %3152 = vmatprep.subr.mxu0 0.0
        %3153 = vmatpush2.msra.mxu0 0.0
        %3154 = vmatprep.subr.mxu0 0.0
        %3155 = vmatpush2.msra.mxu0 0.0
        %3156 = vmatprep.subr.mxu0 0.0
        %3157 = vmatpush2.msra.mxu0 0.0
        %3158 = vmatprep.subr.mxu0 0.0
        %3159 = vmatpush2.msra.mxu0 0.0
        %3160 = vmatprep.mubr.f32.mxu0 0.0
        %3161 = vmatmul.mubr.f32.gmra.mxu0 %v3073
        %v3162 = vpop.f32.mrf.mxu0
        %v3163 = vadd.f32 %v3041, %v3162
        %v3164 = vpop.f32.mrf.mxu0
        %v3165 = vadd.f32 %v3041, %v3164
        %3166 = vmatprep.mubr.f32.mxu0 0.0
        %3167 = vmatmul.mubr.f32.gmra.mxu0 %v3076
        %v3168 = vpop.f32.mrf.mxu0
        %v3169 = vadd.f32 %v3045, %v3168
        %v3170 = vpop.f32.mrf.mxu0
        %v3171 = vadd.f32 %v3045, %v3170
        %3172 = vmatprep.mubr.f32.mxu0 0.0
        %3173 = vmatmul.mubr.f32.gmra.mxu0 %v3079
        %v3174 = vpop.f32.mrf.mxu0
        %v3175 = vadd.f32 %v3049, %v3174
        %v3176 = vpop.f32.mrf.mxu0
        %v3177 = vadd.f32 %v3049, %v3176
        %3178 = vmatprep.mubr.f32.mxu0 0.0
        %3179 = vmatmul.mubr.f32.gmra.mxu0 %v3082
        %v3180 = vpop.f32.mrf.mxu0
        %v3181 = vadd.f32 %v3053, %v3180
        %v3182 = vpop.f32.mrf.mxu0
        %v3183 = vadd.f32 %v3053, %v3182
        %3184 = vmatprep.mubr.f32.mxu0 0.0
        %3185 = vmatmul.mubr.f32.gmra.mxu0 %v3085
        %v3186 = vpop.f32.mrf.mxu0
        %v3187 = vadd.f32 %v3057, %v3186
        %v3188 = vpop.f32.mrf.mxu0
        %v3189 = vadd.f32 %v3057, %v3188
        %3190 = vmatprep.mubr.f32.mxu0 0.0
        %3191 = vmatmul.mubr.f32.gmra.mxu0 %v3088
        %v3192 = vpop.f32.mrf.mxu0
        %v3193 = vadd.f32 %v3061, %v3192
        %v3194 = vpop.f32.mrf.mxu0
        %v3195 = vadd.f32 %v3061, %v3194
        %3196 = vmatprep.mubr.f32.mxu0 0.0
        %3197 = vmatmul.mubr.f32.gmra.mxu0 %v3091
        %v3198 = vpop.f32.mrf.mxu0
        %v3199 = vadd.f32 %v3065, %v3198
        %v3200 = vpop.f32.mrf.mxu0
        %v3201 = vadd.f32 %v3065, %v3200
        %3202 = vmatprep.mubr.f32.mxu0 0.0
        %3203 = vmatmul.mubr.f32.gmra.mxu0 %v3094
        %v3204 = vpop.f32.mrf.mxu0
        %v3205 = vadd.f32 %v3069, %v3204
        %v3206 = vpop.f32.mrf.mxu0
        %v3207 = vadd.f32 %v3069, %v3206
        %3208 = vdwg.mxu0
        %v3209 = vadd.f32 %v3163, %v2625
        %v3210 = vadd.f32 %v3165, %v2626
        %v3211 = vadd.f32 %v3169, %v2627
        %v3212 = vadd.f32 %v3171, %v2628
        %v3213 = vadd.f32 %v3175, %v2629
        %v3214 = vadd.f32 %v3177, %v2630
        %v3215 = vadd.f32 %v3181, %v2631
        %v3216 = vadd.f32 %v3183, %v2632
        %v3217 = vadd.f32 %v3187, %v2633
        %v3218 = vadd.f32 %v3189, %v2634
        %v3219 = vadd.f32 %v3193, %v2635
        %v3220 = vadd.f32 %v3195, %v2636
        %v3221 = vadd.f32 %v3199, %v2637
        %v3222 = vadd.f32 %v3201, %v2638
        %v3223 = vadd.f32 %v3205, %v2639
        %v3224 = vadd.f32 %v3207, %v2640
        %v3225 = vmax.f32 %v3209, 0.0
        %v3226 = vmax.f32 %v3210, 0.0
        %v3227 = vmax.f32 %v3211, 0.0
        %v3228 = vmax.f32 %v3212, 0.0
        %v3229 = vmax.f32 %v3213, 0.0
        %v3230 = vmax.f32 %v3214, 0.0
        %v3231 = vmax.f32 %v3215, 0.0
        %v3232 = vmax.f32 %v3216, 0.0
        %v3233 = vmax.f32 %v3217, 0.0
        %v3234 = vmax.f32 %v3218, 0.0
        %v3235 = vmax.f32 %v3219, 0.0
        %v3236 = vmax.f32 %v3220, 0.0
        %v3237 = vmax.f32 %v3221, 0.0
        %v3238 = vmax.f32 %v3222, 0.0
        %v3239 = vmax.f32 %v3223, 0.0
        %v3240 = vmax.f32 %v3224, 0.0
        %v3241 = vld [vmem:[%s3 + $0x90] sm:$0xff]
        %v3242 = vld [vmem:[%s3 + $0x98] sm:$0xff]
        %v3243 = vld [vmem:[%s3 + $0xa0] sm:$0xff]
        %v3244 = vld [vmem:[%s3 + $0xa8] sm:$0xff]
        %v3245 = vld [vmem:[%s4] sm:$0xff]
        %v3246 = vld [vmem:[%s4 + $0x8] sm:$0xff]
        %v3247 = vld [vmem:[%s4 + $0x10] sm:$0xff]
        %v3248 = vld [vmem:[%s4 + $0x18] sm:$0xff]
        %3250 = vset.pattern.permute.xlu0 4
        %3251 = vperm.xlu0 %3250, %v3245
        %v3252 = vpop.permute.xlu0 %3251
        %3255 = vset.pattern.permute.xlu0 4
        %3256 = vperm.xlu0 %3255, %v3246
        %v3257 = vpop.permute.xlu0 %3256
        %3260 = vset.pattern.permute.xlu0 4
        %3261 = vperm.xlu0 %3260, %v3247
        %v3262 = vpop.permute.xlu0 %3261
        %3265 = vset.pattern.permute.xlu0 4
        %3266 = vperm.xlu0 %3265, %v3248
        %v3267 = vpop.permute.xlu0 %3266
        %v3270 = vsel %vm2655, %v3241, 0
        %v3273 = vsel %vm2655, %v3242, 0
        %v3276 = vsel %vm2655, %v3243, 0
        %v3279 = vsel %vm2655, %v3244, 0
        %3281 = vmatprep.subr.mxu0 0.0
        %3282 = vmatpush1.msra.mxu0 0.0
        %3283 = vmatprep.subr.mxu0 0.0
        %3284 = vmatpush1.msra.mxu0 0.0
        %3285 = vmatprep.subr.mxu0 0.0
        %3286 = vmatpush1.msra.mxu0 0.0
        %3287 = vmatprep.subr.mxu0 0.0
        %3288 = vmatpush1.msra.mxu0 0.0
        %3289 = vmatprep.subr.mxu0 0.0
        %3290 = vmatpush1.msra.mxu0 0.0
        %3291 = vmatprep.subr.mxu0 0.0
        %3292 = vmatpush1.msra.mxu0 0.0
        %3293 = vmatprep.subr.mxu0 0.0
        %3294 = vmatpush1.msra.mxu0 0.0
        %3295 = vmatprep.subr.mxu0 0.0
        %3296 = vmatpush1.msra.mxu0 0.0
        %3297 = vmatprep.subr.mxu0 %v3240
        %3298 = vmatpush1.msra.mxu0 %v3239
        %3299 = vmatprep.subr.mxu0 %v3238
        %3300 = vmatpush1.msra.mxu0 %v3237
        %3301 = vmatprep.subr.mxu0 %v3236
        %3302 = vmatpush1.msra.mxu0 %v3235
        %3303 = vmatprep.subr.mxu0 %v3234
        %3304 = vmatpush1.msra.mxu0 %v3233
        %3305 = vmatprep.subr.mxu0 %v3232
        %3306 = vmatpush1.msra.mxu0 %v3231
        %3307 = vmatprep.subr.mxu0 %v3230
        %3308 = vmatpush1.msra.mxu0 %v3229
        %3309 = vmatprep.subr.mxu0 %v3228
        %3310 = vmatpush1.msra.mxu0 %v3227
        %3311 = vmatprep.subr.mxu0 %v3226
        %3312 = vmatpush1.msra.mxu0 %v3225
        %3313 = vmatprep.subr.mxu0 0.0
        %3314 = vmatpush2.msra.mxu0 0.0
        %3315 = vmatprep.subr.mxu0 0.0
        %3316 = vmatpush2.msra.mxu0 0.0
        %3317 = vmatprep.subr.mxu0 0.0
        %3318 = vmatpush2.msra.mxu0 0.0
        %3319 = vmatprep.subr.mxu0 0.0
        %3320 = vmatpush2.msra.mxu0 0.0
        %3321 = vmatprep.subr.mxu0 0.0
        %3322 = vmatpush2.msra.mxu0 0.0
        %3323 = vmatprep.subr.mxu0 0.0
        %3324 = vmatpush2.msra.mxu0 0.0
        %3325 = vmatprep.subr.mxu0 0.0
        %3326 = vmatpush2.msra.mxu0 0.0
        %3327 = vmatprep.subr.mxu0 0.0
        %3328 = vmatpush2.msra.mxu0 0.0
        %3329 = vmatprep.subr.mxu0 0.0
        %3330 = vmatpush2.msra.mxu0 0.0
        %3331 = vmatprep.subr.mxu0 0.0
        %3332 = vmatpush2.msra.mxu0 0.0
        %3333 = vmatprep.subr.mxu0 0.0
        %3334 = vmatpush2.msra.mxu0 0.0
        %3335 = vmatprep.subr.mxu0 0.0
        %3336 = vmatpush2.msra.mxu0 0.0
        %3337 = vmatprep.subr.mxu0 0.0
        %3338 = vmatpush2.msra.mxu0 0.0
        %3339 = vmatprep.subr.mxu0 0.0
        %3340 = vmatpush2.msra.mxu0 0.0
        %3341 = vmatprep.subr.mxu0 0.0
        %3342 = vmatpush2.msra.mxu0 0.0
        %3343 = vmatprep.subr.mxu0 0.0
        %3344 = vmatpush2.msra.mxu0 0.0
        %3345 = vmatprep.mubr.f32.mxu0 0.0
        %3346 = vmatmul.mubr.f32.gmra.mxu0 %v3270
        %v3347 = vpop.f32.mrf.mxu0
        %v3348 = vadd.f32 %v3252, %v3347
        %v3349 = vpop.f32.mrf.mxu0
        %v3350 = vadd.f32 %v3252, %v3349
        %3351 = vmatprep.mubr.f32.mxu0 0.0
        %3352 = vmatmul.mubr.f32.gmra.mxu0 %v3273
        %v3353 = vpop.f32.mrf.mxu0
        %v3354 = vadd.f32 %v3257, %v3353
        %v3355 = vpop.f32.mrf.mxu0
        %v3356 = vadd.f32 %v3257, %v3355
        %3357 = vmatprep.mubr.f32.mxu0 0.0
        %3358 = vmatmul.mubr.f32.gmra.mxu0 %v3276
        %v3359 = vpop.f32.mrf.mxu0
        %v3360 = vadd.f32 %v3262, %v3359
        %v3361 = vpop.f32.mrf.mxu0
        %v3362 = vadd.f32 %v3262, %v3361
        %3363 = vmatprep.mubr.f32.mxu0 0.0
        %3364 = vmatmul.mubr.f32.gmra.mxu0 %v3279
        %v3365 = vpop.f32.mrf.mxu0
        %v3366 = vadd.f32 %v3267, %v3365
        %v3367 = vpop.f32.mrf.mxu0
        %v3368 = vadd.f32 %v3267, %v3367
        %3369 = vdwg.mxu0
        %v3370 = vmax.f32 %v3348, 0.0
        %v3371 = vmax.f32 %v3350, 0.0
        %v3372 = vmax.f32 %v3354, 0.0
        %v3373 = vmax.f32 %v3356, 0.0
        %v3374 = vmax.f32 %v3360, 0.0
        %v3375 = vmax.f32 %v3362, 0.0
        %v3376 = vmax.f32 %v3366, 0.0
        %v3377 = vmax.f32 %v3368, 0.0
        %v3378 = vld [vmem:[%s2 + $0x30] sm:$0xff]
        %v3379 = vld [vmem:[%s2 + $0x38] sm:$0xff]
        %v3380 = vld [vmem:[%s2 + $0x40] sm:$0xff]
        %v3381 = vld [vmem:[%s2 + $0x48] sm:$0xff]
        %3382 = vset.pattern.permute.xlu0 5
        %3383 = vperm.xlu0 %3382, %v3245
        %v3384 = vpop.permute.xlu0 %3383
        %3386 = vset.pattern.permute.xlu0 5
        %3387 = vperm.xlu0 %3386, %v3246
        %v3388 = vpop.permute.xlu0 %3387
        %3390 = vset.pattern.permute.xlu0 5
        %3391 = vperm.xlu0 %3390, %v3247
        %v3392 = vpop.permute.xlu0 %3391
        %3394 = vset.pattern.permute.xlu0 5
        %3395 = vperm.xlu0 %3394, %v3248
        %v3396 = vpop.permute.xlu0 %3395
        %3398 = vrot.lane.b32.xlu0 %v3370, 64
        %v3399 = vpop.permute.xlu0 %3398
        %3400 = vrot.lane.b32.xlu0 %v3372, 64
        %v3401 = vpop.permute.xlu0 %3400
        %3402 = vrot.lane.b32.xlu0 %v3374, 64
        %v3403 = vpop.permute.xlu0 %3402
        %3404 = vrot.lane.b32.xlu0 %v3376, 64
        %v3405 = vpop.permute.xlu0 %3404
        %3406 = vrot.lane.b32.xlu0 %v3371, 64
        %v3407 = vpop.permute.xlu0 %3406
        %3408 = vrot.lane.b32.xlu0 %v3373, 64
        %v3409 = vpop.permute.xlu0 %3408
        %3410 = vrot.lane.b32.xlu0 %v3375, 64
        %v3411 = vpop.permute.xlu0 %3410
        %3412 = vrot.lane.b32.xlu0 %v3377, 64
        %v3413 = vpop.permute.xlu0 %3412
        %vm3414 = vcmp.lt.s32.totalorder %v227, 64
        %v3415 = vsel %vm3414, %v3399, %v3407
        %v3416 = vsel %vm3414, %v3401, %v3409
        %v3417 = vsel %vm3414, %v3403, %v3411
        %v3418 = vsel %vm3414, %v3405, %v3413
        %v3419 = vsel %vm3414, %v3407, %v3399
        %v3420 = vsel %vm3414, %v3409, %v3401
        %v3421 = vsel %vm3414, %v3411, %v3403
        %v3422 = vsel %vm3414, %v3413, %v3405
        %v3423 = vmul.f32 %v3419, %v245
        %v3424 = vmul.f32 %v3415, %v246
        %v3425 = vmul.f32 %v3420, %v245
        %v3426 = vmul.f32 %v3416, %v246
        %v3427 = vmul.f32 %v3421, %v245
        %v3428 = vmul.f32 %v3417, %v246
        %v3429 = vmul.f32 %v3422, %v245
        %v3430 = vmul.f32 %v3418, %v246
        %3431 = vrot.lane.b32.xlu0 %v3423, 4
        %v3432 = vpop.permute.xlu0 %3431
        %3433 = vrot.lane.b32.xlu0 %v3425, 4
        %v3434 = vpop.permute.xlu0 %3433
        %3435 = vrot.lane.b32.xlu0 %v3427, 4
        %v3436 = vpop.permute.xlu0 %3435
        %3437 = vrot.lane.b32.xlu0 %v3429, 4
        %v3438 = vpop.permute.xlu0 %3437
        %3439 = vrot.lane.b32.xlu0 %v3424, 4
        %v3440 = vpop.permute.xlu0 %3439
        %3441 = vrot.lane.b32.xlu0 %v3426, 4
        %v3442 = vpop.permute.xlu0 %3441
        %3443 = vrot.lane.b32.xlu0 %v3428, 4
        %v3444 = vpop.permute.xlu0 %3443
        %3445 = vrot.lane.b32.xlu0 %v3430, 4
        %v3446 = vpop.permute.xlu0 %3445
        %vm3447 = vcmp.lt.s32.totalorder %v227, 4
        %v3448 = vsel %vm3447, %v3432, %v3440
        %v3449 = vsel %vm3447, %v3434, %v3442
        %v3450 = vsel %vm3447, %v3436, %v3444
        %v3451 = vsel %vm3447, %v3438, %v3446
        %v3452 = vsel %vm3447, %v3440, %v3432
        %v3453 = vsel %vm3447, %v3442, %v3434
        %v3454 = vsel %vm3447, %v3444, %v3436
        %v3455 = vsel %vm3447, %v3446, %v3438
        %v3456 = vmul.f32 %v3452, %v257
        %v3457 = vmul.f32 %v3448, %v258
        %v3458 = vmul.f32 %v3453, %v257
        %v3459 = vmul.f32 %v3449, %v258
        %v3460 = vmul.f32 %v3454, %v257
        %v3461 = vmul.f32 %v3450, %v258
        %v3462 = vmul.f32 %v3455, %v257
        %v3463 = vmul.f32 %v3451, %v258
        %3465 = vset.pattern.permute.xlu0 0
        %3466 = vperm.xlu0 %3465, %v3378
        %v3467 = vpop.permute.xlu0 %3466
        %3470 = vset.pattern.permute.xlu0 0
        %3471 = vperm.xlu0 %3470, %v3379
        %v3472 = vpop.permute.xlu0 %3471
        %3475 = vset.pattern.permute.xlu0 0
        %3476 = vperm.xlu0 %3475, %v3380
        %v3477 = vpop.permute.xlu0 %3476
        %3480 = vset.pattern.permute.xlu0 0
        %3481 = vperm.xlu0 %3480, %v3381
        %v3482 = vpop.permute.xlu0 %3481
        %v3484 = vmul.f32 %v3456, %v3467
        %v3485 = vmul.f32 %v3457, %v3467
        %v3486 = vmul.f32 %v3458, %v3472
        %v3487 = vmul.f32 %v3459, %v3472
        %v3488 = vmul.f32 %v3460, %v3477
        %v3489 = vmul.f32 %v3461, %v3477
        %v3490 = vmul.f32 %v3462, %v3482
        %v3491 = vmul.f32 %v3463, %v3482
        %v3492 = vadd.f32 %v3384, %v3484
        %v3493 = vadd.f32 %v3384, %v3485
        %v3494 = vadd.f32 %v3388, %v3486
        %v3495 = vadd.f32 %v3388, %v3487
        %v3496 = vadd.f32 %v3392, %v3488
        %v3497 = vadd.f32 %v3392, %v3489
        %v3498 = vadd.f32 %v3396, %v3490
        %v3499 = vadd.f32 %v3396, %v3491
        %3500 = vrot.lane.b32.xlu0 %v3423, 3
        %v3501 = vpop.permute.xlu0 %3500
        %3502 = vrot.lane.b32.xlu0 %v3425, 3
        %v3503 = vpop.permute.xlu0 %3502
        %3504 = vrot.lane.b32.xlu0 %v3427, 3
        %v3505 = vpop.permute.xlu0 %3504
        %3506 = vrot.lane.b32.xlu0 %v3429, 3
        %v3507 = vpop.permute.xlu0 %3506
        %3508 = vrot.lane.b32.xlu0 %v3424, 3
        %v3509 = vpop.permute.xlu0 %3508
        %3510 = vrot.lane.b32.xlu0 %v3426, 3
        %v3511 = vpop.permute.xlu0 %3510
        %3512 = vrot.lane.b32.xlu0 %v3428, 3
        %v3513 = vpop.permute.xlu0 %3512
        %3514 = vrot.lane.b32.xlu0 %v3430, 3
        %v3515 = vpop.permute.xlu0 %3514
        %vm3516 = vcmp.lt.s32.totalorder %v227, 3
        %v3517 = vsel %vm3516, %v3501, %v3509
        %v3518 = vsel %vm3516, %v3503, %v3511
        %v3519 = vsel %vm3516, %v3505, %v3513
        %v3520 = vsel %vm3516, %v3507, %v3515
        %v3521 = vsel %vm3516, %v3509, %v3501
        %v3522 = vsel %vm3516, %v3511, %v3503
        %v3523 = vsel %vm3516, %v3513, %v3505
        %v3524 = vsel %vm3516, %v3515, %v3507
        %v3525 = vmul.f32 %v3521, %v281
        %v3526 = vmul.f32 %v3517, %v282
        %v3527 = vmul.f32 %v3522, %v281
        %v3528 = vmul.f32 %v3518, %v282
        %v3529 = vmul.f32 %v3523, %v281
        %v3530 = vmul.f32 %v3519, %v282
        %v3531 = vmul.f32 %v3524, %v281
        %v3532 = vmul.f32 %v3520, %v282
        %3533 = vset.pattern.permute.xlu0 1
        %3534 = vperm.xlu0 %3533, %v3378
        %v3535 = vpop.permute.xlu0 %3534
        %3537 = vset.pattern.permute.xlu0 1
        %3538 = vperm.xlu0 %3537, %v3379
        %v3539 = vpop.permute.xlu0 %3538
        %3541 = vset.pattern.permute.xlu0 1
        %3542 = vperm.xlu0 %3541, %v3380
        %v3543 = vpop.permute.xlu0 %3542
        %3545 = vset.pattern.permute.xlu0 1
        %3546 = vperm.xlu0 %3545, %v3381
        %v3547 = vpop.permute.xlu0 %3546
        %v3549 = vmul.f32 %v3525, %v3535
        %v3550 = vmul.f32 %v3526, %v3535
        %v3551 = vmul.f32 %v3527, %v3539
        %v3552 = vmul.f32 %v3528, %v3539
        %v3553 = vmul.f32 %v3529, %v3543
        %v3554 = vmul.f32 %v3530, %v3543
        %v3555 = vmul.f32 %v3531, %v3547
        %v3556 = vmul.f32 %v3532, %v3547
        %v3557 = vadd.f32 %v3492, %v3549
        %v3558 = vadd.f32 %v3493, %v3550
        %v3559 = vadd.f32 %v3494, %v3551
        %v3560 = vadd.f32 %v3495, %v3552
        %v3561 = vadd.f32 %v3496, %v3553
        %v3562 = vadd.f32 %v3497, %v3554
        %v3563 = vadd.f32 %v3498, %v3555
        %v3564 = vadd.f32 %v3499, %v3556
        %3565 = vrot.lane.b32.xlu0 %v3423, 2
        %v3566 = vpop.permute.xlu0 %3565
        %3567 = vrot.lane.b32.xlu0 %v3425, 2
        %v3568 = vpop.permute.xlu0 %3567
        %3569 = vrot.lane.b32.xlu0 %v3427, 2
        %v3570 = vpop.permute.xlu0 %3569
        %3571 = vrot.lane.b32.xlu0 %v3429, 2
        %v3572 = vpop.permute.xlu0 %3571
        %3573 = vrot.lane.b32.xlu0 %v3424, 2
        %v3574 = vpop.permute.xlu0 %3573
        %3575 = vrot.lane.b32.xlu0 %v3426, 2
        %v3576 = vpop.permute.xlu0 %3575
        %3577 = vrot.lane.b32.xlu0 %v3428, 2
        %v3578 = vpop.permute.xlu0 %3577
        %3579 = vrot.lane.b32.xlu0 %v3430, 2
        %v3580 = vpop.permute.xlu0 %3579
        %v3581 = vsel %vm442, %v3566, %v3574
        %v3582 = vsel %vm442, %v3568, %v3576
        %v3583 = vsel %vm442, %v3570, %v3578
        %v3584 = vsel %vm442, %v3572, %v3580
        %v3585 = vsel %vm442, %v3574, %v3566
        %v3586 = vsel %vm442, %v3576, %v3568
        %v3587 = vsel %vm442, %v3578, %v3570
        %v3588 = vsel %vm442, %v3580, %v3572
        %v3589 = vmul.f32 %v3585, %v305
        %v3590 = vmul.f32 %v3581, %v306
        %v3591 = vmul.f32 %v3586, %v305
        %v3592 = vmul.f32 %v3582, %v306
        %v3593 = vmul.f32 %v3587, %v305
        %v3594 = vmul.f32 %v3583, %v306
        %v3595 = vmul.f32 %v3588, %v305
        %v3596 = vmul.f32 %v3584, %v306
        %3597 = vset.pattern.permute.xlu0 2
        %3598 = vperm.xlu0 %3597, %v3378
        %v3599 = vpop.permute.xlu0 %3598
        %3601 = vset.pattern.permute.xlu0 2
        %3602 = vperm.xlu0 %3601, %v3379
        %v3603 = vpop.permute.xlu0 %3602
        %3605 = vset.pattern.permute.xlu0 2
        %3606 = vperm.xlu0 %3605, %v3380
        %v3607 = vpop.permute.xlu0 %3606
        %3609 = vset.pattern.permute.xlu0 2
        %3610 = vperm.xlu0 %3609, %v3381
        %v3611 = vpop.permute.xlu0 %3610
        %v3613 = vmul.f32 %v3589, %v3599
        %v3614 = vmul.f32 %v3590, %v3599
        %v3615 = vmul.f32 %v3591, %v3603
        %v3616 = vmul.f32 %v3592, %v3603
        %v3617 = vmul.f32 %v3593, %v3607
        %v3618 = vmul.f32 %v3594, %v3607
        %v3619 = vmul.f32 %v3595, %v3611
        %v3620 = vmul.f32 %v3596, %v3611
        %v3621 = vadd.f32 %v3557, %v3613
        %v3622 = vadd.f32 %v3558, %v3614
        %v3623 = vadd.f32 %v3559, %v3615
        %v3624 = vadd.f32 %v3560, %v3616
        %v3625 = vadd.f32 %v3561, %v3617
        %v3626 = vadd.f32 %v3562, %v3618
        %v3627 = vadd.f32 %v3563, %v3619
        %v3628 = vadd.f32 %v3564, %v3620
        %3629 = vrot.lane.b32.xlu0 %v3423, 1
        %v3630 = vpop.permute.xlu0 %3629
        %3631 = vrot.lane.b32.xlu0 %v3425, 1
        %v3632 = vpop.permute.xlu0 %3631
        %3633 = vrot.lane.b32.xlu0 %v3427, 1
        %v3634 = vpop.permute.xlu0 %3633
        %3635 = vrot.lane.b32.xlu0 %v3429, 1
        %v3636 = vpop.permute.xlu0 %3635
        %3637 = vrot.lane.b32.xlu0 %v3424, 1
        %v3638 = vpop.permute.xlu0 %3637
        %3639 = vrot.lane.b32.xlu0 %v3426, 1
        %v3640 = vpop.permute.xlu0 %3639
        %3641 = vrot.lane.b32.xlu0 %v3428, 1
        %v3642 = vpop.permute.xlu0 %3641
        %3643 = vrot.lane.b32.xlu0 %v3430, 1
        %v3644 = vpop.permute.xlu0 %3643
        %v3645 = vsel %vm453, %v3630, %v3638
        %v3646 = vsel %vm453, %v3632, %v3640
        %v3647 = vsel %vm453, %v3634, %v3642
        %v3648 = vsel %vm453, %v3636, %v3644
        %v3649 = vsel %vm453, %v3638, %v3630
        %v3650 = vsel %vm453, %v3640, %v3632
        %v3651 = vsel %vm453, %v3642, %v3634
        %v3652 = vsel %vm453, %v3644, %v3636
        %v3653 = vmul.f32 %v3649, %v329
        %v3654 = vmul.f32 %v3645, %v330
        %v3655 = vmul.f32 %v3650, %v329
        %v3656 = vmul.f32 %v3646, %v330
        %v3657 = vmul.f32 %v3651, %v329
        %v3658 = vmul.f32 %v3647, %v330
        %v3659 = vmul.f32 %v3652, %v329
        %v3660 = vmul.f32 %v3648, %v330
        %3661 = vset.pattern.permute.xlu0 3
        %3662 = vperm.xlu0 %3661, %v3378
        %v3663 = vpop.permute.xlu0 %3662
        %3665 = vset.pattern.permute.xlu0 3
        %3666 = vperm.xlu0 %3665, %v3379
        %v3667 = vpop.permute.xlu0 %3666
        %3669 = vset.pattern.permute.xlu0 3
        %3670 = vperm.xlu0 %3669, %v3380
        %v3671 = vpop.permute.xlu0 %3670
        %3673 = vset.pattern.permute.xlu0 3
        %3674 = vperm.xlu0 %3673, %v3381
        %v3675 = vpop.permute.xlu0 %3674
        %v3677 = vmul.f32 %v3653, %v3663
        %v3678 = vmul.f32 %v3654, %v3663
        %v3679 = vmul.f32 %v3655, %v3667
        %v3680 = vmul.f32 %v3656, %v3667
        %v3681 = vmul.f32 %v3657, %v3671
        %v3682 = vmul.f32 %v3658, %v3671
        %v3683 = vmul.f32 %v3659, %v3675
        %v3684 = vmul.f32 %v3660, %v3675
        %v3685 = vadd.f32 %v3621, %v3677
        %v3686 = vadd.f32 %v3622, %v3678
        %v3687 = vadd.f32 %v3623, %v3679
        %v3688 = vadd.f32 %v3624, %v3680
        %v3689 = vadd.f32 %v3625, %v3681
        %v3690 = vadd.f32 %v3626, %v3682
        %v3691 = vadd.f32 %v3627, %v3683
        %v3692 = vadd.f32 %v3628, %v3684
        %3693 = vset.pattern.permute.xlu0 4
        %3694 = vperm.xlu0 %3693, %v3378
        %v3695 = vpop.permute.xlu0 %3694
        %3697 = vset.pattern.permute.xlu0 4
        %3698 = vperm.xlu0 %3697, %v3379
        %v3699 = vpop.permute.xlu0 %3698
        %3701 = vset.pattern.permute.xlu0 4
        %3702 = vperm.xlu0 %3701, %v3380
        %v3703 = vpop.permute.xlu0 %3702
        %3705 = vset.pattern.permute.xlu0 4
        %3706 = vperm.xlu0 %3705, %v3381
        %v3707 = vpop.permute.xlu0 %3706
        %v3709 = vmul.f32 %v3423, %v3695
        %v3710 = vmul.f32 %v3424, %v3695
        %v3711 = vmul.f32 %v3425, %v3699
        %v3712 = vmul.f32 %v3426, %v3699
        %v3713 = vmul.f32 %v3427, %v3703
        %v3714 = vmul.f32 %v3428, %v3703
        %v3715 = vmul.f32 %v3429, %v3707
        %v3716 = vmul.f32 %v3430, %v3707
        %v3717 = vadd.f32 %v3685, %v3709
        %v3718 = vadd.f32 %v3686, %v3710
        %v3719 = vadd.f32 %v3687, %v3711
        %v3720 = vadd.f32 %v3688, %v3712
        %v3721 = vadd.f32 %v3689, %v3713
        %v3722 = vadd.f32 %v3690, %v3714
        %v3723 = vadd.f32 %v3691, %v3715
        %v3724 = vadd.f32 %v3692, %v3716
        %3725 = vrot.lane.b32.xlu0 %v3423, 127
        %v3726 = vpop.permute.xlu0 %3725
        %3727 = vrot.lane.b32.xlu0 %v3425, 127
        %v3728 = vpop.permute.xlu0 %3727
        %3729 = vrot.lane.b32.xlu0 %v3427, 127
        %v3730 = vpop.permute.xlu0 %3729
        %3731 = vrot.lane.b32.xlu0 %v3429, 127
        %v3732 = vpop.permute.xlu0 %3731
        %3733 = vrot.lane.b32.xlu0 %v3424, 127
        %v3734 = vpop.permute.xlu0 %3733
        %3735 = vrot.lane.b32.xlu0 %v3426, 127
        %v3736 = vpop.permute.xlu0 %3735
        %3737 = vrot.lane.b32.xlu0 %v3428, 127
        %v3738 = vpop.permute.xlu0 %3737
        %3739 = vrot.lane.b32.xlu0 %v3430, 127
        %v3740 = vpop.permute.xlu0 %3739
        %v3741 = vsel %vm466, %v3726, %v3734
        %v3742 = vsel %vm466, %v3728, %v3736
        %v3743 = vsel %vm466, %v3730, %v3738
        %v3744 = vsel %vm466, %v3732, %v3740
        %v3745 = vsel %vm466, %v3734, %v3726
        %v3746 = vsel %vm466, %v3736, %v3728
        %v3747 = vsel %vm466, %v3738, %v3730
        %v3748 = vsel %vm466, %v3740, %v3732
        %v3749 = vmul.f32 %v3741, %v353
        %v3750 = vmul.f32 %v3745, %v354
        %v3751 = vmul.f32 %v3742, %v353
        %v3752 = vmul.f32 %v3746, %v354
        %v3753 = vmul.f32 %v3743, %v353
        %v3754 = vmul.f32 %v3747, %v354
        %v3755 = vmul.f32 %v3744, %v353
        %v3756 = vmul.f32 %v3748, %v354
        %3757 = vset.pattern.permute.xlu0 5
        %3758 = vperm.xlu0 %3757, %v3378
        %v3759 = vpop.permute.xlu0 %3758
        %3761 = vset.pattern.permute.xlu0 5
        %3762 = vperm.xlu0 %3761, %v3379
        %v3763 = vpop.permute.xlu0 %3762
        %3765 = vset.pattern.permute.xlu0 5
        %3766 = vperm.xlu0 %3765, %v3380
        %v3767 = vpop.permute.xlu0 %3766
        %3769 = vset.pattern.permute.xlu0 5
        %3770 = vperm.xlu0 %3769, %v3381
        %v3771 = vpop.permute.xlu0 %3770
        %v3773 = vmul.f32 %v3749, %v3759
        %v3774 = vmul.f32 %v3750, %v3759
        %v3775 = vmul.f32 %v3751, %v3763
        %v3776 = vmul.f32 %v3752, %v3763
        %v3777 = vmul.f32 %v3753, %v3767
        %v3778 = vmul.f32 %v3754, %v3767
        %v3779 = vmul.f32 %v3755, %v3771
        %v3780 = vmul.f32 %v3756, %v3771
        %v3781 = vadd.f32 %v3717, %v3773
        %v3782 = vadd.f32 %v3718, %v3774
        %v3783 = vadd.f32 %v3719, %v3775
        %v3784 = vadd.f32 %v3720, %v3776
        %v3785 = vadd.f32 %v3721, %v3777
        %v3786 = vadd.f32 %v3722, %v3778
        %v3787 = vadd.f32 %v3723, %v3779
        %v3788 = vadd.f32 %v3724, %v3780
        %3789 = vrot.lane.b32.xlu0 %v3423, 126
        %v3790 = vpop.permute.xlu0 %3789
        %3791 = vrot.lane.b32.xlu0 %v3425, 126
        %v3792 = vpop.permute.xlu0 %3791
        %3793 = vrot.lane.b32.xlu0 %v3427, 126
        %v3794 = vpop.permute.xlu0 %3793
        %3795 = vrot.lane.b32.xlu0 %v3429, 126
        %v3796 = vpop.permute.xlu0 %3795
        %3797 = vrot.lane.b32.xlu0 %v3424, 126
        %v3798 = vpop.permute.xlu0 %3797
        %3799 = vrot.lane.b32.xlu0 %v3426, 126
        %v3800 = vpop.permute.xlu0 %3799
        %3801 = vrot.lane.b32.xlu0 %v3428, 126
        %v3802 = vpop.permute.xlu0 %3801
        %3803 = vrot.lane.b32.xlu0 %v3430, 126
        %v3804 = vpop.permute.xlu0 %3803
        %v3805 = vsel %vm477, %v3790, %v3798
        %v3806 = vsel %vm477, %v3792, %v3800
        %v3807 = vsel %vm477, %v3794, %v3802
        %v3808 = vsel %vm477, %v3796, %v3804
        %v3809 = vsel %vm477, %v3798, %v3790
        %v3810 = vsel %vm477, %v3800, %v3792
        %v3811 = vsel %vm477, %v3802, %v3794
        %v3812 = vsel %vm477, %v3804, %v3796
        %v3813 = vmul.f32 %v3805, %v377
        %v3814 = vmul.f32 %v3809, %v378
        %v3815 = vmul.f32 %v3806, %v377
        %v3816 = vmul.f32 %v3810, %v378
        %v3817 = vmul.f32 %v3807, %v377
        %v3818 = vmul.f32 %v3811, %v378
        %v3819 = vmul.f32 %v3808, %v377
        %v3820 = vmul.f32 %v3812, %v378
        %3821 = vset.pattern.permute.xlu0 6
        %3822 = vperm.xlu0 %3821, %v3378
        %v3823 = vpop.permute.xlu0 %3822
        %3825 = vset.pattern.permute.xlu0 6
        %3826 = vperm.xlu0 %3825, %v3379
        %v3827 = vpop.permute.xlu0 %3826
        %3829 = vset.pattern.permute.xlu0 6
        %3830 = vperm.xlu0 %3829, %v3380
        %v3831 = vpop.permute.xlu0 %3830
        %3833 = vset.pattern.permute.xlu0 6
        %3834 = vperm.xlu0 %3833, %v3381
        %v3835 = vpop.permute.xlu0 %3834
        %v3837 = vmul.f32 %v3813, %v3823
        %v3838 = vmul.f32 %v3814, %v3823
        %v3839 = vmul.f32 %v3815, %v3827
        %v3840 = vmul.f32 %v3816, %v3827
        %v3841 = vmul.f32 %v3817, %v3831
        %v3842 = vmul.f32 %v3818, %v3831
        %v3843 = vmul.f32 %v3819, %v3835
        %v3844 = vmul.f32 %v3820, %v3835
        %v3845 = vadd.f32 %v3781, %v3837
        %v3846 = vadd.f32 %v3782, %v3838
        %v3847 = vadd.f32 %v3783, %v3839
        %v3848 = vadd.f32 %v3784, %v3840
        %v3849 = vadd.f32 %v3785, %v3841
        %v3850 = vadd.f32 %v3786, %v3842
        %v3851 = vadd.f32 %v3787, %v3843
        %v3852 = vadd.f32 %v3788, %v3844
        %3853 = vrot.lane.b32.xlu0 %v3423, 125
        %v3854 = vpop.permute.xlu0 %3853
        %3855 = vrot.lane.b32.xlu0 %v3425, 125
        %v3856 = vpop.permute.xlu0 %3855
        %3857 = vrot.lane.b32.xlu0 %v3427, 125
        %v3858 = vpop.permute.xlu0 %3857
        %3859 = vrot.lane.b32.xlu0 %v3429, 125
        %v3860 = vpop.permute.xlu0 %3859
        %3861 = vrot.lane.b32.xlu0 %v3424, 125
        %v3862 = vpop.permute.xlu0 %3861
        %3863 = vrot.lane.b32.xlu0 %v3426, 125
        %v3864 = vpop.permute.xlu0 %3863
        %3865 = vrot.lane.b32.xlu0 %v3428, 125
        %v3866 = vpop.permute.xlu0 %3865
        %3867 = vrot.lane.b32.xlu0 %v3430, 125
        %v3868 = vpop.permute.xlu0 %3867
        %vm3869 = vcmp.lt.s32.totalorder %v227, 125
        %v3870 = vsel %vm3869, %v3854, %v3862
        %v3871 = vsel %vm3869, %v3856, %v3864
        %v3872 = vsel %vm3869, %v3858, %v3866
        %v3873 = vsel %vm3869, %v3860, %v3868
        %v3874 = vsel %vm3869, %v3862, %v3854
        %v3875 = vsel %vm3869, %v3864, %v3856
        %v3876 = vsel %vm3869, %v3866, %v3858
        %v3877 = vsel %vm3869, %v3868, %v3860
        %v3878 = vmul.f32 %v3870, %v401
        %v3879 = vmul.f32 %v3874, %v402
        %v3880 = vmul.f32 %v3871, %v401
        %v3881 = vmul.f32 %v3875, %v402
        %v3882 = vmul.f32 %v3872, %v401
        %v3883 = vmul.f32 %v3876, %v402
        %v3884 = vmul.f32 %v3873, %v401
        %v3885 = vmul.f32 %v3877, %v402
        %3886 = vset.pattern.permute.xlu0 7
        %3887 = vperm.xlu0 %3886, %v3378
        %v3888 = vpop.permute.xlu0 %3887
        %3890 = vset.pattern.permute.xlu0 7
        %3891 = vperm.xlu0 %3890, %v3379
        %v3892 = vpop.permute.xlu0 %3891
        %3894 = vset.pattern.permute.xlu0 7
        %3895 = vperm.xlu0 %3894, %v3380
        %v3896 = vpop.permute.xlu0 %3895
        %3898 = vset.pattern.permute.xlu0 7
        %3899 = vperm.xlu0 %3898, %v3381
        %v3900 = vpop.permute.xlu0 %3899
        %v3902 = vmul.f32 %v3878, %v3888
        %v3903 = vmul.f32 %v3879, %v3888
        %v3904 = vmul.f32 %v3880, %v3892
        %v3905 = vmul.f32 %v3881, %v3892
        %v3906 = vmul.f32 %v3882, %v3896
        %v3907 = vmul.f32 %v3883, %v3896
        %v3908 = vmul.f32 %v3884, %v3900
        %v3909 = vmul.f32 %v3885, %v3900
        %v3910 = vadd.f32 %v3845, %v3902
        %v3911 = vadd.f32 %v3846, %v3903
        %v3912 = vadd.f32 %v3847, %v3904
        %v3913 = vadd.f32 %v3848, %v3905
        %v3914 = vadd.f32 %v3849, %v3906
        %v3915 = vadd.f32 %v3850, %v3907
        %v3916 = vadd.f32 %v3851, %v3908
        %v3917 = vadd.f32 %v3852, %v3909
        %3918 = vrot.lane.b32.xlu0 %v3423, 124
        %v3919 = vpop.permute.xlu0 %3918
        %3920 = vrot.lane.b32.xlu0 %v3425, 124
        %v3921 = vpop.permute.xlu0 %3920
        %3922 = vrot.lane.b32.xlu0 %v3427, 124
        %v3923 = vpop.permute.xlu0 %3922
        %3924 = vrot.lane.b32.xlu0 %v3429, 124
        %v3925 = vpop.permute.xlu0 %3924
        %3926 = vrot.lane.b32.xlu0 %v3424, 124
        %v3927 = vpop.permute.xlu0 %3926
        %3928 = vrot.lane.b32.xlu0 %v3426, 124
        %v3929 = vpop.permute.xlu0 %3928
        %3930 = vrot.lane.b32.xlu0 %v3428, 124
        %v3931 = vpop.permute.xlu0 %3930
        %3932 = vrot.lane.b32.xlu0 %v3430, 124
        %v3933 = vpop.permute.xlu0 %3932
        %vm3934 = vcmp.lt.s32.totalorder %v227, 124
        %v3935 = vsel %vm3934, %v3919, %v3927
        %v3936 = vsel %vm3934, %v3921, %v3929
        %v3937 = vsel %vm3934, %v3923, %v3931
        %v3938 = vsel %vm3934, %v3925, %v3933
        %v3939 = vsel %vm3934, %v3927, %v3919
        %v3940 = vsel %vm3934, %v3929, %v3921
        %v3941 = vsel %vm3934, %v3931, %v3923
        %v3942 = vsel %vm3934, %v3933, %v3925
        %v3943 = vmul.f32 %v3935, %v425
        %v3944 = vmul.f32 %v3939, %v426
        %v3945 = vmul.f32 %v3936, %v425
        %v3946 = vmul.f32 %v3940, %v426
        %v3947 = vmul.f32 %v3937, %v425
        %v3948 = vmul.f32 %v3941, %v426
        %v3949 = vmul.f32 %v3938, %v425
        %v3950 = vmul.f32 %v3942, %v426
        %3951 = vset.pattern.permute.xlu0 8
        %3952 = vperm.xlu0 %3951, %v3378
        %v3953 = vpop.permute.xlu0 %3952
        %3955 = vset.pattern.permute.xlu0 8
        %3956 = vperm.xlu0 %3955, %v3379
        %v3957 = vpop.permute.xlu0 %3956
        %3959 = vset.pattern.permute.xlu0 8
        %3960 = vperm.xlu0 %3959, %v3380
        %v3961 = vpop.permute.xlu0 %3960
        %3963 = vset.pattern.permute.xlu0 8
        %3964 = vperm.xlu0 %3963, %v3381
        %v3965 = vpop.permute.xlu0 %3964
        %v3967 = vmul.f32 %v3943, %v3953
        %v3968 = vmul.f32 %v3944, %v3953
        %v3969 = vmul.f32 %v3945, %v3957
        %v3970 = vmul.f32 %v3946, %v3957
        %v3971 = vmul.f32 %v3947, %v3961
        %v3972 = vmul.f32 %v3948, %v3961
        %v3973 = vmul.f32 %v3949, %v3965
        %v3974 = vmul.f32 %v3950, %v3965
        %v3975 = vadd.f32 %v3910, %v3967
        %v3976 = vadd.f32 %v3911, %v3968
        %v3977 = vadd.f32 %v3912, %v3969
        %v3978 = vadd.f32 %v3913, %v3970
        %v3979 = vadd.f32 %v3914, %v3971
        %v3980 = vadd.f32 %v3915, %v3972
        %v3981 = vadd.f32 %v3916, %v3973
        %v3982 = vadd.f32 %v3917, %v3974
        %3983 = vrot.lane.b32.xlu0 %v3370, 48
        %v3984 = vpop.permute.xlu0 %3983
        %3985 = vrot.lane.b32.xlu0 %v3372, 48
        %v3986 = vpop.permute.xlu0 %3985
        %3987 = vrot.lane.b32.xlu0 %v3374, 48
        %v3988 = vpop.permute.xlu0 %3987
        %3989 = vrot.lane.b32.xlu0 %v3376, 48
        %v3990 = vpop.permute.xlu0 %3989
        %3991 = vrot.lane.b32.xlu0 %v3371, 48
        %v3992 = vpop.permute.xlu0 %3991
        %3993 = vrot.lane.b32.xlu0 %v3373, 48
        %v3994 = vpop.permute.xlu0 %3993
        %3995 = vrot.lane.b32.xlu0 %v3375, 48
        %v3996 = vpop.permute.xlu0 %3995
        %3997 = vrot.lane.b32.xlu0 %v3377, 48
        %v3998 = vpop.permute.xlu0 %3997
        %vm3999 = vcmp.lt.s32.totalorder %v227, 48
        %v4000 = vsel %vm3999, %v3984, %v3992
        %v4001 = vsel %vm3999, %v3986, %v3994
        %v4002 = vsel %vm3999, %v3988, %v3996
        %v4003 = vsel %vm3999, %v3990, %v3998
        %v4004 = vsel %vm3999, %v3992, %v3984
        %v4005 = vsel %vm3999, %v3994, %v3986
        %v4006 = vsel %vm3999, %v3996, %v3988
        %v4007 = vsel %vm3999, %v3998, %v3990
        %v4008 = vmul.f32 %v4004, %v269
        %v4009 = vmul.f32 %v4000, %v270
        %v4010 = vmul.f32 %v4005, %v269
        %v4011 = vmul.f32 %v4001, %v270
        %v4012 = vmul.f32 %v4006, %v269
        %v4013 = vmul.f32 %v4002, %v270
        %v4014 = vmul.f32 %v4007, %v269
        %v4015 = vmul.f32 %v4003, %v270
        %4016 = vrot.lane.b32.xlu0 %v4008, 4
        %v4017 = vpop.permute.xlu0 %4016
        %4018 = vrot.lane.b32.xlu0 %v4010, 4
        %v4019 = vpop.permute.xlu0 %4018
        %4020 = vrot.lane.b32.xlu0 %v4012, 4
        %v4021 = vpop.permute.xlu0 %4020
        %4022 = vrot.lane.b32.xlu0 %v4014, 4
        %v4023 = vpop.permute.xlu0 %4022
        %4024 = vrot.lane.b32.xlu0 %v4009, 4
        %v4025 = vpop.permute.xlu0 %4024
        %4026 = vrot.lane.b32.xlu0 %v4011, 4
        %v4027 = vpop.permute.xlu0 %4026
        %4028 = vrot.lane.b32.xlu0 %v4013, 4
        %v4029 = vpop.permute.xlu0 %4028
        %4030 = vrot.lane.b32.xlu0 %v4015, 4
        %v4031 = vpop.permute.xlu0 %4030
        %v4032 = vsel %vm3447, %v4017, %v4025
        %v4033 = vsel %vm3447, %v4019, %v4027
        %v4034 = vsel %vm3447, %v4021, %v4029
        %v4035 = vsel %vm3447, %v4023, %v4031
        %v4036 = vsel %vm3447, %v4025, %v4017
        %v4037 = vsel %vm3447, %v4027, %v4019
        %v4038 = vsel %vm3447, %v4029, %v4021
        %v4039 = vsel %vm3447, %v4031, %v4023
        %v4040 = vmul.f32 %v4036, %v257
        %v4041 = vmul.f32 %v4032, %v258
        %v4042 = vmul.f32 %v4037, %v257
        %v4043 = vmul.f32 %v4033, %v258
        %v4044 = vmul.f32 %v4038, %v257
        %v4045 = vmul.f32 %v4034, %v258
        %v4046 = vmul.f32 %v4039, %v257
        %v4047 = vmul.f32 %v4035, %v258
        %4048 = vset.pattern.permute.xlu0 9
        %4049 = vperm.xlu0 %4048, %v3378
        %v4050 = vpop.permute.xlu0 %4049
        %4052 = vset.pattern.permute.xlu0 9
        %4053 = vperm.xlu0 %4052, %v3379
        %v4054 = vpop.permute.xlu0 %4053
        %4056 = vset.pattern.permute.xlu0 9
        %4057 = vperm.xlu0 %4056, %v3380
        %v4058 = vpop.permute.xlu0 %4057
        %4060 = vset.pattern.permute.xlu0 9
        %4061 = vperm.xlu0 %4060, %v3381
        %v4062 = vpop.permute.xlu0 %4061
        %v4064 = vmul.f32 %v4040, %v4050
        %v4065 = vmul.f32 %v4041, %v4050
        %v4066 = vmul.f32 %v4042, %v4054
        %v4067 = vmul.f32 %v4043, %v4054
        %v4068 = vmul.f32 %v4044, %v4058
        %v4069 = vmul.f32 %v4045, %v4058
        %v4070 = vmul.f32 %v4046, %v4062
        %v4071 = vmul.f32 %v4047, %v4062
        %v4072 = vadd.f32 %v3975, %v4064
        %v4073 = vadd.f32 %v3976, %v4065
        %v4074 = vadd.f32 %v3977, %v4066
        %v4075 = vadd.f32 %v3978, %v4067
        %v4076 = vadd.f32 %v3979, %v4068
        %v4077 = vadd.f32 %v3980, %v4069
        %v4078 = vadd.f32 %v3981, %v4070
        %v4079 = vadd.f32 %v3982, %v4071
        %4080 = vrot.lane.b32.xlu0 %v4008, 3
        %v4081 = vpop.permute.xlu0 %4080
        %4082 = vrot.lane.b32.xlu0 %v4010, 3
        %v4083 = vpop.permute.xlu0 %4082
        %4084 = vrot.lane.b32.xlu0 %v4012, 3
        %v4085 = vpop.permute.xlu0 %4084
        %4086 = vrot.lane.b32.xlu0 %v4014, 3
        %v4087 = vpop.permute.xlu0 %4086
        %4088 = vrot.lane.b32.xlu0 %v4009, 3
        %v4089 = vpop.permute.xlu0 %4088
        %4090 = vrot.lane.b32.xlu0 %v4011, 3
        %v4091 = vpop.permute.xlu0 %4090
        %4092 = vrot.lane.b32.xlu0 %v4013, 3
        %v4093 = vpop.permute.xlu0 %4092
        %4094 = vrot.lane.b32.xlu0 %v4015, 3
        %v4095 = vpop.permute.xlu0 %4094
        %v4096 = vsel %vm3516, %v4081, %v4089
        %v4097 = vsel %vm3516, %v4083, %v4091
        %v4098 = vsel %vm3516, %v4085, %v4093
        %v4099 = vsel %vm3516, %v4087, %v4095
        %v4100 = vsel %vm3516, %v4089, %v4081
        %v4101 = vsel %vm3516, %v4091, %v4083
        %v4102 = vsel %vm3516, %v4093, %v4085
        %v4103 = vsel %vm3516, %v4095, %v4087
        %v4104 = vmul.f32 %v4100, %v281
        %v4105 = vmul.f32 %v4096, %v282
        %v4106 = vmul.f32 %v4101, %v281
        %v4107 = vmul.f32 %v4097, %v282
        %v4108 = vmul.f32 %v4102, %v281
        %v4109 = vmul.f32 %v4098, %v282
        %v4110 = vmul.f32 %v4103, %v281
        %v4111 = vmul.f32 %v4099, %v282
        %4112 = vset.pattern.permute.xlu0 10
        %4113 = vperm.xlu0 %4112, %v3378
        %v4114 = vpop.permute.xlu0 %4113
        %4116 = vset.pattern.permute.xlu0 10
        %4117 = vperm.xlu0 %4116, %v3379
        %v4118 = vpop.permute.xlu0 %4117
        %4120 = vset.pattern.permute.xlu0 10
        %4121 = vperm.xlu0 %4120, %v3380
        %v4122 = vpop.permute.xlu0 %4121
        %4124 = vset.pattern.permute.xlu0 10
        %4125 = vperm.xlu0 %4124, %v3381
        %v4126 = vpop.permute.xlu0 %4125
        %v4128 = vmul.f32 %v4104, %v4114
        %v4129 = vmul.f32 %v4105, %v4114
        %v4130 = vmul.f32 %v4106, %v4118
        %v4131 = vmul.f32 %v4107, %v4118
        %v4132 = vmul.f32 %v4108, %v4122
        %v4133 = vmul.f32 %v4109, %v4122
        %v4134 = vmul.f32 %v4110, %v4126
        %v4135 = vmul.f32 %v4111, %v4126
        %v4136 = vadd.f32 %v4072, %v4128
        %v4137 = vadd.f32 %v4073, %v4129
        %v4138 = vadd.f32 %v4074, %v4130
        %v4139 = vadd.f32 %v4075, %v4131
        %v4140 = vadd.f32 %v4076, %v4132
        %v4141 = vadd.f32 %v4077, %v4133
        %v4142 = vadd.f32 %v4078, %v4134
        %v4143 = vadd.f32 %v4079, %v4135
        %4144 = vrot.lane.b32.xlu0 %v4008, 2
        %v4145 = vpop.permute.xlu0 %4144
        %4146 = vrot.lane.b32.xlu0 %v4010, 2
        %v4147 = vpop.permute.xlu0 %4146
        %4148 = vrot.lane.b32.xlu0 %v4012, 2
        %v4149 = vpop.permute.xlu0 %4148
        %4150 = vrot.lane.b32.xlu0 %v4014, 2
        %v4151 = vpop.permute.xlu0 %4150
        %4152 = vrot.lane.b32.xlu0 %v4009, 2
        %v4153 = vpop.permute.xlu0 %4152
        %4154 = vrot.lane.b32.xlu0 %v4011, 2
        %v4155 = vpop.permute.xlu0 %4154
        %4156 = vrot.lane.b32.xlu0 %v4013, 2
        %v4157 = vpop.permute.xlu0 %4156
        %4158 = vrot.lane.b32.xlu0 %v4015, 2
        %v4159 = vpop.permute.xlu0 %4158
        %v4160 = vsel %vm442, %v4145, %v4153
        %v4161 = vsel %vm442, %v4147, %v4155
        %v4162 = vsel %vm442, %v4149, %v4157
        %v4163 = vsel %vm442, %v4151, %v4159
        %v4164 = vsel %vm442, %v4153, %v4145
        %v4165 = vsel %vm442, %v4155, %v4147
        %v4166 = vsel %vm442, %v4157, %v4149
        %v4167 = vsel %vm442, %v4159, %v4151
        %v4168 = vmul.f32 %v4164, %v305
        %v4169 = vmul.f32 %v4160, %v306
        %v4170 = vmul.f32 %v4165, %v305
        %v4171 = vmul.f32 %v4161, %v306
        %v4172 = vmul.f32 %v4166, %v305
        %v4173 = vmul.f32 %v4162, %v306
        %v4174 = vmul.f32 %v4167, %v305
        %v4175 = vmul.f32 %v4163, %v306
        %4176 = vset.pattern.permute.xlu0 11
        %4177 = vperm.xlu0 %4176, %v3378
        %v4178 = vpop.permute.xlu0 %4177
        %4180 = vset.pattern.permute.xlu0 11
        %4181 = vperm.xlu0 %4180, %v3379
        %v4182 = vpop.permute.xlu0 %4181
        %4184 = vset.pattern.permute.xlu0 11
        %4185 = vperm.xlu0 %4184, %v3380
        %v4186 = vpop.permute.xlu0 %4185
        %4188 = vset.pattern.permute.xlu0 11
        %4189 = vperm.xlu0 %4188, %v3381
        %v4190 = vpop.permute.xlu0 %4189
        %v4192 = vmul.f32 %v4168, %v4178
        %v4193 = vmul.f32 %v4169, %v4178
        %v4194 = vmul.f32 %v4170, %v4182
        %v4195 = vmul.f32 %v4171, %v4182
        %v4196 = vmul.f32 %v4172, %v4186
        %v4197 = vmul.f32 %v4173, %v4186
        %v4198 = vmul.f32 %v4174, %v4190
        %v4199 = vmul.f32 %v4175, %v4190
        %v4200 = vadd.f32 %v4136, %v4192
        %v4201 = vadd.f32 %v4137, %v4193
        %v4202 = vadd.f32 %v4138, %v4194
        %v4203 = vadd.f32 %v4139, %v4195
        %v4204 = vadd.f32 %v4140, %v4196
        %v4205 = vadd.f32 %v4141, %v4197
        %v4206 = vadd.f32 %v4142, %v4198
        %v4207 = vadd.f32 %v4143, %v4199
        %4208 = vrot.lane.b32.xlu0 %v4008, 1
        %v4209 = vpop.permute.xlu0 %4208
        %4210 = vrot.lane.b32.xlu0 %v4010, 1
        %v4211 = vpop.permute.xlu0 %4210
        %4212 = vrot.lane.b32.xlu0 %v4012, 1
        %v4213 = vpop.permute.xlu0 %4212
        %4214 = vrot.lane.b32.xlu0 %v4014, 1
        %v4215 = vpop.permute.xlu0 %4214
        %4216 = vrot.lane.b32.xlu0 %v4009, 1
        %v4217 = vpop.permute.xlu0 %4216
        %4218 = vrot.lane.b32.xlu0 %v4011, 1
        %v4219 = vpop.permute.xlu0 %4218
        %4220 = vrot.lane.b32.xlu0 %v4013, 1
        %v4221 = vpop.permute.xlu0 %4220
        %4222 = vrot.lane.b32.xlu0 %v4015, 1
        %v4223 = vpop.permute.xlu0 %4222
        %v4224 = vsel %vm453, %v4209, %v4217
        %v4225 = vsel %vm453, %v4211, %v4219
        %v4226 = vsel %vm453, %v4213, %v4221
        %v4227 = vsel %vm453, %v4215, %v4223
        %v4228 = vsel %vm453, %v4217, %v4209
        %v4229 = vsel %vm453, %v4219, %v4211
        %v4230 = vsel %vm453, %v4221, %v4213
        %v4231 = vsel %vm453, %v4223, %v4215
        %v4232 = vmul.f32 %v4228, %v329
        %v4233 = vmul.f32 %v4224, %v330
        %v4234 = vmul.f32 %v4229, %v329
        %v4235 = vmul.f32 %v4225, %v330
        %v4236 = vmul.f32 %v4230, %v329
        %v4237 = vmul.f32 %v4226, %v330
        %v4238 = vmul.f32 %v4231, %v329
        %v4239 = vmul.f32 %v4227, %v330
        %4240 = vset.pattern.permute.xlu0 12
        %4241 = vperm.xlu0 %4240, %v3378
        %v4242 = vpop.permute.xlu0 %4241
        %4244 = vset.pattern.permute.xlu0 12
        %4245 = vperm.xlu0 %4244, %v3379
        %v4246 = vpop.permute.xlu0 %4245
        %4248 = vset.pattern.permute.xlu0 12
        %4249 = vperm.xlu0 %4248, %v3380
        %v4250 = vpop.permute.xlu0 %4249
        %4252 = vset.pattern.permute.xlu0 12
        %4253 = vperm.xlu0 %4252, %v3381
        %v4254 = vpop.permute.xlu0 %4253
        %v4256 = vmul.f32 %v4232, %v4242
        %v4257 = vmul.f32 %v4233, %v4242
        %v4258 = vmul.f32 %v4234, %v4246
        %v4259 = vmul.f32 %v4235, %v4246
        %v4260 = vmul.f32 %v4236, %v4250
        %v4261 = vmul.f32 %v4237, %v4250
        %v4262 = vmul.f32 %v4238, %v4254
        %v4263 = vmul.f32 %v4239, %v4254
        %v4264 = vadd.f32 %v4200, %v4256
        %v4265 = vadd.f32 %v4201, %v4257
        %v4266 = vadd.f32 %v4202, %v4258
        %v4267 = vadd.f32 %v4203, %v4259
        %v4268 = vadd.f32 %v4204, %v4260
        %v4269 = vadd.f32 %v4205, %v4261
        %v4270 = vadd.f32 %v4206, %v4262
        %v4271 = vadd.f32 %v4207, %v4263
        %4272 = vset.pattern.permute.xlu0 13
        %4273 = vperm.xlu0 %4272, %v3378
        %v4274 = vpop.permute.xlu0 %4273
        %4276 = vset.pattern.permute.xlu0 13
        %4277 = vperm.xlu0 %4276, %v3379
        %v4278 = vpop.permute.xlu0 %4277
        %4280 = vset.pattern.permute.xlu0 13
        %4281 = vperm.xlu0 %4280, %v3380
        %v4282 = vpop.permute.xlu0 %4281
        %4284 = vset.pattern.permute.xlu0 13
        %4285 = vperm.xlu0 %4284, %v3381
        %v4286 = vpop.permute.xlu0 %4285
        %v4288 = vmul.f32 %v4008, %v4274
        %v4289 = vmul.f32 %v4009, %v4274
        %v4290 = vmul.f32 %v4010, %v4278
        %v4291 = vmul.f32 %v4011, %v4278
        %v4292 = vmul.f32 %v4012, %v4282
        %v4293 = vmul.f32 %v4013, %v4282
        %v4294 = vmul.f32 %v4014, %v4286
        %v4295 = vmul.f32 %v4015, %v4286
        %v4296 = vadd.f32 %v4264, %v4288
        %v4297 = vadd.f32 %v4265, %v4289
        %v4298 = vadd.f32 %v4266, %v4290
        %v4299 = vadd.f32 %v4267, %v4291
        %v4300 = vadd.f32 %v4268, %v4292
        %v4301 = vadd.f32 %v4269, %v4293
        %v4302 = vadd.f32 %v4270, %v4294
        %v4303 = vadd.f32 %v4271, %v4295
        %4304 = vrot.lane.b32.xlu0 %v4008, 127
        %v4305 = vpop.permute.xlu0 %4304
        %4306 = vrot.lane.b32.xlu0 %v4010, 127
        %v4307 = vpop.permute.xlu0 %4306
        %4308 = vrot.lane.b32.xlu0 %v4012, 127
        %v4309 = vpop.permute.xlu0 %4308
        %4310 = vrot.lane.b32.xlu0 %v4014, 127
        %v4311 = vpop.permute.xlu0 %4310
        %4312 = vrot.lane.b32.xlu0 %v4009, 127
        %v4313 = vpop.permute.xlu0 %4312
        %4314 = vrot.lane.b32.xlu0 %v4011, 127
        %v4315 = vpop.permute.xlu0 %4314
        %4316 = vrot.lane.b32.xlu0 %v4013, 127
        %v4317 = vpop.permute.xlu0 %4316
        %4318 = vrot.lane.b32.xlu0 %v4015, 127
        %v4319 = vpop.permute.xlu0 %4318
        %v4320 = vsel %vm466, %v4305, %v4313
        %v4321 = vsel %vm466, %v4307, %v4315
        %v4322 = vsel %vm466, %v4309, %v4317
        %v4323 = vsel %vm466, %v4311, %v4319
        %v4324 = vsel %vm466, %v4313, %v4305
        %v4325 = vsel %vm466, %v4315, %v4307
        %v4326 = vsel %vm466, %v4317, %v4309
        %v4327 = vsel %vm466, %v4319, %v4311
        %v4328 = vmul.f32 %v4320, %v353
        %v4329 = vmul.f32 %v4324, %v354
        %v4330 = vmul.f32 %v4321, %v353
        %v4331 = vmul.f32 %v4325, %v354
        %v4332 = vmul.f32 %v4322, %v353
        %v4333 = vmul.f32 %v4326, %v354
        %v4334 = vmul.f32 %v4323, %v353
        %v4335 = vmul.f32 %v4327, %v354
        %4336 = vset.pattern.permute.xlu0 14
        %4337 = vperm.xlu0 %4336, %v3378
        %v4338 = vpop.permute.xlu0 %4337
        %4340 = vset.pattern.permute.xlu0 14
        %4341 = vperm.xlu0 %4340, %v3379
        %v4342 = vpop.permute.xlu0 %4341
        %4344 = vset.pattern.permute.xlu0 14
        %4345 = vperm.xlu0 %4344, %v3380
        %v4346 = vpop.permute.xlu0 %4345
        %4348 = vset.pattern.permute.xlu0 14
        %4349 = vperm.xlu0 %4348, %v3381
        %v4350 = vpop.permute.xlu0 %4349
        %v4352 = vmul.f32 %v4328, %v4338
        %v4353 = vmul.f32 %v4329, %v4338
        %v4354 = vmul.f32 %v4330, %v4342
        %v4355 = vmul.f32 %v4331, %v4342
        %v4356 = vmul.f32 %v4332, %v4346
        %v4357 = vmul.f32 %v4333, %v4346
        %v4358 = vmul.f32 %v4334, %v4350
        %v4359 = vmul.f32 %v4335, %v4350
        %v4360 = vadd.f32 %v4296, %v4352
        %v4361 = vadd.f32 %v4297, %v4353
        %v4362 = vadd.f32 %v4298, %v4354
        %v4363 = vadd.f32 %v4299, %v4355
        %v4364 = vadd.f32 %v4300, %v4356
        %v4365 = vadd.f32 %v4301, %v4357
        %v4366 = vadd.f32 %v4302, %v4358
        %v4367 = vadd.f32 %v4303, %v4359
        %4368 = vrot.lane.b32.xlu0 %v4008, 126
        %v4369 = vpop.permute.xlu0 %4368
        %4370 = vrot.lane.b32.xlu0 %v4010, 126
        %v4371 = vpop.permute.xlu0 %4370
        %4372 = vrot.lane.b32.xlu0 %v4012, 126
        %v4373 = vpop.permute.xlu0 %4372
        %4374 = vrot.lane.b32.xlu0 %v4014, 126
        %v4375 = vpop.permute.xlu0 %4374
        %4376 = vrot.lane.b32.xlu0 %v4009, 126
        %v4377 = vpop.permute.xlu0 %4376
        %4378 = vrot.lane.b32.xlu0 %v4011, 126
        %v4379 = vpop.permute.xlu0 %4378
        %4380 = vrot.lane.b32.xlu0 %v4013, 126
        %v4381 = vpop.permute.xlu0 %4380
        %4382 = vrot.lane.b32.xlu0 %v4015, 126
        %v4383 = vpop.permute.xlu0 %4382
        %v4384 = vsel %vm477, %v4369, %v4377
        %v4385 = vsel %vm477, %v4371, %v4379
        %v4386 = vsel %vm477, %v4373, %v4381
        %v4387 = vsel %vm477, %v4375, %v4383
        %v4388 = vsel %vm477, %v4377, %v4369
        %v4389 = vsel %vm477, %v4379, %v4371
        %v4390 = vsel %vm477, %v4381, %v4373
        %v4391 = vsel %vm477, %v4383, %v4375
        %v4392 = vmul.f32 %v4384, %v377
        %v4393 = vmul.f32 %v4388, %v378
        %v4394 = vmul.f32 %v4385, %v377
        %v4395 = vmul.f32 %v4389, %v378
        %v4396 = vmul.f32 %v4386, %v377
        %v4397 = vmul.f32 %v4390, %v378
        %v4398 = vmul.f32 %v4387, %v377
        %v4399 = vmul.f32 %v4391, %v378
        %4400 = vset.pattern.permute.xlu0 15
        %4401 = vperm.xlu0 %4400, %v3378
        %v4402 = vpop.permute.xlu0 %4401
        %4404 = vset.pattern.permute.xlu0 15
        %4405 = vperm.xlu0 %4404, %v3379
        %v4406 = vpop.permute.xlu0 %4405
        %4408 = vset.pattern.permute.xlu0 15
        %4409 = vperm.xlu0 %4408, %v3380
        %v4410 = vpop.permute.xlu0 %4409
        %4412 = vset.pattern.permute.xlu0 15
        %4413 = vperm.xlu0 %4412, %v3381
        %v4414 = vpop.permute.xlu0 %4413
        %v4416 = vmul.f32 %v4392, %v4402
        %v4417 = vmul.f32 %v4393, %v4402
        %v4418 = vmul.f32 %v4394, %v4406
        %v4419 = vmul.f32 %v4395, %v4406
        %v4420 = vmul.f32 %v4396, %v4410
        %v4421 = vmul.f32 %v4397, %v4410
        %v4422 = vmul.f32 %v4398, %v4414
        %v4423 = vmul.f32 %v4399, %v4414
        %v4424 = vadd.f32 %v4360, %v4416
        %v4425 = vadd.f32 %v4361, %v4417
        %v4426 = vadd.f32 %v4362, %v4418
        %v4427 = vadd.f32 %v4363, %v4419
        %v4428 = vadd.f32 %v4364, %v4420
        %v4429 = vadd.f32 %v4365, %v4421
        %v4430 = vadd.f32 %v4366, %v4422
        %v4431 = vadd.f32 %v4367, %v4423
        %4432 = vrot.lane.b32.xlu0 %v4008, 125
        %v4433 = vpop.permute.xlu0 %4432
        %4434 = vrot.lane.b32.xlu0 %v4010, 125
        %v4435 = vpop.permute.xlu0 %4434
        %4436 = vrot.lane.b32.xlu0 %v4012, 125
        %v4437 = vpop.permute.xlu0 %4436
        %4438 = vrot.lane.b32.xlu0 %v4014, 125
        %v4439 = vpop.permute.xlu0 %4438
        %4440 = vrot.lane.b32.xlu0 %v4009, 125
        %v4441 = vpop.permute.xlu0 %4440
        %4442 = vrot.lane.b32.xlu0 %v4011, 125
        %v4443 = vpop.permute.xlu0 %4442
        %4444 = vrot.lane.b32.xlu0 %v4013, 125
        %v4445 = vpop.permute.xlu0 %4444
        %4446 = vrot.lane.b32.xlu0 %v4015, 125
        %v4447 = vpop.permute.xlu0 %4446
        %v4448 = vsel %vm3869, %v4433, %v4441
        %v4449 = vsel %vm3869, %v4435, %v4443
        %v4450 = vsel %vm3869, %v4437, %v4445
        %v4451 = vsel %vm3869, %v4439, %v4447
        %v4452 = vsel %vm3869, %v4441, %v4433
        %v4453 = vsel %vm3869, %v4443, %v4435
        %v4454 = vsel %vm3869, %v4445, %v4437
        %v4455 = vsel %vm3869, %v4447, %v4439
        %v4456 = vmul.f32 %v4448, %v401
        %v4457 = vmul.f32 %v4452, %v402
        %v4458 = vmul.f32 %v4449, %v401
        %v4459 = vmul.f32 %v4453, %v402
        %v4460 = vmul.f32 %v4450, %v401
        %v4461 = vmul.f32 %v4454, %v402
        %v4462 = vmul.f32 %v4451, %v401
        %v4463 = vmul.f32 %v4455, %v402
        %4464 = vset.pattern.permute.xlu0 16
        %4465 = vperm.xlu0 %4464, %v3378
        %v4466 = vpop.permute.xlu0 %4465
        %4468 = vset.pattern.permute.xlu0 16
        %4469 = vperm.xlu0 %4468, %v3379
        %v4470 = vpop.permute.xlu0 %4469
        %4472 = vset.pattern.permute.xlu0 16
        %4473 = vperm.xlu0 %4472, %v3380
        %v4474 = vpop.permute.xlu0 %4473
        %4476 = vset.pattern.permute.xlu0 16
        %4477 = vperm.xlu0 %4476, %v3381
        %v4478 = vpop.permute.xlu0 %4477
        %v4480 = vmul.f32 %v4456, %v4466
        %v4481 = vmul.f32 %v4457, %v4466
        %v4482 = vmul.f32 %v4458, %v4470
        %v4483 = vmul.f32 %v4459, %v4470
        %v4484 = vmul.f32 %v4460, %v4474
        %v4485 = vmul.f32 %v4461, %v4474
        %v4486 = vmul.f32 %v4462, %v4478
        %v4487 = vmul.f32 %v4463, %v4478
        %v4488 = vadd.f32 %v4424, %v4480
        %v4489 = vadd.f32 %v4425, %v4481
        %v4490 = vadd.f32 %v4426, %v4482
        %v4491 = vadd.f32 %v4427, %v4483
        %v4492 = vadd.f32 %v4428, %v4484
        %v4493 = vadd.f32 %v4429, %v4485
        %v4494 = vadd.f32 %v4430, %v4486
        %v4495 = vadd.f32 %v4431, %v4487
        %4496 = vrot.lane.b32.xlu0 %v4008, 124
        %v4497 = vpop.permute.xlu0 %4496
        %4498 = vrot.lane.b32.xlu0 %v4010, 124
        %v4499 = vpop.permute.xlu0 %4498
        %4500 = vrot.lane.b32.xlu0 %v4012, 124
        %v4501 = vpop.permute.xlu0 %4500
        %4502 = vrot.lane.b32.xlu0 %v4014, 124
        %v4503 = vpop.permute.xlu0 %4502
        %4504 = vrot.lane.b32.xlu0 %v4009, 124
        %v4505 = vpop.permute.xlu0 %4504
        %4506 = vrot.lane.b32.xlu0 %v4011, 124
        %v4507 = vpop.permute.xlu0 %4506
        %4508 = vrot.lane.b32.xlu0 %v4013, 124
        %v4509 = vpop.permute.xlu0 %4508
        %4510 = vrot.lane.b32.xlu0 %v4015, 124
        %v4511 = vpop.permute.xlu0 %4510
        %v4512 = vsel %vm3934, %v4497, %v4505
        %v4513 = vsel %vm3934, %v4499, %v4507
        %v4514 = vsel %vm3934, %v4501, %v4509
        %v4515 = vsel %vm3934, %v4503, %v4511
        %v4516 = vsel %vm3934, %v4505, %v4497
        %v4517 = vsel %vm3934, %v4507, %v4499
        %v4518 = vsel %vm3934, %v4509, %v4501
        %v4519 = vsel %vm3934, %v4511, %v4503
        %v4520 = vmul.f32 %v4512, %v425
        %v4521 = vmul.f32 %v4516, %v426
        %v4522 = vmul.f32 %v4513, %v425
        %v4523 = vmul.f32 %v4517, %v426
        %v4524 = vmul.f32 %v4514, %v425
        %v4525 = vmul.f32 %v4518, %v426
        %v4526 = vmul.f32 %v4515, %v425
        %v4527 = vmul.f32 %v4519, %v426
        %4528 = vset.pattern.permute.xlu0 17
        %4529 = vperm.xlu0 %4528, %v3378
        %v4530 = vpop.permute.xlu0 %4529
        %4532 = vset.pattern.permute.xlu0 17
        %4533 = vperm.xlu0 %4532, %v3379
        %v4534 = vpop.permute.xlu0 %4533
        %4536 = vset.pattern.permute.xlu0 17
        %4537 = vperm.xlu0 %4536, %v3380
        %v4538 = vpop.permute.xlu0 %4537
        %4540 = vset.pattern.permute.xlu0 17
        %4541 = vperm.xlu0 %4540, %v3381
        %v4542 = vpop.permute.xlu0 %4541
        %v4544 = vmul.f32 %v4520, %v4530
        %v4545 = vmul.f32 %v4521, %v4530
        %v4546 = vmul.f32 %v4522, %v4534
        %v4547 = vmul.f32 %v4523, %v4534
        %v4548 = vmul.f32 %v4524, %v4538
        %v4549 = vmul.f32 %v4525, %v4538
        %v4550 = vmul.f32 %v4526, %v4542
        %v4551 = vmul.f32 %v4527, %v4542
        %v4552 = vadd.f32 %v4488, %v4544
        %v4553 = vadd.f32 %v4489, %v4545
        %v4554 = vadd.f32 %v4490, %v4546
        %v4555 = vadd.f32 %v4491, %v4547
        %v4556 = vadd.f32 %v4492, %v4548
        %v4557 = vadd.f32 %v4493, %v4549
        %v4558 = vadd.f32 %v4494, %v4550
        %v4559 = vadd.f32 %v4495, %v4551
        %4560 = vrot.lane.b32.xlu0 %v3370, 32
        %v4561 = vpop.permute.xlu0 %4560
        %4562 = vrot.lane.b32.xlu0 %v3372, 32
        %v4563 = vpop.permute.xlu0 %4562
        %4564 = vrot.lane.b32.xlu0 %v3374, 32
        %v4565 = vpop.permute.xlu0 %4564
        %4566 = vrot.lane.b32.xlu0 %v3376, 32
        %v4567 = vpop.permute.xlu0 %4566
        %4568 = vrot.lane.b32.xlu0 %v3371, 32
        %v4569 = vpop.permute.xlu0 %4568
        %4570 = vrot.lane.b32.xlu0 %v3373, 32
        %v4571 = vpop.permute.xlu0 %4570
        %4572 = vrot.lane.b32.xlu0 %v3375, 32
        %v4573 = vpop.permute.xlu0 %4572
        %4574 = vrot.lane.b32.xlu0 %v3377, 32
        %v4575 = vpop.permute.xlu0 %4574
        %v4576 = vsel %vm433, %v4561, %v4569
        %v4577 = vsel %vm433, %v4563, %v4571
        %v4578 = vsel %vm433, %v4565, %v4573
        %v4579 = vsel %vm433, %v4567, %v4575
        %v4580 = vsel %vm433, %v4569, %v4561
        %v4581 = vsel %vm433, %v4571, %v4563
        %v4582 = vsel %vm433, %v4573, %v4565
        %v4583 = vsel %vm433, %v4575, %v4567
        %v4584 = vmul.f32 %v4580, %v293
        %v4585 = vmul.f32 %v4576, %v294
        %v4586 = vmul.f32 %v4581, %v293
        %v4587 = vmul.f32 %v4577, %v294
        %v4588 = vmul.f32 %v4582, %v293
        %v4589 = vmul.f32 %v4578, %v294
        %v4590 = vmul.f32 %v4583, %v293
        %v4591 = vmul.f32 %v4579, %v294
        %4592 = vrot.lane.b32.xlu0 %v4584, 4
        %v4593 = vpop.permute.xlu0 %4592
        %4594 = vrot.lane.b32.xlu0 %v4586, 4
        %v4595 = vpop.permute.xlu0 %4594
        %4596 = vrot.lane.b32.xlu0 %v4588, 4
        %v4597 = vpop.permute.xlu0 %4596
        %4598 = vrot.lane.b32.xlu0 %v4590, 4
        %v4599 = vpop.permute.xlu0 %4598
        %4600 = vrot.lane.b32.xlu0 %v4585, 4
        %v4601 = vpop.permute.xlu0 %4600
        %4602 = vrot.lane.b32.xlu0 %v4587, 4
        %v4603 = vpop.permute.xlu0 %4602
        %4604 = vrot.lane.b32.xlu0 %v4589, 4
        %v4605 = vpop.permute.xlu0 %4604
        %4606 = vrot.lane.b32.xlu0 %v4591, 4
        %v4607 = vpop.permute.xlu0 %4606
        %v4608 = vsel %vm3447, %v4593, %v4601
        %v4609 = vsel %vm3447, %v4595, %v4603
        %v4610 = vsel %vm3447, %v4597, %v4605
        %v4611 = vsel %vm3447, %v4599, %v4607
        %v4612 = vsel %vm3447, %v4601, %v4593
        %v4613 = vsel %vm3447, %v4603, %v4595
        %v4614 = vsel %vm3447, %v4605, %v4597
        %v4615 = vsel %vm3447, %v4607, %v4599
        %v4616 = vmul.f32 %v4612, %v257
        %v4617 = vmul.f32 %v4608, %v258
        %v4618 = vmul.f32 %v4613, %v257
        %v4619 = vmul.f32 %v4609, %v258
        %v4620 = vmul.f32 %v4614, %v257
        %v4621 = vmul.f32 %v4610, %v258
        %v4622 = vmul.f32 %v4615, %v257
        %v4623 = vmul.f32 %v4611, %v258
        %4624 = vset.pattern.permute.xlu0 18
        %4625 = vperm.xlu0 %4624, %v3378
        %v4626 = vpop.permute.xlu0 %4625
        %4628 = vset.pattern.permute.xlu0 18
        %4629 = vperm.xlu0 %4628, %v3379
        %v4630 = vpop.permute.xlu0 %4629
        %4632 = vset.pattern.permute.xlu0 18
        %4633 = vperm.xlu0 %4632, %v3380
        %v4634 = vpop.permute.xlu0 %4633
        %4636 = vset.pattern.permute.xlu0 18
        %4637 = vperm.xlu0 %4636, %v3381
        %v4638 = vpop.permute.xlu0 %4637
        %v4640 = vmul.f32 %v4616, %v4626
        %v4641 = vmul.f32 %v4617, %v4626
        %v4642 = vmul.f32 %v4618, %v4630
        %v4643 = vmul.f32 %v4619, %v4630
        %v4644 = vmul.f32 %v4620, %v4634
        %v4645 = vmul.f32 %v4621, %v4634
        %v4646 = vmul.f32 %v4622, %v4638
        %v4647 = vmul.f32 %v4623, %v4638
        %v4648 = vadd.f32 %v4552, %v4640
        %v4649 = vadd.f32 %v4553, %v4641
        %v4650 = vadd.f32 %v4554, %v4642
        %v4651 = vadd.f32 %v4555, %v4643
        %v4652 = vadd.f32 %v4556, %v4644
        %v4653 = vadd.f32 %v4557, %v4645
        %v4654 = vadd.f32 %v4558, %v4646
        %v4655 = vadd.f32 %v4559, %v4647
        %4656 = vrot.lane.b32.xlu0 %v4584, 3
        %v4657 = vpop.permute.xlu0 %4656
        %4658 = vrot.lane.b32.xlu0 %v4586, 3
        %v4659 = vpop.permute.xlu0 %4658
        %4660 = vrot.lane.b32.xlu0 %v4588, 3
        %v4661 = vpop.permute.xlu0 %4660
        %4662 = vrot.lane.b32.xlu0 %v4590, 3
        %v4663 = vpop.permute.xlu0 %4662
        %4664 = vrot.lane.b32.xlu0 %v4585, 3
        %v4665 = vpop.permute.xlu0 %4664
        %4666 = vrot.lane.b32.xlu0 %v4587, 3
        %v4667 = vpop.permute.xlu0 %4666
        %4668 = vrot.lane.b32.xlu0 %v4589, 3
        %v4669 = vpop.permute.xlu0 %4668
        %4670 = vrot.lane.b32.xlu0 %v4591, 3
        %v4671 = vpop.permute.xlu0 %4670
        %v4672 = vsel %vm3516, %v4657, %v4665
        %v4673 = vsel %vm3516, %v4659, %v4667
        %v4674 = vsel %vm3516, %v4661, %v4669
        %v4675 = vsel %vm3516, %v4663, %v4671
        %v4676 = vsel %vm3516, %v4665, %v4657
        %v4677 = vsel %vm3516, %v4667, %v4659
        %v4678 = vsel %vm3516, %v4669, %v4661
        %v4679 = vsel %vm3516, %v4671, %v4663
        %v4680 = vmul.f32 %v4676, %v281
        %v4681 = vmul.f32 %v4672, %v282
        %v4682 = vmul.f32 %v4677, %v281
        %v4683 = vmul.f32 %v4673, %v282
        %v4684 = vmul.f32 %v4678, %v281
        %v4685 = vmul.f32 %v4674, %v282
        %v4686 = vmul.f32 %v4679, %v281
        %v4687 = vmul.f32 %v4675, %v282
        %4688 = vset.pattern.permute.xlu0 19
        %4689 = vperm.xlu0 %4688, %v3378
        %v4690 = vpop.permute.xlu0 %4689
        %4692 = vset.pattern.permute.xlu0 19
        %4693 = vperm.xlu0 %4692, %v3379
        %v4694 = vpop.permute.xlu0 %4693
        %4696 = vset.pattern.permute.xlu0 19
        %4697 = vperm.xlu0 %4696, %v3380
        %v4698 = vpop.permute.xlu0 %4697
        %4700 = vset.pattern.permute.xlu0 19
        %4701 = vperm.xlu0 %4700, %v3381
        %v4702 = vpop.permute.xlu0 %4701
        %v4704 = vmul.f32 %v4680, %v4690
        %v4705 = vmul.f32 %v4681, %v4690
        %v4706 = vmul.f32 %v4682, %v4694
        %v4707 = vmul.f32 %v4683, %v4694
        %v4708 = vmul.f32 %v4684, %v4698
        %v4709 = vmul.f32 %v4685, %v4698
        %v4710 = vmul.f32 %v4686, %v4702
        %v4711 = vmul.f32 %v4687, %v4702
        %v4712 = vadd.f32 %v4648, %v4704
        %v4713 = vadd.f32 %v4649, %v4705
        %v4714 = vadd.f32 %v4650, %v4706
        %v4715 = vadd.f32 %v4651, %v4707
        %v4716 = vadd.f32 %v4652, %v4708
        %v4717 = vadd.f32 %v4653, %v4709
        %v4718 = vadd.f32 %v4654, %v4710
        %v4719 = vadd.f32 %v4655, %v4711
        %4720 = vrot.lane.b32.xlu0 %v4584, 2
        %v4721 = vpop.permute.xlu0 %4720
        %4722 = vrot.lane.b32.xlu0 %v4586, 2
        %v4723 = vpop.permute.xlu0 %4722
        %4724 = vrot.lane.b32.xlu0 %v4588, 2
        %v4725 = vpop.permute.xlu0 %4724
        %4726 = vrot.lane.b32.xlu0 %v4590, 2
        %v4727 = vpop.permute.xlu0 %4726
        %4728 = vrot.lane.b32.xlu0 %v4585, 2
        %v4729 = vpop.permute.xlu0 %4728
        %4730 = vrot.lane.b32.xlu0 %v4587, 2
        %v4731 = vpop.permute.xlu0 %4730
        %4732 = vrot.lane.b32.xlu0 %v4589, 2
        %v4733 = vpop.permute.xlu0 %4732
        %4734 = vrot.lane.b32.xlu0 %v4591, 2
        %v4735 = vpop.permute.xlu0 %4734
        %v4736 = vsel %vm442, %v4721, %v4729
        %v4737 = vsel %vm442, %v4723, %v4731
        %v4738 = vsel %vm442, %v4725, %v4733
        %v4739 = vsel %vm442, %v4727, %v4735
        %v4740 = vsel %vm442, %v4729, %v4721
        %v4741 = vsel %vm442, %v4731, %v4723
        %v4742 = vsel %vm442, %v4733, %v4725
        %v4743 = vsel %vm442, %v4735, %v4727
        %v4744 = vmul.f32 %v4740, %v305
        %v4745 = vmul.f32 %v4736, %v306
        %v4746 = vmul.f32 %v4741, %v305
        %v4747 = vmul.f32 %v4737, %v306
        %v4748 = vmul.f32 %v4742, %v305
        %v4749 = vmul.f32 %v4738, %v306
        %v4750 = vmul.f32 %v4743, %v305
        %v4751 = vmul.f32 %v4739, %v306
        %4752 = vset.pattern.permute.xlu0 20
        %4753 = vperm.xlu0 %4752, %v3378
        %v4754 = vpop.permute.xlu0 %4753
        %4756 = vset.pattern.permute.xlu0 20
        %4757 = vperm.xlu0 %4756, %v3379
        %v4758 = vpop.permute.xlu0 %4757
        %4760 = vset.pattern.permute.xlu0 20
        %4761 = vperm.xlu0 %4760, %v3380
        %v4762 = vpop.permute.xlu0 %4761
        %4764 = vset.pattern.permute.xlu0 20
        %4765 = vperm.xlu0 %4764, %v3381
        %v4766 = vpop.permute.xlu0 %4765
        %v4768 = vmul.f32 %v4744, %v4754
        %v4769 = vmul.f32 %v4745, %v4754
        %v4770 = vmul.f32 %v4746, %v4758
        %v4771 = vmul.f32 %v4747, %v4758
        %v4772 = vmul.f32 %v4748, %v4762
        %v4773 = vmul.f32 %v4749, %v4762
        %v4774 = vmul.f32 %v4750, %v4766
        %v4775 = vmul.f32 %v4751, %v4766
        %v4776 = vadd.f32 %v4712, %v4768
        %v4777 = vadd.f32 %v4713, %v4769
        %v4778 = vadd.f32 %v4714, %v4770
        %v4779 = vadd.f32 %v4715, %v4771
        %v4780 = vadd.f32 %v4716, %v4772
        %v4781 = vadd.f32 %v4717, %v4773
        %v4782 = vadd.f32 %v4718, %v4774
        %v4783 = vadd.f32 %v4719, %v4775
        %4784 = vrot.lane.b32.xlu0 %v4584, 1
        %v4785 = vpop.permute.xlu0 %4784
        %4786 = vrot.lane.b32.xlu0 %v4586, 1
        %v4787 = vpop.permute.xlu0 %4786
        %4788 = vrot.lane.b32.xlu0 %v4588, 1
        %v4789 = vpop.permute.xlu0 %4788
        %4790 = vrot.lane.b32.xlu0 %v4590, 1
        %v4791 = vpop.permute.xlu0 %4790
        %4792 = vrot.lane.b32.xlu0 %v4585, 1
        %v4793 = vpop.permute.xlu0 %4792
        %4794 = vrot.lane.b32.xlu0 %v4587, 1
        %v4795 = vpop.permute.xlu0 %4794
        %4796 = vrot.lane.b32.xlu0 %v4589, 1
        %v4797 = vpop.permute.xlu0 %4796
        %4798 = vrot.lane.b32.xlu0 %v4591, 1
        %v4799 = vpop.permute.xlu0 %4798
        %v4800 = vsel %vm453, %v4785, %v4793
        %v4801 = vsel %vm453, %v4787, %v4795
        %v4802 = vsel %vm453, %v4789, %v4797
        %v4803 = vsel %vm453, %v4791, %v4799
        %v4804 = vsel %vm453, %v4793, %v4785
        %v4805 = vsel %vm453, %v4795, %v4787
        %v4806 = vsel %vm453, %v4797, %v4789
        %v4807 = vsel %vm453, %v4799, %v4791
        %v4808 = vmul.f32 %v4804, %v329
        %v4809 = vmul.f32 %v4800, %v330
        %v4810 = vmul.f32 %v4805, %v329
        %v4811 = vmul.f32 %v4801, %v330
        %v4812 = vmul.f32 %v4806, %v329
        %v4813 = vmul.f32 %v4802, %v330
        %v4814 = vmul.f32 %v4807, %v329
        %v4815 = vmul.f32 %v4803, %v330
        %4816 = vset.pattern.permute.xlu0 21
        %4817 = vperm.xlu0 %4816, %v3378
        %v4818 = vpop.permute.xlu0 %4817
        %4820 = vset.pattern.permute.xlu0 21
        %4821 = vperm.xlu0 %4820, %v3379
        %v4822 = vpop.permute.xlu0 %4821
        %4824 = vset.pattern.permute.xlu0 21
        %4825 = vperm.xlu0 %4824, %v3380
        %v4826 = vpop.permute.xlu0 %4825
        %4828 = vset.pattern.permute.xlu0 21
        %4829 = vperm.xlu0 %4828, %v3381
        %v4830 = vpop.permute.xlu0 %4829
        %v4832 = vmul.f32 %v4808, %v4818
        %v4833 = vmul.f32 %v4809, %v4818
        %v4834 = vmul.f32 %v4810, %v4822
        %v4835 = vmul.f32 %v4811, %v4822
        %v4836 = vmul.f32 %v4812, %v4826
        %v4837 = vmul.f32 %v4813, %v4826
        %v4838 = vmul.f32 %v4814, %v4830
        %v4839 = vmul.f32 %v4815, %v4830
        %v4840 = vadd.f32 %v4776, %v4832
        %v4841 = vadd.f32 %v4777, %v4833
        %v4842 = vadd.f32 %v4778, %v4834
        %v4843 = vadd.f32 %v4779, %v4835
        %v4844 = vadd.f32 %v4780, %v4836
        %v4845 = vadd.f32 %v4781, %v4837
        %v4846 = vadd.f32 %v4782, %v4838
        %v4847 = vadd.f32 %v4783, %v4839
        %4848 = vset.pattern.permute.xlu0 22
        %4849 = vperm.xlu0 %4848, %v3378
        %v4850 = vpop.permute.xlu0 %4849
        %4852 = vset.pattern.permute.xlu0 22
        %4853 = vperm.xlu0 %4852, %v3379
        %v4854 = vpop.permute.xlu0 %4853
        %4856 = vset.pattern.permute.xlu0 22
        %4857 = vperm.xlu0 %4856, %v3380
        %v4858 = vpop.permute.xlu0 %4857
        %4860 = vset.pattern.permute.xlu0 22
        %4861 = vperm.xlu0 %4860, %v3381
        %v4862 = vpop.permute.xlu0 %4861
        %v4864 = vmul.f32 %v4584, %v4850
        %v4865 = vmul.f32 %v4585, %v4850
        %v4866 = vmul.f32 %v4586, %v4854
        %v4867 = vmul.f32 %v4587, %v4854
        %v4868 = vmul.f32 %v4588, %v4858
        %v4869 = vmul.f32 %v4589, %v4858
        %v4870 = vmul.f32 %v4590, %v4862
        %v4871 = vmul.f32 %v4591, %v4862
        %v4872 = vadd.f32 %v4840, %v4864
        %v4873 = vadd.f32 %v4841, %v4865
        %v4874 = vadd.f32 %v4842, %v4866
        %v4875 = vadd.f32 %v4843, %v4867
        %v4876 = vadd.f32 %v4844, %v4868
        %v4877 = vadd.f32 %v4845, %v4869
        %v4878 = vadd.f32 %v4846, %v4870
        %v4879 = vadd.f32 %v4847, %v4871
        %4880 = vrot.lane.b32.xlu0 %v4584, 127
        %v4881 = vpop.permute.xlu0 %4880
        %4882 = vrot.lane.b32.xlu0 %v4586, 127
        %v4883 = vpop.permute.xlu0 %4882
        %4884 = vrot.lane.b32.xlu0 %v4588, 127
        %v4885 = vpop.permute.xlu0 %4884
        %4886 = vrot.lane.b32.xlu0 %v4590, 127
        %v4887 = vpop.permute.xlu0 %4886
        %4888 = vrot.lane.b32.xlu0 %v4585, 127
        %v4889 = vpop.permute.xlu0 %4888
        %4890 = vrot.lane.b32.xlu0 %v4587, 127
        %v4891 = vpop.permute.xlu0 %4890
        %4892 = vrot.lane.b32.xlu0 %v4589, 127
        %v4893 = vpop.permute.xlu0 %4892
        %4894 = vrot.lane.b32.xlu0 %v4591, 127
        %v4895 = vpop.permute.xlu0 %4894
        %v4896 = vsel %vm466, %v4881, %v4889
        %v4897 = vsel %vm466, %v4883, %v4891
        %v4898 = vsel %vm466, %v4885, %v4893
        %v4899 = vsel %vm466, %v4887, %v4895
        %v4900 = vsel %vm466, %v4889, %v4881
        %v4901 = vsel %vm466, %v4891, %v4883
        %v4902 = vsel %vm466, %v4893, %v4885
        %v4903 = vsel %vm466, %v4895, %v4887
        %v4904 = vmul.f32 %v4896, %v353
        %v4905 = vmul.f32 %v4900, %v354
        %v4906 = vmul.f32 %v4897, %v353
        %v4907 = vmul.f32 %v4901, %v354
        %v4908 = vmul.f32 %v4898, %v353
        %v4909 = vmul.f32 %v4902, %v354
        %v4910 = vmul.f32 %v4899, %v353
        %v4911 = vmul.f32 %v4903, %v354
        %4912 = vset.pattern.permute.xlu0 23
        %4913 = vperm.xlu0 %4912, %v3378
        %v4914 = vpop.permute.xlu0 %4913
        %4916 = vset.pattern.permute.xlu0 23
        %4917 = vperm.xlu0 %4916, %v3379
        %v4918 = vpop.permute.xlu0 %4917
        %4920 = vset.pattern.permute.xlu0 23
        %4921 = vperm.xlu0 %4920, %v3380
        %v4922 = vpop.permute.xlu0 %4921
        %4924 = vset.pattern.permute.xlu0 23
        %4925 = vperm.xlu0 %4924, %v3381
        %v4926 = vpop.permute.xlu0 %4925
        %v4928 = vmul.f32 %v4904, %v4914
        %v4929 = vmul.f32 %v4905, %v4914
        %v4930 = vmul.f32 %v4906, %v4918
        %v4931 = vmul.f32 %v4907, %v4918
        %v4932 = vmul.f32 %v4908, %v4922
        %v4933 = vmul.f32 %v4909, %v4922
        %v4934 = vmul.f32 %v4910, %v4926
        %v4935 = vmul.f32 %v4911, %v4926
        %v4936 = vadd.f32 %v4872, %v4928
        %v4937 = vadd.f32 %v4873, %v4929
        %v4938 = vadd.f32 %v4874, %v4930
        %v4939 = vadd.f32 %v4875, %v4931
        %v4940 = vadd.f32 %v4876, %v4932
        %v4941 = vadd.f32 %v4877, %v4933
        %v4942 = vadd.f32 %v4878, %v4934
        %v4943 = vadd.f32 %v4879, %v4935
        %4944 = vrot.lane.b32.xlu0 %v4584, 126
        %v4945 = vpop.permute.xlu0 %4944
        %4946 = vrot.lane.b32.xlu0 %v4586, 126
        %v4947 = vpop.permute.xlu0 %4946
        %4948 = vrot.lane.b32.xlu0 %v4588, 126
        %v4949 = vpop.permute.xlu0 %4948
        %4950 = vrot.lane.b32.xlu0 %v4590, 126
        %v4951 = vpop.permute.xlu0 %4950
        %4952 = vrot.lane.b32.xlu0 %v4585, 126
        %v4953 = vpop.permute.xlu0 %4952
        %4954 = vrot.lane.b32.xlu0 %v4587, 126
        %v4955 = vpop.permute.xlu0 %4954
        %4956 = vrot.lane.b32.xlu0 %v4589, 126
        %v4957 = vpop.permute.xlu0 %4956
        %4958 = vrot.lane.b32.xlu0 %v4591, 126
        %v4959 = vpop.permute.xlu0 %4958
        %v4960 = vsel %vm477, %v4945, %v4953
        %v4961 = vsel %vm477, %v4947, %v4955
        %v4962 = vsel %vm477, %v4949, %v4957
        %v4963 = vsel %vm477, %v4951, %v4959
        %v4964 = vsel %vm477, %v4953, %v4945
        %v4965 = vsel %vm477, %v4955, %v4947
        %v4966 = vsel %vm477, %v4957, %v4949
        %v4967 = vsel %vm477, %v4959, %v4951
        %v4968 = vmul.f32 %v4960, %v377
        %v4969 = vmul.f32 %v4964, %v378
        %v4970 = vmul.f32 %v4961, %v377
        %v4971 = vmul.f32 %v4965, %v378
        %v4972 = vmul.f32 %v4962, %v377
        %v4973 = vmul.f32 %v4966, %v378
        %v4974 = vmul.f32 %v4963, %v377
        %v4975 = vmul.f32 %v4967, %v378
        %4976 = vset.pattern.permute.xlu0 24
        %4977 = vperm.xlu0 %4976, %v3378
        %v4978 = vpop.permute.xlu0 %4977
        %4980 = vset.pattern.permute.xlu0 24
        %4981 = vperm.xlu0 %4980, %v3379
        %v4982 = vpop.permute.xlu0 %4981
        %4984 = vset.pattern.permute.xlu0 24
        %4985 = vperm.xlu0 %4984, %v3380
        %v4986 = vpop.permute.xlu0 %4985
        %4988 = vset.pattern.permute.xlu0 24
        %4989 = vperm.xlu0 %4988, %v3381
        %v4990 = vpop.permute.xlu0 %4989
        %v4992 = vmul.f32 %v4968, %v4978
        %v4993 = vmul.f32 %v4969, %v4978
        %v4994 = vmul.f32 %v4970, %v4982
        %v4995 = vmul.f32 %v4971, %v4982
        %v4996 = vmul.f32 %v4972, %v4986
        %v4997 = vmul.f32 %v4973, %v4986
        %v4998 = vmul.f32 %v4974, %v4990
        %v4999 = vmul.f32 %v4975, %v4990
        %v5000 = vadd.f32 %v4936, %v4992
        %v5001 = vadd.f32 %v4937, %v4993
        %v5002 = vadd.f32 %v4938, %v4994
        %v5003 = vadd.f32 %v4939, %v4995
        %v5004 = vadd.f32 %v4940, %v4996
        %v5005 = vadd.f32 %v4941, %v4997
        %v5006 = vadd.f32 %v4942, %v4998
        %v5007 = vadd.f32 %v4943, %v4999
        %5008 = vrot.lane.b32.xlu0 %v4584, 125
        %v5009 = vpop.permute.xlu0 %5008
        %5010 = vrot.lane.b32.xlu0 %v4586, 125
        %v5011 = vpop.permute.xlu0 %5010
        %5012 = vrot.lane.b32.xlu0 %v4588, 125
        %v5013 = vpop.permute.xlu0 %5012
        %5014 = vrot.lane.b32.xlu0 %v4590, 125
        %v5015 = vpop.permute.xlu0 %5014
        %5016 = vrot.lane.b32.xlu0 %v4585, 125
        %v5017 = vpop.permute.xlu0 %5016
        %5018 = vrot.lane.b32.xlu0 %v4587, 125
        %v5019 = vpop.permute.xlu0 %5018
        %5020 = vrot.lane.b32.xlu0 %v4589, 125
        %v5021 = vpop.permute.xlu0 %5020
        %5022 = vrot.lane.b32.xlu0 %v4591, 125
        %v5023 = vpop.permute.xlu0 %5022
        %v5024 = vsel %vm3869, %v5009, %v5017
        %v5025 = vsel %vm3869, %v5011, %v5019
        %v5026 = vsel %vm3869, %v5013, %v5021
        %v5027 = vsel %vm3869, %v5015, %v5023
        %v5028 = vsel %vm3869, %v5017, %v5009
        %v5029 = vsel %vm3869, %v5019, %v5011
        %v5030 = vsel %vm3869, %v5021, %v5013
        %v5031 = vsel %vm3869, %v5023, %v5015
        %v5032 = vmul.f32 %v5024, %v401
        %v5033 = vmul.f32 %v5028, %v402
        %v5034 = vmul.f32 %v5025, %v401
        %v5035 = vmul.f32 %v5029, %v402
        %v5036 = vmul.f32 %v5026, %v401
        %v5037 = vmul.f32 %v5030, %v402
        %v5038 = vmul.f32 %v5027, %v401
        %v5039 = vmul.f32 %v5031, %v402
        %5040 = vset.pattern.permute.xlu0 25
        %5041 = vperm.xlu0 %5040, %v3378
        %v5042 = vpop.permute.xlu0 %5041
        %5044 = vset.pattern.permute.xlu0 25
        %5045 = vperm.xlu0 %5044, %v3379
        %v5046 = vpop.permute.xlu0 %5045
        %5048 = vset.pattern.permute.xlu0 25
        %5049 = vperm.xlu0 %5048, %v3380
        %v5050 = vpop.permute.xlu0 %5049
        %5052 = vset.pattern.permute.xlu0 25
        %5053 = vperm.xlu0 %5052, %v3381
        %v5054 = vpop.permute.xlu0 %5053
        %v5056 = vmul.f32 %v5032, %v5042
        %v5057 = vmul.f32 %v5033, %v5042
        %v5058 = vmul.f32 %v5034, %v5046
        %v5059 = vmul.f32 %v5035, %v5046
        %v5060 = vmul.f32 %v5036, %v5050
        %v5061 = vmul.f32 %v5037, %v5050
        %v5062 = vmul.f32 %v5038, %v5054
        %v5063 = vmul.f32 %v5039, %v5054
        %v5064 = vadd.f32 %v5000, %v5056
        %v5065 = vadd.f32 %v5001, %v5057
        %v5066 = vadd.f32 %v5002, %v5058
        %v5067 = vadd.f32 %v5003, %v5059
        %v5068 = vadd.f32 %v5004, %v5060
        %v5069 = vadd.f32 %v5005, %v5061
        %v5070 = vadd.f32 %v5006, %v5062
        %v5071 = vadd.f32 %v5007, %v5063
        %5072 = vrot.lane.b32.xlu0 %v4584, 124
        %v5073 = vpop.permute.xlu0 %5072
        %5074 = vrot.lane.b32.xlu0 %v4586, 124
        %v5075 = vpop.permute.xlu0 %5074
        %5076 = vrot.lane.b32.xlu0 %v4588, 124
        %v5077 = vpop.permute.xlu0 %5076
        %5078 = vrot.lane.b32.xlu0 %v4590, 124
        %v5079 = vpop.permute.xlu0 %5078
        %5080 = vrot.lane.b32.xlu0 %v4585, 124
        %v5081 = vpop.permute.xlu0 %5080
        %5082 = vrot.lane.b32.xlu0 %v4587, 124
        %v5083 = vpop.permute.xlu0 %5082
        %5084 = vrot.lane.b32.xlu0 %v4589, 124
        %v5085 = vpop.permute.xlu0 %5084
        %5086 = vrot.lane.b32.xlu0 %v4591, 124
        %v5087 = vpop.permute.xlu0 %5086
        %v5088 = vsel %vm3934, %v5073, %v5081
        %v5089 = vsel %vm3934, %v5075, %v5083
        %v5090 = vsel %vm3934, %v5077, %v5085
        %v5091 = vsel %vm3934, %v5079, %v5087
        %v5092 = vsel %vm3934, %v5081, %v5073
        %v5093 = vsel %vm3934, %v5083, %v5075
        %v5094 = vsel %vm3934, %v5085, %v5077
        %v5095 = vsel %vm3934, %v5087, %v5079
        %v5096 = vmul.f32 %v5088, %v425
        %v5097 = vmul.f32 %v5092, %v426
        %v5098 = vmul.f32 %v5089, %v425
        %v5099 = vmul.f32 %v5093, %v426
        %v5100 = vmul.f32 %v5090, %v425
        %v5101 = vmul.f32 %v5094, %v426
        %v5102 = vmul.f32 %v5091, %v425
        %v5103 = vmul.f32 %v5095, %v426
        %5104 = vset.pattern.permute.xlu0 26
        %5105 = vperm.xlu0 %5104, %v3378
        %v5106 = vpop.permute.xlu0 %5105
        %5108 = vset.pattern.permute.xlu0 26
        %5109 = vperm.xlu0 %5108, %v3379
        %v5110 = vpop.permute.xlu0 %5109
        %5112 = vset.pattern.permute.xlu0 26
        %5113 = vperm.xlu0 %5112, %v3380
        %v5114 = vpop.permute.xlu0 %5113
        %5116 = vset.pattern.permute.xlu0 26
        %5117 = vperm.xlu0 %5116, %v3381
        %v5118 = vpop.permute.xlu0 %5117
        %v5120 = vmul.f32 %v5096, %v5106
        %v5121 = vmul.f32 %v5097, %v5106
        %v5122 = vmul.f32 %v5098, %v5110
        %v5123 = vmul.f32 %v5099, %v5110
        %v5124 = vmul.f32 %v5100, %v5114
        %v5125 = vmul.f32 %v5101, %v5114
        %v5126 = vmul.f32 %v5102, %v5118
        %v5127 = vmul.f32 %v5103, %v5118
        %v5128 = vadd.f32 %v5064, %v5120
        %v5129 = vadd.f32 %v5065, %v5121
        %v5130 = vadd.f32 %v5066, %v5122
        %v5131 = vadd.f32 %v5067, %v5123
        %v5132 = vadd.f32 %v5068, %v5124
        %v5133 = vadd.f32 %v5069, %v5125
        %v5134 = vadd.f32 %v5070, %v5126
        %v5135 = vadd.f32 %v5071, %v5127
        %5136 = vrot.lane.b32.xlu0 %v3370, 16
        %v5137 = vpop.permute.xlu0 %5136
        %5138 = vrot.lane.b32.xlu0 %v3372, 16
        %v5139 = vpop.permute.xlu0 %5138
        %5140 = vrot.lane.b32.xlu0 %v3374, 16
        %v5141 = vpop.permute.xlu0 %5140
        %5142 = vrot.lane.b32.xlu0 %v3376, 16
        %v5143 = vpop.permute.xlu0 %5142
        %5144 = vrot.lane.b32.xlu0 %v3371, 16
        %v5145 = vpop.permute.xlu0 %5144
        %5146 = vrot.lane.b32.xlu0 %v3373, 16
        %v5147 = vpop.permute.xlu0 %5146
        %5148 = vrot.lane.b32.xlu0 %v3375, 16
        %v5149 = vpop.permute.xlu0 %5148
        %5150 = vrot.lane.b32.xlu0 %v3377, 16
        %v5151 = vpop.permute.xlu0 %5150
        %v5152 = vsel %vm488, %v5137, %v5145
        %v5153 = vsel %vm488, %v5139, %v5147
        %v5154 = vsel %vm488, %v5141, %v5149
        %v5155 = vsel %vm488, %v5143, %v5151
        %v5156 = vsel %vm488, %v5145, %v5137
        %v5157 = vsel %vm488, %v5147, %v5139
        %v5158 = vsel %vm488, %v5149, %v5141
        %v5159 = vsel %vm488, %v5151, %v5143
        %v5160 = vmul.f32 %v5156, %v317
        %v5161 = vmul.f32 %v5152, %v318
        %v5162 = vmul.f32 %v5157, %v317
        %v5163 = vmul.f32 %v5153, %v318
        %v5164 = vmul.f32 %v5158, %v317
        %v5165 = vmul.f32 %v5154, %v318
        %v5166 = vmul.f32 %v5159, %v317
        %v5167 = vmul.f32 %v5155, %v318
        %5168 = vrot.lane.b32.xlu0 %v5160, 4
        %v5169 = vpop.permute.xlu0 %5168
        %5170 = vrot.lane.b32.xlu0 %v5162, 4
        %v5171 = vpop.permute.xlu0 %5170
        %5172 = vrot.lane.b32.xlu0 %v5164, 4
        %v5173 = vpop.permute.xlu0 %5172
        %5174 = vrot.lane.b32.xlu0 %v5166, 4
        %v5175 = vpop.permute.xlu0 %5174
        %5176 = vrot.lane.b32.xlu0 %v5161, 4
        %v5177 = vpop.permute.xlu0 %5176
        %5178 = vrot.lane.b32.xlu0 %v5163, 4
        %v5179 = vpop.permute.xlu0 %5178
        %5180 = vrot.lane.b32.xlu0 %v5165, 4
        %v5181 = vpop.permute.xlu0 %5180
        %5182 = vrot.lane.b32.xlu0 %v5167, 4
        %v5183 = vpop.permute.xlu0 %5182
        %v5184 = vsel %vm3447, %v5169, %v5177
        %v5185 = vsel %vm3447, %v5171, %v5179
        %v5186 = vsel %vm3447, %v5173, %v5181
        %v5187 = vsel %vm3447, %v5175, %v5183
        %v5188 = vsel %vm3447, %v5177, %v5169
        %v5189 = vsel %vm3447, %v5179, %v5171
        %v5190 = vsel %vm3447, %v5181, %v5173
        %v5191 = vsel %vm3447, %v5183, %v5175
        %v5192 = vmul.f32 %v5188, %v257
        %v5193 = vmul.f32 %v5184, %v258
        %v5194 = vmul.f32 %v5189, %v257
        %v5195 = vmul.f32 %v5185, %v258
        %v5196 = vmul.f32 %v5190, %v257
        %v5197 = vmul.f32 %v5186, %v258
        %v5198 = vmul.f32 %v5191, %v257
        %v5199 = vmul.f32 %v5187, %v258
        %5200 = vset.pattern.permute.xlu0 27
        %5201 = vperm.xlu0 %5200, %v3378
        %v5202 = vpop.permute.xlu0 %5201
        %5204 = vset.pattern.permute.xlu0 27
        %5205 = vperm.xlu0 %5204, %v3379
        %v5206 = vpop.permute.xlu0 %5205
        %5208 = vset.pattern.permute.xlu0 27
        %5209 = vperm.xlu0 %5208, %v3380
        %v5210 = vpop.permute.xlu0 %5209
        %5212 = vset.pattern.permute.xlu0 27
        %5213 = vperm.xlu0 %5212, %v3381
        %v5214 = vpop.permute.xlu0 %5213
        %v5216 = vmul.f32 %v5192, %v5202
        %v5217 = vmul.f32 %v5193, %v5202
        %v5218 = vmul.f32 %v5194, %v5206
        %v5219 = vmul.f32 %v5195, %v5206
        %v5220 = vmul.f32 %v5196, %v5210
        %v5221 = vmul.f32 %v5197, %v5210
        %v5222 = vmul.f32 %v5198, %v5214
        %v5223 = vmul.f32 %v5199, %v5214
        %v5224 = vadd.f32 %v5128, %v5216
        %v5225 = vadd.f32 %v5129, %v5217
        %v5226 = vadd.f32 %v5130, %v5218
        %v5227 = vadd.f32 %v5131, %v5219
        %v5228 = vadd.f32 %v5132, %v5220
        %v5229 = vadd.f32 %v5133, %v5221
        %v5230 = vadd.f32 %v5134, %v5222
        %v5231 = vadd.f32 %v5135, %v5223
        %5232 = vrot.lane.b32.xlu0 %v5160, 3
        %v5233 = vpop.permute.xlu0 %5232
        %5234 = vrot.lane.b32.xlu0 %v5162, 3
        %v5235 = vpop.permute.xlu0 %5234
        %5236 = vrot.lane.b32.xlu0 %v5164, 3
        %v5237 = vpop.permute.xlu0 %5236
        %5238 = vrot.lane.b32.xlu0 %v5166, 3
        %v5239 = vpop.permute.xlu0 %5238
        %5240 = vrot.lane.b32.xlu0 %v5161, 3
        %v5241 = vpop.permute.xlu0 %5240
        %5242 = vrot.lane.b32.xlu0 %v5163, 3
        %v5243 = vpop.permute.xlu0 %5242
        %5244 = vrot.lane.b32.xlu0 %v5165, 3
        %v5245 = vpop.permute.xlu0 %5244
        %5246 = vrot.lane.b32.xlu0 %v5167, 3
        %v5247 = vpop.permute.xlu0 %5246
        %v5248 = vsel %vm3516, %v5233, %v5241
        %v5249 = vsel %vm3516, %v5235, %v5243
        %v5250 = vsel %vm3516, %v5237, %v5245
        %v5251 = vsel %vm3516, %v5239, %v5247
        %v5252 = vsel %vm3516, %v5241, %v5233
        %v5253 = vsel %vm3516, %v5243, %v5235
        %v5254 = vsel %vm3516, %v5245, %v5237
        %v5255 = vsel %vm3516, %v5247, %v5239
        %v5256 = vmul.f32 %v5252, %v281
        %v5257 = vmul.f32 %v5248, %v282
        %v5258 = vmul.f32 %v5253, %v281
        %v5259 = vmul.f32 %v5249, %v282
        %v5260 = vmul.f32 %v5254, %v281
        %v5261 = vmul.f32 %v5250, %v282
        %v5262 = vmul.f32 %v5255, %v281
        %v5263 = vmul.f32 %v5251, %v282
        %5264 = vset.pattern.permute.xlu0 28
        %5265 = vperm.xlu0 %5264, %v3378
        %v5266 = vpop.permute.xlu0 %5265
        %5268 = vset.pattern.permute.xlu0 28
        %5269 = vperm.xlu0 %5268, %v3379
        %v5270 = vpop.permute.xlu0 %5269
        %5272 = vset.pattern.permute.xlu0 28
        %5273 = vperm.xlu0 %5272, %v3380
        %v5274 = vpop.permute.xlu0 %5273
        %5276 = vset.pattern.permute.xlu0 28
        %5277 = vperm.xlu0 %5276, %v3381
        %v5278 = vpop.permute.xlu0 %5277
        %v5280 = vmul.f32 %v5256, %v5266
        %v5281 = vmul.f32 %v5257, %v5266
        %v5282 = vmul.f32 %v5258, %v5270
        %v5283 = vmul.f32 %v5259, %v5270
        %v5284 = vmul.f32 %v5260, %v5274
        %v5285 = vmul.f32 %v5261, %v5274
        %v5286 = vmul.f32 %v5262, %v5278
        %v5287 = vmul.f32 %v5263, %v5278
        %v5288 = vadd.f32 %v5224, %v5280
        %v5289 = vadd.f32 %v5225, %v5281
        %v5290 = vadd.f32 %v5226, %v5282
        %v5291 = vadd.f32 %v5227, %v5283
        %v5292 = vadd.f32 %v5228, %v5284
        %v5293 = vadd.f32 %v5229, %v5285
        %v5294 = vadd.f32 %v5230, %v5286
        %v5295 = vadd.f32 %v5231, %v5287
        %5296 = vrot.lane.b32.xlu0 %v5160, 2
        %v5297 = vpop.permute.xlu0 %5296
        %5298 = vrot.lane.b32.xlu0 %v5162, 2
        %v5299 = vpop.permute.xlu0 %5298
        %5300 = vrot.lane.b32.xlu0 %v5164, 2
        %v5301 = vpop.permute.xlu0 %5300
        %5302 = vrot.lane.b32.xlu0 %v5166, 2
        %v5303 = vpop.permute.xlu0 %5302
        %5304 = vrot.lane.b32.xlu0 %v5161, 2
        %v5305 = vpop.permute.xlu0 %5304
        %5306 = vrot.lane.b32.xlu0 %v5163, 2
        %v5307 = vpop.permute.xlu0 %5306
        %5308 = vrot.lane.b32.xlu0 %v5165, 2
        %v5309 = vpop.permute.xlu0 %5308
        %5310 = vrot.lane.b32.xlu0 %v5167, 2
        %v5311 = vpop.permute.xlu0 %5310
        %v5312 = vsel %vm442, %v5297, %v5305
        %v5313 = vsel %vm442, %v5299, %v5307
        %v5314 = vsel %vm442, %v5301, %v5309
        %v5315 = vsel %vm442, %v5303, %v5311
        %v5316 = vsel %vm442, %v5305, %v5297
        %v5317 = vsel %vm442, %v5307, %v5299
        %v5318 = vsel %vm442, %v5309, %v5301
        %v5319 = vsel %vm442, %v5311, %v5303
        %v5320 = vmul.f32 %v5316, %v305
        %v5321 = vmul.f32 %v5312, %v306
        %v5322 = vmul.f32 %v5317, %v305
        %v5323 = vmul.f32 %v5313, %v306
        %v5324 = vmul.f32 %v5318, %v305
        %v5325 = vmul.f32 %v5314, %v306
        %v5326 = vmul.f32 %v5319, %v305
        %v5327 = vmul.f32 %v5315, %v306
        %5328 = vset.pattern.permute.xlu0 29
        %5329 = vperm.xlu0 %5328, %v3378
        %v5330 = vpop.permute.xlu0 %5329
        %5332 = vset.pattern.permute.xlu0 29
        %5333 = vperm.xlu0 %5332, %v3379
        %v5334 = vpop.permute.xlu0 %5333
        %5336 = vset.pattern.permute.xlu0 29
        %5337 = vperm.xlu0 %5336, %v3380
        %v5338 = vpop.permute.xlu0 %5337
        %5340 = vset.pattern.permute.xlu0 29
        %5341 = vperm.xlu0 %5340, %v3381
        %v5342 = vpop.permute.xlu0 %5341
        %v5344 = vmul.f32 %v5320, %v5330
        %v5345 = vmul.f32 %v5321, %v5330
        %v5346 = vmul.f32 %v5322, %v5334
        %v5347 = vmul.f32 %v5323, %v5334
        %v5348 = vmul.f32 %v5324, %v5338
        %v5349 = vmul.f32 %v5325, %v5338
        %v5350 = vmul.f32 %v5326, %v5342
        %v5351 = vmul.f32 %v5327, %v5342
        %v5352 = vadd.f32 %v5288, %v5344
        %v5353 = vadd.f32 %v5289, %v5345
        %v5354 = vadd.f32 %v5290, %v5346
        %v5355 = vadd.f32 %v5291, %v5347
        %v5356 = vadd.f32 %v5292, %v5348
        %v5357 = vadd.f32 %v5293, %v5349
        %v5358 = vadd.f32 %v5294, %v5350
        %v5359 = vadd.f32 %v5295, %v5351
        %5360 = vrot.lane.b32.xlu0 %v5160, 1
        %v5361 = vpop.permute.xlu0 %5360
        %5362 = vrot.lane.b32.xlu0 %v5162, 1
        %v5363 = vpop.permute.xlu0 %5362
        %5364 = vrot.lane.b32.xlu0 %v5164, 1
        %v5365 = vpop.permute.xlu0 %5364
        %5366 = vrot.lane.b32.xlu0 %v5166, 1
        %v5367 = vpop.permute.xlu0 %5366
        %5368 = vrot.lane.b32.xlu0 %v5161, 1
        %v5369 = vpop.permute.xlu0 %5368
        %5370 = vrot.lane.b32.xlu0 %v5163, 1
        %v5371 = vpop.permute.xlu0 %5370
        %5372 = vrot.lane.b32.xlu0 %v5165, 1
        %v5373 = vpop.permute.xlu0 %5372
        %5374 = vrot.lane.b32.xlu0 %v5167, 1
        %v5375 = vpop.permute.xlu0 %5374
        %v5376 = vsel %vm453, %v5361, %v5369
        %v5377 = vsel %vm453, %v5363, %v5371
        %v5378 = vsel %vm453, %v5365, %v5373
        %v5379 = vsel %vm453, %v5367, %v5375
        %v5380 = vsel %vm453, %v5369, %v5361
        %v5381 = vsel %vm453, %v5371, %v5363
        %v5382 = vsel %vm453, %v5373, %v5365
        %v5383 = vsel %vm453, %v5375, %v5367
        %v5384 = vmul.f32 %v5380, %v329
        %v5385 = vmul.f32 %v5376, %v330
        %v5386 = vmul.f32 %v5381, %v329
        %v5387 = vmul.f32 %v5377, %v330
        %v5388 = vmul.f32 %v5382, %v329
        %v5389 = vmul.f32 %v5378, %v330
        %v5390 = vmul.f32 %v5383, %v329
        %v5391 = vmul.f32 %v5379, %v330
        %5392 = vset.pattern.permute.xlu0 30
        %5393 = vperm.xlu0 %5392, %v3378
        %v5394 = vpop.permute.xlu0 %5393
        %5396 = vset.pattern.permute.xlu0 30
        %5397 = vperm.xlu0 %5396, %v3379
        %v5398 = vpop.permute.xlu0 %5397
        %5400 = vset.pattern.permute.xlu0 30
        %5401 = vperm.xlu0 %5400, %v3380
        %v5402 = vpop.permute.xlu0 %5401
        %5404 = vset.pattern.permute.xlu0 30
        %5405 = vperm.xlu0 %5404, %v3381
        %v5406 = vpop.permute.xlu0 %5405
        %v5408 = vmul.f32 %v5384, %v5394
        %v5409 = vmul.f32 %v5385, %v5394
        %v5410 = vmul.f32 %v5386, %v5398
        %v5411 = vmul.f32 %v5387, %v5398
        %v5412 = vmul.f32 %v5388, %v5402
        %v5413 = vmul.f32 %v5389, %v5402
        %v5414 = vmul.f32 %v5390, %v5406
        %v5415 = vmul.f32 %v5391, %v5406
        %v5416 = vadd.f32 %v5352, %v5408
        %v5417 = vadd.f32 %v5353, %v5409
        %v5418 = vadd.f32 %v5354, %v5410
        %v5419 = vadd.f32 %v5355, %v5411
        %v5420 = vadd.f32 %v5356, %v5412
        %v5421 = vadd.f32 %v5357, %v5413
        %v5422 = vadd.f32 %v5358, %v5414
        %v5423 = vadd.f32 %v5359, %v5415
        %5424 = vset.pattern.permute.xlu0 31
        %5425 = vperm.xlu0 %5424, %v3378
        %v5426 = vpop.permute.xlu0 %5425
        %5428 = vset.pattern.permute.xlu0 31
        %5429 = vperm.xlu0 %5428, %v3379
        %v5430 = vpop.permute.xlu0 %5429
        %5432 = vset.pattern.permute.xlu0 31
        %5433 = vperm.xlu0 %5432, %v3380
        %v5434 = vpop.permute.xlu0 %5433
        %5436 = vset.pattern.permute.xlu0 31
        %5437 = vperm.xlu0 %5436, %v3381
        %v5438 = vpop.permute.xlu0 %5437
        %v5440 = vmul.f32 %v5160, %v5426
        %v5441 = vmul.f32 %v5161, %v5426
        %v5442 = vmul.f32 %v5162, %v5430
        %v5443 = vmul.f32 %v5163, %v5430
        %v5444 = vmul.f32 %v5164, %v5434
        %v5445 = vmul.f32 %v5165, %v5434
        %v5446 = vmul.f32 %v5166, %v5438
        %v5447 = vmul.f32 %v5167, %v5438
        %v5448 = vadd.f32 %v5416, %v5440
        %v5449 = vadd.f32 %v5417, %v5441
        %v5450 = vadd.f32 %v5418, %v5442
        %v5451 = vadd.f32 %v5419, %v5443
        %v5452 = vadd.f32 %v5420, %v5444
        %v5453 = vadd.f32 %v5421, %v5445
        %v5454 = vadd.f32 %v5422, %v5446
        %v5455 = vadd.f32 %v5423, %v5447
        %5456 = vrot.lane.b32.xlu0 %v5160, 127
        %v5457 = vpop.permute.xlu0 %5456
        %5458 = vrot.lane.b32.xlu0 %v5162, 127
        %v5459 = vpop.permute.xlu0 %5458
        %5460 = vrot.lane.b32.xlu0 %v5164, 127
        %v5461 = vpop.permute.xlu0 %5460
        %5462 = vrot.lane.b32.xlu0 %v5166, 127
        %v5463 = vpop.permute.xlu0 %5462
        %5464 = vrot.lane.b32.xlu0 %v5161, 127
        %v5465 = vpop.permute.xlu0 %5464
        %5466 = vrot.lane.b32.xlu0 %v5163, 127
        %v5467 = vpop.permute.xlu0 %5466
        %5468 = vrot.lane.b32.xlu0 %v5165, 127
        %v5469 = vpop.permute.xlu0 %5468
        %5470 = vrot.lane.b32.xlu0 %v5167, 127
        %v5471 = vpop.permute.xlu0 %5470
        %v5472 = vsel %vm466, %v5457, %v5465
        %v5473 = vsel %vm466, %v5459, %v5467
        %v5474 = vsel %vm466, %v5461, %v5469
        %v5475 = vsel %vm466, %v5463, %v5471
        %v5476 = vsel %vm466, %v5465, %v5457
        %v5477 = vsel %vm466, %v5467, %v5459
        %v5478 = vsel %vm466, %v5469, %v5461
        %v5479 = vsel %vm466, %v5471, %v5463
        %v5480 = vmul.f32 %v5472, %v353
        %v5481 = vmul.f32 %v5476, %v354
        %v5482 = vmul.f32 %v5473, %v353
        %v5483 = vmul.f32 %v5477, %v354
        %v5484 = vmul.f32 %v5474, %v353
        %v5485 = vmul.f32 %v5478, %v354
        %v5486 = vmul.f32 %v5475, %v353
        %v5487 = vmul.f32 %v5479, %v354
        %5488 = vset.pattern.permute.xlu0 32
        %5489 = vperm.xlu0 %5488, %v3378
        %v5490 = vpop.permute.xlu0 %5489
        %5492 = vset.pattern.permute.xlu0 32
        %5493 = vperm.xlu0 %5492, %v3379
        %v5494 = vpop.permute.xlu0 %5493
        %5496 = vset.pattern.permute.xlu0 32
        %5497 = vperm.xlu0 %5496, %v3380
        %v5498 = vpop.permute.xlu0 %5497
        %5500 = vset.pattern.permute.xlu0 32
        %5501 = vperm.xlu0 %5500, %v3381
        %v5502 = vpop.permute.xlu0 %5501
        %v5504 = vmul.f32 %v5480, %v5490
        %v5505 = vmul.f32 %v5481, %v5490
        %v5506 = vmul.f32 %v5482, %v5494
        %v5507 = vmul.f32 %v5483, %v5494
        %v5508 = vmul.f32 %v5484, %v5498
        %v5509 = vmul.f32 %v5485, %v5498
        %v5510 = vmul.f32 %v5486, %v5502
        %v5511 = vmul.f32 %v5487, %v5502
        %v5512 = vadd.f32 %v5448, %v5504
        %v5513 = vadd.f32 %v5449, %v5505
        %v5514 = vadd.f32 %v5450, %v5506
        %v5515 = vadd.f32 %v5451, %v5507
        %v5516 = vadd.f32 %v5452, %v5508
        %v5517 = vadd.f32 %v5453, %v5509
        %v5518 = vadd.f32 %v5454, %v5510
        %v5519 = vadd.f32 %v5455, %v5511
        %5520 = vrot.lane.b32.xlu0 %v5160, 126
        %v5521 = vpop.permute.xlu0 %5520
        %5522 = vrot.lane.b32.xlu0 %v5162, 126
        %v5523 = vpop.permute.xlu0 %5522
        %5524 = vrot.lane.b32.xlu0 %v5164, 126
        %v5525 = vpop.permute.xlu0 %5524
        %5526 = vrot.lane.b32.xlu0 %v5166, 126
        %v5527 = vpop.permute.xlu0 %5526
        %5528 = vrot.lane.b32.xlu0 %v5161, 126
        %v5529 = vpop.permute.xlu0 %5528
        %5530 = vrot.lane.b32.xlu0 %v5163, 126
        %v5531 = vpop.permute.xlu0 %5530
        %5532 = vrot.lane.b32.xlu0 %v5165, 126
        %v5533 = vpop.permute.xlu0 %5532
        %5534 = vrot.lane.b32.xlu0 %v5167, 126
        %v5535 = vpop.permute.xlu0 %5534
        %v5536 = vsel %vm477, %v5521, %v5529
        %v5537 = vsel %vm477, %v5523, %v5531
        %v5538 = vsel %vm477, %v5525, %v5533
        %v5539 = vsel %vm477, %v5527, %v5535
        %v5540 = vsel %vm477, %v5529, %v5521
        %v5541 = vsel %vm477, %v5531, %v5523
        %v5542 = vsel %vm477, %v5533, %v5525
        %v5543 = vsel %vm477, %v5535, %v5527
        %v5544 = vmul.f32 %v5536, %v377
        %v5545 = vmul.f32 %v5540, %v378
        %v5546 = vmul.f32 %v5537, %v377
        %v5547 = vmul.f32 %v5541, %v378
        %v5548 = vmul.f32 %v5538, %v377
        %v5549 = vmul.f32 %v5542, %v378
        %v5550 = vmul.f32 %v5539, %v377
        %v5551 = vmul.f32 %v5543, %v378
        %5552 = vset.pattern.permute.xlu0 33
        %5553 = vperm.xlu0 %5552, %v3378
        %v5554 = vpop.permute.xlu0 %5553
        %5556 = vset.pattern.permute.xlu0 33
        %5557 = vperm.xlu0 %5556, %v3379
        %v5558 = vpop.permute.xlu0 %5557
        %5560 = vset.pattern.permute.xlu0 33
        %5561 = vperm.xlu0 %5560, %v3380
        %v5562 = vpop.permute.xlu0 %5561
        %5564 = vset.pattern.permute.xlu0 33
        %5565 = vperm.xlu0 %5564, %v3381
        %v5566 = vpop.permute.xlu0 %5565
        %v5568 = vmul.f32 %v5544, %v5554
        %v5569 = vmul.f32 %v5545, %v5554
        %v5570 = vmul.f32 %v5546, %v5558
        %v5571 = vmul.f32 %v5547, %v5558
        %v5572 = vmul.f32 %v5548, %v5562
        %v5573 = vmul.f32 %v5549, %v5562
        %v5574 = vmul.f32 %v5550, %v5566
        %v5575 = vmul.f32 %v5551, %v5566
        %v5576 = vadd.f32 %v5512, %v5568
        %v5577 = vadd.f32 %v5513, %v5569
        %v5578 = vadd.f32 %v5514, %v5570
        %v5579 = vadd.f32 %v5515, %v5571
        %v5580 = vadd.f32 %v5516, %v5572
        %v5581 = vadd.f32 %v5517, %v5573
        %v5582 = vadd.f32 %v5518, %v5574
        %v5583 = vadd.f32 %v5519, %v5575
        %5584 = vrot.lane.b32.xlu0 %v5160, 125
        %v5585 = vpop.permute.xlu0 %5584
        %5586 = vrot.lane.b32.xlu0 %v5162, 125
        %v5587 = vpop.permute.xlu0 %5586
        %5588 = vrot.lane.b32.xlu0 %v5164, 125
        %v5589 = vpop.permute.xlu0 %5588
        %5590 = vrot.lane.b32.xlu0 %v5166, 125
        %v5591 = vpop.permute.xlu0 %5590
        %5592 = vrot.lane.b32.xlu0 %v5161, 125
        %v5593 = vpop.permute.xlu0 %5592
        %5594 = vrot.lane.b32.xlu0 %v5163, 125
        %v5595 = vpop.permute.xlu0 %5594
        %5596 = vrot.lane.b32.xlu0 %v5165, 125
        %v5597 = vpop.permute.xlu0 %5596
        %5598 = vrot.lane.b32.xlu0 %v5167, 125
        %v5599 = vpop.permute.xlu0 %5598
        %v5600 = vsel %vm3869, %v5585, %v5593
        %v5601 = vsel %vm3869, %v5587, %v5595
        %v5602 = vsel %vm3869, %v5589, %v5597
        %v5603 = vsel %vm3869, %v5591, %v5599
        %v5604 = vsel %vm3869, %v5593, %v5585
        %v5605 = vsel %vm3869, %v5595, %v5587
        %v5606 = vsel %vm3869, %v5597, %v5589
        %v5607 = vsel %vm3869, %v5599, %v5591
        %v5608 = vmul.f32 %v5600, %v401
        %v5609 = vmul.f32 %v5604, %v402
        %v5610 = vmul.f32 %v5601, %v401
        %v5611 = vmul.f32 %v5605, %v402
        %v5612 = vmul.f32 %v5602, %v401
        %v5613 = vmul.f32 %v5606, %v402
        %v5614 = vmul.f32 %v5603, %v401
        %v5615 = vmul.f32 %v5607, %v402
        %5616 = vset.pattern.permute.xlu0 34
        %5617 = vperm.xlu0 %5616, %v3378
        %v5618 = vpop.permute.xlu0 %5617
        %5620 = vset.pattern.permute.xlu0 34
        %5621 = vperm.xlu0 %5620, %v3379
        %v5622 = vpop.permute.xlu0 %5621
        %5624 = vset.pattern.permute.xlu0 34
        %5625 = vperm.xlu0 %5624, %v3380
        %v5626 = vpop.permute.xlu0 %5625
        %5628 = vset.pattern.permute.xlu0 34
        %5629 = vperm.xlu0 %5628, %v3381
        %v5630 = vpop.permute.xlu0 %5629
        %v5632 = vmul.f32 %v5608, %v5618
        %v5633 = vmul.f32 %v5609, %v5618
        %v5634 = vmul.f32 %v5610, %v5622
        %v5635 = vmul.f32 %v5611, %v5622
        %v5636 = vmul.f32 %v5612, %v5626
        %v5637 = vmul.f32 %v5613, %v5626
        %v5638 = vmul.f32 %v5614, %v5630
        %v5639 = vmul.f32 %v5615, %v5630
        %v5640 = vadd.f32 %v5576, %v5632
        %v5641 = vadd.f32 %v5577, %v5633
        %v5642 = vadd.f32 %v5578, %v5634
        %v5643 = vadd.f32 %v5579, %v5635
        %v5644 = vadd.f32 %v5580, %v5636
        %v5645 = vadd.f32 %v5581, %v5637
        %v5646 = vadd.f32 %v5582, %v5638
        %v5647 = vadd.f32 %v5583, %v5639
        %5648 = vrot.lane.b32.xlu0 %v5160, 124
        %v5649 = vpop.permute.xlu0 %5648
        %5650 = vrot.lane.b32.xlu0 %v5162, 124
        %v5651 = vpop.permute.xlu0 %5650
        %5652 = vrot.lane.b32.xlu0 %v5164, 124
        %v5653 = vpop.permute.xlu0 %5652
        %5654 = vrot.lane.b32.xlu0 %v5166, 124
        %v5655 = vpop.permute.xlu0 %5654
        %5656 = vrot.lane.b32.xlu0 %v5161, 124
        %v5657 = vpop.permute.xlu0 %5656
        %5658 = vrot.lane.b32.xlu0 %v5163, 124
        %v5659 = vpop.permute.xlu0 %5658
        %5660 = vrot.lane.b32.xlu0 %v5165, 124
        %v5661 = vpop.permute.xlu0 %5660
        %5662 = vrot.lane.b32.xlu0 %v5167, 124
        %v5663 = vpop.permute.xlu0 %5662
        %v5664 = vsel %vm3934, %v5649, %v5657
        %v5665 = vsel %vm3934, %v5651, %v5659
        %v5666 = vsel %vm3934, %v5653, %v5661
        %v5667 = vsel %vm3934, %v5655, %v5663
        %v5668 = vsel %vm3934, %v5657, %v5649
        %v5669 = vsel %vm3934, %v5659, %v5651
        %v5670 = vsel %vm3934, %v5661, %v5653
        %v5671 = vsel %vm3934, %v5663, %v5655
        %v5672 = vmul.f32 %v5664, %v425
        %v5673 = vmul.f32 %v5668, %v426
        %v5674 = vmul.f32 %v5665, %v425
        %v5675 = vmul.f32 %v5669, %v426
        %v5676 = vmul.f32 %v5666, %v425
        %v5677 = vmul.f32 %v5670, %v426
        %v5678 = vmul.f32 %v5667, %v425
        %v5679 = vmul.f32 %v5671, %v426
        %5680 = vset.pattern.permute.xlu0 35
        %5681 = vperm.xlu0 %5680, %v3378
        %v5682 = vpop.permute.xlu0 %5681
        %5684 = vset.pattern.permute.xlu0 35
        %5685 = vperm.xlu0 %5684, %v3379
        %v5686 = vpop.permute.xlu0 %5685
        %5688 = vset.pattern.permute.xlu0 35
        %5689 = vperm.xlu0 %5688, %v3380
        %v5690 = vpop.permute.xlu0 %5689
        %5692 = vset.pattern.permute.xlu0 35
        %5693 = vperm.xlu0 %5692, %v3381
        %v5694 = vpop.permute.xlu0 %5693
        %v5696 = vmul.f32 %v5672, %v5682
        %v5697 = vmul.f32 %v5673, %v5682
        %v5698 = vmul.f32 %v5674, %v5686
        %v5699 = vmul.f32 %v5675, %v5686
        %v5700 = vmul.f32 %v5676, %v5690
        %v5701 = vmul.f32 %v5677, %v5690
        %v5702 = vmul.f32 %v5678, %v5694
        %v5703 = vmul.f32 %v5679, %v5694
        %v5704 = vadd.f32 %v5640, %v5696
        %v5705 = vadd.f32 %v5641, %v5697
        %v5706 = vadd.f32 %v5642, %v5698
        %v5707 = vadd.f32 %v5643, %v5699
        %v5708 = vadd.f32 %v5644, %v5700
        %v5709 = vadd.f32 %v5645, %v5701
        %v5710 = vadd.f32 %v5646, %v5702
        %v5711 = vadd.f32 %v5647, %v5703
        %5712 = vrot.lane.b32.xlu0 %v3370, 4
        %v5713 = vpop.permute.xlu0 %5712
        %5714 = vrot.lane.b32.xlu0 %v3372, 4
        %v5715 = vpop.permute.xlu0 %5714
        %5716 = vrot.lane.b32.xlu0 %v3374, 4
        %v5717 = vpop.permute.xlu0 %5716
        %5718 = vrot.lane.b32.xlu0 %v3376, 4
        %v5719 = vpop.permute.xlu0 %5718
        %5720 = vrot.lane.b32.xlu0 %v3371, 4
        %v5721 = vpop.permute.xlu0 %5720
        %5722 = vrot.lane.b32.xlu0 %v3373, 4
        %v5723 = vpop.permute.xlu0 %5722
        %5724 = vrot.lane.b32.xlu0 %v3375, 4
        %v5725 = vpop.permute.xlu0 %5724
        %5726 = vrot.lane.b32.xlu0 %v3377, 4
        %v5727 = vpop.permute.xlu0 %5726
        %v5728 = vsel %vm3447, %v5713, %v5721
        %v5729 = vsel %vm3447, %v5715, %v5723
        %v5730 = vsel %vm3447, %v5717, %v5725
        %v5731 = vsel %vm3447, %v5719, %v5727
        %v5732 = vsel %vm3447, %v5721, %v5713
        %v5733 = vsel %vm3447, %v5723, %v5715
        %v5734 = vsel %vm3447, %v5725, %v5717
        %v5735 = vsel %vm3447, %v5727, %v5719
        %v5736 = vmul.f32 %v5732, %v257
        %v5737 = vmul.f32 %v5728, %v258
        %v5738 = vmul.f32 %v5733, %v257
        %v5739 = vmul.f32 %v5729, %v258
        %v5740 = vmul.f32 %v5734, %v257
        %v5741 = vmul.f32 %v5730, %v258
        %v5742 = vmul.f32 %v5735, %v257
        %v5743 = vmul.f32 %v5731, %v258
        %5744 = vset.pattern.permute.xlu0 36
        %5745 = vperm.xlu0 %5744, %v3378
        %v5746 = vpop.permute.xlu0 %5745
        %5748 = vset.pattern.permute.xlu0 36
        %5749 = vperm.xlu0 %5748, %v3379
        %v5750 = vpop.permute.xlu0 %5749
        %5752 = vset.pattern.permute.xlu0 36
        %5753 = vperm.xlu0 %5752, %v3380
        %v5754 = vpop.permute.xlu0 %5753
        %5756 = vset.pattern.permute.xlu0 36
        %5757 = vperm.xlu0 %5756, %v3381
        %v5758 = vpop.permute.xlu0 %5757
        %v5760 = vmul.f32 %v5736, %v5746
        %v5761 = vmul.f32 %v5737, %v5746
        %v5762 = vmul.f32 %v5738, %v5750
        %v5763 = vmul.f32 %v5739, %v5750
        %v5764 = vmul.f32 %v5740, %v5754
        %v5765 = vmul.f32 %v5741, %v5754
        %v5766 = vmul.f32 %v5742, %v5758
        %v5767 = vmul.f32 %v5743, %v5758
        %v5768 = vadd.f32 %v5704, %v5760
        %v5769 = vadd.f32 %v5705, %v5761
        %v5770 = vadd.f32 %v5706, %v5762
        %v5771 = vadd.f32 %v5707, %v5763
        %v5772 = vadd.f32 %v5708, %v5764
        %v5773 = vadd.f32 %v5709, %v5765
        %v5774 = vadd.f32 %v5710, %v5766
        %v5775 = vadd.f32 %v5711, %v5767
        %5776 = vrot.lane.b32.xlu0 %v3370, 3
        %v5777 = vpop.permute.xlu0 %5776
        %5778 = vrot.lane.b32.xlu0 %v3372, 3
        %v5779 = vpop.permute.xlu0 %5778
        %5780 = vrot.lane.b32.xlu0 %v3374, 3
        %v5781 = vpop.permute.xlu0 %5780
        %5782 = vrot.lane.b32.xlu0 %v3376, 3
        %v5783 = vpop.permute.xlu0 %5782
        %5784 = vrot.lane.b32.xlu0 %v3371, 3
        %v5785 = vpop.permute.xlu0 %5784
        %5786 = vrot.lane.b32.xlu0 %v3373, 3
        %v5787 = vpop.permute.xlu0 %5786
        %5788 = vrot.lane.b32.xlu0 %v3375, 3
        %v5789 = vpop.permute.xlu0 %5788
        %5790 = vrot.lane.b32.xlu0 %v3377, 3
        %v5791 = vpop.permute.xlu0 %5790
        %v5792 = vsel %vm3516, %v5777, %v5785
        %v5793 = vsel %vm3516, %v5779, %v5787
        %v5794 = vsel %vm3516, %v5781, %v5789
        %v5795 = vsel %vm3516, %v5783, %v5791
        %v5796 = vsel %vm3516, %v5785, %v5777
        %v5797 = vsel %vm3516, %v5787, %v5779
        %v5798 = vsel %vm3516, %v5789, %v5781
        %v5799 = vsel %vm3516, %v5791, %v5783
        %v5800 = vmul.f32 %v5796, %v281
        %v5801 = vmul.f32 %v5792, %v282
        %v5802 = vmul.f32 %v5797, %v281
        %v5803 = vmul.f32 %v5793, %v282
        %v5804 = vmul.f32 %v5798, %v281
        %v5805 = vmul.f32 %v5794, %v282
        %v5806 = vmul.f32 %v5799, %v281
        %v5807 = vmul.f32 %v5795, %v282
        %5808 = vset.pattern.permute.xlu0 37
        %5809 = vperm.xlu0 %5808, %v3378
        %v5810 = vpop.permute.xlu0 %5809
        %5812 = vset.pattern.permute.xlu0 37
        %5813 = vperm.xlu0 %5812, %v3379
        %v5814 = vpop.permute.xlu0 %5813
        %5816 = vset.pattern.permute.xlu0 37
        %5817 = vperm.xlu0 %5816, %v3380
        %v5818 = vpop.permute.xlu0 %5817
        %5820 = vset.pattern.permute.xlu0 37
        %5821 = vperm.xlu0 %5820, %v3381
        %v5822 = vpop.permute.xlu0 %5821
        %v5824 = vmul.f32 %v5800, %v5810
        %v5825 = vmul.f32 %v5801, %v5810
        %v5826 = vmul.f32 %v5802, %v5814
        %v5827 = vmul.f32 %v5803, %v5814
        %v5828 = vmul.f32 %v5804, %v5818
        %v5829 = vmul.f32 %v5805, %v5818
        %v5830 = vmul.f32 %v5806, %v5822
        %v5831 = vmul.f32 %v5807, %v5822
        %v5832 = vadd.f32 %v5768, %v5824
        %v5833 = vadd.f32 %v5769, %v5825
        %v5834 = vadd.f32 %v5770, %v5826
        %v5835 = vadd.f32 %v5771, %v5827
        %v5836 = vadd.f32 %v5772, %v5828
        %v5837 = vadd.f32 %v5773, %v5829
        %v5838 = vadd.f32 %v5774, %v5830
        %v5839 = vadd.f32 %v5775, %v5831
        %5840 = vrot.lane.b32.xlu0 %v3370, 2
        %v5841 = vpop.permute.xlu0 %5840
        %5842 = vrot.lane.b32.xlu0 %v3372, 2
        %v5843 = vpop.permute.xlu0 %5842
        %5844 = vrot.lane.b32.xlu0 %v3374, 2
        %v5845 = vpop.permute.xlu0 %5844
        %5846 = vrot.lane.b32.xlu0 %v3376, 2
        %v5847 = vpop.permute.xlu0 %5846
        %5848 = vrot.lane.b32.xlu0 %v3371, 2
        %v5849 = vpop.permute.xlu0 %5848
        %5850 = vrot.lane.b32.xlu0 %v3373, 2
        %v5851 = vpop.permute.xlu0 %5850
        %5852 = vrot.lane.b32.xlu0 %v3375, 2
        %v5853 = vpop.permute.xlu0 %5852
        %5854 = vrot.lane.b32.xlu0 %v3377, 2
        %v5855 = vpop.permute.xlu0 %5854
        %v5856 = vsel %vm442, %v5841, %v5849
        %v5857 = vsel %vm442, %v5843, %v5851
        %v5858 = vsel %vm442, %v5845, %v5853
        %v5859 = vsel %vm442, %v5847, %v5855
        %v5860 = vsel %vm442, %v5849, %v5841
        %v5861 = vsel %vm442, %v5851, %v5843
        %v5862 = vsel %vm442, %v5853, %v5845
        %v5863 = vsel %vm442, %v5855, %v5847
        %v5864 = vmul.f32 %v5860, %v305
        %v5865 = vmul.f32 %v5856, %v306
        %v5866 = vmul.f32 %v5861, %v305
        %v5867 = vmul.f32 %v5857, %v306
        %v5868 = vmul.f32 %v5862, %v305
        %v5869 = vmul.f32 %v5858, %v306
        %v5870 = vmul.f32 %v5863, %v305
        %v5871 = vmul.f32 %v5859, %v306
        %5872 = vset.pattern.permute.xlu0 38
        %5873 = vperm.xlu0 %5872, %v3378
        %v5874 = vpop.permute.xlu0 %5873
        %5876 = vset.pattern.permute.xlu0 38
        %5877 = vperm.xlu0 %5876, %v3379
        %v5878 = vpop.permute.xlu0 %5877
        %5880 = vset.pattern.permute.xlu0 38
        %5881 = vperm.xlu0 %5880, %v3380
        %v5882 = vpop.permute.xlu0 %5881
        %5884 = vset.pattern.permute.xlu0 38
        %5885 = vperm.xlu0 %5884, %v3381
        %v5886 = vpop.permute.xlu0 %5885
        %v5888 = vmul.f32 %v5864, %v5874
        %v5889 = vmul.f32 %v5865, %v5874
        %v5890 = vmul.f32 %v5866, %v5878
        %v5891 = vmul.f32 %v5867, %v5878
        %v5892 = vmul.f32 %v5868, %v5882
        %v5893 = vmul.f32 %v5869, %v5882
        %v5894 = vmul.f32 %v5870, %v5886
        %v5895 = vmul.f32 %v5871, %v5886
        %v5896 = vadd.f32 %v5832, %v5888
        %v5897 = vadd.f32 %v5833, %v5889
        %v5898 = vadd.f32 %v5834, %v5890
        %v5899 = vadd.f32 %v5835, %v5891
        %v5900 = vadd.f32 %v5836, %v5892
        %v5901 = vadd.f32 %v5837, %v5893
        %v5902 = vadd.f32 %v5838, %v5894
        %v5903 = vadd.f32 %v5839, %v5895
        %5904 = vrot.lane.b32.xlu0 %v3370, 1
        %v5905 = vpop.permute.xlu0 %5904
        %5906 = vrot.lane.b32.xlu0 %v3372, 1
        %v5907 = vpop.permute.xlu0 %5906
        %5908 = vrot.lane.b32.xlu0 %v3374, 1
        %v5909 = vpop.permute.xlu0 %5908
        %5910 = vrot.lane.b32.xlu0 %v3376, 1
        %v5911 = vpop.permute.xlu0 %5910
        %5912 = vrot.lane.b32.xlu0 %v3371, 1
        %v5913 = vpop.permute.xlu0 %5912
        %5914 = vrot.lane.b32.xlu0 %v3373, 1
        %v5915 = vpop.permute.xlu0 %5914
        %5916 = vrot.lane.b32.xlu0 %v3375, 1
        %v5917 = vpop.permute.xlu0 %5916
        %5918 = vrot.lane.b32.xlu0 %v3377, 1
        %v5919 = vpop.permute.xlu0 %5918
        %v5920 = vsel %vm453, %v5905, %v5913
        %v5921 = vsel %vm453, %v5907, %v5915
        %v5922 = vsel %vm453, %v5909, %v5917
        %v5923 = vsel %vm453, %v5911, %v5919
        %v5924 = vsel %vm453, %v5913, %v5905
        %v5925 = vsel %vm453, %v5915, %v5907
        %v5926 = vsel %vm453, %v5917, %v5909
        %v5927 = vsel %vm453, %v5919, %v5911
        %v5928 = vmul.f32 %v5924, %v329
        %v5929 = vmul.f32 %v5920, %v330
        %v5930 = vmul.f32 %v5925, %v329
        %v5931 = vmul.f32 %v5921, %v330
        %v5932 = vmul.f32 %v5926, %v329
        %v5933 = vmul.f32 %v5922, %v330
        %v5934 = vmul.f32 %v5927, %v329
        %v5935 = vmul.f32 %v5923, %v330
        %5936 = vset.pattern.permute.xlu0 39
        %5937 = vperm.xlu0 %5936, %v3378
        %v5938 = vpop.permute.xlu0 %5937
        %5940 = vset.pattern.permute.xlu0 39
        %5941 = vperm.xlu0 %5940, %v3379
        %v5942 = vpop.permute.xlu0 %5941
        %5944 = vset.pattern.permute.xlu0 39
        %5945 = vperm.xlu0 %5944, %v3380
        %v5946 = vpop.permute.xlu0 %5945
        %5948 = vset.pattern.permute.xlu0 39
        %5949 = vperm.xlu0 %5948, %v3381
        %v5950 = vpop.permute.xlu0 %5949
        %v5952 = vmul.f32 %v5928, %v5938
        %v5953 = vmul.f32 %v5929, %v5938
        %v5954 = vmul.f32 %v5930, %v5942
        %v5955 = vmul.f32 %v5931, %v5942
        %v5956 = vmul.f32 %v5932, %v5946
        %v5957 = vmul.f32 %v5933, %v5946
        %v5958 = vmul.f32 %v5934, %v5950
        %v5959 = vmul.f32 %v5935, %v5950
        %v5960 = vadd.f32 %v5896, %v5952
        %v5961 = vadd.f32 %v5897, %v5953
        %v5962 = vadd.f32 %v5898, %v5954
        %v5963 = vadd.f32 %v5899, %v5955
        %v5964 = vadd.f32 %v5900, %v5956
        %v5965 = vadd.f32 %v5901, %v5957
        %v5966 = vadd.f32 %v5902, %v5958
        %v5967 = vadd.f32 %v5903, %v5959
        %5968 = vset.pattern.permute.xlu0 40
        %5969 = vperm.xlu0 %5968, %v3378
        %v5970 = vpop.permute.xlu0 %5969
        %5972 = vset.pattern.permute.xlu0 40
        %5973 = vperm.xlu0 %5972, %v3379
        %v5974 = vpop.permute.xlu0 %5973
        %5976 = vset.pattern.permute.xlu0 40
        %5977 = vperm.xlu0 %5976, %v3380
        %v5978 = vpop.permute.xlu0 %5977
        %5980 = vset.pattern.permute.xlu0 40
        %5981 = vperm.xlu0 %5980, %v3381
        %v5982 = vpop.permute.xlu0 %5981
        %v5984 = vmul.f32 %v3370, %v5970
        %v5985 = vmul.f32 %v3371, %v5970
        %v5986 = vmul.f32 %v3372, %v5974
        %v5987 = vmul.f32 %v3373, %v5974
        %v5988 = vmul.f32 %v3374, %v5978
        %v5989 = vmul.f32 %v3375, %v5978
        %v5990 = vmul.f32 %v3376, %v5982
        %v5991 = vmul.f32 %v3377, %v5982
        %v5992 = vadd.f32 %v5960, %v5984
        %v5993 = vadd.f32 %v5961, %v5985
        %v5994 = vadd.f32 %v5962, %v5986
        %v5995 = vadd.f32 %v5963, %v5987
        %v5996 = vadd.f32 %v5964, %v5988
        %v5997 = vadd.f32 %v5965, %v5989
        %v5998 = vadd.f32 %v5966, %v5990
        %v5999 = vadd.f32 %v5967, %v5991
        %6000 = vrot.lane.b32.xlu0 %v3370, 127
        %v6001 = vpop.permute.xlu0 %6000
        %6002 = vrot.lane.b32.xlu0 %v3372, 127
        %v6003 = vpop.permute.xlu0 %6002
        %6004 = vrot.lane.b32.xlu0 %v3374, 127
        %v6005 = vpop.permute.xlu0 %6004
        %6006 = vrot.lane.b32.xlu0 %v3376, 127
        %v6007 = vpop.permute.xlu0 %6006
        %6008 = vrot.lane.b32.xlu0 %v3371, 127
        %v6009 = vpop.permute.xlu0 %6008
        %6010 = vrot.lane.b32.xlu0 %v3373, 127
        %v6011 = vpop.permute.xlu0 %6010
        %6012 = vrot.lane.b32.xlu0 %v3375, 127
        %v6013 = vpop.permute.xlu0 %6012
        %6014 = vrot.lane.b32.xlu0 %v3377, 127
        %v6015 = vpop.permute.xlu0 %6014
        %v6016 = vsel %vm466, %v6001, %v6009
        %v6017 = vsel %vm466, %v6003, %v6011
        %v6018 = vsel %vm466, %v6005, %v6013
        %v6019 = vsel %vm466, %v6007, %v6015
        %v6020 = vsel %vm466, %v6009, %v6001
        %v6021 = vsel %vm466, %v6011, %v6003
        %v6022 = vsel %vm466, %v6013, %v6005
        %v6023 = vsel %vm466, %v6015, %v6007
        %v6024 = vmul.f32 %v6016, %v353
        %v6025 = vmul.f32 %v6020, %v354
        %v6026 = vmul.f32 %v6017, %v353
        %v6027 = vmul.f32 %v6021, %v354
        %v6028 = vmul.f32 %v6018, %v353
        %v6029 = vmul.f32 %v6022, %v354
        %v6030 = vmul.f32 %v6019, %v353
        %v6031 = vmul.f32 %v6023, %v354
        %6032 = vset.pattern.permute.xlu0 41
        %6033 = vperm.xlu0 %6032, %v3378
        %v6034 = vpop.permute.xlu0 %6033
        %6036 = vset.pattern.permute.xlu0 41
        %6037 = vperm.xlu0 %6036, %v3379
        %v6038 = vpop.permute.xlu0 %6037
        %6040 = vset.pattern.permute.xlu0 41
        %6041 = vperm.xlu0 %6040, %v3380
        %v6042 = vpop.permute.xlu0 %6041
        %6044 = vset.pattern.permute.xlu0 41
        %6045 = vperm.xlu0 %6044, %v3381
        %v6046 = vpop.permute.xlu0 %6045
        %v6048 = vmul.f32 %v6024, %v6034
        %v6049 = vmul.f32 %v6025, %v6034
        %v6050 = vmul.f32 %v6026, %v6038
        %v6051 = vmul.f32 %v6027, %v6038
        %v6052 = vmul.f32 %v6028, %v6042
        %v6053 = vmul.f32 %v6029, %v6042
        %v6054 = vmul.f32 %v6030, %v6046
        %v6055 = vmul.f32 %v6031, %v6046
        %v6056 = vadd.f32 %v5992, %v6048
        %v6057 = vadd.f32 %v5993, %v6049
        %v6058 = vadd.f32 %v5994, %v6050
        %v6059 = vadd.f32 %v5995, %v6051
        %v6060 = vadd.f32 %v5996, %v6052
        %v6061 = vadd.f32 %v5997, %v6053
        %v6062 = vadd.f32 %v5998, %v6054
        %v6063 = vadd.f32 %v5999, %v6055
        %6064 = vrot.lane.b32.xlu0 %v3370, 126
        %v6065 = vpop.permute.xlu0 %6064
        %6066 = vrot.lane.b32.xlu0 %v3372, 126
        %v6067 = vpop.permute.xlu0 %6066
        %6068 = vrot.lane.b32.xlu0 %v3374, 126
        %v6069 = vpop.permute.xlu0 %6068
        %6070 = vrot.lane.b32.xlu0 %v3376, 126
        %v6071 = vpop.permute.xlu0 %6070
        %6072 = vrot.lane.b32.xlu0 %v3371, 126
        %v6073 = vpop.permute.xlu0 %6072
        %6074 = vrot.lane.b32.xlu0 %v3373, 126
        %v6075 = vpop.permute.xlu0 %6074
        %6076 = vrot.lane.b32.xlu0 %v3375, 126
        %v6077 = vpop.permute.xlu0 %6076
        %6078 = vrot.lane.b32.xlu0 %v3377, 126
        %v6079 = vpop.permute.xlu0 %6078
        %v6080 = vsel %vm477, %v6065, %v6073
        %v6081 = vsel %vm477, %v6067, %v6075
        %v6082 = vsel %vm477, %v6069, %v6077
        %v6083 = vsel %vm477, %v6071, %v6079
        %v6084 = vsel %vm477, %v6073, %v6065
        %v6085 = vsel %vm477, %v6075, %v6067
        %v6086 = vsel %vm477, %v6077, %v6069
        %v6087 = vsel %vm477, %v6079, %v6071
        %v6088 = vmul.f32 %v6080, %v377
        %v6089 = vmul.f32 %v6084, %v378
        %v6090 = vmul.f32 %v6081, %v377
        %v6091 = vmul.f32 %v6085, %v378
        %v6092 = vmul.f32 %v6082, %v377
        %v6093 = vmul.f32 %v6086, %v378
        %v6094 = vmul.f32 %v6083, %v377
        %v6095 = vmul.f32 %v6087, %v378
        %6096 = vset.pattern.permute.xlu0 42
        %6097 = vperm.xlu0 %6096, %v3378
        %v6098 = vpop.permute.xlu0 %6097
        %6100 = vset.pattern.permute.xlu0 42
        %6101 = vperm.xlu0 %6100, %v3379
        %v6102 = vpop.permute.xlu0 %6101
        %6104 = vset.pattern.permute.xlu0 42
        %6105 = vperm.xlu0 %6104, %v3380
        %v6106 = vpop.permute.xlu0 %6105
        %6108 = vset.pattern.permute.xlu0 42
        %6109 = vperm.xlu0 %6108, %v3381
        %v6110 = vpop.permute.xlu0 %6109
        %v6112 = vmul.f32 %v6088, %v6098
        %v6113 = vmul.f32 %v6089, %v6098
        %v6114 = vmul.f32 %v6090, %v6102
        %v6115 = vmul.f32 %v6091, %v6102
        %v6116 = vmul.f32 %v6092, %v6106
        %v6117 = vmul.f32 %v6093, %v6106
        %v6118 = vmul.f32 %v6094, %v6110
        %v6119 = vmul.f32 %v6095, %v6110
        %v6120 = vadd.f32 %v6056, %v6112
        %v6121 = vadd.f32 %v6057, %v6113
        %v6122 = vadd.f32 %v6058, %v6114
        %v6123 = vadd.f32 %v6059, %v6115
        %v6124 = vadd.f32 %v6060, %v6116
        %v6125 = vadd.f32 %v6061, %v6117
        %v6126 = vadd.f32 %v6062, %v6118
        %v6127 = vadd.f32 %v6063, %v6119
        %6128 = vrot.lane.b32.xlu0 %v3370, 125
        %v6129 = vpop.permute.xlu0 %6128
        %6130 = vrot.lane.b32.xlu0 %v3372, 125
        %v6131 = vpop.permute.xlu0 %6130
        %6132 = vrot.lane.b32.xlu0 %v3374, 125
        %v6133 = vpop.permute.xlu0 %6132
        %6134 = vrot.lane.b32.xlu0 %v3376, 125
        %v6135 = vpop.permute.xlu0 %6134
        %6136 = vrot.lane.b32.xlu0 %v3371, 125
        %v6137 = vpop.permute.xlu0 %6136
        %6138 = vrot.lane.b32.xlu0 %v3373, 125
        %v6139 = vpop.permute.xlu0 %6138
        %6140 = vrot.lane.b32.xlu0 %v3375, 125
        %v6141 = vpop.permute.xlu0 %6140
        %6142 = vrot.lane.b32.xlu0 %v3377, 125
        %v6143 = vpop.permute.xlu0 %6142
        %v6144 = vsel %vm3869, %v6129, %v6137
        %v6145 = vsel %vm3869, %v6131, %v6139
        %v6146 = vsel %vm3869, %v6133, %v6141
        %v6147 = vsel %vm3869, %v6135, %v6143
        %v6148 = vsel %vm3869, %v6137, %v6129
        %v6149 = vsel %vm3869, %v6139, %v6131
        %v6150 = vsel %vm3869, %v6141, %v6133
        %v6151 = vsel %vm3869, %v6143, %v6135
        %v6152 = vmul.f32 %v6144, %v401
        %v6153 = vmul.f32 %v6148, %v402
        %v6154 = vmul.f32 %v6145, %v401
        %v6155 = vmul.f32 %v6149, %v402
        %v6156 = vmul.f32 %v6146, %v401
        %v6157 = vmul.f32 %v6150, %v402
        %v6158 = vmul.f32 %v6147, %v401
        %v6159 = vmul.f32 %v6151, %v402
        %6160 = vset.pattern.permute.xlu0 43
        %6161 = vperm.xlu0 %6160, %v3378
        %v6162 = vpop.permute.xlu0 %6161
        %6164 = vset.pattern.permute.xlu0 43
        %6165 = vperm.xlu0 %6164, %v3379
        %v6166 = vpop.permute.xlu0 %6165
        %6168 = vset.pattern.permute.xlu0 43
        %6169 = vperm.xlu0 %6168, %v3380
        %v6170 = vpop.permute.xlu0 %6169
        %6172 = vset.pattern.permute.xlu0 43
        %6173 = vperm.xlu0 %6172, %v3381
        %v6174 = vpop.permute.xlu0 %6173
        %v6176 = vmul.f32 %v6152, %v6162
        %v6177 = vmul.f32 %v6153, %v6162
        %v6178 = vmul.f32 %v6154, %v6166
        %v6179 = vmul.f32 %v6155, %v6166
        %v6180 = vmul.f32 %v6156, %v6170
        %v6181 = vmul.f32 %v6157, %v6170
        %v6182 = vmul.f32 %v6158, %v6174
        %v6183 = vmul.f32 %v6159, %v6174
        %v6184 = vadd.f32 %v6120, %v6176
        %v6185 = vadd.f32 %v6121, %v6177
        %v6186 = vadd.f32 %v6122, %v6178
        %v6187 = vadd.f32 %v6123, %v6179
        %v6188 = vadd.f32 %v6124, %v6180
        %v6189 = vadd.f32 %v6125, %v6181
        %v6190 = vadd.f32 %v6126, %v6182
        %v6191 = vadd.f32 %v6127, %v6183
        %6192 = vrot.lane.b32.xlu0 %v3370, 124
        %v6193 = vpop.permute.xlu0 %6192
        %6194 = vrot.lane.b32.xlu0 %v3372, 124
        %v6195 = vpop.permute.xlu0 %6194
        %6196 = vrot.lane.b32.xlu0 %v3374, 124
        %v6197 = vpop.permute.xlu0 %6196
        %6198 = vrot.lane.b32.xlu0 %v3376, 124
        %v6199 = vpop.permute.xlu0 %6198
        %6200 = vrot.lane.b32.xlu0 %v3371, 124
        %v6201 = vpop.permute.xlu0 %6200
        %6202 = vrot.lane.b32.xlu0 %v3373, 124
        %v6203 = vpop.permute.xlu0 %6202
        %6204 = vrot.lane.b32.xlu0 %v3375, 124
        %v6205 = vpop.permute.xlu0 %6204
        %6206 = vrot.lane.b32.xlu0 %v3377, 124
        %v6207 = vpop.permute.xlu0 %6206
        %v6208 = vsel %vm3934, %v6193, %v6201
        %v6209 = vsel %vm3934, %v6195, %v6203
        %v6210 = vsel %vm3934, %v6197, %v6205
        %v6211 = vsel %vm3934, %v6199, %v6207
        %v6212 = vsel %vm3934, %v6201, %v6193
        %v6213 = vsel %vm3934, %v6203, %v6195
        %v6214 = vsel %vm3934, %v6205, %v6197
        %v6215 = vsel %vm3934, %v6207, %v6199
        %v6216 = vmul.f32 %v6208, %v425
        %v6217 = vmul.f32 %v6212, %v426
        %v6218 = vmul.f32 %v6209, %v425
        %v6219 = vmul.f32 %v6213, %v426
        %v6220 = vmul.f32 %v6210, %v425
        %v6221 = vmul.f32 %v6214, %v426
        %v6222 = vmul.f32 %v6211, %v425
        %v6223 = vmul.f32 %v6215, %v426
        %6224 = vset.pattern.permute.xlu0 44
        %6225 = vperm.xlu0 %6224, %v3378
        %v6226 = vpop.permute.xlu0 %6225
        %6228 = vset.pattern.permute.xlu0 44
        %6229 = vperm.xlu0 %6228, %v3379
        %v6230 = vpop.permute.xlu0 %6229
        %6232 = vset.pattern.permute.xlu0 44
        %6233 = vperm.xlu0 %6232, %v3380
        %v6234 = vpop.permute.xlu0 %6233
        %6236 = vset.pattern.permute.xlu0 44
        %6237 = vperm.xlu0 %6236, %v3381
        %v6238 = vpop.permute.xlu0 %6237
        %v6240 = vmul.f32 %v6216, %v6226
        %v6241 = vmul.f32 %v6217, %v6226
        %v6242 = vmul.f32 %v6218, %v6230
        %v6243 = vmul.f32 %v6219, %v6230
        %v6244 = vmul.f32 %v6220, %v6234
        %v6245 = vmul.f32 %v6221, %v6234
        %v6246 = vmul.f32 %v6222, %v6238
        %v6247 = vmul.f32 %v6223, %v6238
        %v6248 = vadd.f32 %v6184, %v6240
        %v6249 = vadd.f32 %v6185, %v6241
        %v6250 = vadd.f32 %v6186, %v6242
        %v6251 = vadd.f32 %v6187, %v6243
        %v6252 = vadd.f32 %v6188, %v6244
        %v6253 = vadd.f32 %v6189, %v6245
        %v6254 = vadd.f32 %v6190, %v6246
        %v6255 = vadd.f32 %v6191, %v6247
        %6256 = vrot.lane.b32.xlu0 %v3370, 112
        %v6257 = vpop.permute.xlu0 %6256
        %6258 = vrot.lane.b32.xlu0 %v3372, 112
        %v6259 = vpop.permute.xlu0 %6258
        %6260 = vrot.lane.b32.xlu0 %v3374, 112
        %v6261 = vpop.permute.xlu0 %6260
        %6262 = vrot.lane.b32.xlu0 %v3376, 112
        %v6263 = vpop.permute.xlu0 %6262
        %6264 = vrot.lane.b32.xlu0 %v3371, 112
        %v6265 = vpop.permute.xlu0 %6264
        %6266 = vrot.lane.b32.xlu0 %v3373, 112
        %v6267 = vpop.permute.xlu0 %6266
        %6268 = vrot.lane.b32.xlu0 %v3375, 112
        %v6269 = vpop.permute.xlu0 %6268
        %6270 = vrot.lane.b32.xlu0 %v3377, 112
        %v6271 = vpop.permute.xlu0 %6270
        %v6272 = vsel %vm581, %v6257, %v6265
        %v6273 = vsel %vm581, %v6259, %v6267
        %v6274 = vsel %vm581, %v6261, %v6269
        %v6275 = vsel %vm581, %v6263, %v6271
        %v6276 = vsel %vm581, %v6265, %v6257
        %v6277 = vsel %vm581, %v6267, %v6259
        %v6278 = vsel %vm581, %v6269, %v6261
        %v6279 = vsel %vm581, %v6271, %v6263
        %v6280 = vmul.f32 %v6272, %v341
        %v6281 = vmul.f32 %v6276, %v342
        %v6282 = vmul.f32 %v6273, %v341
        %v6283 = vmul.f32 %v6277, %v342
        %v6284 = vmul.f32 %v6274, %v341
        %v6285 = vmul.f32 %v6278, %v342
        %v6286 = vmul.f32 %v6275, %v341
        %v6287 = vmul.f32 %v6279, %v342
        %6288 = vrot.lane.b32.xlu0 %v6280, 4
        %v6289 = vpop.permute.xlu0 %6288
        %6290 = vrot.lane.b32.xlu0 %v6282, 4
        %v6291 = vpop.permute.xlu0 %6290
        %6292 = vrot.lane.b32.xlu0 %v6284, 4
        %v6293 = vpop.permute.xlu0 %6292
        %6294 = vrot.lane.b32.xlu0 %v6286, 4
        %v6295 = vpop.permute.xlu0 %6294
        %6296 = vrot.lane.b32.xlu0 %v6281, 4
        %v6297 = vpop.permute.xlu0 %6296
        %6298 = vrot.lane.b32.xlu0 %v6283, 4
        %v6299 = vpop.permute.xlu0 %6298
        %6300 = vrot.lane.b32.xlu0 %v6285, 4
        %v6301 = vpop.permute.xlu0 %6300
        %6302 = vrot.lane.b32.xlu0 %v6287, 4
        %v6303 = vpop.permute.xlu0 %6302
        %v6304 = vsel %vm3447, %v6289, %v6297
        %v6305 = vsel %vm3447, %v6291, %v6299
        %v6306 = vsel %vm3447, %v6293, %v6301
        %v6307 = vsel %vm3447, %v6295, %v6303
        %v6308 = vsel %vm3447, %v6297, %v6289
        %v6309 = vsel %vm3447, %v6299, %v6291
        %v6310 = vsel %vm3447, %v6301, %v6293
        %v6311 = vsel %vm3447, %v6303, %v6295
        %v6312 = vmul.f32 %v6308, %v257
        %v6313 = vmul.f32 %v6304, %v258
        %v6314 = vmul.f32 %v6309, %v257
        %v6315 = vmul.f32 %v6305, %v258
        %v6316 = vmul.f32 %v6310, %v257
        %v6317 = vmul.f32 %v6306, %v258
        %v6318 = vmul.f32 %v6311, %v257
        %v6319 = vmul.f32 %v6307, %v258
        %6320 = vset.pattern.permute.xlu0 45
        %6321 = vperm.xlu0 %6320, %v3378
        %v6322 = vpop.permute.xlu0 %6321
        %6324 = vset.pattern.permute.xlu0 45
        %6325 = vperm.xlu0 %6324, %v3379
        %v6326 = vpop.permute.xlu0 %6325
        %6328 = vset.pattern.permute.xlu0 45
        %6329 = vperm.xlu0 %6328, %v3380
        %v6330 = vpop.permute.xlu0 %6329
        %6332 = vset.pattern.permute.xlu0 45
        %6333 = vperm.xlu0 %6332, %v3381
        %v6334 = vpop.permute.xlu0 %6333
        %v6336 = vmul.f32 %v6312, %v6322
        %v6337 = vmul.f32 %v6313, %v6322
        %v6338 = vmul.f32 %v6314, %v6326
        %v6339 = vmul.f32 %v6315, %v6326
        %v6340 = vmul.f32 %v6316, %v6330
        %v6341 = vmul.f32 %v6317, %v6330
        %v6342 = vmul.f32 %v6318, %v6334
        %v6343 = vmul.f32 %v6319, %v6334
        %v6344 = vadd.f32 %v6248, %v6336
        %v6345 = vadd.f32 %v6249, %v6337
        %v6346 = vadd.f32 %v6250, %v6338
        %v6347 = vadd.f32 %v6251, %v6339
        %v6348 = vadd.f32 %v6252, %v6340
        %v6349 = vadd.f32 %v6253, %v6341
        %v6350 = vadd.f32 %v6254, %v6342
        %v6351 = vadd.f32 %v6255, %v6343
        %6352 = vrot.lane.b32.xlu0 %v6280, 3
        %v6353 = vpop.permute.xlu0 %6352
        %6354 = vrot.lane.b32.xlu0 %v6282, 3
        %v6355 = vpop.permute.xlu0 %6354
        %6356 = vrot.lane.b32.xlu0 %v6284, 3
        %v6357 = vpop.permute.xlu0 %6356
        %6358 = vrot.lane.b32.xlu0 %v6286, 3
        %v6359 = vpop.permute.xlu0 %6358
        %6360 = vrot.lane.b32.xlu0 %v6281, 3
        %v6361 = vpop.permute.xlu0 %6360
        %6362 = vrot.lane.b32.xlu0 %v6283, 3
        %v6363 = vpop.permute.xlu0 %6362
        %6364 = vrot.lane.b32.xlu0 %v6285, 3
        %v6365 = vpop.permute.xlu0 %6364
        %6366 = vrot.lane.b32.xlu0 %v6287, 3
        %v6367 = vpop.permute.xlu0 %6366
        %v6368 = vsel %vm3516, %v6353, %v6361
        %v6369 = vsel %vm3516, %v6355, %v6363
        %v6370 = vsel %vm3516, %v6357, %v6365
        %v6371 = vsel %vm3516, %v6359, %v6367
        %v6372 = vsel %vm3516, %v6361, %v6353
        %v6373 = vsel %vm3516, %v6363, %v6355
        %v6374 = vsel %vm3516, %v6365, %v6357
        %v6375 = vsel %vm3516, %v6367, %v6359
        %v6376 = vmul.f32 %v6372, %v281
        %v6377 = vmul.f32 %v6368, %v282
        %v6378 = vmul.f32 %v6373, %v281
        %v6379 = vmul.f32 %v6369, %v282
        %v6380 = vmul.f32 %v6374, %v281
        %v6381 = vmul.f32 %v6370, %v282
        %v6382 = vmul.f32 %v6375, %v281
        %v6383 = vmul.f32 %v6371, %v282
        %6384 = vset.pattern.permute.xlu0 46
        %6385 = vperm.xlu0 %6384, %v3378
        %v6386 = vpop.permute.xlu0 %6385
        %6388 = vset.pattern.permute.xlu0 46
        %6389 = vperm.xlu0 %6388, %v3379
        %v6390 = vpop.permute.xlu0 %6389
        %6392 = vset.pattern.permute.xlu0 46
        %6393 = vperm.xlu0 %6392, %v3380
        %v6394 = vpop.permute.xlu0 %6393
        %6396 = vset.pattern.permute.xlu0 46
        %6397 = vperm.xlu0 %6396, %v3381
        %v6398 = vpop.permute.xlu0 %6397
        %v6400 = vmul.f32 %v6376, %v6386
        %v6401 = vmul.f32 %v6377, %v6386
        %v6402 = vmul.f32 %v6378, %v6390
        %v6403 = vmul.f32 %v6379, %v6390
        %v6404 = vmul.f32 %v6380, %v6394
        %v6405 = vmul.f32 %v6381, %v6394
        %v6406 = vmul.f32 %v6382, %v6398
        %v6407 = vmul.f32 %v6383, %v6398
        %v6408 = vadd.f32 %v6344, %v6400
        %v6409 = vadd.f32 %v6345, %v6401
        %v6410 = vadd.f32 %v6346, %v6402
        %v6411 = vadd.f32 %v6347, %v6403
        %v6412 = vadd.f32 %v6348, %v6404
        %v6413 = vadd.f32 %v6349, %v6405
        %v6414 = vadd.f32 %v6350, %v6406
        %v6415 = vadd.f32 %v6351, %v6407
        %6416 = vrot.lane.b32.xlu0 %v6280, 2
        %v6417 = vpop.permute.xlu0 %6416
        %6418 = vrot.lane.b32.xlu0 %v6282, 2
        %v6419 = vpop.permute.xlu0 %6418
        %6420 = vrot.lane.b32.xlu0 %v6284, 2
        %v6421 = vpop.permute.xlu0 %6420
        %6422 = vrot.lane.b32.xlu0 %v6286, 2
        %v6423 = vpop.permute.xlu0 %6422
        %6424 = vrot.lane.b32.xlu0 %v6281, 2
        %v6425 = vpop.permute.xlu0 %6424
        %6426 = vrot.lane.b32.xlu0 %v6283, 2
        %v6427 = vpop.permute.xlu0 %6426
        %6428 = vrot.lane.b32.xlu0 %v6285, 2
        %v6429 = vpop.permute.xlu0 %6428
        %6430 = vrot.lane.b32.xlu0 %v6287, 2
        %v6431 = vpop.permute.xlu0 %6430
        %v6432 = vsel %vm442, %v6417, %v6425
        %v6433 = vsel %vm442, %v6419, %v6427
        %v6434 = vsel %vm442, %v6421, %v6429
        %v6435 = vsel %vm442, %v6423, %v6431
        %v6436 = vsel %vm442, %v6425, %v6417
        %v6437 = vsel %vm442, %v6427, %v6419
        %v6438 = vsel %vm442, %v6429, %v6421
        %v6439 = vsel %vm442, %v6431, %v6423
        %v6440 = vmul.f32 %v6436, %v305
        %v6441 = vmul.f32 %v6432, %v306
        %v6442 = vmul.f32 %v6437, %v305
        %v6443 = vmul.f32 %v6433, %v306
        %v6444 = vmul.f32 %v6438, %v305
        %v6445 = vmul.f32 %v6434, %v306
        %v6446 = vmul.f32 %v6439, %v305
        %v6447 = vmul.f32 %v6435, %v306
        %6448 = vset.pattern.permute.xlu0 47
        %6449 = vperm.xlu0 %6448, %v3378
        %v6450 = vpop.permute.xlu0 %6449
        %6452 = vset.pattern.permute.xlu0 47
        %6453 = vperm.xlu0 %6452, %v3379
        %v6454 = vpop.permute.xlu0 %6453
        %6456 = vset.pattern.permute.xlu0 47
        %6457 = vperm.xlu0 %6456, %v3380
        %v6458 = vpop.permute.xlu0 %6457
        %6460 = vset.pattern.permute.xlu0 47
        %6461 = vperm.xlu0 %6460, %v3381
        %v6462 = vpop.permute.xlu0 %6461
        %v6464 = vmul.f32 %v6440, %v6450
        %v6465 = vmul.f32 %v6441, %v6450
        %v6466 = vmul.f32 %v6442, %v6454
        %v6467 = vmul.f32 %v6443, %v6454
        %v6468 = vmul.f32 %v6444, %v6458
        %v6469 = vmul.f32 %v6445, %v6458
        %v6470 = vmul.f32 %v6446, %v6462
        %v6471 = vmul.f32 %v6447, %v6462
        %v6472 = vadd.f32 %v6408, %v6464
        %v6473 = vadd.f32 %v6409, %v6465
        %v6474 = vadd.f32 %v6410, %v6466
        %v6475 = vadd.f32 %v6411, %v6467
        %v6476 = vadd.f32 %v6412, %v6468
        %v6477 = vadd.f32 %v6413, %v6469
        %v6478 = vadd.f32 %v6414, %v6470
        %v6479 = vadd.f32 %v6415, %v6471
        %6480 = vrot.lane.b32.xlu0 %v6280, 1
        %v6481 = vpop.permute.xlu0 %6480
        %6482 = vrot.lane.b32.xlu0 %v6282, 1
        %v6483 = vpop.permute.xlu0 %6482
        %6484 = vrot.lane.b32.xlu0 %v6284, 1
        %v6485 = vpop.permute.xlu0 %6484
        %6486 = vrot.lane.b32.xlu0 %v6286, 1
        %v6487 = vpop.permute.xlu0 %6486
        %6488 = vrot.lane.b32.xlu0 %v6281, 1
        %v6489 = vpop.permute.xlu0 %6488
        %6490 = vrot.lane.b32.xlu0 %v6283, 1
        %v6491 = vpop.permute.xlu0 %6490
        %6492 = vrot.lane.b32.xlu0 %v6285, 1
        %v6493 = vpop.permute.xlu0 %6492
        %6494 = vrot.lane.b32.xlu0 %v6287, 1
        %v6495 = vpop.permute.xlu0 %6494
        %v6496 = vsel %vm453, %v6481, %v6489
        %v6497 = vsel %vm453, %v6483, %v6491
        %v6498 = vsel %vm453, %v6485, %v6493
        %v6499 = vsel %vm453, %v6487, %v6495
        %v6500 = vsel %vm453, %v6489, %v6481
        %v6501 = vsel %vm453, %v6491, %v6483
        %v6502 = vsel %vm453, %v6493, %v6485
        %v6503 = vsel %vm453, %v6495, %v6487
        %v6504 = vmul.f32 %v6500, %v329
        %v6505 = vmul.f32 %v6496, %v330
        %v6506 = vmul.f32 %v6501, %v329
        %v6507 = vmul.f32 %v6497, %v330
        %v6508 = vmul.f32 %v6502, %v329
        %v6509 = vmul.f32 %v6498, %v330
        %v6510 = vmul.f32 %v6503, %v329
        %v6511 = vmul.f32 %v6499, %v330
        %6512 = vset.pattern.permute.xlu0 48
        %6513 = vperm.xlu0 %6512, %v3378
        %v6514 = vpop.permute.xlu0 %6513
        %6516 = vset.pattern.permute.xlu0 48
        %6517 = vperm.xlu0 %6516, %v3379
        %v6518 = vpop.permute.xlu0 %6517
        %6520 = vset.pattern.permute.xlu0 48
        %6521 = vperm.xlu0 %6520, %v3380
        %v6522 = vpop.permute.xlu0 %6521
        %6524 = vset.pattern.permute.xlu0 48
        %6525 = vperm.xlu0 %6524, %v3381
        %v6526 = vpop.permute.xlu0 %6525
        %v6528 = vmul.f32 %v6504, %v6514
        %v6529 = vmul.f32 %v6505, %v6514
        %v6530 = vmul.f32 %v6506, %v6518
        %v6531 = vmul.f32 %v6507, %v6518
        %v6532 = vmul.f32 %v6508, %v6522
        %v6533 = vmul.f32 %v6509, %v6522
        %v6534 = vmul.f32 %v6510, %v6526
        %v6535 = vmul.f32 %v6511, %v6526
        %v6536 = vadd.f32 %v6472, %v6528
        %v6537 = vadd.f32 %v6473, %v6529
        %v6538 = vadd.f32 %v6474, %v6530
        %v6539 = vadd.f32 %v6475, %v6531
        %v6540 = vadd.f32 %v6476, %v6532
        %v6541 = vadd.f32 %v6477, %v6533
        %v6542 = vadd.f32 %v6478, %v6534
        %v6543 = vadd.f32 %v6479, %v6535
        %6544 = vset.pattern.permute.xlu0 49
        %6545 = vperm.xlu0 %6544, %v3378
        %v6546 = vpop.permute.xlu0 %6545
        %6548 = vset.pattern.permute.xlu0 49
        %6549 = vperm.xlu0 %6548, %v3379
        %v6550 = vpop.permute.xlu0 %6549
        %6552 = vset.pattern.permute.xlu0 49
        %6553 = vperm.xlu0 %6552, %v3380
        %v6554 = vpop.permute.xlu0 %6553
        %6556 = vset.pattern.permute.xlu0 49
        %6557 = vperm.xlu0 %6556, %v3381
        %v6558 = vpop.permute.xlu0 %6557
        %v6560 = vmul.f32 %v6280, %v6546
        %v6561 = vmul.f32 %v6281, %v6546
        %v6562 = vmul.f32 %v6282, %v6550
        %v6563 = vmul.f32 %v6283, %v6550
        %v6564 = vmul.f32 %v6284, %v6554
        %v6565 = vmul.f32 %v6285, %v6554
        %v6566 = vmul.f32 %v6286, %v6558
        %v6567 = vmul.f32 %v6287, %v6558
        %v6568 = vadd.f32 %v6536, %v6560
        %v6569 = vadd.f32 %v6537, %v6561
        %v6570 = vadd.f32 %v6538, %v6562
        %v6571 = vadd.f32 %v6539, %v6563
        %v6572 = vadd.f32 %v6540, %v6564
        %v6573 = vadd.f32 %v6541, %v6565
        %v6574 = vadd.f32 %v6542, %v6566
        %v6575 = vadd.f32 %v6543, %v6567
        %6576 = vrot.lane.b32.xlu0 %v6280, 127
        %v6577 = vpop.permute.xlu0 %6576
        %6578 = vrot.lane.b32.xlu0 %v6282, 127
        %v6579 = vpop.permute.xlu0 %6578
        %6580 = vrot.lane.b32.xlu0 %v6284, 127
        %v6581 = vpop.permute.xlu0 %6580
        %6582 = vrot.lane.b32.xlu0 %v6286, 127
        %v6583 = vpop.permute.xlu0 %6582
        %6584 = vrot.lane.b32.xlu0 %v6281, 127
        %v6585 = vpop.permute.xlu0 %6584
        %6586 = vrot.lane.b32.xlu0 %v6283, 127
        %v6587 = vpop.permute.xlu0 %6586
        %6588 = vrot.lane.b32.xlu0 %v6285, 127
        %v6589 = vpop.permute.xlu0 %6588
        %6590 = vrot.lane.b32.xlu0 %v6287, 127
        %v6591 = vpop.permute.xlu0 %6590
        %v6592 = vsel %vm466, %v6577, %v6585
        %v6593 = vsel %vm466, %v6579, %v6587
        %v6594 = vsel %vm466, %v6581, %v6589
        %v6595 = vsel %vm466, %v6583, %v6591
        %v6596 = vsel %vm466, %v6585, %v6577
        %v6597 = vsel %vm466, %v6587, %v6579
        %v6598 = vsel %vm466, %v6589, %v6581
        %v6599 = vsel %vm466, %v6591, %v6583
        %v6600 = vmul.f32 %v6592, %v353
        %v6601 = vmul.f32 %v6596, %v354
        %v6602 = vmul.f32 %v6593, %v353
        %v6603 = vmul.f32 %v6597, %v354
        %v6604 = vmul.f32 %v6594, %v353
        %v6605 = vmul.f32 %v6598, %v354
        %v6606 = vmul.f32 %v6595, %v353
        %v6607 = vmul.f32 %v6599, %v354
        %6608 = vset.pattern.permute.xlu0 50
        %6609 = vperm.xlu0 %6608, %v3378
        %v6610 = vpop.permute.xlu0 %6609
        %6612 = vset.pattern.permute.xlu0 50
        %6613 = vperm.xlu0 %6612, %v3379
        %v6614 = vpop.permute.xlu0 %6613
        %6616 = vset.pattern.permute.xlu0 50
        %6617 = vperm.xlu0 %6616, %v3380
        %v6618 = vpop.permute.xlu0 %6617
        %6620 = vset.pattern.permute.xlu0 50
        %6621 = vperm.xlu0 %6620, %v3381
        %v6622 = vpop.permute.xlu0 %6621
        %v6624 = vmul.f32 %v6600, %v6610
        %v6625 = vmul.f32 %v6601, %v6610
        %v6626 = vmul.f32 %v6602, %v6614
        %v6627 = vmul.f32 %v6603, %v6614
        %v6628 = vmul.f32 %v6604, %v6618
        %v6629 = vmul.f32 %v6605, %v6618
        %v6630 = vmul.f32 %v6606, %v6622
        %v6631 = vmul.f32 %v6607, %v6622
        %v6632 = vadd.f32 %v6568, %v6624
        %v6633 = vadd.f32 %v6569, %v6625
        %v6634 = vadd.f32 %v6570, %v6626
        %v6635 = vadd.f32 %v6571, %v6627
        %v6636 = vadd.f32 %v6572, %v6628
        %v6637 = vadd.f32 %v6573, %v6629
        %v6638 = vadd.f32 %v6574, %v6630
        %v6639 = vadd.f32 %v6575, %v6631
        %6640 = vrot.lane.b32.xlu0 %v6280, 126
        %v6641 = vpop.permute.xlu0 %6640
        %6642 = vrot.lane.b32.xlu0 %v6282, 126
        %v6643 = vpop.permute.xlu0 %6642
        %6644 = vrot.lane.b32.xlu0 %v6284, 126
        %v6645 = vpop.permute.xlu0 %6644
        %6646 = vrot.lane.b32.xlu0 %v6286, 126
        %v6647 = vpop.permute.xlu0 %6646
        %6648 = vrot.lane.b32.xlu0 %v6281, 126
        %v6649 = vpop.permute.xlu0 %6648
        %6650 = vrot.lane.b32.xlu0 %v6283, 126
        %v6651 = vpop.permute.xlu0 %6650
        %6652 = vrot.lane.b32.xlu0 %v6285, 126
        %v6653 = vpop.permute.xlu0 %6652
        %6654 = vrot.lane.b32.xlu0 %v6287, 126
        %v6655 = vpop.permute.xlu0 %6654
        %v6656 = vsel %vm477, %v6641, %v6649
        %v6657 = vsel %vm477, %v6643, %v6651
        %v6658 = vsel %vm477, %v6645, %v6653
        %v6659 = vsel %vm477, %v6647, %v6655
        %v6660 = vsel %vm477, %v6649, %v6641
        %v6661 = vsel %vm477, %v6651, %v6643
        %v6662 = vsel %vm477, %v6653, %v6645
        %v6663 = vsel %vm477, %v6655, %v6647
        %v6664 = vmul.f32 %v6656, %v377
        %v6665 = vmul.f32 %v6660, %v378
        %v6666 = vmul.f32 %v6657, %v377
        %v6667 = vmul.f32 %v6661, %v378
        %v6668 = vmul.f32 %v6658, %v377
        %v6669 = vmul.f32 %v6662, %v378
        %v6670 = vmul.f32 %v6659, %v377
        %v6671 = vmul.f32 %v6663, %v378
        %6672 = vset.pattern.permute.xlu0 51
        %6673 = vperm.xlu0 %6672, %v3378
        %v6674 = vpop.permute.xlu0 %6673
        %6676 = vset.pattern.permute.xlu0 51
        %6677 = vperm.xlu0 %6676, %v3379
        %v6678 = vpop.permute.xlu0 %6677
        %6680 = vset.pattern.permute.xlu0 51
        %6681 = vperm.xlu0 %6680, %v3380
        %v6682 = vpop.permute.xlu0 %6681
        %6684 = vset.pattern.permute.xlu0 51
        %6685 = vperm.xlu0 %6684, %v3381
        %v6686 = vpop.permute.xlu0 %6685
        %v6688 = vmul.f32 %v6664, %v6674
        %v6689 = vmul.f32 %v6665, %v6674
        %v6690 = vmul.f32 %v6666, %v6678
        %v6691 = vmul.f32 %v6667, %v6678
        %v6692 = vmul.f32 %v6668, %v6682
        %v6693 = vmul.f32 %v6669, %v6682
        %v6694 = vmul.f32 %v6670, %v6686
        %v6695 = vmul.f32 %v6671, %v6686
        %v6696 = vadd.f32 %v6632, %v6688
        %v6697 = vadd.f32 %v6633, %v6689
        %v6698 = vadd.f32 %v6634, %v6690
        %v6699 = vadd.f32 %v6635, %v6691
        %v6700 = vadd.f32 %v6636, %v6692
        %v6701 = vadd.f32 %v6637, %v6693
        %v6702 = vadd.f32 %v6638, %v6694
        %v6703 = vadd.f32 %v6639, %v6695
        %6704 = vrot.lane.b32.xlu0 %v6280, 125
        %v6705 = vpop.permute.xlu0 %6704
        %6706 = vrot.lane.b32.xlu0 %v6282, 125
        %v6707 = vpop.permute.xlu0 %6706
        %6708 = vrot.lane.b32.xlu0 %v6284, 125
        %v6709 = vpop.permute.xlu0 %6708
        %6710 = vrot.lane.b32.xlu0 %v6286, 125
        %v6711 = vpop.permute.xlu0 %6710
        %6712 = vrot.lane.b32.xlu0 %v6281, 125
        %v6713 = vpop.permute.xlu0 %6712
        %6714 = vrot.lane.b32.xlu0 %v6283, 125
        %v6715 = vpop.permute.xlu0 %6714
        %6716 = vrot.lane.b32.xlu0 %v6285, 125
        %v6717 = vpop.permute.xlu0 %6716
        %6718 = vrot.lane.b32.xlu0 %v6287, 125
        %v6719 = vpop.permute.xlu0 %6718
        %v6720 = vsel %vm3869, %v6705, %v6713
        %v6721 = vsel %vm3869, %v6707, %v6715
        %v6722 = vsel %vm3869, %v6709, %v6717
        %v6723 = vsel %vm3869, %v6711, %v6719
        %v6724 = vsel %vm3869, %v6713, %v6705
        %v6725 = vsel %vm3869, %v6715, %v6707
        %v6726 = vsel %vm3869, %v6717, %v6709
        %v6727 = vsel %vm3869, %v6719, %v6711
        %v6728 = vmul.f32 %v6720, %v401
        %v6729 = vmul.f32 %v6724, %v402
        %v6730 = vmul.f32 %v6721, %v401
        %v6731 = vmul.f32 %v6725, %v402
        %v6732 = vmul.f32 %v6722, %v401
        %v6733 = vmul.f32 %v6726, %v402
        %v6734 = vmul.f32 %v6723, %v401
        %v6735 = vmul.f32 %v6727, %v402
        %6736 = vset.pattern.permute.xlu0 52
        %6737 = vperm.xlu0 %6736, %v3378
        %v6738 = vpop.permute.xlu0 %6737
        %6740 = vset.pattern.permute.xlu0 52
        %6741 = vperm.xlu0 %6740, %v3379
        %v6742 = vpop.permute.xlu0 %6741
        %6744 = vset.pattern.permute.xlu0 52
        %6745 = vperm.xlu0 %6744, %v3380
        %v6746 = vpop.permute.xlu0 %6745
        %6748 = vset.pattern.permute.xlu0 52
        %6749 = vperm.xlu0 %6748, %v3381
        %v6750 = vpop.permute.xlu0 %6749
        %v6752 = vmul.f32 %v6728, %v6738
        %v6753 = vmul.f32 %v6729, %v6738
        %v6754 = vmul.f32 %v6730, %v6742
        %v6755 = vmul.f32 %v6731, %v6742
        %v6756 = vmul.f32 %v6732, %v6746
        %v6757 = vmul.f32 %v6733, %v6746
        %v6758 = vmul.f32 %v6734, %v6750
        %v6759 = vmul.f32 %v6735, %v6750
        %v6760 = vadd.f32 %v6696, %v6752
        %v6761 = vadd.f32 %v6697, %v6753
        %v6762 = vadd.f32 %v6698, %v6754
        %v6763 = vadd.f32 %v6699, %v6755
        %v6764 = vadd.f32 %v6700, %v6756
        %v6765 = vadd.f32 %v6701, %v6757
        %v6766 = vadd.f32 %v6702, %v6758
        %v6767 = vadd.f32 %v6703, %v6759
        %6768 = vrot.lane.b32.xlu0 %v6280, 124
        %v6769 = vpop.permute.xlu0 %6768
        %6770 = vrot.lane.b32.xlu0 %v6282, 124
        %v6771 = vpop.permute.xlu0 %6770
        %6772 = vrot.lane.b32.xlu0 %v6284, 124
        %v6773 = vpop.permute.xlu0 %6772
        %6774 = vrot.lane.b32.xlu0 %v6286, 124
        %v6775 = vpop.permute.xlu0 %6774
        %6776 = vrot.lane.b32.xlu0 %v6281, 124
        %v6777 = vpop.permute.xlu0 %6776
        %6778 = vrot.lane.b32.xlu0 %v6283, 124
        %v6779 = vpop.permute.xlu0 %6778
        %6780 = vrot.lane.b32.xlu0 %v6285, 124
        %v6781 = vpop.permute.xlu0 %6780
        %6782 = vrot.lane.b32.xlu0 %v6287, 124
        %v6783 = vpop.permute.xlu0 %6782
        %v6784 = vsel %vm3934, %v6769, %v6777
        %v6785 = vsel %vm3934, %v6771, %v6779
        %v6786 = vsel %vm3934, %v6773, %v6781
        %v6787 = vsel %vm3934, %v6775, %v6783
        %v6788 = vsel %vm3934, %v6777, %v6769
        %v6789 = vsel %vm3934, %v6779, %v6771
        %v6790 = vsel %vm3934, %v6781, %v6773
        %v6791 = vsel %vm3934, %v6783, %v6775
        %v6792 = vmul.f32 %v6784, %v425
        %v6793 = vmul.f32 %v6788, %v426
        %v6794 = vmul.f32 %v6785, %v425
        %v6795 = vmul.f32 %v6789, %v426
        %v6796 = vmul.f32 %v6786, %v425
        %v6797 = vmul.f32 %v6790, %v426
        %v6798 = vmul.f32 %v6787, %v425
        %v6799 = vmul.f32 %v6791, %v426
        %6800 = vset.pattern.permute.xlu0 53
        %6801 = vperm.xlu0 %6800, %v3378
        %v6802 = vpop.permute.xlu0 %6801
        %6804 = vset.pattern.permute.xlu0 53
        %6805 = vperm.xlu0 %6804, %v3379
        %v6806 = vpop.permute.xlu0 %6805
        %6808 = vset.pattern.permute.xlu0 53
        %6809 = vperm.xlu0 %6808, %v3380
        %v6810 = vpop.permute.xlu0 %6809
        %6812 = vset.pattern.permute.xlu0 53
        %6813 = vperm.xlu0 %6812, %v3381
        %v6814 = vpop.permute.xlu0 %6813
        %v6816 = vmul.f32 %v6792, %v6802
        %v6817 = vmul.f32 %v6793, %v6802
        %v6818 = vmul.f32 %v6794, %v6806
        %v6819 = vmul.f32 %v6795, %v6806
        %v6820 = vmul.f32 %v6796, %v6810
        %v6821 = vmul.f32 %v6797, %v6810
        %v6822 = vmul.f32 %v6798, %v6814
        %v6823 = vmul.f32 %v6799, %v6814
        %v6824 = vadd.f32 %v6760, %v6816
        %v6825 = vadd.f32 %v6761, %v6817
        %v6826 = vadd.f32 %v6762, %v6818
        %v6827 = vadd.f32 %v6763, %v6819
        %v6828 = vadd.f32 %v6764, %v6820
        %v6829 = vadd.f32 %v6765, %v6821
        %v6830 = vadd.f32 %v6766, %v6822
        %v6831 = vadd.f32 %v6767, %v6823
        %6832 = vrot.lane.b32.xlu0 %v3370, 96
        %v6833 = vpop.permute.xlu0 %6832
        %6834 = vrot.lane.b32.xlu0 %v3372, 96
        %v6835 = vpop.permute.xlu0 %6834
        %6836 = vrot.lane.b32.xlu0 %v3374, 96
        %v6837 = vpop.permute.xlu0 %6836
        %6838 = vrot.lane.b32.xlu0 %v3376, 96
        %v6839 = vpop.permute.xlu0 %6838
        %6840 = vrot.lane.b32.xlu0 %v3371, 96
        %v6841 = vpop.permute.xlu0 %6840
        %6842 = vrot.lane.b32.xlu0 %v3373, 96
        %v6843 = vpop.permute.xlu0 %6842
        %6844 = vrot.lane.b32.xlu0 %v3375, 96
        %v6845 = vpop.permute.xlu0 %6844
        %6846 = vrot.lane.b32.xlu0 %v3377, 96
        %v6847 = vpop.permute.xlu0 %6846
        %v6848 = vsel %vm632, %v6833, %v6841
        %v6849 = vsel %vm632, %v6835, %v6843
        %v6850 = vsel %vm632, %v6837, %v6845
        %v6851 = vsel %vm632, %v6839, %v6847
        %v6852 = vsel %vm632, %v6841, %v6833
        %v6853 = vsel %vm632, %v6843, %v6835
        %v6854 = vsel %vm632, %v6845, %v6837
        %v6855 = vsel %vm632, %v6847, %v6839
        %v6856 = vmul.f32 %v6848, %v365
        %v6857 = vmul.f32 %v6852, %v366
        %v6858 = vmul.f32 %v6849, %v365
        %v6859 = vmul.f32 %v6853, %v366
        %v6860 = vmul.f32 %v6850, %v365
        %v6861 = vmul.f32 %v6854, %v366
        %v6862 = vmul.f32 %v6851, %v365
        %v6863 = vmul.f32 %v6855, %v366
        %6864 = vrot.lane.b32.xlu0 %v6856, 4
        %v6865 = vpop.permute.xlu0 %6864
        %6866 = vrot.lane.b32.xlu0 %v6858, 4
        %v6867 = vpop.permute.xlu0 %6866
        %6868 = vrot.lane.b32.xlu0 %v6860, 4
        %v6869 = vpop.permute.xlu0 %6868
        %6870 = vrot.lane.b32.xlu0 %v6862, 4
        %v6871 = vpop.permute.xlu0 %6870
        %6872 = vrot.lane.b32.xlu0 %v6857, 4
        %v6873 = vpop.permute.xlu0 %6872
        %6874 = vrot.lane.b32.xlu0 %v6859, 4
        %v6875 = vpop.permute.xlu0 %6874
        %6876 = vrot.lane.b32.xlu0 %v6861, 4
        %v6877 = vpop.permute.xlu0 %6876
        %6878 = vrot.lane.b32.xlu0 %v6863, 4
        %v6879 = vpop.permute.xlu0 %6878
        %v6880 = vsel %vm3447, %v6865, %v6873
        %v6881 = vsel %vm3447, %v6867, %v6875
        %v6882 = vsel %vm3447, %v6869, %v6877
        %v6883 = vsel %vm3447, %v6871, %v6879
        %v6884 = vsel %vm3447, %v6873, %v6865
        %v6885 = vsel %vm3447, %v6875, %v6867
        %v6886 = vsel %vm3447, %v6877, %v6869
        %v6887 = vsel %vm3447, %v6879, %v6871
        %v6888 = vmul.f32 %v6884, %v257
        %v6889 = vmul.f32 %v6880, %v258
        %v6890 = vmul.f32 %v6885, %v257
        %v6891 = vmul.f32 %v6881, %v258
        %v6892 = vmul.f32 %v6886, %v257
        %v6893 = vmul.f32 %v6882, %v258
        %v6894 = vmul.f32 %v6887, %v257
        %v6895 = vmul.f32 %v6883, %v258
        %6896 = vset.pattern.permute.xlu0 54
        %6897 = vperm.xlu0 %6896, %v3378
        %v6898 = vpop.permute.xlu0 %6897
        %6900 = vset.pattern.permute.xlu0 54
        %6901 = vperm.xlu0 %6900, %v3379
        %v6902 = vpop.permute.xlu0 %6901
        %6904 = vset.pattern.permute.xlu0 54
        %6905 = vperm.xlu0 %6904, %v3380
        %v6906 = vpop.permute.xlu0 %6905
        %6908 = vset.pattern.permute.xlu0 54
        %6909 = vperm.xlu0 %6908, %v3381
        %v6910 = vpop.permute.xlu0 %6909
        %v6912 = vmul.f32 %v6888, %v6898
        %v6913 = vmul.f32 %v6889, %v6898
        %v6914 = vmul.f32 %v6890, %v6902
        %v6915 = vmul.f32 %v6891, %v6902
        %v6916 = vmul.f32 %v6892, %v6906
        %v6917 = vmul.f32 %v6893, %v6906
        %v6918 = vmul.f32 %v6894, %v6910
        %v6919 = vmul.f32 %v6895, %v6910
        %v6920 = vadd.f32 %v6824, %v6912
        %v6921 = vadd.f32 %v6825, %v6913
        %v6922 = vadd.f32 %v6826, %v6914
        %v6923 = vadd.f32 %v6827, %v6915
        %v6924 = vadd.f32 %v6828, %v6916
        %v6925 = vadd.f32 %v6829, %v6917
        %v6926 = vadd.f32 %v6830, %v6918
        %v6927 = vadd.f32 %v6831, %v6919
        %6928 = vrot.lane.b32.xlu0 %v6856, 3
        %v6929 = vpop.permute.xlu0 %6928
        %6930 = vrot.lane.b32.xlu0 %v6858, 3
        %v6931 = vpop.permute.xlu0 %6930
        %6932 = vrot.lane.b32.xlu0 %v6860, 3
        %v6933 = vpop.permute.xlu0 %6932
        %6934 = vrot.lane.b32.xlu0 %v6862, 3
        %v6935 = vpop.permute.xlu0 %6934
        %6936 = vrot.lane.b32.xlu0 %v6857, 3
        %v6937 = vpop.permute.xlu0 %6936
        %6938 = vrot.lane.b32.xlu0 %v6859, 3
        %v6939 = vpop.permute.xlu0 %6938
        %6940 = vrot.lane.b32.xlu0 %v6861, 3
        %v6941 = vpop.permute.xlu0 %6940
        %6942 = vrot.lane.b32.xlu0 %v6863, 3
        %v6943 = vpop.permute.xlu0 %6942
        %v6944 = vsel %vm3516, %v6929, %v6937
        %v6945 = vsel %vm3516, %v6931, %v6939
        %v6946 = vsel %vm3516, %v6933, %v6941
        %v6947 = vsel %vm3516, %v6935, %v6943
        %v6948 = vsel %vm3516, %v6937, %v6929
        %v6949 = vsel %vm3516, %v6939, %v6931
        %v6950 = vsel %vm3516, %v6941, %v6933
        %v6951 = vsel %vm3516, %v6943, %v6935
        %v6952 = vmul.f32 %v6948, %v281
        %v6953 = vmul.f32 %v6944, %v282
        %v6954 = vmul.f32 %v6949, %v281
        %v6955 = vmul.f32 %v6945, %v282
        %v6956 = vmul.f32 %v6950, %v281
        %v6957 = vmul.f32 %v6946, %v282
        %v6958 = vmul.f32 %v6951, %v281
        %v6959 = vmul.f32 %v6947, %v282
        %6960 = vset.pattern.permute.xlu0 55
        %6961 = vperm.xlu0 %6960, %v3378
        %v6962 = vpop.permute.xlu0 %6961
        %6964 = vset.pattern.permute.xlu0 55
        %6965 = vperm.xlu0 %6964, %v3379
        %v6966 = vpop.permute.xlu0 %6965
        %6968 = vset.pattern.permute.xlu0 55
        %6969 = vperm.xlu0 %6968, %v3380
        %v6970 = vpop.permute.xlu0 %6969
        %6972 = vset.pattern.permute.xlu0 55
        %6973 = vperm.xlu0 %6972, %v3381
        %v6974 = vpop.permute.xlu0 %6973
        %v6976 = vmul.f32 %v6952, %v6962
        %v6977 = vmul.f32 %v6953, %v6962
        %v6978 = vmul.f32 %v6954, %v6966
        %v6979 = vmul.f32 %v6955, %v6966
        %v6980 = vmul.f32 %v6956, %v6970
        %v6981 = vmul.f32 %v6957, %v6970
        %v6982 = vmul.f32 %v6958, %v6974
        %v6983 = vmul.f32 %v6959, %v6974
        %v6984 = vadd.f32 %v6920, %v6976
        %v6985 = vadd.f32 %v6921, %v6977
        %v6986 = vadd.f32 %v6922, %v6978
        %v6987 = vadd.f32 %v6923, %v6979
        %v6988 = vadd.f32 %v6924, %v6980
        %v6989 = vadd.f32 %v6925, %v6981
        %v6990 = vadd.f32 %v6926, %v6982
        %v6991 = vadd.f32 %v6927, %v6983
        %6992 = vrot.lane.b32.xlu0 %v6856, 2
        %v6993 = vpop.permute.xlu0 %6992
        %6994 = vrot.lane.b32.xlu0 %v6858, 2
        %v6995 = vpop.permute.xlu0 %6994
        %6996 = vrot.lane.b32.xlu0 %v6860, 2
        %v6997 = vpop.permute.xlu0 %6996
        %6998 = vrot.lane.b32.xlu0 %v6862, 2
        %v6999 = vpop.permute.xlu0 %6998
        %7000 = vrot.lane.b32.xlu0 %v6857, 2
        %v7001 = vpop.permute.xlu0 %7000
        %7002 = vrot.lane.b32.xlu0 %v6859, 2
        %v7003 = vpop.permute.xlu0 %7002
        %7004 = vrot.lane.b32.xlu0 %v6861, 2
        %v7005 = vpop.permute.xlu0 %7004
        %7006 = vrot.lane.b32.xlu0 %v6863, 2
        %v7007 = vpop.permute.xlu0 %7006
        %v7008 = vsel %vm442, %v6993, %v7001
        %v7009 = vsel %vm442, %v6995, %v7003
        %v7010 = vsel %vm442, %v6997, %v7005
        %v7011 = vsel %vm442, %v6999, %v7007
        %v7012 = vsel %vm442, %v7001, %v6993
        %v7013 = vsel %vm442, %v7003, %v6995
        %v7014 = vsel %vm442, %v7005, %v6997
        %v7015 = vsel %vm442, %v7007, %v6999
        %v7016 = vmul.f32 %v7012, %v305
        %v7017 = vmul.f32 %v7008, %v306
        %v7018 = vmul.f32 %v7013, %v305
        %v7019 = vmul.f32 %v7009, %v306
        %v7020 = vmul.f32 %v7014, %v305
        %v7021 = vmul.f32 %v7010, %v306
        %v7022 = vmul.f32 %v7015, %v305
        %v7023 = vmul.f32 %v7011, %v306
        %7024 = vset.pattern.permute.xlu0 56
        %7025 = vperm.xlu0 %7024, %v3378
        %v7026 = vpop.permute.xlu0 %7025
        %7028 = vset.pattern.permute.xlu0 56
        %7029 = vperm.xlu0 %7028, %v3379
        %v7030 = vpop.permute.xlu0 %7029
        %7032 = vset.pattern.permute.xlu0 56
        %7033 = vperm.xlu0 %7032, %v3380
        %v7034 = vpop.permute.xlu0 %7033
        %7036 = vset.pattern.permute.xlu0 56
        %7037 = vperm.xlu0 %7036, %v3381
        %v7038 = vpop.permute.xlu0 %7037
        %v7040 = vmul.f32 %v7016, %v7026
        %v7041 = vmul.f32 %v7017, %v7026
        %v7042 = vmul.f32 %v7018, %v7030
        %v7043 = vmul.f32 %v7019, %v7030
        %v7044 = vmul.f32 %v7020, %v7034
        %v7045 = vmul.f32 %v7021, %v7034
        %v7046 = vmul.f32 %v7022, %v7038
        %v7047 = vmul.f32 %v7023, %v7038
        %v7048 = vadd.f32 %v6984, %v7040
        %v7049 = vadd.f32 %v6985, %v7041
        %v7050 = vadd.f32 %v6986, %v7042
        %v7051 = vadd.f32 %v6987, %v7043
        %v7052 = vadd.f32 %v6988, %v7044
        %v7053 = vadd.f32 %v6989, %v7045
        %v7054 = vadd.f32 %v6990, %v7046
        %v7055 = vadd.f32 %v6991, %v7047
        %7056 = vrot.lane.b32.xlu0 %v6856, 1
        %v7057 = vpop.permute.xlu0 %7056
        %7058 = vrot.lane.b32.xlu0 %v6858, 1
        %v7059 = vpop.permute.xlu0 %7058
        %7060 = vrot.lane.b32.xlu0 %v6860, 1
        %v7061 = vpop.permute.xlu0 %7060
        %7062 = vrot.lane.b32.xlu0 %v6862, 1
        %v7063 = vpop.permute.xlu0 %7062
        %7064 = vrot.lane.b32.xlu0 %v6857, 1
        %v7065 = vpop.permute.xlu0 %7064
        %7066 = vrot.lane.b32.xlu0 %v6859, 1
        %v7067 = vpop.permute.xlu0 %7066
        %7068 = vrot.lane.b32.xlu0 %v6861, 1
        %v7069 = vpop.permute.xlu0 %7068
        %7070 = vrot.lane.b32.xlu0 %v6863, 1
        %v7071 = vpop.permute.xlu0 %7070
        %v7072 = vsel %vm453, %v7057, %v7065
        %v7073 = vsel %vm453, %v7059, %v7067
        %v7074 = vsel %vm453, %v7061, %v7069
        %v7075 = vsel %vm453, %v7063, %v7071
        %v7076 = vsel %vm453, %v7065, %v7057
        %v7077 = vsel %vm453, %v7067, %v7059
        %v7078 = vsel %vm453, %v7069, %v7061
        %v7079 = vsel %vm453, %v7071, %v7063
        %v7080 = vmul.f32 %v7076, %v329
        %v7081 = vmul.f32 %v7072, %v330
        %v7082 = vmul.f32 %v7077, %v329
        %v7083 = vmul.f32 %v7073, %v330
        %v7084 = vmul.f32 %v7078, %v329
        %v7085 = vmul.f32 %v7074, %v330
        %v7086 = vmul.f32 %v7079, %v329
        %v7087 = vmul.f32 %v7075, %v330
        %7088 = vset.pattern.permute.xlu0 57
        %7089 = vperm.xlu0 %7088, %v3378
        %v7090 = vpop.permute.xlu0 %7089
        %7092 = vset.pattern.permute.xlu0 57
        %7093 = vperm.xlu0 %7092, %v3379
        %v7094 = vpop.permute.xlu0 %7093
        %7096 = vset.pattern.permute.xlu0 57
        %7097 = vperm.xlu0 %7096, %v3380
        %v7098 = vpop.permute.xlu0 %7097
        %7100 = vset.pattern.permute.xlu0 57
        %7101 = vperm.xlu0 %7100, %v3381
        %v7102 = vpop.permute.xlu0 %7101
        %v7104 = vmul.f32 %v7080, %v7090
        %v7105 = vmul.f32 %v7081, %v7090
        %v7106 = vmul.f32 %v7082, %v7094
        %v7107 = vmul.f32 %v7083, %v7094
        %v7108 = vmul.f32 %v7084, %v7098
        %v7109 = vmul.f32 %v7085, %v7098
        %v7110 = vmul.f32 %v7086, %v7102
        %v7111 = vmul.f32 %v7087, %v7102
        %v7112 = vadd.f32 %v7048, %v7104
        %v7113 = vadd.f32 %v7049, %v7105
        %v7114 = vadd.f32 %v7050, %v7106
        %v7115 = vadd.f32 %v7051, %v7107
        %v7116 = vadd.f32 %v7052, %v7108
        %v7117 = vadd.f32 %v7053, %v7109
        %v7118 = vadd.f32 %v7054, %v7110
        %v7119 = vadd.f32 %v7055, %v7111
        %7120 = vset.pattern.permute.xlu0 58
        %7121 = vperm.xlu0 %7120, %v3378
        %v7122 = vpop.permute.xlu0 %7121
        %7124 = vset.pattern.permute.xlu0 58
        %7125 = vperm.xlu0 %7124, %v3379
        %v7126 = vpop.permute.xlu0 %7125
        %7128 = vset.pattern.permute.xlu0 58
        %7129 = vperm.xlu0 %7128, %v3380
        %v7130 = vpop.permute.xlu0 %7129
        %7132 = vset.pattern.permute.xlu0 58
        %7133 = vperm.xlu0 %7132, %v3381
        %v7134 = vpop.permute.xlu0 %7133
        %v7136 = vmul.f32 %v6856, %v7122
        %v7137 = vmul.f32 %v6857, %v7122
        %v7138 = vmul.f32 %v6858, %v7126
        %v7139 = vmul.f32 %v6859, %v7126
        %v7140 = vmul.f32 %v6860, %v7130
        %v7141 = vmul.f32 %v6861, %v7130
        %v7142 = vmul.f32 %v6862, %v7134
        %v7143 = vmul.f32 %v6863, %v7134
        %v7144 = vadd.f32 %v7112, %v7136
        %v7145 = vadd.f32 %v7113, %v7137
        %v7146 = vadd.f32 %v7114, %v7138
        %v7147 = vadd.f32 %v7115, %v7139
        %v7148 = vadd.f32 %v7116, %v7140
        %v7149 = vadd.f32 %v7117, %v7141
        %v7150 = vadd.f32 %v7118, %v7142
        %v7151 = vadd.f32 %v7119, %v7143
        %7152 = vrot.lane.b32.xlu0 %v6856, 127
        %v7153 = vpop.permute.xlu0 %7152
        %7154 = vrot.lane.b32.xlu0 %v6858, 127
        %v7155 = vpop.permute.xlu0 %7154
        %7156 = vrot.lane.b32.xlu0 %v6860, 127
        %v7157 = vpop.permute.xlu0 %7156
        %7158 = vrot.lane.b32.xlu0 %v6862, 127
        %v7159 = vpop.permute.xlu0 %7158
        %7160 = vrot.lane.b32.xlu0 %v6857, 127
        %v7161 = vpop.permute.xlu0 %7160
        %7162 = vrot.lane.b32.xlu0 %v6859, 127
        %v7163 = vpop.permute.xlu0 %7162
        %7164 = vrot.lane.b32.xlu0 %v6861, 127
        %v7165 = vpop.permute.xlu0 %7164
        %7166 = vrot.lane.b32.xlu0 %v6863, 127
        %v7167 = vpop.permute.xlu0 %7166
        %v7168 = vsel %vm466, %v7153, %v7161
        %v7169 = vsel %vm466, %v7155, %v7163
        %v7170 = vsel %vm466, %v7157, %v7165
        %v7171 = vsel %vm466, %v7159, %v7167
        %v7172 = vsel %vm466, %v7161, %v7153
        %v7173 = vsel %vm466, %v7163, %v7155
        %v7174 = vsel %vm466, %v7165, %v7157
        %v7175 = vsel %vm466, %v7167, %v7159
        %v7176 = vmul.f32 %v7168, %v353
        %v7177 = vmul.f32 %v7172, %v354
        %v7178 = vmul.f32 %v7169, %v353
        %v7179 = vmul.f32 %v7173, %v354
        %v7180 = vmul.f32 %v7170, %v353
        %v7181 = vmul.f32 %v7174, %v354
        %v7182 = vmul.f32 %v7171, %v353
        %v7183 = vmul.f32 %v7175, %v354
        %7184 = vset.pattern.permute.xlu0 59
        %7185 = vperm.xlu0 %7184, %v3378
        %v7186 = vpop.permute.xlu0 %7185
        %7188 = vset.pattern.permute.xlu0 59
        %7189 = vperm.xlu0 %7188, %v3379
        %v7190 = vpop.permute.xlu0 %7189
        %7192 = vset.pattern.permute.xlu0 59
        %7193 = vperm.xlu0 %7192, %v3380
        %v7194 = vpop.permute.xlu0 %7193
        %7196 = vset.pattern.permute.xlu0 59
        %7197 = vperm.xlu0 %7196, %v3381
        %v7198 = vpop.permute.xlu0 %7197
        %v7200 = vmul.f32 %v7176, %v7186
        %v7201 = vmul.f32 %v7177, %v7186
        %v7202 = vmul.f32 %v7178, %v7190
        %v7203 = vmul.f32 %v7179, %v7190
        %v7204 = vmul.f32 %v7180, %v7194
        %v7205 = vmul.f32 %v7181, %v7194
        %v7206 = vmul.f32 %v7182, %v7198
        %v7207 = vmul.f32 %v7183, %v7198
        %v7208 = vadd.f32 %v7144, %v7200
        %v7209 = vadd.f32 %v7145, %v7201
        %v7210 = vadd.f32 %v7146, %v7202
        %v7211 = vadd.f32 %v7147, %v7203
        %v7212 = vadd.f32 %v7148, %v7204
        %v7213 = vadd.f32 %v7149, %v7205
        %v7214 = vadd.f32 %v7150, %v7206
        %v7215 = vadd.f32 %v7151, %v7207
        %7216 = vrot.lane.b32.xlu0 %v6856, 126
        %v7217 = vpop.permute.xlu0 %7216
        %7218 = vrot.lane.b32.xlu0 %v6858, 126
        %v7219 = vpop.permute.xlu0 %7218
        %7220 = vrot.lane.b32.xlu0 %v6860, 126
        %v7221 = vpop.permute.xlu0 %7220
        %7222 = vrot.lane.b32.xlu0 %v6862, 126
        %v7223 = vpop.permute.xlu0 %7222
        %7224 = vrot.lane.b32.xlu0 %v6857, 126
        %v7225 = vpop.permute.xlu0 %7224
        %7226 = vrot.lane.b32.xlu0 %v6859, 126
        %v7227 = vpop.permute.xlu0 %7226
        %7228 = vrot.lane.b32.xlu0 %v6861, 126
        %v7229 = vpop.permute.xlu0 %7228
        %7230 = vrot.lane.b32.xlu0 %v6863, 126
        %v7231 = vpop.permute.xlu0 %7230
        %v7232 = vsel %vm477, %v7217, %v7225
        %v7233 = vsel %vm477, %v7219, %v7227
        %v7234 = vsel %vm477, %v7221, %v7229
        %v7235 = vsel %vm477, %v7223, %v7231
        %v7236 = vsel %vm477, %v7225, %v7217
        %v7237 = vsel %vm477, %v7227, %v7219
        %v7238 = vsel %vm477, %v7229, %v7221
        %v7239 = vsel %vm477, %v7231, %v7223
        %v7240 = vmul.f32 %v7232, %v377
        %v7241 = vmul.f32 %v7236, %v378
        %v7242 = vmul.f32 %v7233, %v377
        %v7243 = vmul.f32 %v7237, %v378
        %v7244 = vmul.f32 %v7234, %v377
        %v7245 = vmul.f32 %v7238, %v378
        %v7246 = vmul.f32 %v7235, %v377
        %v7247 = vmul.f32 %v7239, %v378
        %7248 = vset.pattern.permute.xlu0 60
        %7249 = vperm.xlu0 %7248, %v3378
        %v7250 = vpop.permute.xlu0 %7249
        %7252 = vset.pattern.permute.xlu0 60
        %7253 = vperm.xlu0 %7252, %v3379
        %v7254 = vpop.permute.xlu0 %7253
        %7256 = vset.pattern.permute.xlu0 60
        %7257 = vperm.xlu0 %7256, %v3380
        %v7258 = vpop.permute.xlu0 %7257
        %7260 = vset.pattern.permute.xlu0 60
        %7261 = vperm.xlu0 %7260, %v3381
        %v7262 = vpop.permute.xlu0 %7261
        %v7264 = vmul.f32 %v7240, %v7250
        %v7265 = vmul.f32 %v7241, %v7250
        %v7266 = vmul.f32 %v7242, %v7254
        %v7267 = vmul.f32 %v7243, %v7254
        %v7268 = vmul.f32 %v7244, %v7258
        %v7269 = vmul.f32 %v7245, %v7258
        %v7270 = vmul.f32 %v7246, %v7262
        %v7271 = vmul.f32 %v7247, %v7262
        %v7272 = vadd.f32 %v7208, %v7264
        %v7273 = vadd.f32 %v7209, %v7265
        %v7274 = vadd.f32 %v7210, %v7266
        %v7275 = vadd.f32 %v7211, %v7267
        %v7276 = vadd.f32 %v7212, %v7268
        %v7277 = vadd.f32 %v7213, %v7269
        %v7278 = vadd.f32 %v7214, %v7270
        %v7279 = vadd.f32 %v7215, %v7271
        %7280 = vrot.lane.b32.xlu0 %v6856, 125
        %v7281 = vpop.permute.xlu0 %7280
        %7282 = vrot.lane.b32.xlu0 %v6858, 125
        %v7283 = vpop.permute.xlu0 %7282
        %7284 = vrot.lane.b32.xlu0 %v6860, 125
        %v7285 = vpop.permute.xlu0 %7284
        %7286 = vrot.lane.b32.xlu0 %v6862, 125
        %v7287 = vpop.permute.xlu0 %7286
        %7288 = vrot.lane.b32.xlu0 %v6857, 125
        %v7289 = vpop.permute.xlu0 %7288
        %7290 = vrot.lane.b32.xlu0 %v6859, 125
        %v7291 = vpop.permute.xlu0 %7290
        %7292 = vrot.lane.b32.xlu0 %v6861, 125
        %v7293 = vpop.permute.xlu0 %7292
        %7294 = vrot.lane.b32.xlu0 %v6863, 125
        %v7295 = vpop.permute.xlu0 %7294
        %v7296 = vsel %vm3869, %v7281, %v7289
        %v7297 = vsel %vm3869, %v7283, %v7291
        %v7298 = vsel %vm3869, %v7285, %v7293
        %v7299 = vsel %vm3869, %v7287, %v7295
        %v7300 = vsel %vm3869, %v7289, %v7281
        %v7301 = vsel %vm3869, %v7291, %v7283
        %v7302 = vsel %vm3869, %v7293, %v7285
        %v7303 = vsel %vm3869, %v7295, %v7287
        %v7304 = vmul.f32 %v7296, %v401
        %v7305 = vmul.f32 %v7300, %v402
        %v7306 = vmul.f32 %v7297, %v401
        %v7307 = vmul.f32 %v7301, %v402
        %v7308 = vmul.f32 %v7298, %v401
        %v7309 = vmul.f32 %v7302, %v402
        %v7310 = vmul.f32 %v7299, %v401
        %v7311 = vmul.f32 %v7303, %v402
        %7312 = vset.pattern.permute.xlu0 61
        %7313 = vperm.xlu0 %7312, %v3378
        %v7314 = vpop.permute.xlu0 %7313
        %7316 = vset.pattern.permute.xlu0 61
        %7317 = vperm.xlu0 %7316, %v3379
        %v7318 = vpop.permute.xlu0 %7317
        %7320 = vset.pattern.permute.xlu0 61
        %7321 = vperm.xlu0 %7320, %v3380
        %v7322 = vpop.permute.xlu0 %7321
        %7324 = vset.pattern.permute.xlu0 61
        %7325 = vperm.xlu0 %7324, %v3381
        %v7326 = vpop.permute.xlu0 %7325
        %v7328 = vmul.f32 %v7304, %v7314
        %v7329 = vmul.f32 %v7305, %v7314
        %v7330 = vmul.f32 %v7306, %v7318
        %v7331 = vmul.f32 %v7307, %v7318
        %v7332 = vmul.f32 %v7308, %v7322
        %v7333 = vmul.f32 %v7309, %v7322
        %v7334 = vmul.f32 %v7310, %v7326
        %v7335 = vmul.f32 %v7311, %v7326
        %v7336 = vadd.f32 %v7272, %v7328
        %v7337 = vadd.f32 %v7273, %v7329
        %v7338 = vadd.f32 %v7274, %v7330
        %v7339 = vadd.f32 %v7275, %v7331
        %v7340 = vadd.f32 %v7276, %v7332
        %v7341 = vadd.f32 %v7277, %v7333
        %v7342 = vadd.f32 %v7278, %v7334
        %v7343 = vadd.f32 %v7279, %v7335
        %7344 = vrot.lane.b32.xlu0 %v6856, 124
        %v7345 = vpop.permute.xlu0 %7344
        %7346 = vrot.lane.b32.xlu0 %v6858, 124
        %v7347 = vpop.permute.xlu0 %7346
        %7348 = vrot.lane.b32.xlu0 %v6860, 124
        %v7349 = vpop.permute.xlu0 %7348
        %7350 = vrot.lane.b32.xlu0 %v6862, 124
        %v7351 = vpop.permute.xlu0 %7350
        %7352 = vrot.lane.b32.xlu0 %v6857, 124
        %v7353 = vpop.permute.xlu0 %7352
        %7354 = vrot.lane.b32.xlu0 %v6859, 124
        %v7355 = vpop.permute.xlu0 %7354
        %7356 = vrot.lane.b32.xlu0 %v6861, 124
        %v7357 = vpop.permute.xlu0 %7356
        %7358 = vrot.lane.b32.xlu0 %v6863, 124
        %v7359 = vpop.permute.xlu0 %7358
        %v7360 = vsel %vm3934, %v7345, %v7353
        %v7361 = vsel %vm3934, %v7347, %v7355
        %v7362 = vsel %vm3934, %v7349, %v7357
        %v7363 = vsel %vm3934, %v7351, %v7359
        %v7364 = vsel %vm3934, %v7353, %v7345
        %v7365 = vsel %vm3934, %v7355, %v7347
        %v7366 = vsel %vm3934, %v7357, %v7349
        %v7367 = vsel %vm3934, %v7359, %v7351
        %v7368 = vmul.f32 %v7360, %v425
        %v7369 = vmul.f32 %v7364, %v426
        %v7370 = vmul.f32 %v7361, %v425
        %v7371 = vmul.f32 %v7365, %v426
        %v7372 = vmul.f32 %v7362, %v425
        %v7373 = vmul.f32 %v7366, %v426
        %v7374 = vmul.f32 %v7363, %v425
        %v7375 = vmul.f32 %v7367, %v426
        %7376 = vset.pattern.permute.xlu0 62
        %7377 = vperm.xlu0 %7376, %v3378
        %v7378 = vpop.permute.xlu0 %7377
        %7380 = vset.pattern.permute.xlu0 62
        %7381 = vperm.xlu0 %7380, %v3379
        %v7382 = vpop.permute.xlu0 %7381
        %7384 = vset.pattern.permute.xlu0 62
        %7385 = vperm.xlu0 %7384, %v3380
        %v7386 = vpop.permute.xlu0 %7385
        %7388 = vset.pattern.permute.xlu0 62
        %7389 = vperm.xlu0 %7388, %v3381
        %v7390 = vpop.permute.xlu0 %7389
        %v7392 = vmul.f32 %v7368, %v7378
        %v7393 = vmul.f32 %v7369, %v7378
        %v7394 = vmul.f32 %v7370, %v7382
        %v7395 = vmul.f32 %v7371, %v7382
        %v7396 = vmul.f32 %v7372, %v7386
        %v7397 = vmul.f32 %v7373, %v7386
        %v7398 = vmul.f32 %v7374, %v7390
        %v7399 = vmul.f32 %v7375, %v7390
        %v7400 = vadd.f32 %v7336, %v7392
        %v7401 = vadd.f32 %v7337, %v7393
        %v7402 = vadd.f32 %v7338, %v7394
        %v7403 = vadd.f32 %v7339, %v7395
        %v7404 = vadd.f32 %v7340, %v7396
        %v7405 = vadd.f32 %v7341, %v7397
        %v7406 = vadd.f32 %v7342, %v7398
        %v7407 = vadd.f32 %v7343, %v7399
        %7408 = vrot.lane.b32.xlu0 %v3370, 80
        %v7409 = vpop.permute.xlu0 %7408
        %7410 = vrot.lane.b32.xlu0 %v3372, 80
        %v7411 = vpop.permute.xlu0 %7410
        %7412 = vrot.lane.b32.xlu0 %v3374, 80
        %v7413 = vpop.permute.xlu0 %7412
        %7414 = vrot.lane.b32.xlu0 %v3376, 80
        %v7415 = vpop.permute.xlu0 %7414
        %7416 = vrot.lane.b32.xlu0 %v3371, 80
        %v7417 = vpop.permute.xlu0 %7416
        %7418 = vrot.lane.b32.xlu0 %v3373, 80
        %v7419 = vpop.permute.xlu0 %7418
        %7420 = vrot.lane.b32.xlu0 %v3375, 80
        %v7421 = vpop.permute.xlu0 %7420
        %7422 = vrot.lane.b32.xlu0 %v3377, 80
        %v7423 = vpop.permute.xlu0 %7422
        %vm7424 = vcmp.lt.s32.totalorder %v227, 80
        %v7425 = vsel %vm7424, %v7409, %v7417
        %v7426 = vsel %vm7424, %v7411, %v7419
        %v7427 = vsel %vm7424, %v7413, %v7421
        %v7428 = vsel %vm7424, %v7415, %v7423
        %v7429 = vsel %vm7424, %v7417, %v7409
        %v7430 = vsel %vm7424, %v7419, %v7411
        %v7431 = vsel %vm7424, %v7421, %v7413
        %v7432 = vsel %vm7424, %v7423, %v7415
        %v7433 = vmul.f32 %v7425, %v389
        %v7434 = vmul.f32 %v7429, %v390
        %v7435 = vmul.f32 %v7426, %v389
        %v7436 = vmul.f32 %v7430, %v390
        %v7437 = vmul.f32 %v7427, %v389
        %v7438 = vmul.f32 %v7431, %v390
        %v7439 = vmul.f32 %v7428, %v389
        %v7440 = vmul.f32 %v7432, %v390
        %7441 = vrot.lane.b32.xlu0 %v7433, 4
        %v7442 = vpop.permute.xlu0 %7441
        %7443 = vrot.lane.b32.xlu0 %v7435, 4
        %v7444 = vpop.permute.xlu0 %7443
        %7445 = vrot.lane.b32.xlu0 %v7437, 4
        %v7446 = vpop.permute.xlu0 %7445
        %7447 = vrot.lane.b32.xlu0 %v7439, 4
        %v7448 = vpop.permute.xlu0 %7447
        %7449 = vrot.lane.b32.xlu0 %v7434, 4
        %v7450 = vpop.permute.xlu0 %7449
        %7451 = vrot.lane.b32.xlu0 %v7436, 4
        %v7452 = vpop.permute.xlu0 %7451
        %7453 = vrot.lane.b32.xlu0 %v7438, 4
        %v7454 = vpop.permute.xlu0 %7453
        %7455 = vrot.lane.b32.xlu0 %v7440, 4
        %v7456 = vpop.permute.xlu0 %7455
        %v7457 = vsel %vm3447, %v7442, %v7450
        %v7458 = vsel %vm3447, %v7444, %v7452
        %v7459 = vsel %vm3447, %v7446, %v7454
        %v7460 = vsel %vm3447, %v7448, %v7456
        %v7461 = vsel %vm3447, %v7450, %v7442
        %v7462 = vsel %vm3447, %v7452, %v7444
        %v7463 = vsel %vm3447, %v7454, %v7446
        %v7464 = vsel %vm3447, %v7456, %v7448
        %v7465 = vmul.f32 %v7461, %v257
        %v7466 = vmul.f32 %v7457, %v258
        %v7467 = vmul.f32 %v7462, %v257
        %v7468 = vmul.f32 %v7458, %v258
        %v7469 = vmul.f32 %v7463, %v257
        %v7470 = vmul.f32 %v7459, %v258
        %v7471 = vmul.f32 %v7464, %v257
        %v7472 = vmul.f32 %v7460, %v258
        %7473 = vset.pattern.permute.xlu0 63
        %7474 = vperm.xlu0 %7473, %v3378
        %v7475 = vpop.permute.xlu0 %7474
        %7477 = vset.pattern.permute.xlu0 63
        %7478 = vperm.xlu0 %7477, %v3379
        %v7479 = vpop.permute.xlu0 %7478
        %7481 = vset.pattern.permute.xlu0 63
        %7482 = vperm.xlu0 %7481, %v3380
        %v7483 = vpop.permute.xlu0 %7482
        %7485 = vset.pattern.permute.xlu0 63
        %7486 = vperm.xlu0 %7485, %v3381
        %v7487 = vpop.permute.xlu0 %7486
        %v7489 = vmul.f32 %v7465, %v7475
        %v7490 = vmul.f32 %v7466, %v7475
        %v7491 = vmul.f32 %v7467, %v7479
        %v7492 = vmul.f32 %v7468, %v7479
        %v7493 = vmul.f32 %v7469, %v7483
        %v7494 = vmul.f32 %v7470, %v7483
        %v7495 = vmul.f32 %v7471, %v7487
        %v7496 = vmul.f32 %v7472, %v7487
        %v7497 = vadd.f32 %v7400, %v7489
        %v7498 = vadd.f32 %v7401, %v7490
        %v7499 = vadd.f32 %v7402, %v7491
        %v7500 = vadd.f32 %v7403, %v7492
        %v7501 = vadd.f32 %v7404, %v7493
        %v7502 = vadd.f32 %v7405, %v7494
        %v7503 = vadd.f32 %v7406, %v7495
        %v7504 = vadd.f32 %v7407, %v7496
        %7505 = vrot.lane.b32.xlu0 %v7433, 3
        %v7506 = vpop.permute.xlu0 %7505
        %7507 = vrot.lane.b32.xlu0 %v7435, 3
        %v7508 = vpop.permute.xlu0 %7507
        %7509 = vrot.lane.b32.xlu0 %v7437, 3
        %v7510 = vpop.permute.xlu0 %7509
        %7511 = vrot.lane.b32.xlu0 %v7439, 3
        %v7512 = vpop.permute.xlu0 %7511
        %7513 = vrot.lane.b32.xlu0 %v7434, 3
        %v7514 = vpop.permute.xlu0 %7513
        %7515 = vrot.lane.b32.xlu0 %v7436, 3
        %v7516 = vpop.permute.xlu0 %7515
        %7517 = vrot.lane.b32.xlu0 %v7438, 3
        %v7518 = vpop.permute.xlu0 %7517
        %7519 = vrot.lane.b32.xlu0 %v7440, 3
        %v7520 = vpop.permute.xlu0 %7519
        %v7521 = vsel %vm3516, %v7506, %v7514
        %v7522 = vsel %vm3516, %v7508, %v7516
        %v7523 = vsel %vm3516, %v7510, %v7518
        %v7524 = vsel %vm3516, %v7512, %v7520
        %v7525 = vsel %vm3516, %v7514, %v7506
        %v7526 = vsel %vm3516, %v7516, %v7508
        %v7527 = vsel %vm3516, %v7518, %v7510
        %v7528 = vsel %vm3516, %v7520, %v7512
        %v7529 = vmul.f32 %v7525, %v281
        %v7530 = vmul.f32 %v7521, %v282
        %v7531 = vmul.f32 %v7526, %v281
        %v7532 = vmul.f32 %v7522, %v282
        %v7533 = vmul.f32 %v7527, %v281
        %v7534 = vmul.f32 %v7523, %v282
        %v7535 = vmul.f32 %v7528, %v281
        %v7536 = vmul.f32 %v7524, %v282
        %7537 = vset.pattern.permute.xlu0 64
        %7538 = vperm.xlu0 %7537, %v3378
        %v7539 = vpop.permute.xlu0 %7538
        %7541 = vset.pattern.permute.xlu0 64
        %7542 = vperm.xlu0 %7541, %v3379
        %v7543 = vpop.permute.xlu0 %7542
        %7545 = vset.pattern.permute.xlu0 64
        %7546 = vperm.xlu0 %7545, %v3380
        %v7547 = vpop.permute.xlu0 %7546
        %7549 = vset.pattern.permute.xlu0 64
        %7550 = vperm.xlu0 %7549, %v3381
        %v7551 = vpop.permute.xlu0 %7550
        %v7553 = vmul.f32 %v7529, %v7539
        %v7554 = vmul.f32 %v7530, %v7539
        %v7555 = vmul.f32 %v7531, %v7543
        %v7556 = vmul.f32 %v7532, %v7543
        %v7557 = vmul.f32 %v7533, %v7547
        %v7558 = vmul.f32 %v7534, %v7547
        %v7559 = vmul.f32 %v7535, %v7551
        %v7560 = vmul.f32 %v7536, %v7551
        %v7561 = vadd.f32 %v7497, %v7553
        %v7562 = vadd.f32 %v7498, %v7554
        %v7563 = vadd.f32 %v7499, %v7555
        %v7564 = vadd.f32 %v7500, %v7556
        %v7565 = vadd.f32 %v7501, %v7557
        %v7566 = vadd.f32 %v7502, %v7558
        %v7567 = vadd.f32 %v7503, %v7559
        %v7568 = vadd.f32 %v7504, %v7560
        %7569 = vrot.lane.b32.xlu0 %v7433, 2
        %v7570 = vpop.permute.xlu0 %7569
        %7571 = vrot.lane.b32.xlu0 %v7435, 2
        %v7572 = vpop.permute.xlu0 %7571
        %7573 = vrot.lane.b32.xlu0 %v7437, 2
        %v7574 = vpop.permute.xlu0 %7573
        %7575 = vrot.lane.b32.xlu0 %v7439, 2
        %v7576 = vpop.permute.xlu0 %7575
        %7577 = vrot.lane.b32.xlu0 %v7434, 2
        %v7578 = vpop.permute.xlu0 %7577
        %7579 = vrot.lane.b32.xlu0 %v7436, 2
        %v7580 = vpop.permute.xlu0 %7579
        %7581 = vrot.lane.b32.xlu0 %v7438, 2
        %v7582 = vpop.permute.xlu0 %7581
        %7583 = vrot.lane.b32.xlu0 %v7440, 2
        %v7584 = vpop.permute.xlu0 %7583
        %v7585 = vsel %vm442, %v7570, %v7578
        %v7586 = vsel %vm442, %v7572, %v7580
        %v7587 = vsel %vm442, %v7574, %v7582
        %v7588 = vsel %vm442, %v7576, %v7584
        %v7589 = vsel %vm442, %v7578, %v7570
        %v7590 = vsel %vm442, %v7580, %v7572
        %v7591 = vsel %vm442, %v7582, %v7574
        %v7592 = vsel %vm442, %v7584, %v7576
        %v7593 = vmul.f32 %v7589, %v305
        %v7594 = vmul.f32 %v7585, %v306
        %v7595 = vmul.f32 %v7590, %v305
        %v7596 = vmul.f32 %v7586, %v306
        %v7597 = vmul.f32 %v7591, %v305
        %v7598 = vmul.f32 %v7587, %v306
        %v7599 = vmul.f32 %v7592, %v305
        %v7600 = vmul.f32 %v7588, %v306
        %7601 = vset.pattern.permute.xlu0 65
        %7602 = vperm.xlu0 %7601, %v3378
        %v7603 = vpop.permute.xlu0 %7602
        %7605 = vset.pattern.permute.xlu0 65
        %7606 = vperm.xlu0 %7605, %v3379
        %v7607 = vpop.permute.xlu0 %7606
        %7609 = vset.pattern.permute.xlu0 65
        %7610 = vperm.xlu0 %7609, %v3380
        %v7611 = vpop.permute.xlu0 %7610
        %7613 = vset.pattern.permute.xlu0 65
        %7614 = vperm.xlu0 %7613, %v3381
        %v7615 = vpop.permute.xlu0 %7614
        %v7617 = vmul.f32 %v7593, %v7603
        %v7618 = vmul.f32 %v7594, %v7603
        %v7619 = vmul.f32 %v7595, %v7607
        %v7620 = vmul.f32 %v7596, %v7607
        %v7621 = vmul.f32 %v7597, %v7611
        %v7622 = vmul.f32 %v7598, %v7611
        %v7623 = vmul.f32 %v7599, %v7615
        %v7624 = vmul.f32 %v7600, %v7615
        %v7625 = vadd.f32 %v7561, %v7617
        %v7626 = vadd.f32 %v7562, %v7618
        %v7627 = vadd.f32 %v7563, %v7619
        %v7628 = vadd.f32 %v7564, %v7620
        %v7629 = vadd.f32 %v7565, %v7621
        %v7630 = vadd.f32 %v7566, %v7622
        %v7631 = vadd.f32 %v7567, %v7623
        %v7632 = vadd.f32 %v7568, %v7624
        %7633 = vrot.lane.b32.xlu0 %v7433, 1
        %v7634 = vpop.permute.xlu0 %7633
        %7635 = vrot.lane.b32.xlu0 %v7435, 1
        %v7636 = vpop.permute.xlu0 %7635
        %7637 = vrot.lane.b32.xlu0 %v7437, 1
        %v7638 = vpop.permute.xlu0 %7637
        %7639 = vrot.lane.b32.xlu0 %v7439, 1
        %v7640 = vpop.permute.xlu0 %7639
        %7641 = vrot.lane.b32.xlu0 %v7434, 1
        %v7642 = vpop.permute.xlu0 %7641
        %7643 = vrot.lane.b32.xlu0 %v7436, 1
        %v7644 = vpop.permute.xlu0 %7643
        %7645 = vrot.lane.b32.xlu0 %v7438, 1
        %v7646 = vpop.permute.xlu0 %7645
        %7647 = vrot.lane.b32.xlu0 %v7440, 1
        %v7648 = vpop.permute.xlu0 %7647
        %v7649 = vsel %vm453, %v7634, %v7642
        %v7650 = vsel %vm453, %v7636, %v7644
        %v7651 = vsel %vm453, %v7638, %v7646
        %v7652 = vsel %vm453, %v7640, %v7648
        %v7653 = vsel %vm453, %v7642, %v7634
        %v7654 = vsel %vm453, %v7644, %v7636
        %v7655 = vsel %vm453, %v7646, %v7638
        %v7656 = vsel %vm453, %v7648, %v7640
        %v7657 = vmul.f32 %v7653, %v329
        %v7658 = vmul.f32 %v7649, %v330
        %v7659 = vmul.f32 %v7654, %v329
        %v7660 = vmul.f32 %v7650, %v330
        %v7661 = vmul.f32 %v7655, %v329
        %v7662 = vmul.f32 %v7651, %v330
        %v7663 = vmul.f32 %v7656, %v329
        %v7664 = vmul.f32 %v7652, %v330
        %7665 = vset.pattern.permute.xlu0 66
        %7666 = vperm.xlu0 %7665, %v3378
        %v7667 = vpop.permute.xlu0 %7666
        %7669 = vset.pattern.permute.xlu0 66
        %7670 = vperm.xlu0 %7669, %v3379
        %v7671 = vpop.permute.xlu0 %7670
        %7673 = vset.pattern.permute.xlu0 66
        %7674 = vperm.xlu0 %7673, %v3380
        %v7675 = vpop.permute.xlu0 %7674
        %7677 = vset.pattern.permute.xlu0 66
        %7678 = vperm.xlu0 %7677, %v3381
        %v7679 = vpop.permute.xlu0 %7678
        %v7681 = vmul.f32 %v7657, %v7667
        %v7682 = vmul.f32 %v7658, %v7667
        %v7683 = vmul.f32 %v7659, %v7671
        %v7684 = vmul.f32 %v7660, %v7671
        %v7685 = vmul.f32 %v7661, %v7675
        %v7686 = vmul.f32 %v7662, %v7675
        %v7687 = vmul.f32 %v7663, %v7679
        %v7688 = vmul.f32 %v7664, %v7679
        %v7689 = vadd.f32 %v7625, %v7681
        %v7690 = vadd.f32 %v7626, %v7682
        %v7691 = vadd.f32 %v7627, %v7683
        %v7692 = vadd.f32 %v7628, %v7684
        %v7693 = vadd.f32 %v7629, %v7685
        %v7694 = vadd.f32 %v7630, %v7686
        %v7695 = vadd.f32 %v7631, %v7687
        %v7696 = vadd.f32 %v7632, %v7688
        %7697 = vset.pattern.permute.xlu0 67
        %7698 = vperm.xlu0 %7697, %v3378
        %v7699 = vpop.permute.xlu0 %7698
        %7701 = vset.pattern.permute.xlu0 67
        %7702 = vperm.xlu0 %7701, %v3379
        %v7703 = vpop.permute.xlu0 %7702
        %7705 = vset.pattern.permute.xlu0 67
        %7706 = vperm.xlu0 %7705, %v3380
        %v7707 = vpop.permute.xlu0 %7706
        %7709 = vset.pattern.permute.xlu0 67
        %7710 = vperm.xlu0 %7709, %v3381
        %v7711 = vpop.permute.xlu0 %7710
        %v7713 = vmul.f32 %v7433, %v7699
        %v7714 = vmul.f32 %v7434, %v7699
        %v7715 = vmul.f32 %v7435, %v7703
        %v7716 = vmul.f32 %v7436, %v7703
        %v7717 = vmul.f32 %v7437, %v7707
        %v7718 = vmul.f32 %v7438, %v7707
        %v7719 = vmul.f32 %v7439, %v7711
        %v7720 = vmul.f32 %v7440, %v7711
        %v7721 = vadd.f32 %v7689, %v7713
        %v7722 = vadd.f32 %v7690, %v7714
        %v7723 = vadd.f32 %v7691, %v7715
        %v7724 = vadd.f32 %v7692, %v7716
        %v7725 = vadd.f32 %v7693, %v7717
        %v7726 = vadd.f32 %v7694, %v7718
        %v7727 = vadd.f32 %v7695, %v7719
        %v7728 = vadd.f32 %v7696, %v7720
        %7729 = vrot.lane.b32.xlu0 %v7433, 127
        %v7730 = vpop.permute.xlu0 %7729
        %7731 = vrot.lane.b32.xlu0 %v7435, 127
        %v7732 = vpop.permute.xlu0 %7731
        %7733 = vrot.lane.b32.xlu0 %v7437, 127
        %v7734 = vpop.permute.xlu0 %7733
        %7735 = vrot.lane.b32.xlu0 %v7439, 127
        %v7736 = vpop.permute.xlu0 %7735
        %7737 = vrot.lane.b32.xlu0 %v7434, 127
        %v7738 = vpop.permute.xlu0 %7737
        %7739 = vrot.lane.b32.xlu0 %v7436, 127
        %v7740 = vpop.permute.xlu0 %7739
        %7741 = vrot.lane.b32.xlu0 %v7438, 127
        %v7742 = vpop.permute.xlu0 %7741
        %7743 = vrot.lane.b32.xlu0 %v7440, 127
        %v7744 = vpop.permute.xlu0 %7743
        %v7745 = vsel %vm466, %v7730, %v7738
        %v7746 = vsel %vm466, %v7732, %v7740
        %v7747 = vsel %vm466, %v7734, %v7742
        %v7748 = vsel %vm466, %v7736, %v7744
        %v7749 = vsel %vm466, %v7738, %v7730
        %v7750 = vsel %vm466, %v7740, %v7732
        %v7751 = vsel %vm466, %v7742, %v7734
        %v7752 = vsel %vm466, %v7744, %v7736
        %v7753 = vmul.f32 %v7745, %v353
        %v7754 = vmul.f32 %v7749, %v354
        %v7755 = vmul.f32 %v7746, %v353
        %v7756 = vmul.f32 %v7750, %v354
        %v7757 = vmul.f32 %v7747, %v353
        %v7758 = vmul.f32 %v7751, %v354
        %v7759 = vmul.f32 %v7748, %v353
        %v7760 = vmul.f32 %v7752, %v354
        %7761 = vset.pattern.permute.xlu0 68
        %7762 = vperm.xlu0 %7761, %v3378
        %v7763 = vpop.permute.xlu0 %7762
        %7765 = vset.pattern.permute.xlu0 68
        %7766 = vperm.xlu0 %7765, %v3379
        %v7767 = vpop.permute.xlu0 %7766
        %7769 = vset.pattern.permute.xlu0 68
        %7770 = vperm.xlu0 %7769, %v3380
        %v7771 = vpop.permute.xlu0 %7770
        %7773 = vset.pattern.permute.xlu0 68
        %7774 = vperm.xlu0 %7773, %v3381
        %v7775 = vpop.permute.xlu0 %7774
        %v7777 = vmul.f32 %v7753, %v7763
        %v7778 = vmul.f32 %v7754, %v7763
        %v7779 = vmul.f32 %v7755, %v7767
        %v7780 = vmul.f32 %v7756, %v7767
        %v7781 = vmul.f32 %v7757, %v7771
        %v7782 = vmul.f32 %v7758, %v7771
        %v7783 = vmul.f32 %v7759, %v7775
        %v7784 = vmul.f32 %v7760, %v7775
        %v7785 = vadd.f32 %v7721, %v7777
        %v7786 = vadd.f32 %v7722, %v7778
        %v7787 = vadd.f32 %v7723, %v7779
        %v7788 = vadd.f32 %v7724, %v7780
        %v7789 = vadd.f32 %v7725, %v7781
        %v7790 = vadd.f32 %v7726, %v7782
        %v7791 = vadd.f32 %v7727, %v7783
        %v7792 = vadd.f32 %v7728, %v7784
        %7793 = vrot.lane.b32.xlu0 %v7433, 126
        %v7794 = vpop.permute.xlu0 %7793
        %7795 = vrot.lane.b32.xlu0 %v7435, 126
        %v7796 = vpop.permute.xlu0 %7795
        %7797 = vrot.lane.b32.xlu0 %v7437, 126
        %v7798 = vpop.permute.xlu0 %7797
        %7799 = vrot.lane.b32.xlu0 %v7439, 126
        %v7800 = vpop.permute.xlu0 %7799
        %7801 = vrot.lane.b32.xlu0 %v7434, 126
        %v7802 = vpop.permute.xlu0 %7801
        %7803 = vrot.lane.b32.xlu0 %v7436, 126
        %v7804 = vpop.permute.xlu0 %7803
        %7805 = vrot.lane.b32.xlu0 %v7438, 126
        %v7806 = vpop.permute.xlu0 %7805
        %7807 = vrot.lane.b32.xlu0 %v7440, 126
        %v7808 = vpop.permute.xlu0 %7807
        %v7809 = vsel %vm477, %v7794, %v7802
        %v7810 = vsel %vm477, %v7796, %v7804
        %v7811 = vsel %vm477, %v7798, %v7806
        %v7812 = vsel %vm477, %v7800, %v7808
        %v7813 = vsel %vm477, %v7802, %v7794
        %v7814 = vsel %vm477, %v7804, %v7796
        %v7815 = vsel %vm477, %v7806, %v7798
        %v7816 = vsel %vm477, %v7808, %v7800
        %v7817 = vmul.f32 %v7809, %v377
        %v7818 = vmul.f32 %v7813, %v378
        %v7819 = vmul.f32 %v7810, %v377
        %v7820 = vmul.f32 %v7814, %v378
        %v7821 = vmul.f32 %v7811, %v377
        %v7822 = vmul.f32 %v7815, %v378
        %v7823 = vmul.f32 %v7812, %v377
        %v7824 = vmul.f32 %v7816, %v378
        %7825 = vset.pattern.permute.xlu0 69
        %7826 = vperm.xlu0 %7825, %v3378
        %v7827 = vpop.permute.xlu0 %7826
        %7829 = vset.pattern.permute.xlu0 69
        %7830 = vperm.xlu0 %7829, %v3379
        %v7831 = vpop.permute.xlu0 %7830
        %7833 = vset.pattern.permute.xlu0 69
        %7834 = vperm.xlu0 %7833, %v3380
        %v7835 = vpop.permute.xlu0 %7834
        %7837 = vset.pattern.permute.xlu0 69
        %7838 = vperm.xlu0 %7837, %v3381
        %v7839 = vpop.permute.xlu0 %7838
        %v7841 = vmul.f32 %v7817, %v7827
        %v7842 = vmul.f32 %v7818, %v7827
        %v7843 = vmul.f32 %v7819, %v7831
        %v7844 = vmul.f32 %v7820, %v7831
        %v7845 = vmul.f32 %v7821, %v7835
        %v7846 = vmul.f32 %v7822, %v7835
        %v7847 = vmul.f32 %v7823, %v7839
        %v7848 = vmul.f32 %v7824, %v7839
        %v7849 = vadd.f32 %v7785, %v7841
        %v7850 = vadd.f32 %v7786, %v7842
        %v7851 = vadd.f32 %v7787, %v7843
        %v7852 = vadd.f32 %v7788, %v7844
        %v7853 = vadd.f32 %v7789, %v7845
        %v7854 = vadd.f32 %v7790, %v7846
        %v7855 = vadd.f32 %v7791, %v7847
        %v7856 = vadd.f32 %v7792, %v7848
        %7857 = vrot.lane.b32.xlu0 %v7433, 125
        %v7858 = vpop.permute.xlu0 %7857
        %7859 = vrot.lane.b32.xlu0 %v7435, 125
        %v7860 = vpop.permute.xlu0 %7859
        %7861 = vrot.lane.b32.xlu0 %v7437, 125
        %v7862 = vpop.permute.xlu0 %7861
        %7863 = vrot.lane.b32.xlu0 %v7439, 125
        %v7864 = vpop.permute.xlu0 %7863
        %7865 = vrot.lane.b32.xlu0 %v7434, 125
        %v7866 = vpop.permute.xlu0 %7865
        %7867 = vrot.lane.b32.xlu0 %v7436, 125
        %v7868 = vpop.permute.xlu0 %7867
        %7869 = vrot.lane.b32.xlu0 %v7438, 125
        %v7870 = vpop.permute.xlu0 %7869
        %7871 = vrot.lane.b32.xlu0 %v7440, 125
        %v7872 = vpop.permute.xlu0 %7871
        %v7873 = vsel %vm3869, %v7858, %v7866
        %v7874 = vsel %vm3869, %v7860, %v7868
        %v7875 = vsel %vm3869, %v7862, %v7870
        %v7876 = vsel %vm3869, %v7864, %v7872
        %v7877 = vsel %vm3869, %v7866, %v7858
        %v7878 = vsel %vm3869, %v7868, %v7860
        %v7879 = vsel %vm3869, %v7870, %v7862
        %v7880 = vsel %vm3869, %v7872, %v7864
        %v7881 = vmul.f32 %v7873, %v401
        %v7882 = vmul.f32 %v7877, %v402
        %v7883 = vmul.f32 %v7874, %v401
        %v7884 = vmul.f32 %v7878, %v402
        %v7885 = vmul.f32 %v7875, %v401
        %v7886 = vmul.f32 %v7879, %v402
        %v7887 = vmul.f32 %v7876, %v401
        %v7888 = vmul.f32 %v7880, %v402
        %7889 = vset.pattern.permute.xlu0 70
        %7890 = vperm.xlu0 %7889, %v3378
        %v7891 = vpop.permute.xlu0 %7890
        %7893 = vset.pattern.permute.xlu0 70
        %7894 = vperm.xlu0 %7893, %v3379
        %v7895 = vpop.permute.xlu0 %7894
        %7897 = vset.pattern.permute.xlu0 70
        %7898 = vperm.xlu0 %7897, %v3380
        %v7899 = vpop.permute.xlu0 %7898
        %7901 = vset.pattern.permute.xlu0 70
        %7902 = vperm.xlu0 %7901, %v3381
        %v7903 = vpop.permute.xlu0 %7902
        %v7905 = vmul.f32 %v7881, %v7891
        %v7906 = vmul.f32 %v7882, %v7891
        %v7907 = vmul.f32 %v7883, %v7895
        %v7908 = vmul.f32 %v7884, %v7895
        %v7909 = vmul.f32 %v7885, %v7899
        %v7910 = vmul.f32 %v7886, %v7899
        %v7911 = vmul.f32 %v7887, %v7903
        %v7912 = vmul.f32 %v7888, %v7903
        %v7913 = vadd.f32 %v7849, %v7905
        %v7914 = vadd.f32 %v7850, %v7906
        %v7915 = vadd.f32 %v7851, %v7907
        %v7916 = vadd.f32 %v7852, %v7908
        %v7917 = vadd.f32 %v7853, %v7909
        %v7918 = vadd.f32 %v7854, %v7910
        %v7919 = vadd.f32 %v7855, %v7911
        %v7920 = vadd.f32 %v7856, %v7912
        %7921 = vrot.lane.b32.xlu0 %v7433, 124
        %v7922 = vpop.permute.xlu0 %7921
        %7923 = vrot.lane.b32.xlu0 %v7435, 124
        %v7924 = vpop.permute.xlu0 %7923
        %7925 = vrot.lane.b32.xlu0 %v7437, 124
        %v7926 = vpop.permute.xlu0 %7925
        %7927 = vrot.lane.b32.xlu0 %v7439, 124
        %v7928 = vpop.permute.xlu0 %7927
        %7929 = vrot.lane.b32.xlu0 %v7434, 124
        %v7930 = vpop.permute.xlu0 %7929
        %7931 = vrot.lane.b32.xlu0 %v7436, 124
        %v7932 = vpop.permute.xlu0 %7931
        %7933 = vrot.lane.b32.xlu0 %v7438, 124
        %v7934 = vpop.permute.xlu0 %7933
        %7935 = vrot.lane.b32.xlu0 %v7440, 124
        %v7936 = vpop.permute.xlu0 %7935
        %v7937 = vsel %vm3934, %v7922, %v7930
        %v7938 = vsel %vm3934, %v7924, %v7932
        %v7939 = vsel %vm3934, %v7926, %v7934
        %v7940 = vsel %vm3934, %v7928, %v7936
        %v7941 = vsel %vm3934, %v7930, %v7922
        %v7942 = vsel %vm3934, %v7932, %v7924
        %v7943 = vsel %vm3934, %v7934, %v7926
        %v7944 = vsel %vm3934, %v7936, %v7928
        %v7945 = vmul.f32 %v7937, %v425
        %v7946 = vmul.f32 %v7941, %v426
        %v7947 = vmul.f32 %v7938, %v425
        %v7948 = vmul.f32 %v7942, %v426
        %v7949 = vmul.f32 %v7939, %v425
        %v7950 = vmul.f32 %v7943, %v426
        %v7951 = vmul.f32 %v7940, %v425
        %v7952 = vmul.f32 %v7944, %v426
        %7953 = vset.pattern.permute.xlu0 71
        %7954 = vperm.xlu0 %7953, %v3378
        %v7955 = vpop.permute.xlu0 %7954
        %7957 = vset.pattern.permute.xlu0 71
        %7958 = vperm.xlu0 %7957, %v3379
        %v7959 = vpop.permute.xlu0 %7958
        %7961 = vset.pattern.permute.xlu0 71
        %7962 = vperm.xlu0 %7961, %v3380
        %v7963 = vpop.permute.xlu0 %7962
        %7965 = vset.pattern.permute.xlu0 71
        %7966 = vperm.xlu0 %7965, %v3381
        %v7967 = vpop.permute.xlu0 %7966
        %v7969 = vmul.f32 %v7945, %v7955
        %v7970 = vmul.f32 %v7946, %v7955
        %v7971 = vmul.f32 %v7947, %v7959
        %v7972 = vmul.f32 %v7948, %v7959
        %v7973 = vmul.f32 %v7949, %v7963
        %v7974 = vmul.f32 %v7950, %v7963
        %v7975 = vmul.f32 %v7951, %v7967
        %v7976 = vmul.f32 %v7952, %v7967
        %v7977 = vadd.f32 %v7913, %v7969
        %v7978 = vadd.f32 %v7914, %v7970
        %v7979 = vadd.f32 %v7915, %v7971
        %v7980 = vadd.f32 %v7916, %v7972
        %v7981 = vadd.f32 %v7917, %v7973
        %v7982 = vadd.f32 %v7918, %v7974
        %v7983 = vadd.f32 %v7919, %v7975
        %v7984 = vadd.f32 %v7920, %v7976
        %v7985 = vmul.f32 %v3415, %v413
        %v7986 = vmul.f32 %v3419, %v414
        %v7987 = vmul.f32 %v3416, %v413
        %v7988 = vmul.f32 %v3420, %v414
        %v7989 = vmul.f32 %v3417, %v413
        %v7990 = vmul.f32 %v3421, %v414
        %v7991 = vmul.f32 %v3418, %v413
        %v7992 = vmul.f32 %v3422, %v414
        %7993 = vrot.lane.b32.xlu0 %v7985, 4
        %v7994 = vpop.permute.xlu0 %7993
        %7995 = vrot.lane.b32.xlu0 %v7987, 4
        %v7996 = vpop.permute.xlu0 %7995
        %7997 = vrot.lane.b32.xlu0 %v7989, 4
        %v7998 = vpop.permute.xlu0 %7997
        %7999 = vrot.lane.b32.xlu0 %v7991, 4
        %v8000 = vpop.permute.xlu0 %7999
        %8001 = vrot.lane.b32.xlu0 %v7986, 4
        %v8002 = vpop.permute.xlu0 %8001
        %8003 = vrot.lane.b32.xlu0 %v7988, 4
        %v8004 = vpop.permute.xlu0 %8003
        %8005 = vrot.lane.b32.xlu0 %v7990, 4
        %v8006 = vpop.permute.xlu0 %8005
        %8007 = vrot.lane.b32.xlu0 %v7992, 4
        %v8008 = vpop.permute.xlu0 %8007
        %v8009 = vsel %vm3447, %v7994, %v8002
        %v8010 = vsel %vm3447, %v7996, %v8004
        %v8011 = vsel %vm3447, %v7998, %v8006
        %v8012 = vsel %vm3447, %v8000, %v8008
        %v8013 = vsel %vm3447, %v8002, %v7994
        %v8014 = vsel %vm3447, %v8004, %v7996
        %v8015 = vsel %vm3447, %v8006, %v7998
        %v8016 = vsel %vm3447, %v8008, %v8000
        %v8017 = vmul.f32 %v8013, %v257
        %v8018 = vmul.f32 %v8009, %v258
        %v8019 = vmul.f32 %v8014, %v257
        %v8020 = vmul.f32 %v8010, %v258
        %v8021 = vmul.f32 %v8015, %v257
        %v8022 = vmul.f32 %v8011, %v258
        %v8023 = vmul.f32 %v8016, %v257
        %v8024 = vmul.f32 %v8012, %v258
        %8025 = vset.pattern.permute.xlu0 72
        %8026 = vperm.xlu0 %8025, %v3378
        %v8027 = vpop.permute.xlu0 %8026
        %8029 = vset.pattern.permute.xlu0 72
        %8030 = vperm.xlu0 %8029, %v3379
        %v8031 = vpop.permute.xlu0 %8030
        %8033 = vset.pattern.permute.xlu0 72
        %8034 = vperm.xlu0 %8033, %v3380
        %v8035 = vpop.permute.xlu0 %8034
        %8037 = vset.pattern.permute.xlu0 72
        %8038 = vperm.xlu0 %8037, %v3381
        %v8039 = vpop.permute.xlu0 %8038
        %v8041 = vmul.f32 %v8017, %v8027
        %v8042 = vmul.f32 %v8018, %v8027
        %v8043 = vmul.f32 %v8019, %v8031
        %v8044 = vmul.f32 %v8020, %v8031
        %v8045 = vmul.f32 %v8021, %v8035
        %v8046 = vmul.f32 %v8022, %v8035
        %v8047 = vmul.f32 %v8023, %v8039
        %v8048 = vmul.f32 %v8024, %v8039
        %v8049 = vadd.f32 %v7977, %v8041
        %v8050 = vadd.f32 %v7978, %v8042
        %v8051 = vadd.f32 %v7979, %v8043
        %v8052 = vadd.f32 %v7980, %v8044
        %v8053 = vadd.f32 %v7981, %v8045
        %v8054 = vadd.f32 %v7982, %v8046
        %v8055 = vadd.f32 %v7983, %v8047
        %v8056 = vadd.f32 %v7984, %v8048
        %8057 = vrot.lane.b32.xlu0 %v7985, 3
        %v8058 = vpop.permute.xlu0 %8057
        %8059 = vrot.lane.b32.xlu0 %v7987, 3
        %v8060 = vpop.permute.xlu0 %8059
        %8061 = vrot.lane.b32.xlu0 %v7989, 3
        %v8062 = vpop.permute.xlu0 %8061
        %8063 = vrot.lane.b32.xlu0 %v7991, 3
        %v8064 = vpop.permute.xlu0 %8063
        %8065 = vrot.lane.b32.xlu0 %v7986, 3
        %v8066 = vpop.permute.xlu0 %8065
        %8067 = vrot.lane.b32.xlu0 %v7988, 3
        %v8068 = vpop.permute.xlu0 %8067
        %8069 = vrot.lane.b32.xlu0 %v7990, 3
        %v8070 = vpop.permute.xlu0 %8069
        %8071 = vrot.lane.b32.xlu0 %v7992, 3
        %v8072 = vpop.permute.xlu0 %8071
        %v8073 = vsel %vm3516, %v8058, %v8066
        %v8074 = vsel %vm3516, %v8060, %v8068
        %v8075 = vsel %vm3516, %v8062, %v8070
        %v8076 = vsel %vm3516, %v8064, %v8072
        %v8077 = vsel %vm3516, %v8066, %v8058
        %v8078 = vsel %vm3516, %v8068, %v8060
        %v8079 = vsel %vm3516, %v8070, %v8062
        %v8080 = vsel %vm3516, %v8072, %v8064
        %v8081 = vmul.f32 %v8077, %v281
        %v8082 = vmul.f32 %v8073, %v282
        %v8083 = vmul.f32 %v8078, %v281
        %v8084 = vmul.f32 %v8074, %v282
        %v8085 = vmul.f32 %v8079, %v281
        %v8086 = vmul.f32 %v8075, %v282
        %v8087 = vmul.f32 %v8080, %v281
        %v8088 = vmul.f32 %v8076, %v282
        %8089 = vset.pattern.permute.xlu0 73
        %8090 = vperm.xlu0 %8089, %v3378
        %v8091 = vpop.permute.xlu0 %8090
        %8093 = vset.pattern.permute.xlu0 73
        %8094 = vperm.xlu0 %8093, %v3379
        %v8095 = vpop.permute.xlu0 %8094
        %8097 = vset.pattern.permute.xlu0 73
        %8098 = vperm.xlu0 %8097, %v3380
        %v8099 = vpop.permute.xlu0 %8098
        %8101 = vset.pattern.permute.xlu0 73
        %8102 = vperm.xlu0 %8101, %v3381
        %v8103 = vpop.permute.xlu0 %8102
        %v8105 = vmul.f32 %v8081, %v8091
        %v8106 = vmul.f32 %v8082, %v8091
        %v8107 = vmul.f32 %v8083, %v8095
        %v8108 = vmul.f32 %v8084, %v8095
        %v8109 = vmul.f32 %v8085, %v8099
        %v8110 = vmul.f32 %v8086, %v8099
        %v8111 = vmul.f32 %v8087, %v8103
        %v8112 = vmul.f32 %v8088, %v8103
        %v8113 = vadd.f32 %v8049, %v8105
        %v8114 = vadd.f32 %v8050, %v8106
        %v8115 = vadd.f32 %v8051, %v8107
        %v8116 = vadd.f32 %v8052, %v8108
        %v8117 = vadd.f32 %v8053, %v8109
        %v8118 = vadd.f32 %v8054, %v8110
        %v8119 = vadd.f32 %v8055, %v8111
        %v8120 = vadd.f32 %v8056, %v8112
        %8121 = vrot.lane.b32.xlu0 %v7985, 2
        %v8122 = vpop.permute.xlu0 %8121
        %8123 = vrot.lane.b32.xlu0 %v7987, 2
        %v8124 = vpop.permute.xlu0 %8123
        %8125 = vrot.lane.b32.xlu0 %v7989, 2
        %v8126 = vpop.permute.xlu0 %8125
        %8127 = vrot.lane.b32.xlu0 %v7991, 2
        %v8128 = vpop.permute.xlu0 %8127
        %8129 = vrot.lane.b32.xlu0 %v7986, 2
        %v8130 = vpop.permute.xlu0 %8129
        %8131 = vrot.lane.b32.xlu0 %v7988, 2
        %v8132 = vpop.permute.xlu0 %8131
        %8133 = vrot.lane.b32.xlu0 %v7990, 2
        %v8134 = vpop.permute.xlu0 %8133
        %8135 = vrot.lane.b32.xlu0 %v7992, 2
        %v8136 = vpop.permute.xlu0 %8135
        %v8137 = vsel %vm442, %v8122, %v8130
        %v8138 = vsel %vm442, %v8124, %v8132
        %v8139 = vsel %vm442, %v8126, %v8134
        %v8140 = vsel %vm442, %v8128, %v8136
        %v8141 = vsel %vm442, %v8130, %v8122
        %v8142 = vsel %vm442, %v8132, %v8124
        %v8143 = vsel %vm442, %v8134, %v8126
        %v8144 = vsel %vm442, %v8136, %v8128
        %v8145 = vmul.f32 %v8141, %v305
        %v8146 = vmul.f32 %v8137, %v306
        %v8147 = vmul.f32 %v8142, %v305
        %v8148 = vmul.f32 %v8138, %v306
        %v8149 = vmul.f32 %v8143, %v305
        %v8150 = vmul.f32 %v8139, %v306
        %v8151 = vmul.f32 %v8144, %v305
        %v8152 = vmul.f32 %v8140, %v306
        %8153 = vset.pattern.permute.xlu0 74
        %8154 = vperm.xlu0 %8153, %v3378
        %v8155 = vpop.permute.xlu0 %8154
        %8157 = vset.pattern.permute.xlu0 74
        %8158 = vperm.xlu0 %8157, %v3379
        %v8159 = vpop.permute.xlu0 %8158
        %8161 = vset.pattern.permute.xlu0 74
        %8162 = vperm.xlu0 %8161, %v3380
        %v8163 = vpop.permute.xlu0 %8162
        %8165 = vset.pattern.permute.xlu0 74
        %8166 = vperm.xlu0 %8165, %v3381
        %v8167 = vpop.permute.xlu0 %8166
        %v8169 = vmul.f32 %v8145, %v8155
        %v8170 = vmul.f32 %v8146, %v8155
        %v8171 = vmul.f32 %v8147, %v8159
        %v8172 = vmul.f32 %v8148, %v8159
        %v8173 = vmul.f32 %v8149, %v8163
        %v8174 = vmul.f32 %v8150, %v8163
        %v8175 = vmul.f32 %v8151, %v8167
        %v8176 = vmul.f32 %v8152, %v8167
        %v8177 = vadd.f32 %v8113, %v8169
        %v8178 = vadd.f32 %v8114, %v8170
        %v8179 = vadd.f32 %v8115, %v8171
        %v8180 = vadd.f32 %v8116, %v8172
        %v8181 = vadd.f32 %v8117, %v8173
        %v8182 = vadd.f32 %v8118, %v8174
        %v8183 = vadd.f32 %v8119, %v8175
        %v8184 = vadd.f32 %v8120, %v8176
        %8185 = vrot.lane.b32.xlu0 %v7985, 1
        %v8186 = vpop.permute.xlu0 %8185
        %8187 = vrot.lane.b32.xlu0 %v7987, 1
        %v8188 = vpop.permute.xlu0 %8187
        %8189 = vrot.lane.b32.xlu0 %v7989, 1
        %v8190 = vpop.permute.xlu0 %8189
        %8191 = vrot.lane.b32.xlu0 %v7991, 1
        %v8192 = vpop.permute.xlu0 %8191
        %8193 = vrot.lane.b32.xlu0 %v7986, 1
        %v8194 = vpop.permute.xlu0 %8193
        %8195 = vrot.lane.b32.xlu0 %v7988, 1
        %v8196 = vpop.permute.xlu0 %8195
        %8197 = vrot.lane.b32.xlu0 %v7990, 1
        %v8198 = vpop.permute.xlu0 %8197
        %8199 = vrot.lane.b32.xlu0 %v7992, 1
        %v8200 = vpop.permute.xlu0 %8199
        %v8201 = vsel %vm453, %v8186, %v8194
        %v8202 = vsel %vm453, %v8188, %v8196
        %v8203 = vsel %vm453, %v8190, %v8198
        %v8204 = vsel %vm453, %v8192, %v8200
        %v8205 = vsel %vm453, %v8194, %v8186
        %v8206 = vsel %vm453, %v8196, %v8188
        %v8207 = vsel %vm453, %v8198, %v8190
        %v8208 = vsel %vm453, %v8200, %v8192
        %v8209 = vmul.f32 %v8205, %v329
        %v8210 = vmul.f32 %v8201, %v330
        %v8211 = vmul.f32 %v8206, %v329
        %v8212 = vmul.f32 %v8202, %v330
        %v8213 = vmul.f32 %v8207, %v329
        %v8214 = vmul.f32 %v8203, %v330
        %v8215 = vmul.f32 %v8208, %v329
        %v8216 = vmul.f32 %v8204, %v330
        %8217 = vset.pattern.permute.xlu0 75
        %8218 = vperm.xlu0 %8217, %v3378
        %v8219 = vpop.permute.xlu0 %8218
        %8221 = vset.pattern.permute.xlu0 75
        %8222 = vperm.xlu0 %8221, %v3379
        %v8223 = vpop.permute.xlu0 %8222
        %8225 = vset.pattern.permute.xlu0 75
        %8226 = vperm.xlu0 %8225, %v3380
        %v8227 = vpop.permute.xlu0 %8226
        %8229 = vset.pattern.permute.xlu0 75
        %8230 = vperm.xlu0 %8229, %v3381
        %v8231 = vpop.permute.xlu0 %8230
        %v8233 = vmul.f32 %v8209, %v8219
        %v8234 = vmul.f32 %v8210, %v8219
        %v8235 = vmul.f32 %v8211, %v8223
        %v8236 = vmul.f32 %v8212, %v8223
        %v8237 = vmul.f32 %v8213, %v8227
        %v8238 = vmul.f32 %v8214, %v8227
        %v8239 = vmul.f32 %v8215, %v8231
        %v8240 = vmul.f32 %v8216, %v8231
        %v8241 = vadd.f32 %v8177, %v8233
        %v8242 = vadd.f32 %v8178, %v8234
        %v8243 = vadd.f32 %v8179, %v8235
        %v8244 = vadd.f32 %v8180, %v8236
        %v8245 = vadd.f32 %v8181, %v8237
        %v8246 = vadd.f32 %v8182, %v8238
        %v8247 = vadd.f32 %v8183, %v8239
        %v8248 = vadd.f32 %v8184, %v8240
        %8249 = vset.pattern.permute.xlu0 76
        %8250 = vperm.xlu0 %8249, %v3378
        %v8251 = vpop.permute.xlu0 %8250
        %8253 = vset.pattern.permute.xlu0 76
        %8254 = vperm.xlu0 %8253, %v3379
        %v8255 = vpop.permute.xlu0 %8254
        %8257 = vset.pattern.permute.xlu0 76
        %8258 = vperm.xlu0 %8257, %v3380
        %v8259 = vpop.permute.xlu0 %8258
        %8261 = vset.pattern.permute.xlu0 76
        %8262 = vperm.xlu0 %8261, %v3381
        %v8263 = vpop.permute.xlu0 %8262
        %v8265 = vmul.f32 %v7985, %v8251
        %v8266 = vmul.f32 %v7986, %v8251
        %v8267 = vmul.f32 %v7987, %v8255
        %v8268 = vmul.f32 %v7988, %v8255
        %v8269 = vmul.f32 %v7989, %v8259
        %v8270 = vmul.f32 %v7990, %v8259
        %v8271 = vmul.f32 %v7991, %v8263
        %v8272 = vmul.f32 %v7992, %v8263
        %v8273 = vadd.f32 %v8241, %v8265
        %v8274 = vadd.f32 %v8242, %v8266
        %v8275 = vadd.f32 %v8243, %v8267
        %v8276 = vadd.f32 %v8244, %v8268
        %v8277 = vadd.f32 %v8245, %v8269
        %v8278 = vadd.f32 %v8246, %v8270
        %v8279 = vadd.f32 %v8247, %v8271
        %v8280 = vadd.f32 %v8248, %v8272
        %8281 = vrot.lane.b32.xlu0 %v7985, 127
        %v8282 = vpop.permute.xlu0 %8281
        %8283 = vrot.lane.b32.xlu0 %v7987, 127
        %v8284 = vpop.permute.xlu0 %8283
        %8285 = vrot.lane.b32.xlu0 %v7989, 127
        %v8286 = vpop.permute.xlu0 %8285
        %8287 = vrot.lane.b32.xlu0 %v7991, 127
        %v8288 = vpop.permute.xlu0 %8287
        %8289 = vrot.lane.b32.xlu0 %v7986, 127
        %v8290 = vpop.permute.xlu0 %8289
        %8291 = vrot.lane.b32.xlu0 %v7988, 127
        %v8292 = vpop.permute.xlu0 %8291
        %8293 = vrot.lane.b32.xlu0 %v7990, 127
        %v8294 = vpop.permute.xlu0 %8293
        %8295 = vrot.lane.b32.xlu0 %v7992, 127
        %v8296 = vpop.permute.xlu0 %8295
        %v8297 = vsel %vm466, %v8282, %v8290
        %v8298 = vsel %vm466, %v8284, %v8292
        %v8299 = vsel %vm466, %v8286, %v8294
        %v8300 = vsel %vm466, %v8288, %v8296
        %v8301 = vsel %vm466, %v8290, %v8282
        %v8302 = vsel %vm466, %v8292, %v8284
        %v8303 = vsel %vm466, %v8294, %v8286
        %v8304 = vsel %vm466, %v8296, %v8288
        %v8305 = vmul.f32 %v8297, %v353
        %v8306 = vmul.f32 %v8301, %v354
        %v8307 = vmul.f32 %v8298, %v353
        %v8308 = vmul.f32 %v8302, %v354
        %v8309 = vmul.f32 %v8299, %v353
        %v8310 = vmul.f32 %v8303, %v354
        %v8311 = vmul.f32 %v8300, %v353
        %v8312 = vmul.f32 %v8304, %v354
        %8313 = vset.pattern.permute.xlu0 77
        %8314 = vperm.xlu0 %8313, %v3378
        %v8315 = vpop.permute.xlu0 %8314
        %8317 = vset.pattern.permute.xlu0 77
        %8318 = vperm.xlu0 %8317, %v3379
        %v8319 = vpop.permute.xlu0 %8318
        %8321 = vset.pattern.permute.xlu0 77
        %8322 = vperm.xlu0 %8321, %v3380
        %v8323 = vpop.permute.xlu0 %8322
        %8325 = vset.pattern.permute.xlu0 77
        %8326 = vperm.xlu0 %8325, %v3381
        %v8327 = vpop.permute.xlu0 %8326
        %v8329 = vmul.f32 %v8305, %v8315
        %v8330 = vmul.f32 %v8306, %v8315
        %v8331 = vmul.f32 %v8307, %v8319
        %v8332 = vmul.f32 %v8308, %v8319
        %v8333 = vmul.f32 %v8309, %v8323
        %v8334 = vmul.f32 %v8310, %v8323
        %v8335 = vmul.f32 %v8311, %v8327
        %v8336 = vmul.f32 %v8312, %v8327
        %v8337 = vadd.f32 %v8273, %v8329
        %v8338 = vadd.f32 %v8274, %v8330
        %v8339 = vadd.f32 %v8275, %v8331
        %v8340 = vadd.f32 %v8276, %v8332
        %v8341 = vadd.f32 %v8277, %v8333
        %v8342 = vadd.f32 %v8278, %v8334
        %v8343 = vadd.f32 %v8279, %v8335
        %v8344 = vadd.f32 %v8280, %v8336
        %8345 = vrot.lane.b32.xlu0 %v7985, 126
        %v8346 = vpop.permute.xlu0 %8345
        %8347 = vrot.lane.b32.xlu0 %v7987, 126
        %v8348 = vpop.permute.xlu0 %8347
        %8349 = vrot.lane.b32.xlu0 %v7989, 126
        %v8350 = vpop.permute.xlu0 %8349
        %8351 = vrot.lane.b32.xlu0 %v7991, 126
        %v8352 = vpop.permute.xlu0 %8351
        %8353 = vrot.lane.b32.xlu0 %v7986, 126
        %v8354 = vpop.permute.xlu0 %8353
        %8355 = vrot.lane.b32.xlu0 %v7988, 126
        %v8356 = vpop.permute.xlu0 %8355
        %8357 = vrot.lane.b32.xlu0 %v7990, 126
        %v8358 = vpop.permute.xlu0 %8357
        %8359 = vrot.lane.b32.xlu0 %v7992, 126
        %v8360 = vpop.permute.xlu0 %8359
        %v8361 = vsel %vm477, %v8346, %v8354
        %v8362 = vsel %vm477, %v8348, %v8356
        %v8363 = vsel %vm477, %v8350, %v8358
        %v8364 = vsel %vm477, %v8352, %v8360
        %v8365 = vsel %vm477, %v8354, %v8346
        %v8366 = vsel %vm477, %v8356, %v8348
        %v8367 = vsel %vm477, %v8358, %v8350
        %v8368 = vsel %vm477, %v8360, %v8352
        %v8369 = vmul.f32 %v8361, %v377
        %v8370 = vmul.f32 %v8365, %v378
        %v8371 = vmul.f32 %v8362, %v377
        %v8372 = vmul.f32 %v8366, %v378
        %v8373 = vmul.f32 %v8363, %v377
        %v8374 = vmul.f32 %v8367, %v378
        %v8375 = vmul.f32 %v8364, %v377
        %v8376 = vmul.f32 %v8368, %v378
        %8377 = vset.pattern.permute.xlu0 78
        %8378 = vperm.xlu0 %8377, %v3378
        %v8379 = vpop.permute.xlu0 %8378
        %8381 = vset.pattern.permute.xlu0 78
        %8382 = vperm.xlu0 %8381, %v3379
        %v8383 = vpop.permute.xlu0 %8382
        %8385 = vset.pattern.permute.xlu0 78
        %8386 = vperm.xlu0 %8385, %v3380
        %v8387 = vpop.permute.xlu0 %8386
        %8389 = vset.pattern.permute.xlu0 78
        %8390 = vperm.xlu0 %8389, %v3381
        %v8391 = vpop.permute.xlu0 %8390
        %v8393 = vmul.f32 %v8369, %v8379
        %v8394 = vmul.f32 %v8370, %v8379
        %v8395 = vmul.f32 %v8371, %v8383
        %v8396 = vmul.f32 %v8372, %v8383
        %v8397 = vmul.f32 %v8373, %v8387
        %v8398 = vmul.f32 %v8374, %v8387
        %v8399 = vmul.f32 %v8375, %v8391
        %v8400 = vmul.f32 %v8376, %v8391
        %v8401 = vadd.f32 %v8337, %v8393
        %v8402 = vadd.f32 %v8338, %v8394
        %v8403 = vadd.f32 %v8339, %v8395
        %v8404 = vadd.f32 %v8340, %v8396
        %v8405 = vadd.f32 %v8341, %v8397
        %v8406 = vadd.f32 %v8342, %v8398
        %v8407 = vadd.f32 %v8343, %v8399
        %v8408 = vadd.f32 %v8344, %v8400
        %8409 = vrot.lane.b32.xlu0 %v7985, 125
        %v8410 = vpop.permute.xlu0 %8409
        %8411 = vrot.lane.b32.xlu0 %v7987, 125
        %v8412 = vpop.permute.xlu0 %8411
        %8413 = vrot.lane.b32.xlu0 %v7989, 125
        %v8414 = vpop.permute.xlu0 %8413
        %8415 = vrot.lane.b32.xlu0 %v7991, 125
        %v8416 = vpop.permute.xlu0 %8415
        %8417 = vrot.lane.b32.xlu0 %v7986, 125
        %v8418 = vpop.permute.xlu0 %8417
        %8419 = vrot.lane.b32.xlu0 %v7988, 125
        %v8420 = vpop.permute.xlu0 %8419
        %8421 = vrot.lane.b32.xlu0 %v7990, 125
        %v8422 = vpop.permute.xlu0 %8421
        %8423 = vrot.lane.b32.xlu0 %v7992, 125
        %v8424 = vpop.permute.xlu0 %8423
        %v8425 = vsel %vm3869, %v8410, %v8418
        %v8426 = vsel %vm3869, %v8412, %v8420
        %v8427 = vsel %vm3869, %v8414, %v8422
        %v8428 = vsel %vm3869, %v8416, %v8424
        %v8429 = vsel %vm3869, %v8418, %v8410
        %v8430 = vsel %vm3869, %v8420, %v8412
        %v8431 = vsel %vm3869, %v8422, %v8414
        %v8432 = vsel %vm3869, %v8424, %v8416
        %v8433 = vmul.f32 %v8425, %v401
        %v8434 = vmul.f32 %v8429, %v402
        %v8435 = vmul.f32 %v8426, %v401
        %v8436 = vmul.f32 %v8430, %v402
        %v8437 = vmul.f32 %v8427, %v401
        %v8438 = vmul.f32 %v8431, %v402
        %v8439 = vmul.f32 %v8428, %v401
        %v8440 = vmul.f32 %v8432, %v402
        %8441 = vset.pattern.permute.xlu0 79
        %8442 = vperm.xlu0 %8441, %v3378
        %v8443 = vpop.permute.xlu0 %8442
        %8445 = vset.pattern.permute.xlu0 79
        %8446 = vperm.xlu0 %8445, %v3379
        %v8447 = vpop.permute.xlu0 %8446
        %8449 = vset.pattern.permute.xlu0 79
        %8450 = vperm.xlu0 %8449, %v3380
        %v8451 = vpop.permute.xlu0 %8450
        %8453 = vset.pattern.permute.xlu0 79
        %8454 = vperm.xlu0 %8453, %v3381
        %v8455 = vpop.permute.xlu0 %8454
        %v8457 = vmul.f32 %v8433, %v8443
        %v8458 = vmul.f32 %v8434, %v8443
        %v8459 = vmul.f32 %v8435, %v8447
        %v8460 = vmul.f32 %v8436, %v8447
        %v8461 = vmul.f32 %v8437, %v8451
        %v8462 = vmul.f32 %v8438, %v8451
        %v8463 = vmul.f32 %v8439, %v8455
        %v8464 = vmul.f32 %v8440, %v8455
        %v8465 = vadd.f32 %v8401, %v8457
        %v8466 = vadd.f32 %v8402, %v8458
        %v8467 = vadd.f32 %v8403, %v8459
        %v8468 = vadd.f32 %v8404, %v8460
        %v8469 = vadd.f32 %v8405, %v8461
        %v8470 = vadd.f32 %v8406, %v8462
        %v8471 = vadd.f32 %v8407, %v8463
        %v8472 = vadd.f32 %v8408, %v8464
        %8473 = vrot.lane.b32.xlu0 %v7985, 124
        %v8474 = vpop.permute.xlu0 %8473
        %8475 = vrot.lane.b32.xlu0 %v7987, 124
        %v8476 = vpop.permute.xlu0 %8475
        %8477 = vrot.lane.b32.xlu0 %v7989, 124
        %v8478 = vpop.permute.xlu0 %8477
        %8479 = vrot.lane.b32.xlu0 %v7991, 124
        %v8480 = vpop.permute.xlu0 %8479
        %8481 = vrot.lane.b32.xlu0 %v7986, 124
        %v8482 = vpop.permute.xlu0 %8481
        %8483 = vrot.lane.b32.xlu0 %v7988, 124
        %v8484 = vpop.permute.xlu0 %8483
        %8485 = vrot.lane.b32.xlu0 %v7990, 124
        %v8486 = vpop.permute.xlu0 %8485
        %8487 = vrot.lane.b32.xlu0 %v7992, 124
        %v8488 = vpop.permute.xlu0 %8487
        %v8489 = vsel %vm3934, %v8474, %v8482
        %v8490 = vsel %vm3934, %v8476, %v8484
        %v8491 = vsel %vm3934, %v8478, %v8486
        %v8492 = vsel %vm3934, %v8480, %v8488
        %v8493 = vsel %vm3934, %v8482, %v8474
        %v8494 = vsel %vm3934, %v8484, %v8476
        %v8495 = vsel %vm3934, %v8486, %v8478
        %v8496 = vsel %vm3934, %v8488, %v8480
        %v8497 = vmul.f32 %v8489, %v425
        %v8498 = vmul.f32 %v8493, %v426
        %v8499 = vmul.f32 %v8490, %v425
        %v8500 = vmul.f32 %v8494, %v426
        %v8501 = vmul.f32 %v8491, %v425
        %v8502 = vmul.f32 %v8495, %v426
        %v8503 = vmul.f32 %v8492, %v425
        %v8504 = vmul.f32 %v8496, %v426
        %8505 = vset.pattern.permute.xlu0 80
        %8506 = vperm.xlu0 %8505, %v3378
        %v8507 = vpop.permute.xlu0 %8506
        %8509 = vset.pattern.permute.xlu0 80
        %8510 = vperm.xlu0 %8509, %v3379
        %v8511 = vpop.permute.xlu0 %8510
        %8513 = vset.pattern.permute.xlu0 80
        %8514 = vperm.xlu0 %8513, %v3380
        %v8515 = vpop.permute.xlu0 %8514
        %8517 = vset.pattern.permute.xlu0 80
        %8518 = vperm.xlu0 %8517, %v3381
        %v8519 = vpop.permute.xlu0 %8518
        %v8521 = vmul.f32 %v8497, %v8507
        %v8522 = vmul.f32 %v8498, %v8507
        %v8523 = vmul.f32 %v8499, %v8511
        %v8524 = vmul.f32 %v8500, %v8511
        %v8525 = vmul.f32 %v8501, %v8515
        %v8526 = vmul.f32 %v8502, %v8515
        %v8527 = vmul.f32 %v8503, %v8519
        %v8528 = vmul.f32 %v8504, %v8519
        %v8529 = vadd.f32 %v8465, %v8521
        %v8530 = vadd.f32 %v8466, %v8522
        %v8531 = vadd.f32 %v8467, %v8523
        %v8532 = vadd.f32 %v8468, %v8524
        %v8533 = vadd.f32 %v8469, %v8525
        %v8534 = vadd.f32 %v8470, %v8526
        %v8535 = vadd.f32 %v8471, %v8527
        %v8536 = vadd.f32 %v8472, %v8528
        %v8537 = vmul.f32 %v8529, 0.2
        %v8538 = vmul.f32 %v8530, 0.2
        %v8539 = vmul.f32 %v8531, 0.2
        %v8540 = vmul.f32 %v8532, 0.2
        %v8541 = vmul.f32 %v8533, 0.2
        %v8542 = vmul.f32 %v8534, 0.2
        %v8543 = vmul.f32 %v8535, 0.2
        %v8544 = vmul.f32 %v8536, 0.2
        %v8545 = vmax.f32 %v8529, %v8537
        %v8546 = vmax.f32 %v8530, %v8538
        %v8547 = vmax.f32 %v8531, %v8539
        %v8548 = vmax.f32 %v8532, %v8540
        %v8549 = vmax.f32 %v8533, %v8541
        %v8550 = vmax.f32 %v8534, %v8542
        %v8551 = vmax.f32 %v8535, %v8543
        %v8552 = vmax.f32 %v8536, %v8544
        %v8553 = vld [vmem:[%s3 + $0xb0] sm:$0x7]
        %v8554 = vld [vmem:[%s4] sm:$0x7]
        %8556 = vset.pattern.permute.xlu0 6
        %8557 = vperm.xlu0 %8556, %v8554
        %v8558 = vpop.permute.xlu0 %8557
        %v8561 = vsel %vm2487, %v8553, 0
        %8563 = vmatprep.subr.mxu0 0.0
        %8564 = vmatpush1.msra.mxu0 0.0
        %8565 = vmatprep.subr.mxu0 0.0
        %8566 = vmatpush1.msra.mxu0 0.0
        %8567 = vmatprep.subr.mxu0 0.0
        %8568 = vmatpush1.msra.mxu0 0.0
        %8569 = vmatprep.subr.mxu0 0.0
        %8570 = vmatpush1.msra.mxu0 0.0
        %8571 = vmatprep.subr.mxu0 0.0
        %8572 = vmatpush1.msra.mxu0 0.0
        %8573 = vmatprep.subr.mxu0 0.0
        %8574 = vmatpush1.msra.mxu0 0.0
        %8575 = vmatprep.subr.mxu0 0.0
        %8576 = vmatpush1.msra.mxu0 0.0
        %8577 = vmatprep.subr.mxu0 0.0
        %8578 = vmatpush1.msra.mxu0 0.0
        %8579 = vmatprep.subr.mxu0 0.0
        %8580 = vmatpush1.msra.mxu0 0.0
        %8581 = vmatprep.subr.mxu0 0.0
        %8582 = vmatpush1.msra.mxu0 0.0
        %8583 = vmatprep.subr.mxu0 0.0
        %8584 = vmatpush1.msra.mxu0 0.0
        %8585 = vmatprep.subr.mxu0 0.0
        %8586 = vmatpush1.msra.mxu0 0.0
        %8587 = vmatprep.subr.mxu0 %v8552
        %8588 = vmatpush1.msra.mxu0 %v8551
        %8589 = vmatprep.subr.mxu0 %v8550
        %8590 = vmatpush1.msra.mxu0 %v8549
        %8591 = vmatprep.subr.mxu0 %v8548
        %8592 = vmatpush1.msra.mxu0 %v8547
        %8593 = vmatprep.subr.mxu0 %v8546
        %8594 = vmatpush1.msra.mxu0 %v8545
        %8595 = vmatprep.subr.mxu0 0.0
        %8596 = vmatpush2.msra.mxu0 0.0
        %8597 = vmatprep.subr.mxu0 0.0
        %8598 = vmatpush2.msra.mxu0 0.0
        %8599 = vmatprep.subr.mxu0 0.0
        %8600 = vmatpush2.msra.mxu0 0.0
        %8601 = vmatprep.subr.mxu0 0.0
        %8602 = vmatpush2.msra.mxu0 0.0
        %8603 = vmatprep.subr.mxu0 0.0
        %8604 = vmatpush2.msra.mxu0 0.0
        %8605 = vmatprep.subr.mxu0 0.0
        %8606 = vmatpush2.msra.mxu0 0.0
        %8607 = vmatprep.subr.mxu0 0.0
        %8608 = vmatpush2.msra.mxu0 0.0
        %8609 = vmatprep.subr.mxu0 0.0
        %8610 = vmatpush2.msra.mxu0 0.0
        %8611 = vmatprep.subr.mxu0 0.0
        %8612 = vmatpush2.msra.mxu0 0.0
        %8613 = vmatprep.subr.mxu0 0.0
        %8614 = vmatpush2.msra.mxu0 0.0
        %8615 = vmatprep.subr.mxu0 0.0
        %8616 = vmatpush2.msra.mxu0 0.0
        %8617 = vmatprep.subr.mxu0 0.0
        %8618 = vmatpush2.msra.mxu0 0.0
        %8619 = vmatprep.subr.mxu0 0.0
        %8620 = vmatpush2.msra.mxu0 0.0
        %8621 = vmatprep.subr.mxu0 0.0
        %8622 = vmatpush2.msra.mxu0 0.0
        %8623 = vmatprep.subr.mxu0 0.0
        %8624 = vmatpush2.msra.mxu0 0.0
        %8625 = vmatprep.subr.mxu0 0.0
        %8626 = vmatpush2.msra.mxu0 0.0
        %8627 = vmatprep.mubr.f32.mxu0 0.0
        %8628 = vmatmul.mubr.f32.gmra.mxu0 %v8561
        %v8629 = vpop.f32.mrf.mxu0
        %v8630 = vadd.f32 %v8558, %v8629
        %v8631 = vpop.f32.mrf.mxu0
        %v8632 = vadd.f32 %v8558, %v8631
        %8633 = vdwg.mxu0
        %v8634 = vtanh.pop %v8630
        %v8635 = vtanh.pop %v8632
        %v8636 = vld [vmem:[%s223] sm:$0x7]
        %v8637 = vld [vmem:[%s223 + $0x8] sm:$0x7]
        %v8638 = vadd.f32 %v8634, %v8636
        %v8639 = vadd.f32 %v8635, %v8637
        %v8642 = vcombine.low %v8638, %v8639
        %8644 = vst [vmem:[%s218] sm:$0x77] %v8642
        %s8645 = sand.u32 %s137, 1
        %s8646 = scalar_lea.sflag [#allocation4], %s8645
        %s8647 = sand.u32 %s137, 1
        %s8648 = smul.addr %s8647, 8
        %s8649 = scalar_lea.vmem [#allocation3], %s8648
        // Predicated region
        $region41: #{tpu_custom_call.1} parent=39 // pred_check
          %p8650 = pneg %p147
        $region42: #{tpu_custom_call.1} parent=39 // pred_check_branch
          %8652 = sbr.rel (%p8650) target = $region44
        $region43: #{tpu_custom_call.1} parent=39 // pred_region
          %s8653 = smul.u32 2, %s19
          %s8655 = ssub.s32 128, 128
          %8656 = vsyncadd %s8646, %s8655
          %s8657 = smul.addr %s8653, 64
          %s8658 = scalar_lea.hbm %s5, %s8657
          %s8660 = sshll.u32 %s8649, 4
          %s8661 = int_to_ptr.vmem [resolvable:$true] %s8660
          %8663 = dma.vmem_to_hbm [thread:$0]  %s8661, 128, %s8658, %s8646
        $region44: #{tpu_custom_call.1} parent=39 // pred_fallthru
          _
      $region40: #{tpu_custom_call.1} parent=5 // pred_fallthru
        _
      %p8664 = scmp.le.s32.totalorder 2, %s14
      // Predicated region
      $region45: #{tpu_custom_call.1} parent=5 // pred_check
        %p8665 = pneg %p8664
      $region46: #{tpu_custom_call.1} parent=5 // pred_check_branch
        %8667 = sbr.rel (%p8665) target = $region48
      $region47: #{tpu_custom_call.1} parent=5 // pred_region
        %s8668 = ssub.s32 %s14, 2
        // Predicated region
        $region49: #{tpu_custom_call.1} parent=47 // pred_check
          %p8669 = pneg %p153
        $region50: #{tpu_custom_call.1} parent=47 // pred_check_branch
          %8671 = sbr.rel (%p8669) target = $region52
        $region51: #{tpu_custom_call.1} parent=47 // pred_region
          %s8672 = sand.u32 %s138, 1
          %s8673 = scalar_lea.sflag [#allocation4], %s8672
          %s8674 = sand.u32 %s138, 1
          %s8675 = smul.addr %s8674, 8
          %s8676 = scalar_lea.vmem [#allocation3], %s8675
          %8677 = dma.done %s8673, 128
        $region52: #{tpu_custom_call.1} parent=47 // pred_fallthru
          _
      $region48: #{tpu_custom_call.1} parent=5 // pred_fallthru
        _
    $region6: #{tpu_custom_call.1} parent=1 // loop_footer
      %s18 = sadd.s32 1, %s14
    $region7: #{tpu_custom_call.1} parent=1 // loop_footer_branch
      %13 = sbr.rel target = $region3
    $region8: #{tpu_custom_call.1} parent=1 // loop_exit
      _
    %8678 = vsyncpa [#allocation4], 1
    %s8679 = scalar_lea.sflag [#allocation4], 1
    %8680 = vsyncpa %s8679, 1

</llo_original>
